<compile_context>
chip_gen: v6e
topology: v6e:2x2x1
jax: 0.10.0
libtpu: 0.0.40
codegen_flags: <defaults>
</compile_context>

<pallas_src>
import functools

import jax
import jax.numpy as jnp
from jax import lax
from jax.experimental import pallas as pl
from jax.experimental.pallas import tpu as pltpu


def _transformer_block_kernel(x_ref, wqkv_ref, wo_ref, g_ref, b_ref, cw_ref, cb_ref,
                              o_ref, attn_sc, stack_sc, *,
                              num_heads, num_grams, seq_len, valid_features,
                              mxu_dtype, approx_recip):
    # Block shapes: x_ref / o_ref (R, Fp) with R = batch_tile * S;
    # wqkv (Fp, 3Fp); wo (Fp, Fp); ln params / conv bias (1, Fp); cw (G*Fp, Fp).
    # attn_sc (R, Fp) and stack_sc (R, G*Fp) are VMEM scratch in the MXU dtype.
    R, Fp = x_ref.shape
    S, H, G = seq_len, num_heads, num_grams
    # Static checks: the row-axis roll in the conv taps wraps across sequence /
    # batch-tile boundaries; the position mask below is only correct if the block
    # is exactly batch_tile whole sequences.
    assert R % S == 0, "block rows must be an exact multiple of the sequence length"
    assert Fp % H == 0
    TB = R // S
    Dh = Fp // H                     # padded head width (>=128 ideal on v6e/v7x)
    Fv = valid_features              # un-padded feature count (LayerNorm uses this)

    mx = lambda a: a.astype(mxu_dtype)   # activation cast only; weights pre-cast

    x = x_ref[...]                                           # (R, Fp) f32

    # --- fused Q/K/V projection (1/sqrt(Dh) folded into the Q columns at prep time)
    qkv = jnp.dot(mx(x), wqkv_ref[...],
                  preferred_element_type=jnp.float32).astype(mxu_dtype)  # (R, 3Fp)

    # --- self-attention: per batch row / per head; head outputs go into attn_sc so
    #     the output projection is a single (R,Fp)@(Fp,Fp) matmul afterwards.
    # NOTE: static Python loops are fine at the small TB*H used here; switch to
    # lax.fori_loop(..., unroll=True) + pl.ds scratch writes if TB or H grow.
    # NOTE: for large S (>= ~1k) replace the materialized (S,S) scores with a
    # flash-style online softmax over K tiles.
    for b in range(TB):
        r0 = b * S
        for h in range(H):
            c0 = h * Dh
            q = qkv[r0:r0 + S, c0:c0 + Dh]                         # (S, Dh)
            k = qkv[r0:r0 + S, Fp + c0:Fp + c0 + Dh]               # (S, Dh)
            v = qkv[r0:r0 + S, 2 * Fp + c0:2 * Fp + c0 + Dh]       # (S, Dh)
            # Scores contract the last dims directly (no explicit K transpose).
            s = lax.dot_general(q, k, (((1,), (1,)), ((), ())),
                                preferred_element_type=jnp.float32)  # (S, S)
            s = s - jnp.max(s, axis=-1, keepdims=True)
            e = jnp.exp(s)
            denom = jnp.sum(e, axis=-1, keepdims=True)
            if approx_recip:
                p = e * pl.reciprocal(denom, approx=True)   # EUP slot, ~free
            else:
                p = e / denom
            hv = jnp.dot(mx(p), v, preferred_element_type=jnp.float32)  # (S, Dh)
            attn_sc[r0:r0 + S, c0:c0 + Dh] = hv.astype(attn_sc.dtype)

    # --- single K=Fp output projection + residual
    r = x + jnp.dot(attn_sc[...], wo_ref[...], preferred_element_type=jnp.float32)

    # --- LayerNorm over the Fv valid features (eps=1e-5, biased variance).
    # Padded columns of r are exactly zero (zero-padded x, zero W columns), so the
    # sums over Fp only need the closed-form correction term for the variance.
    inv_F = 1.0 / Fv
    mu = jnp.sum(r, axis=-1, keepdims=True) * inv_F
    diff = r - mu
    ssq = jnp.sum(diff * diff, axis=-1, keepdims=True)
    if Fp != Fv:
        ssq = ssq - float(Fp - Fv) * (mu * mu)
    xn = diff * lax.rsqrt(ssq * inv_F + 1e-5)
    xn = xn * g_ref[0] + b_ref[0]        # padded gamma/beta are zero -> padded cols 0

    # --- n-gram Conv1d over the sequence axis ("same" zero padding).  Each tap is
    # written straight into the (R, G*Fp) scratch; the taps are then consumed by a
    # single K = G*Fp matmul against the pre-stacked conv weight.
    P = (G - 1) // 2
    pos = lax.broadcasted_iota(jnp.int32, (R, 1), 0) % S   # (R,1) row-in-sequence
    for k in range(G):
        d = k - P                        # tap_k[s] = xn[s + d] (0 outside [0,S))
        if d == 0:
            tap = xn
        else:
            shifted = pltpu.roll(xn, shift=(-d) % R, axis=0)        # XLU sublane roll
            valid = jnp.logical_and(pos + d >= 0, pos + d < S)      # (R,1) mask
            tap = jnp.where(valid, shifted, 0.0)
        stack_sc[:, k * Fp:(k + 1) * Fp] = tap.astype(stack_sc.dtype)

    y = jnp.dot(stack_sc[...], cw_ref[...],
                preferred_element_type=jnp.float32) + cb_ref[0]
    o_ref[...] = y.astype(o_ref.dtype)


def prepare_params(params, *, num_heads, mxu_dtype=jnp.bfloat16, feature_pad=None):
    """One-time weight prep.

    - fuses Q/K/V into one (Fp, 3Fp) matrix and folds the 1/sqrt(Dh) scale into Q,
    - optionally zero-pads the feature axis to `feature_pad` (use a multiple of 128
      for lane-dense blocks; padding is per-head for Q/K/V columns and W rows so the
      head layout is preserved),
    - stacks the conv taps into a single (G*Fp, Fp) matrix,
    - pre-casts the three big matmul weights to `mxu_dtype` (bf16 recommended on
      v6e/v7x: half the weight DMA bytes / VMEM residency, 2x MXU operand rate).
    """
    F = params["Q"].shape[0]
    H = num_heads
    assert F % H == 0
    Dh = F // H
    scale = 1.0 / (Dh ** 0.5)
    G = params["conv_w"].shape[0]

    Fp = F if feature_pad is None else int(feature_pad)
    assert Fp >= F and Fp % H == 0
    Dhp = Fp // H
    dp = Dhp - Dh

    def pad_head_cols(w):                    # (F, F) -> (F, Fp), per-head column pad
        w = w.reshape(F, H, Dh)
        w = jnp.pad(w, ((0, 0), (0, 0), (0, dp)))
        return w.reshape(F, Fp)

    def pad_rows(w, n):
        return jnp.pad(w, ((0, n - w.shape[0]), (0, 0)))

    q = pad_rows(pad_head_cols(params["Q"] * scale), Fp)          # (Fp, Fp)
    k = pad_rows(pad_head_cols(params["K"]), Fp)
    v = pad_rows(pad_head_cols(params["V"]), Fp)
    wqkv = jnp.concatenate([q, k, v], axis=1)                      # (Fp, 3Fp)

    # W rows correspond to concatenated head outputs -> pad per head, then pad cols.
    w = params["W"].reshape(H, Dh, F)
    w = jnp.pad(w, ((0, 0), (0, dp), (0, 0))).reshape(Fp, F)
    wo = jnp.pad(w, ((0, 0), (0, Fp - F)))                         # (Fp, Fp)

    ln_g = jnp.pad(params["ln_g"], ((0, 0), (0, Fp - F)))
    ln_b = jnp.pad(params["ln_b"], ((0, 0), (0, Fp - F)))
    cw = jnp.pad(params["conv_w"],
                 ((0, 0), (0, Fp - F), (0, Fp - F))).reshape(G * Fp, Fp)
    cb = jnp.pad(params["conv_b"], ((0, 0), (0, Fp - F)))

    return {
        "wqkv": wqkv.astype(mxu_dtype),
        "wo": wo.astype(mxu_dtype),
        "cw": cw.astype(mxu_dtype),
        "ln_g": ln_g, "ln_b": ln_b, "cb": cb,
        "valid_features": F,
        "padded_features": Fp,
        "mxu_dtype": mxu_dtype,
    }


def _const_weight_spec(shape, buffers):
    """BlockSpec for a grid-invariant weight block, optionally single-buffered."""
    index_map = lambda i: (0,) * len(shape)
    if buffers is not None:
        try:
            return pl.BlockSpec(shape, index_map, pipeline_mode=pl.Buffered(buffers))
        except (AttributeError, TypeError):       # older jax without pipeline_mode
            pass
    return pl.BlockSpec(shape, index_map)


def transformer_encoder_block(x, prepared, *, num_heads, num_grams,
                              batch_tile=1, approx_softmax_recip=True,
                              single_buffer_weights=True, vmem_limit_bytes=None):
    """Fused TransformerEncoderBlock forward.

    Tiling guidance:
      * batch_tile: choose so R = batch_tile*S is ~512+ rows (largest fitting VMEM);
        on v7x keep grid = B//batch_tile >= 2 so both TensorCores get work.
      * vmem_limit_bytes: v5e/v6e can go toward ~96 MiB for big row tiles (128 MiB
        physical); on v7x stay around ~48 MiB (64 MiB physical).
      * prepared with mxu_dtype=bf16 + feature_pad=multiple of 128 for v6e/v7x.
    """
    B, S, F = x.shape
    Fp = int(prepared["padded_features"])
    assert int(prepared["valid_features"]) == F
    assert B % batch_tile == 0
    TB = batch_tile
    R = TB * S
    G = num_grams
    mxu_dtype = prepared["mxu_dtype"]
    assert prepared["wqkv"].shape == (Fp, 3 * Fp)
    assert prepared["cw"].shape == (G * Fp, Fp)

    # Flatten batch/seq in the wrapper (free XLA reshape) and zero-pad the feature
    # axis to the lane-dense width; the kernel then sees plain 2-D row blocks.
    x2 = x.reshape(B * S, F)
    if Fp != F:
        x2 = jnp.pad(x2, ((0, 0), (0, Fp - F)))

    kernel = functools.partial(
        _transformer_block_kernel,
        num_heads=num_heads, num_grams=G, seq_len=S, valid_features=F,
        mxu_dtype=mxu_dtype, approx_recip=approx_softmax_recip)

    cp_kwargs = dict(dimension_semantics=("parallel",))   # batch-tile axis: megacore
    if vmem_limit_bytes is not None:
        cp_kwargs["vmem_limit_bytes"] = vmem_limit_bytes

    def build(weight_buffers):
        return pl.pallas_call(
            kernel,
            out_shape=jax.ShapeDtypeStruct((B * S, Fp), x.dtype),
            grid_spec=pltpu.PrefetchScalarGridSpec(
                num_scalar_prefetch=0,
                grid=(B // TB,),
                in_specs=[
                    pl.BlockSpec((R, Fp), lambda i: (i, 0)),           # x rows
                    _const_weight_spec((Fp, 3 * Fp), weight_buffers),  # fused QKV
                    _const_weight_spec((Fp, Fp), weight_buffers),      # out proj W
                    pl.BlockSpec((1, Fp), lambda i: (0, 0)),           # LN gamma
                    pl.BlockSpec((1, Fp), lambda i: (0, 0)),           # LN beta
                    _const_weight_spec((G * Fp, Fp), weight_buffers),  # stacked conv
                    pl.BlockSpec((1, Fp), lambda i: (0, 0)),           # conv bias
                ],
                out_specs=pl.BlockSpec((R, Fp), lambda i: (i, 0)),
                scratch_shapes=[
                    pltpu.VMEM((R, Fp), mxu_dtype),        # per-head attention out
                    pltpu.VMEM((R, G * Fp), mxu_dtype),    # stacked conv taps
                ],
            ),
            compiler_params=pltpu.CompilerParams(**cp_kwargs),
        )

    args = (x2, prepared["wqkv"], prepared["wo"], prepared["ln_g"], prepared["ln_b"],
            prepared["cw"], prepared["cb"])
    if single_buffer_weights:
        try:
            out = build(1)(*args)
        except Exception:   # Buffered(1) unsupported on this jax/Mosaic: fall back
            out = build(None)(*args)
    else:
        out = build(None)(*args)

    out = out.reshape(B, S, Fp)
    return out[..., :F] if Fp != F else out


def _reference(x, p, num_heads, num_grams):
    """Pure-JAX reference mirroring the PyTorch forward (uses raw params)."""
    B, S, F = x.shape
    Dh = F // num_heads
    xq = (x @ p["Q"]).reshape(B, S, num_heads, Dh)
    xk = (x @ p["K"]).reshape(B, S, num_heads, Dh)
    xv = (x @ p["V"]).reshape(B, S, num_heads, Dh)
    a = jnp.einsum("bqhf,bkhf->bqhk", xq, xk) / (Dh ** 0.5)
    a = jax.nn.softmax(a, axis=-1)
    o = jnp.einsum("bqhk,bkhf->bqhf", a, xv).reshape(B, S, F) @ p["W"]
    r = o + x
    mu = r.mean(-1, keepdims=True)
    var = jnp.square(r - mu).mean(-1, keepdims=True)
    xn = (r - mu) / jnp.sqrt(var + 1e-5) * p["ln_g"][0] + p["ln_b"][0]
    P = (num_grams - 1) // 2
    xp = jnp.pad(xn, ((0, 0), (P, num_grams - 1 - P), (0, 0)))
    y = sum(jnp.einsum("bsf,fg->bsg", xp[:, k:k + S], p["conv_w"][k])
            for k in range(num_grams))
    return y + p["conv_b"][0]


if __name__ == "__main__":
    B, S, F, H, G = 8, 8, 32, 4, 3   # batch, seq, in_features, num_heads, num_grams

    key = jax.random.PRNGKey(0)
    ks = jax.random.split(key, 8)

    # xavier_uniform bound for the (F, F) attention projections
    xav = (6.0 / (F + F)) ** 0.5
    # torch Conv1d default init bound: 1 / sqrt(in_channels * kernel_size)
    cbnd = 1.0 / (F * G) ** 0.5

    params = {
        "Q": jax.random.uniform(ks[0], (F, F), jnp.float32, -xav, xav),
        "K": jax.random.uniform(ks[1], (F, F), jnp.float32, -xav, xav),
        "V": jax.random.uniform(ks[2], (F, F), jnp.float32, -xav, xav),
        "W": jax.random.uniform(ks[3], (F, F), jnp.float32, -xav, xav),
        "ln_g": jnp.ones((1, F), jnp.float32),
        "ln_b": jnp.zeros((1, F), jnp.float32),
        # conv_w[k] is the (F_in, F_out) matrix for tap k (== torch w[:, :, k].T)
        "conv_w": jax.random.uniform(ks[4], (G, F, F), jnp.float32, -cbnd, cbnd),
        "conv_b": jax.random.uniform(ks[5], (1, F), jnp.float32, -cbnd, cbnd),
    }

    x = jax.random.normal(ks[6], (B, S, F), jnp.float32)
    y_ref = _reference(x, params, H, G)

    # (1) f32 MXU operands + exact softmax normalization: tight correctness check.
    #     feature_pad=128 makes every block/store lane-dense; batch_tile=4 gives
    #     R=32 rows per grid step while keeping grid=2 (megacore-shardable).
    prep_f32 = prepare_params(params, num_heads=H, mxu_dtype=jnp.float32,
                              feature_pad=128)
    y = transformer_encoder_block(x, prep_f32, num_heads=H, num_grams=G,
                                  batch_tile=4, approx_softmax_recip=False,
                                  vmem_limit_bytes=48 * 1024 * 1024)
    jax.block_until_ready(y)
    err = float(jnp.max(jnp.abs(y - y_ref)))
    assert jnp.allclose(y, y_ref, atol=2e-3, rtol=2e-3), f"f32 path max abs err {err}"

    # (2) bf16 weights + approx softmax reciprocal (the v6e/v7x production config),
    #     validated here at a correspondingly looser tolerance.
    prep_bf16 = prepare_params(params, num_heads=H, mxu_dtype=jnp.bfloat16,
                               feature_pad=128)
    y16 = transformer_encoder_block(x, prep_bf16, num_heads=H, num_grams=G,
                                    batch_tile=4, approx_softmax_recip=True,
                                    vmem_limit_bytes=48 * 1024 * 1024)
    jax.block_until_ready(y16)
    err16 = float(jnp.max(jnp.abs(y16 - y_ref)))
    assert jnp.allclose(y16, y_ref, atol=5e-2, rtol=5e-2), \
        f"bf16 path max abs err {err16}"

    print("KERNEL_OK")
</pallas_src>

<mosaic_0001>
module attributes {stable_mosaic.version = 11 : i64} {
  func.func @_transformer_block_kernel(%arg0: i32, %arg1: memref<32x128xf32, #tpu.memory_space<vmem>>, %arg2: memref<128x384xf32, #tpu.memory_space<vmem>>, %arg3: memref<128x128xf32, #tpu.memory_space<vmem>>, %arg4: memref<1x128xf32, #tpu.memory_space<vmem>>, %arg5: memref<1x128xf32, #tpu.memory_space<vmem>>, %arg6: memref<384x128xf32, #tpu.memory_space<vmem>>, %arg7: memref<1x128xf32, #tpu.memory_space<vmem>>, %arg8: memref<32x128xf32, #tpu.memory_space<vmem>>, %arg9: memref<32x128xf32, #tpu.memory_space<vmem>>, %arg10: memref<32x384xf32, #tpu.memory_space<vmem>>) attributes {dimension_semantics = [#tpu.dimension_semantics<parallel>], iteration_bounds = array<i64: 2>, scalar_prefetch = 0 : i64, scratch_operands = 2 : i64, tpu.core_type = #tpu.core_type<tc>, window_params = [{transform_indices = @transform_0, window_bounds = array<i64: 32, 128>}, {pipeline_mode = #tpu.pipeline_mode<synchronous>, transform_indices = @transform_1, window_bounds = array<i64: 128, 384>}, {pipeline_mode = #tpu.pipeline_mode<synchronous>, transform_indices = @transform_2, window_bounds = array<i64: 128, 128>}, {pipeline_mode = #tpu.pipeline_mode<synchronous>, transform_indices = @transform_3, window_bounds = array<i64: 1, 128>}, {pipeline_mode = #tpu.pipeline_mode<synchronous>, transform_indices = @transform_4, window_bounds = array<i64: 1, 128>}, {pipeline_mode = #tpu.pipeline_mode<synchronous>, transform_indices = @transform_5, window_bounds = array<i64: 384, 128>}, {pipeline_mode = #tpu.pipeline_mode<synchronous>, transform_indices = @transform_6, window_bounds = array<i64: 1, 128>}, {transform_indices = @transform_7, window_bounds = array<i64: 32, 128>}]} {
    %c0 = arith.constant 0 : index
    %c0_0 = arith.constant 0 : index
    %0 = vector.load %arg1[%c0, %c0_0] : memref<32x128xf32, #tpu.memory_space<vmem>>, vector<32x128xf32>
    %c0_1 = arith.constant 0 : index
    %c0_2 = arith.constant 0 : index
    %1 = vector.load %arg2[%c0_1, %c0_2] : memref<128x384xf32, #tpu.memory_space<vmem>>, vector<128x384xf32>
    %cst = arith.constant dense<0.000000e+00> : vector<32x384xf32>
    %2 = tpu.matmul %0, %1, %cst {dimension_numbers = #tpu.dot_dimension_numbers<[1], [0], [0], [1], [0, 0, 1, 1], [], []>} : vector<32x128xf32>, vector<128x384xf32>, vector<32x384xf32> -> vector<32x384xf32>
    %3 = vector.extract_strided_slice %2 {offsets = [0, 0], sizes = [8, 32], strides = [1, 1]} : vector<32x384xf32> to vector<8x32xf32>
    %4 = vector.extract_strided_slice %2 {offsets = [0, 128], sizes = [8, 32], strides = [1, 1]} : vector<32x384xf32> to vector<8x32xf32>
    %5 = vector.extract_strided_slice %2 {offsets = [0, 256], sizes = [8, 32], strides = [1, 1]} : vector<32x384xf32> to vector<8x32xf32>
    %cst_3 = arith.constant dense<0.000000e+00> : vector<8x8xf32>
    %6 = tpu.matmul %3, %4, %cst_3 {dimension_numbers = #tpu.dot_dimension_numbers<[1], [1], [0], [0], [0, 0, 1, 0], [], []>} : vector<8x32xf32>, vector<8x32xf32>, vector<8x8xf32> -> vector<8x8xf32>
    %cst_4 = arith.constant dense<0xFF800000> : vector<8xf32>
    %7 = vector.multi_reduction <maximumf>, %6, %cst_4 [1] : vector<8x8xf32> to vector<8xf32>
    %8 = vector.shape_cast %7 : vector<8xf32> to vector<8x1xf32>
    %9 = vector.broadcast %8 : vector<8x1xf32> to vector<8x8xf32>
    %10 = arith.subf %6, %9 : vector<8x8xf32>
    %11 = math.exp %10 : vector<8x8xf32>
    %cst_5 = arith.constant dense<0.000000e+00> : vector<8xf32>
    %12 = vector.multi_reduction <add>, %11, %cst_5 [1] : vector<8x8xf32> to vector<8xf32>
    %13 = vector.shape_cast %12 : vector<8xf32> to vector<8x1xf32>
    %14 = vector.broadcast %13 : vector<8x1xf32> to vector<8x8xf32>
    %15 = arith.divf %11, %14 : vector<8x8xf32>
    %cst_6 = arith.constant dense<0.000000e+00> : vector<8x32xf32>
    %16 = tpu.matmul %15, %5, %cst_6 {dimension_numbers = #tpu.dot_dimension_numbers<[1], [0], [0], [1], [0, 0, 1, 1], [], []>} : vector<8x8xf32>, vector<8x32xf32>, vector<8x32xf32> -> vector<8x32xf32>
    %c0_7 = arith.constant 0 : index
    %c0_8 = arith.constant 0 : index
    %17 = vector.load %arg9[%c0_7, %c0_8] : memref<32x128xf32, #tpu.memory_space<vmem>>, vector<8x32xf32>
    tpu.vector_store %arg9[%c0_7, %c0_8], %16 {strides = array<i32>} : memref<32x128xf32, #tpu.memory_space<vmem>>, vector<8x32xf32>,
    %18 = vector.extract_strided_slice %2 {offsets = [0, 32], sizes = [8, 32], strides = [1, 1]} : vector<32x384xf32> to vector<8x32xf32>
    %19 = vector.extract_strided_slice %2 {offsets = [0, 160], sizes = [8, 32], strides = [1, 1]} : vector<32x384xf32> to vector<8x32xf32>
    %20 = vector.extract_strided_slice %2 {offsets = [0, 288], sizes = [8, 32], strides = [1, 1]} : vector<32x384xf32> to vector<8x32xf32>
    %cst_9 = arith.constant dense<0.000000e+00> : vector<8x8xf32>
    %21 = tpu.matmul %18, %19, %cst_9 {dimension_numbers = #tpu.dot_dimension_numbers<[1], [1], [0], [0], [0, 0, 1, 0], [], []>} : vector<8x32xf32>, vector<8x32xf32>, vector<8x8xf32> -> vector<8x8xf32>
    %cst_10 = arith.constant dense<0xFF800000> : vector<8xf32>
    %22 = vector.multi_reduction <maximumf>, %21, %cst_10 [1] : vector<8x8xf32> to vector<8xf32>
    %23 = vector.shape_cast %22 : vector<8xf32> to vector<8x1xf32>
    %24 = vector.broadcast %23 : vector<8x1xf32> to vector<8x8xf32>
    %25 = arith.subf %21, %24 : vector<8x8xf32>
    %26 = math.exp %25 : vector<8x8xf32>
    %cst_11 = arith.constant dense<0.000000e+00> : vector<8xf32>
    %27 = vector.multi_reduction <add>, %26, %cst_11 [1] : vector<8x8xf32> to vector<8xf32>
    %28 = vector.shape_cast %27 : vector<8xf32> to vector<8x1xf32>
    %29 = vector.broadcast %28 : vector<8x1xf32> to vector<8x8xf32>
    %30 = arith.divf %26, %29 : vector<8x8xf32>
    %cst_12 = arith.constant dense<0.000000e+00> : vector<8x32xf32>
    %31 = tpu.matmul %30, %20, %cst_12 {dimension_numbers = #tpu.dot_dimension_numbers<[1], [0], [0], [1], [0, 0, 1, 1], [], []>} : vector<8x8xf32>, vector<8x32xf32>, vector<8x32xf32> -> vector<8x32xf32>
    %c0_13 = arith.constant 0 : index
    %c32 = arith.constant 32 : index
    %32 = vector.load %arg9[%c0_13, %c32] : memref<32x128xf32, #tpu.memory_space<vmem>>, vector<8x32xf32>
    tpu.vector_store %arg9[%c0_13, %c32], %31 {strides = array<i32>} : memref<32x128xf32, #tpu.memory_space<vmem>>, vector<8x32xf32>,
    %33 = vector.extract_strided_slice %2 {offsets = [0, 64], sizes = [8, 32], strides = [1, 1]} : vector<32x384xf32> to vector<8x32xf32>
    %34 = vector.extract_strided_slice %2 {offsets = [0, 192], sizes = [8, 32], strides = [1, 1]} : vector<32x384xf32> to vector<8x32xf32>
    %35 = vector.extract_strided_slice %2 {offsets = [0, 320], sizes = [8, 32], strides = [1, 1]} : vector<32x384xf32> to vector<8x32xf32>
    %cst_14 = arith.constant dense<0.000000e+00> : vector<8x8xf32>
    %36 = tpu.matmul %33, %34, %cst_14 {dimension_numbers = #tpu.dot_dimension_numbers<[1], [1], [0], [0], [0, 0, 1, 0], [], []>} : vector<8x32xf32>, vector<8x32xf32>, vector<8x8xf32> -> vector<8x8xf32>
    %cst_15 = arith.constant dense<0xFF800000> : vector<8xf32>
    %37 = vector.multi_reduction <maximumf>, %36, %cst_15 [1] : vector<8x8xf32> to vector<8xf32>
    %38 = vector.shape_cast %37 : vector<8xf32> to vector<8x1xf32>
    %39 = vector.broadcast %38 : vector<8x1xf32> to vector<8x8xf32>
    %40 = arith.subf %36, %39 : vector<8x8xf32>
    %41 = math.exp %40 : vector<8x8xf32>
    %cst_16 = arith.constant dense<0.000000e+00> : vector<8xf32>
    %42 = vector.multi_reduction <add>, %41, %cst_16 [1] : vector<8x8xf32> to vector<8xf32>
    %43 = vector.shape_cast %42 : vector<8xf32> to vector<8x1xf32>
    %44 = vector.broadcast %43 : vector<8x1xf32> to vector<8x8xf32>
    %45 = arith.divf %41, %44 : vector<8x8xf32>
    %cst_17 = arith.constant dense<0.000000e+00> : vector<8x32xf32>
    %46 = tpu.matmul %45, %35, %cst_17 {dimension_numbers = #tpu.dot_dimension_numbers<[1], [0], [0], [1], [0, 0, 1, 1], [], []>} : vector<8x8xf32>, vector<8x32xf32>, vector<8x32xf32> -> vector<8x32xf32>
    %c0_18 = arith.constant 0 : index
    %c64 = arith.constant 64 : index
    %47 = vector.load %arg9[%c0_18, %c64] : memref<32x128xf32, #tpu.memory_space<vmem>>, vector<8x32xf32>
    tpu.vector_store %arg9[%c0_18, %c64], %46 {strides = array<i32>} : memref<32x128xf32, #tpu.memory_space<vmem>>, vector<8x32xf32>,
    %48 = vector.extract_strided_slice %2 {offsets = [0, 96], sizes = [8, 32], strides = [1, 1]} : vector<32x384xf32> to vector<8x32xf32>
    %49 = vector.extract_strided_slice %2 {offsets = [0, 224], sizes = [8, 32], strides = [1, 1]} : vector<32x384xf32> to vector<8x32xf32>
    %50 = vector.extract_strided_slice %2 {offsets = [0, 352], sizes = [8, 32], strides = [1, 1]} : vector<32x384xf32> to vector<8x32xf32>
    %cst_19 = arith.constant dense<0.000000e+00> : vector<8x8xf32>
    %51 = tpu.matmul %48, %49, %cst_19 {dimension_numbers = #tpu.dot_dimension_numbers<[1], [1], [0], [0], [0, 0, 1, 0], [], []>} : vector<8x32xf32>, vector<8x32xf32>, vector<8x8xf32> -> vector<8x8xf32>
    %cst_20 = arith.constant dense<0xFF800000> : vector<8xf32>
    %52 = vector.multi_reduction <maximumf>, %51, %cst_20 [1] : vector<8x8xf32> to vector<8xf32>
    %53 = vector.shape_cast %52 : vector<8xf32> to vector<8x1xf32>
    %54 = vector.broadcast %53 : vector<8x1xf32> to vector<8x8xf32>
    %55 = arith.subf %51, %54 : vector<8x8xf32>
    %56 = math.exp %55 : vector<8x8xf32>
    %cst_21 = arith.constant dense<0.000000e+00> : vector<8xf32>
    %57 = vector.multi_reduction <add>, %56, %cst_21 [1] : vector<8x8xf32> to vector<8xf32>
    %58 = vector.shape_cast %57 : vector<8xf32> to vector<8x1xf32>
    %59 = vector.broadcast %58 : vector<8x1xf32> to vector<8x8xf32>
    %60 = arith.divf %56, %59 : vector<8x8xf32>
    %cst_22 = arith.constant dense<0.000000e+00> : vector<8x32xf32>
    %61 = tpu.matmul %60, %50, %cst_22 {dimension_numbers = #tpu.dot_dimension_numbers<[1], [0], [0], [1], [0, 0, 1, 1], [], []>} : vector<8x8xf32>, vector<8x32xf32>, vector<8x32xf32> -> vector<8x32xf32>
    %c0_23 = arith.constant 0 : index
    %c96 = arith.constant 96 : index
    %62 = vector.load %arg9[%c0_23, %c96] : memref<32x128xf32, #tpu.memory_space<vmem>>, vector<8x32xf32>
    tpu.vector_store %arg9[%c0_23, %c96], %61 {strides = array<i32>} : memref<32x128xf32, #tpu.memory_space<vmem>>, vector<8x32xf32>,
    %63 = vector.extract_strided_slice %2 {offsets = [8, 0], sizes = [8, 32], strides = [1, 1]} : vector<32x384xf32> to vector<8x32xf32>
    %64 = vector.extract_strided_slice %2 {offsets = [8, 128], sizes = [8, 32], strides = [1, 1]} : vector<32x384xf32> to vector<8x32xf32>
    %65 = vector.extract_strided_slice %2 {offsets = [8, 256], sizes = [8, 32], strides = [1, 1]} : vector<32x384xf32> to vector<8x32xf32>
    %cst_24 = arith.constant dense<0.000000e+00> : vector<8x8xf32>
    %66 = tpu.matmul %63, %64, %cst_24 {dimension_numbers = #tpu.dot_dimension_numbers<[1], [1], [0], [0], [0, 0, 1, 0], [], []>} : vector<8x32xf32>, vector<8x32xf32>, vector<8x8xf32> -> vector<8x8xf32>
    %cst_25 = arith.constant dense<0xFF800000> : vector<8xf32>
    %67 = vector.multi_reduction <maximumf>, %66, %cst_25 [1] : vector<8x8xf32> to vector<8xf32>
    %68 = vector.shape_cast %67 : vector<8xf32> to vector<8x1xf32>
    %69 = vector.broadcast %68 : vector<8x1xf32> to vector<8x8xf32>
    %70 = arith.subf %66, %69 : vector<8x8xf32>
    %71 = math.exp %70 : vector<8x8xf32>
    %cst_26 = arith.constant dense<0.000000e+00> : vector<8xf32>
    %72 = vector.multi_reduction <add>, %71, %cst_26 [1] : vector<8x8xf32> to vector<8xf32>
    %73 = vector.shape_cast %72 : vector<8xf32> to vector<8x1xf32>
    %74 = vector.broadcast %73 : vector<8x1xf32> to vector<8x8xf32>
    %75 = arith.divf %71, %74 : vector<8x8xf32>
    %cst_27 = arith.constant dense<0.000000e+00> : vector<8x32xf32>
    %76 = tpu.matmul %75, %65, %cst_27 {dimension_numbers = #tpu.dot_dimension_numbers<[1], [0], [0], [1], [0, 0, 1, 1], [], []>} : vector<8x8xf32>, vector<8x32xf32>, vector<8x32xf32> -> vector<8x32xf32>
    %c8 = arith.constant 8 : index
    %c0_28 = arith.constant 0 : index
    %77 = vector.load %arg9[%c8, %c0_28] : memref<32x128xf32, #tpu.memory_space<vmem>>, vector<8x32xf32>
    tpu.vector_store %arg9[%c8, %c0_28], %76 {strides = array<i32>} : memref<32x128xf32, #tpu.memory_space<vmem>>, vector<8x32xf32>,
    %78 = vector.extract_strided_slice %2 {offsets = [8, 32], sizes = [8, 32], strides = [1, 1]} : vector<32x384xf32> to vector<8x32xf32>
    %79 = vector.extract_strided_slice %2 {offsets = [8, 160], sizes = [8, 32], strides = [1, 1]} : vector<32x384xf32> to vector<8x32xf32>
    %80 = vector.extract_strided_slice %2 {offsets = [8, 288], sizes = [8, 32], strides = [1, 1]} : vector<32x384xf32> to vector<8x32xf32>
    %cst_29 = arith.constant dense<0.000000e+00> : vector<8x8xf32>
    %81 = tpu.matmul %78, %79, %cst_29 {dimension_numbers = #tpu.dot_dimension_numbers<[1], [1], [0], [0], [0, 0, 1, 0], [], []>} : vector<8x32xf32>, vector<8x32xf32>, vector<8x8xf32> -> vector<8x8xf32>
    %cst_30 = arith.constant dense<0xFF800000> : vector<8xf32>
    %82 = vector.multi_reduction <maximumf>, %81, %cst_30 [1] : vector<8x8xf32> to vector<8xf32>
    %83 = vector.shape_cast %82 : vector<8xf32> to vector<8x1xf32>
    %84 = vector.broadcast %83 : vector<8x1xf32> to vector<8x8xf32>
    %85 = arith.subf %81, %84 : vector<8x8xf32>
    %86 = math.exp %85 : vector<8x8xf32>
    %cst_31 = arith.constant dense<0.000000e+00> : vector<8xf32>
    %87 = vector.multi_reduction <add>, %86, %cst_31 [1] : vector<8x8xf32> to vector<8xf32>
    %88 = vector.shape_cast %87 : vector<8xf32> to vector<8x1xf32>
    %89 = vector.broadcast %88 : vector<8x1xf32> to vector<8x8xf32>
    %90 = arith.divf %86, %89 : vector<8x8xf32>
    %cst_32 = arith.constant dense<0.000000e+00> : vector<8x32xf32>
    %91 = tpu.matmul %90, %80, %cst_32 {dimension_numbers = #tpu.dot_dimension_numbers<[1], [0], [0], [1], [0, 0, 1, 1], [], []>} : vector<8x8xf32>, vector<8x32xf32>, vector<8x32xf32> -> vector<8x32xf32>
    %c8_33 = arith.constant 8 : index
    %c32_34 = arith.constant 32 : index
    %92 = vector.load %arg9[%c8_33, %c32_34] : memref<32x128xf32, #tpu.memory_space<vmem>>, vector<8x32xf32>
    tpu.vector_store %arg9[%c8_33, %c32_34], %91 {strides = array<i32>} : memref<32x128xf32, #tpu.memory_space<vmem>>, vector<8x32xf32>,
    %93 = vector.extract_strided_slice %2 {offsets = [8, 64], sizes = [8, 32], strides = [1, 1]} : vector<32x384xf32> to vector<8x32xf32>
    %94 = vector.extract_strided_slice %2 {offsets = [8, 192], sizes = [8, 32], strides = [1, 1]} : vector<32x384xf32> to vector<8x32xf32>
    %95 = vector.extract_strided_slice %2 {offsets = [8, 320], sizes = [8, 32], strides = [1, 1]} : vector<32x384xf32> to vector<8x32xf32>
    %cst_35 = arith.constant dense<0.000000e+00> : vector<8x8xf32>
    %96 = tpu.matmul %93, %94, %cst_35 {dimension_numbers = #tpu.dot_dimension_numbers<[1], [1], [0], [0], [0, 0, 1, 0], [], []>} : vector<8x32xf32>, vector<8x32xf32>, vector<8x8xf32> -> vector<8x8xf32>
    %cst_36 = arith.constant dense<0xFF800000> : vector<8xf32>
    %97 = vector.multi_reduction <maximumf>, %96, %cst_36 [1] : vector<8x8xf32> to vector<8xf32>
    %98 = vector.shape_cast %97 : vector<8xf32> to vector<8x1xf32>
    %99 = vector.broadcast %98 : vector<8x1xf32> to vector<8x8xf32>
    %100 = arith.subf %96, %99 : vector<8x8xf32>
    %101 = math.exp %100 : vector<8x8xf32>
    %cst_37 = arith.constant dense<0.000000e+00> : vector<8xf32>
    %102 = vector.multi_reduction <add>, %101, %cst_37 [1] : vector<8x8xf32> to vector<8xf32>
    %103 = vector.shape_cast %102 : vector<8xf32> to vector<8x1xf32>
    %104 = vector.broadcast %103 : vector<8x1xf32> to vector<8x8xf32>
    %105 = arith.divf %101, %104 : vector<8x8xf32>
    %cst_38 = arith.constant dense<0.000000e+00> : vector<8x32xf32>
    %106 = tpu.matmul %105, %95, %cst_38 {dimension_numbers = #tpu.dot_dimension_numbers<[1], [0], [0], [1], [0, 0, 1, 1], [], []>} : vector<8x8xf32>, vector<8x32xf32>, vector<8x32xf32> -> vector<8x32xf32>
    %c8_39 = arith.constant 8 : index
    %c64_40 = arith.constant 64 : index
    %107 = vector.load %arg9[%c8_39, %c64_40] : memref<32x128xf32, #tpu.memory_space<vmem>>, vector<8x32xf32>
    tpu.vector_store %arg9[%c8_39, %c64_40], %106 {strides = array<i32>} : memref<32x128xf32, #tpu.memory_space<vmem>>, vector<8x32xf32>,
    %108 = vector.extract_strided_slice %2 {offsets = [8, 96], sizes = [8, 32], strides = [1, 1]} : vector<32x384xf32> to vector<8x32xf32>
    %109 = vector.extract_strided_slice %2 {offsets = [8, 224], sizes = [8, 32], strides = [1, 1]} : vector<32x384xf32> to vector<8x32xf32>
    %110 = vector.extract_strided_slice %2 {offsets = [8, 352], sizes = [8, 32], strides = [1, 1]} : vector<32x384xf32> to vector<8x32xf32>
    %cst_41 = arith.constant dense<0.000000e+00> : vector<8x8xf32>
    %111 = tpu.matmul %108, %109, %cst_41 {dimension_numbers = #tpu.dot_dimension_numbers<[1], [1], [0], [0], [0, 0, 1, 0], [], []>} : vector<8x32xf32>, vector<8x32xf32>, vector<8x8xf32> -> vector<8x8xf32>
    %cst_42 = arith.constant dense<0xFF800000> : vector<8xf32>
    %112 = vector.multi_reduction <maximumf>, %111, %cst_42 [1] : vector<8x8xf32> to vector<8xf32>
    %113 = vector.shape_cast %112 : vector<8xf32> to vector<8x1xf32>
    %114 = vector.broadcast %113 : vector<8x1xf32> to vector<8x8xf32>
    %115 = arith.subf %111, %114 : vector<8x8xf32>
    %116 = math.exp %115 : vector<8x8xf32>
    %cst_43 = arith.constant dense<0.000000e+00> : vector<8xf32>
    %117 = vector.multi_reduction <add>, %116, %cst_43 [1] : vector<8x8xf32> to vector<8xf32>
    %118 = vector.shape_cast %117 : vector<8xf32> to vector<8x1xf32>
    %119 = vector.broadcast %118 : vector<8x1xf32> to vector<8x8xf32>
    %120 = arith.divf %116, %119 : vector<8x8xf32>
    %cst_44 = arith.constant dense<0.000000e+00> : vector<8x32xf32>
    %121 = tpu.matmul %120, %110, %cst_44 {dimension_numbers = #tpu.dot_dimension_numbers<[1], [0], [0], [1], [0, 0, 1, 1], [], []>} : vector<8x8xf32>, vector<8x32xf32>, vector<8x32xf32> -> vector<8x32xf32>
    %c8_45 = arith.constant 8 : index
    %c96_46 = arith.constant 96 : index
    %122 = vector.load %arg9[%c8_45, %c96_46] : memref<32x128xf32, #tpu.memory_space<vmem>>, vector<8x32xf32>
    tpu.vector_store %arg9[%c8_45, %c96_46], %121 {strides = array<i32>} : memref<32x128xf32, #tpu.memory_space<vmem>>, vector<8x32xf32>,
    %123 = vector.extract_strided_slice %2 {offsets = [16, 0], sizes = [8, 32], strides = [1, 1]} : vector<32x384xf32> to vector<8x32xf32>
    %124 = vector.extract_strided_slice %2 {offsets = [16, 128], sizes = [8, 32], strides = [1, 1]} : vector<32x384xf32> to vector<8x32xf32>
    %125 = vector.extract_strided_slice %2 {offsets = [16, 256], sizes = [8, 32], strides = [1, 1]} : vector<32x384xf32> to vector<8x32xf32>
    %cst_47 = arith.constant dense<0.000000e+00> : vector<8x8xf32>
    %126 = tpu.matmul %123, %124, %cst_47 {dimension_numbers = #tpu.dot_dimension_numbers<[1], [1], [0], [0], [0, 0, 1, 0], [], []>} : vector<8x32xf32>, vector<8x32xf32>, vector<8x8xf32> -> vector<8x8xf32>
    %cst_48 = arith.constant dense<0xFF800000> : vector<8xf32>
    %127 = vector.multi_reduction <maximumf>, %126, %cst_48 [1] : vector<8x8xf32> to vector<8xf32>
    %128 = vector.shape_cast %127 : vector<8xf32> to vector<8x1xf32>
    %129 = vector.broadcast %128 : vector<8x1xf32> to vector<8x8xf32>
    %130 = arith.subf %126, %129 : vector<8x8xf32>
    %131 = math.exp %130 : vector<8x8xf32>
    %cst_49 = arith.constant dense<0.000000e+00> : vector<8xf32>
    %132 = vector.multi_reduction <add>, %131, %cst_49 [1] : vector<8x8xf32> to vector<8xf32>
    %133 = vector.shape_cast %132 : vector<8xf32> to vector<8x1xf32>
    %134 = vector.broadcast %133 : vector<8x1xf32> to vector<8x8xf32>
    %135 = arith.divf %131, %134 : vector<8x8xf32>
    %cst_50 = arith.constant dense<0.000000e+00> : vector<8x32xf32>
    %136 = tpu.matmul %135, %125, %cst_50 {dimension_numbers = #tpu.dot_dimension_numbers<[1], [0], [0], [1], [0, 0, 1, 1], [], []>} : vector<8x8xf32>, vector<8x32xf32>, vector<8x32xf32> -> vector<8x32xf32>
    %c16 = arith.constant 16 : index
    %c0_51 = arith.constant 0 : index
    %137 = vector.load %arg9[%c16, %c0_51] : memref<32x128xf32, #tpu.memory_space<vmem>>, vector<8x32xf32>
    tpu.vector_store %arg9[%c16, %c0_51], %136 {strides = array<i32>} : memref<32x128xf32, #tpu.memory_space<vmem>>, vector<8x32xf32>,
    %138 = vector.extract_strided_slice %2 {offsets = [16, 32], sizes = [8, 32], strides = [1, 1]} : vector<32x384xf32> to vector<8x32xf32>
    %139 = vector.extract_strided_slice %2 {offsets = [16, 160], sizes = [8, 32], strides = [1, 1]} : vector<32x384xf32> to vector<8x32xf32>
    %140 = vector.extract_strided_slice %2 {offsets = [16, 288], sizes = [8, 32], strides = [1, 1]} : vector<32x384xf32> to vector<8x32xf32>
    %cst_52 = arith.constant dense<0.000000e+00> : vector<8x8xf32>
    %141 = tpu.matmul %138, %139, %cst_52 {dimension_numbers = #tpu.dot_dimension_numbers<[1], [1], [0], [0], [0, 0, 1, 0], [], []>} : vector<8x32xf32>, vector<8x32xf32>, vector<8x8xf32> -> vector<8x8xf32>
    %cst_53 = arith.constant dense<0xFF800000> : vector<8xf32>
    %142 = vector.multi_reduction <maximumf>, %141, %cst_53 [1] : vector<8x8xf32> to vector<8xf32>
    %143 = vector.shape_cast %142 : vector<8xf32> to vector<8x1xf32>
    %144 = vector.broadcast %143 : vector<8x1xf32> to vector<8x8xf32>
    %145 = arith.subf %141, %144 : vector<8x8xf32>
    %146 = math.exp %145 : vector<8x8xf32>
    %cst_54 = arith.constant dense<0.000000e+00> : vector<8xf32>
    %147 = vector.multi_reduction <add>, %146, %cst_54 [1] : vector<8x8xf32> to vector<8xf32>
    %148 = vector.shape_cast %147 : vector<8xf32> to vector<8x1xf32>
    %149 = vector.broadcast %148 : vector<8x1xf32> to vector<8x8xf32>
    %150 = arith.divf %146, %149 : vector<8x8xf32>
    %cst_55 = arith.constant dense<0.000000e+00> : vector<8x32xf32>
    %151 = tpu.matmul %150, %140, %cst_55 {dimension_numbers = #tpu.dot_dimension_numbers<[1], [0], [0], [1], [0, 0, 1, 1], [], []>} : vector<8x8xf32>, vector<8x32xf32>, vector<8x32xf32> -> vector<8x32xf32>
    %c16_56 = arith.constant 16 : index
    %c32_57 = arith.constant 32 : index
    %152 = vector.load %arg9[%c16_56, %c32_57] : memref<32x128xf32, #tpu.memory_space<vmem>>, vector<8x32xf32>
    tpu.vector_store %arg9[%c16_56, %c32_57], %151 {strides = array<i32>} : memref<32x128xf32, #tpu.memory_space<vmem>>, vector<8x32xf32>,
    %153 = vector.extract_strided_slice %2 {offsets = [16, 64], sizes = [8, 32], strides = [1, 1]} : vector<32x384xf32> to vector<8x32xf32>
    %154 = vector.extract_strided_slice %2 {offsets = [16, 192], sizes = [8, 32], strides = [1, 1]} : vector<32x384xf32> to vector<8x32xf32>
    %155 = vector.extract_strided_slice %2 {offsets = [16, 320], sizes = [8, 32], strides = [1, 1]} : vector<32x384xf32> to vector<8x32xf32>
    %cst_58 = arith.constant dense<0.000000e+00> : vector<8x8xf32>
    %156 = tpu.matmul %153, %154, %cst_58 {dimension_numbers = #tpu.dot_dimension_numbers<[1], [1], [0], [0], [0, 0, 1, 0], [], []>} : vector<8x32xf32>, vector<8x32xf32>, vector<8x8xf32> -> vector<8x8xf32>
    %cst_59 = arith.constant dense<0xFF800000> : vector<8xf32>
    %157 = vector.multi_reduction <maximumf>, %156, %cst_59 [1] : vector<8x8xf32> to vector<8xf32>
    %158 = vector.shape_cast %157 : vector<8xf32> to vector<8x1xf32>
    %159 = vector.broadcast %158 : vector<8x1xf32> to vector<8x8xf32>
    %160 = arith.subf %156, %159 : vector<8x8xf32>
    %161 = math.exp %160 : vector<8x8xf32>
    %cst_60 = arith.constant dense<0.000000e+00> : vector<8xf32>
    %162 = vector.multi_reduction <add>, %161, %cst_60 [1] : vector<8x8xf32> to vector<8xf32>
    %163 = vector.shape_cast %162 : vector<8xf32> to vector<8x1xf32>
    %164 = vector.broadcast %163 : vector<8x1xf32> to vector<8x8xf32>
    %165 = arith.divf %161, %164 : vector<8x8xf32>
    %cst_61 = arith.constant dense<0.000000e+00> : vector<8x32xf32>
    %166 = tpu.matmul %165, %155, %cst_61 {dimension_numbers = #tpu.dot_dimension_numbers<[1], [0], [0], [1], [0, 0, 1, 1], [], []>} : vector<8x8xf32>, vector<8x32xf32>, vector<8x32xf32> -> vector<8x32xf32>
    %c16_62 = arith.constant 16 : index
    %c64_63 = arith.constant 64 : index
    %167 = vector.load %arg9[%c16_62, %c64_63] : memref<32x128xf32, #tpu.memory_space<vmem>>, vector<8x32xf32>
    tpu.vector_store %arg9[%c16_62, %c64_63], %166 {strides = array<i32>} : memref<32x128xf32, #tpu.memory_space<vmem>>, vector<8x32xf32>,
    %168 = vector.extract_strided_slice %2 {offsets = [16, 96], sizes = [8, 32], strides = [1, 1]} : vector<32x384xf32> to vector<8x32xf32>
    %169 = vector.extract_strided_slice %2 {offsets = [16, 224], sizes = [8, 32], strides = [1, 1]} : vector<32x384xf32> to vector<8x32xf32>
    %170 = vector.extract_strided_slice %2 {offsets = [16, 352], sizes = [8, 32], strides = [1, 1]} : vector<32x384xf32> to vector<8x32xf32>
    %cst_64 = arith.constant dense<0.000000e+00> : vector<8x8xf32>
    %171 = tpu.matmul %168, %169, %cst_64 {dimension_numbers = #tpu.dot_dimension_numbers<[1], [1], [0], [0], [0, 0, 1, 0], [], []>} : vector<8x32xf32>, vector<8x32xf32>, vector<8x8xf32> -> vector<8x8xf32>
    %cst_65 = arith.constant dense<0xFF800000> : vector<8xf32>
    %172 = vector.multi_reduction <maximumf>, %171, %cst_65 [1] : vector<8x8xf32> to vector<8xf32>
    %173 = vector.shape_cast %172 : vector<8xf32> to vector<8x1xf32>
    %174 = vector.broadcast %173 : vector<8x1xf32> to vector<8x8xf32>
    %175 = arith.subf %171, %174 : vector<8x8xf32>
    %176 = math.exp %175 : vector<8x8xf32>
    %cst_66 = arith.constant dense<0.000000e+00> : vector<8xf32>
    %177 = vector.multi_reduction <add>, %176, %cst_66 [1] : vector<8x8xf32> to vector<8xf32>
    %178 = vector.shape_cast %177 : vector<8xf32> to vector<8x1xf32>
    %179 = vector.broadcast %178 : vector<8x1xf32> to vector<8x8xf32>
    %180 = arith.divf %176, %179 : vector<8x8xf32>
    %cst_67 = arith.constant dense<0.000000e+00> : vector<8x32xf32>
    %181 = tpu.matmul %180, %170, %cst_67 {dimension_numbers = #tpu.dot_dimension_numbers<[1], [0], [0], [1], [0, 0, 1, 1], [], []>} : vector<8x8xf32>, vector<8x32xf32>, vector<8x32xf32> -> vector<8x32xf32>
    %c16_68 = arith.constant 16 : index
    %c96_69 = arith.constant 96 : index
    %182 = vector.load %arg9[%c16_68, %c96_69] : memref<32x128xf32, #tpu.memory_space<vmem>>, vector<8x32xf32>
    tpu.vector_store %arg9[%c16_68, %c96_69], %181 {strides = array<i32>} : memref<32x128xf32, #tpu.memory_space<vmem>>, vector<8x32xf32>,
    %183 = vector.extract_strided_slice %2 {offsets = [24, 0], sizes = [8, 32], strides = [1, 1]} : vector<32x384xf32> to vector<8x32xf32>
    %184 = vector.extract_strided_slice %2 {offsets = [24, 128], sizes = [8, 32], strides = [1, 1]} : vector<32x384xf32> to vector<8x32xf32>
    %185 = vector.extract_strided_slice %2 {offsets = [24, 256], sizes = [8, 32], strides = [1, 1]} : vector<32x384xf32> to vector<8x32xf32>
    %cst_70 = arith.constant dense<0.000000e+00> : vector<8x8xf32>
    %186 = tpu.matmul %183, %184, %cst_70 {dimension_numbers = #tpu.dot_dimension_numbers<[1], [1], [0], [0], [0, 0, 1, 0], [], []>} : vector<8x32xf32>, vector<8x32xf32>, vector<8x8xf32> -> vector<8x8xf32>
    %cst_71 = arith.constant dense<0xFF800000> : vector<8xf32>
    %187 = vector.multi_reduction <maximumf>, %186, %cst_71 [1] : vector<8x8xf32> to vector<8xf32>
    %188 = vector.shape_cast %187 : vector<8xf32> to vector<8x1xf32>
    %189 = vector.broadcast %188 : vector<8x1xf32> to vector<8x8xf32>
    %190 = arith.subf %186, %189 : vector<8x8xf32>
    %191 = math.exp %190 : vector<8x8xf32>
    %cst_72 = arith.constant dense<0.000000e+00> : vector<8xf32>
    %192 = vector.multi_reduction <add>, %191, %cst_72 [1] : vector<8x8xf32> to vector<8xf32>
    %193 = vector.shape_cast %192 : vector<8xf32> to vector<8x1xf32>
    %194 = vector.broadcast %193 : vector<8x1xf32> to vector<8x8xf32>
    %195 = arith.divf %191, %194 : vector<8x8xf32>
    %cst_73 = arith.constant dense<0.000000e+00> : vector<8x32xf32>
    %196 = tpu.matmul %195, %185, %cst_73 {dimension_numbers = #tpu.dot_dimension_numbers<[1], [0], [0], [1], [0, 0, 1, 1], [], []>} : vector<8x8xf32>, vector<8x32xf32>, vector<8x32xf32> -> vector<8x32xf32>
    %c24 = arith.constant 24 : index
    %c0_74 = arith.constant 0 : index
    %197 = vector.load %arg9[%c24, %c0_74] : memref<32x128xf32, #tpu.memory_space<vmem>>, vector<8x32xf32>
    tpu.vector_store %arg9[%c24, %c0_74], %196 {strides = array<i32>} : memref<32x128xf32, #tpu.memory_space<vmem>>, vector<8x32xf32>,
    %198 = vector.extract_strided_slice %2 {offsets = [24, 32], sizes = [8, 32], strides = [1, 1]} : vector<32x384xf32> to vector<8x32xf32>
    %199 = vector.extract_strided_slice %2 {offsets = [24, 160], sizes = [8, 32], strides = [1, 1]} : vector<32x384xf32> to vector<8x32xf32>
    %200 = vector.extract_strided_slice %2 {offsets = [24, 288], sizes = [8, 32], strides = [1, 1]} : vector<32x384xf32> to vector<8x32xf32>
    %cst_75 = arith.constant dense<0.000000e+00> : vector<8x8xf32>
    %201 = tpu.matmul %198, %199, %cst_75 {dimension_numbers = #tpu.dot_dimension_numbers<[1], [1], [0], [0], [0, 0, 1, 0], [], []>} : vector<8x32xf32>, vector<8x32xf32>, vector<8x8xf32> -> vector<8x8xf32>
    %cst_76 = arith.constant dense<0xFF800000> : vector<8xf32>
    %202 = vector.multi_reduction <maximumf>, %201, %cst_76 [1] : vector<8x8xf32> to vector<8xf32>
    %203 = vector.shape_cast %202 : vector<8xf32> to vector<8x1xf32>
    %204 = vector.broadcast %203 : vector<8x1xf32> to vector<8x8xf32>
    %205 = arith.subf %201, %204 : vector<8x8xf32>
    %206 = math.exp %205 : vector<8x8xf32>
    %cst_77 = arith.constant dense<0.000000e+00> : vector<8xf32>
    %207 = vector.multi_reduction <add>, %206, %cst_77 [1] : vector<8x8xf32> to vector<8xf32>
    %208 = vector.shape_cast %207 : vector<8xf32> to vector<8x1xf32>
    %209 = vector.broadcast %208 : vector<8x1xf32> to vector<8x8xf32>
    %210 = arith.divf %206, %209 : vector<8x8xf32>
    %cst_78 = arith.constant dense<0.000000e+00> : vector<8x32xf32>
    %211 = tpu.matmul %210, %200, %cst_78 {dimension_numbers = #tpu.dot_dimension_numbers<[1], [0], [0], [1], [0, 0, 1, 1], [], []>} : vector<8x8xf32>, vector<8x32xf32>, vector<8x32xf32> -> vector<8x32xf32>
    %c24_79 = arith.constant 24 : index
    %c32_80 = arith.constant 32 : index
    %212 = vector.load %arg9[%c24_79, %c32_80] : memref<32x128xf32, #tpu.memory_space<vmem>>, vector<8x32xf32>
    tpu.vector_store %arg9[%c24_79, %c32_80], %211 {strides = array<i32>} : memref<32x128xf32, #tpu.memory_space<vmem>>, vector<8x32xf32>,
    %213 = vector.extract_strided_slice %2 {offsets = [24, 64], sizes = [8, 32], strides = [1, 1]} : vector<32x384xf32> to vector<8x32xf32>
    %214 = vector.extract_strided_slice %2 {offsets = [24, 192], sizes = [8, 32], strides = [1, 1]} : vector<32x384xf32> to vector<8x32xf32>
    %215 = vector.extract_strided_slice %2 {offsets = [24, 320], sizes = [8, 32], strides = [1, 1]} : vector<32x384xf32> to vector<8x32xf32>
    %cst_81 = arith.constant dense<0.000000e+00> : vector<8x8xf32>
    %216 = tpu.matmul %213, %214, %cst_81 {dimension_numbers = #tpu.dot_dimension_numbers<[1], [1], [0], [0], [0, 0, 1, 0], [], []>} : vector<8x32xf32>, vector<8x32xf32>, vector<8x8xf32> -> vector<8x8xf32>
    %cst_82 = arith.constant dense<0xFF800000> : vector<8xf32>
    %217 = vector.multi_reduction <maximumf>, %216, %cst_82 [1] : vector<8x8xf32> to vector<8xf32>
    %218 = vector.shape_cast %217 : vector<8xf32> to vector<8x1xf32>
    %219 = vector.broadcast %218 : vector<8x1xf32> to vector<8x8xf32>
    %220 = arith.subf %216, %219 : vector<8x8xf32>
    %221 = math.exp %220 : vector<8x8xf32>
    %cst_83 = arith.constant dense<0.000000e+00> : vector<8xf32>
    %222 = vector.multi_reduction <add>, %221, %cst_83 [1] : vector<8x8xf32> to vector<8xf32>
    %223 = vector.shape_cast %222 : vector<8xf32> to vector<8x1xf32>
    %224 = vector.broadcast %223 : vector<8x1xf32> to vector<8x8xf32>
    %225 = arith.divf %221, %224 : vector<8x8xf32>
    %cst_84 = arith.constant dense<0.000000e+00> : vector<8x32xf32>
    %226 = tpu.matmul %225, %215, %cst_84 {dimension_numbers = #tpu.dot_dimension_numbers<[1], [0], [0], [1], [0, 0, 1, 1], [], []>} : vector<8x8xf32>, vector<8x32xf32>, vector<8x32xf32> -> vector<8x32xf32>
    %c24_85 = arith.constant 24 : index
    %c64_86 = arith.constant 64 : index
    %227 = vector.load %arg9[%c24_85, %c64_86] : memref<32x128xf32, #tpu.memory_space<vmem>>, vector<8x32xf32>
    tpu.vector_store %arg9[%c24_85, %c64_86], %226 {strides = array<i32>} : memref<32x128xf32, #tpu.memory_space<vmem>>, vector<8x32xf32>,
    %228 = vector.extract_strided_slice %2 {offsets = [24, 96], sizes = [8, 32], strides = [1, 1]} : vector<32x384xf32> to vector<8x32xf32>
    %229 = vector.extract_strided_slice %2 {offsets = [24, 224], sizes = [8, 32], strides = [1, 1]} : vector<32x384xf32> to vector<8x32xf32>
    %230 = vector.extract_strided_slice %2 {offsets = [24, 352], sizes = [8, 32], strides = [1, 1]} : vector<32x384xf32> to vector<8x32xf32>
    %cst_87 = arith.constant dense<0.000000e+00> : vector<8x8xf32>
    %231 = tpu.matmul %228, %229, %cst_87 {dimension_numbers = #tpu.dot_dimension_numbers<[1], [1], [0], [0], [0, 0, 1, 0], [], []>} : vector<8x32xf32>, vector<8x32xf32>, vector<8x8xf32> -> vector<8x8xf32>
    %cst_88 = arith.constant dense<0xFF800000> : vector<8xf32>
    %232 = vector.multi_reduction <maximumf>, %231, %cst_88 [1] : vector<8x8xf32> to vector<8xf32>
    %233 = vector.shape_cast %232 : vector<8xf32> to vector<8x1xf32>
    %234 = vector.broadcast %233 : vector<8x1xf32> to vector<8x8xf32>
    %235 = arith.subf %231, %234 : vector<8x8xf32>
    %236 = math.exp %235 : vector<8x8xf32>
    %cst_89 = arith.constant dense<0.000000e+00> : vector<8xf32>
    %237 = vector.multi_reduction <add>, %236, %cst_89 [1] : vector<8x8xf32> to vector<8xf32>
    %238 = vector.shape_cast %237 : vector<8xf32> to vector<8x1xf32>
    %239 = vector.broadcast %238 : vector<8x1xf32> to vector<8x8xf32>
    %240 = arith.divf %236, %239 : vector<8x8xf32>
    %cst_90 = arith.constant dense<0.000000e+00> : vector<8x32xf32>
    %241 = tpu.matmul %240, %230, %cst_90 {dimension_numbers = #tpu.dot_dimension_numbers<[1], [0], [0], [1], [0, 0, 1, 1], [], []>} : vector<8x8xf32>, vector<8x32xf32>, vector<8x32xf32> -> vector<8x32xf32>
    %c24_91 = arith.constant 24 : index
    %c96_92 = arith.constant 96 : index
    %242 = vector.load %arg9[%c24_91, %c96_92] : memref<32x128xf32, #tpu.memory_space<vmem>>, vector<8x32xf32>
    tpu.vector_store %arg9[%c24_91, %c96_92], %241 {strides = array<i32>} : memref<32x128xf32, #tpu.memory_space<vmem>>, vector<8x32xf32>,
    %c0_93 = arith.constant 0 : index
    %c0_94 = arith.constant 0 : index
    %243 = vector.load %arg9[%c0_93, %c0_94] : memref<32x128xf32, #tpu.memory_space<vmem>>, vector<32x128xf32>
    %c0_95 = arith.constant 0 : index
    %c0_96 = arith.constant 0 : index
    %244 = vector.load %arg3[%c0_95, %c0_96] : memref<128x128xf32, #tpu.memory_space<vmem>>, vector<128x128xf32>
    %cst_97 = arith.constant dense<0.000000e+00> : vector<32x128xf32>
    %245 = tpu.matmul %243, %244, %cst_97 {dimension_numbers = #tpu.dot_dimension_numbers<[1], [0], [0], [1], [0, 0, 1, 1], [], []>} : vector<32x128xf32>, vector<128x128xf32>, vector<32x128xf32> -> vector<32x128xf32>
    %246 = arith.addf %0, %245 : vector<32x128xf32>
    %cst_98 = arith.constant dense<0.000000e+00> : vector<32xf32>
    %247 = vector.multi_reduction <add>, %246, %cst_98 [1] : vector<32x128xf32> to vector<32xf32>
    %248 = vector.shape_cast %247 : vector<32xf32> to vector<32x1xf32>
    %cst_99 = arith.constant 3.125000e-02 : f32
    %249 = vector.broadcast %cst_99 : f32 to vector<32x1xf32>
    %250 = arith.mulf %248, %249 : vector<32x1xf32>
    %251 = vector.broadcast %250 : vector<32x1xf32> to vector<32x128xf32>
    %252 = arith.subf %246, %251 : vector<32x128xf32>
    %253 = arith.mulf %252, %252 : vector<32x128xf32>
    %cst_100 = arith.constant dense<0.000000e+00> : vector<32xf32>
    %254 = vector.multi_reduction <add>, %253, %cst_100 [1] : vector<32x128xf32> to vector<32xf32>
    %255 = vector.shape_cast %254 : vector<32xf32> to vector<32x1xf32>
    %256 = arith.mulf %250, %250 : vector<32x1xf32>
    %cst_101 = arith.constant 9.600000e+01 : f32
    %257 = vector.broadcast %cst_101 : f32 to vector<32x1xf32>
    %258 = arith.mulf %257, %256 : vector<32x1xf32>
    %259 = arith.subf %255, %258 : vector<32x1xf32>
    %cst_102 = arith.constant 3.125000e-02 : f32
    %260 = vector.broadcast %cst_102 : f32 to vector<32x1xf32>
    %261 = arith.mulf %259, %260 : vector<32x1xf32>
    %cst_103 = arith.constant 9.99999974E-6 : f32
    %262 = vector.broadcast %cst_103 : f32 to vector<32x1xf32>
    %263 = arith.addf %261, %262 : vector<32x1xf32>
    %264 = math.rsqrt %263 : vector<32x1xf32>
    %265 = vector.broadcast %264 : vector<32x1xf32> to vector<32x128xf32>
    %266 = arith.mulf %252, %265 : vector<32x128xf32>
    %c0_104 = arith.constant 0 : index
    %c0_105 = arith.constant 0 : index
    %267 = vector.load %arg4[%c0_104, %c0_105] : memref<1x128xf32, #tpu.memory_space<vmem>>, vector<1x128xf32>
    %268 = vector.shape_cast %267 : vector<1x128xf32> to vector<128xf32>
    %269 = vector.shape_cast %268 : vector<128xf32> to vector<1x128xf32>
    %270 = vector.broadcast %269 : vector<1x128xf32> to vector<32x128xf32>
    %271 = arith.mulf %266, %270 : vector<32x128xf32>
    %c0_106 = arith.constant 0 : index
    %c0_107 = arith.constant 0 : index
    %272 = vector.load %arg5[%c0_106, %c0_107] : memref<1x128xf32, #tpu.memory_space<vmem>>, vector<1x128xf32>
    %273 = vector.shape_cast %272 : vector<1x128xf32> to vector<128xf32>
    %274 = vector.shape_cast %273 : vector<128xf32> to vector<1x128xf32>
    %275 = vector.broadcast %274 : vector<1x128xf32> to vector<32x128xf32>
    %276 = arith.addf %271, %275 : vector<32x128xf32>
    %277 = tpu.iota {dimensions = array<i32: 0>} : vector<32x1xi32>
    %c8_i32 = arith.constant 8 : i32
    %c0_i32 = arith.constant 0 : i32
    %278 = arith.cmpi eq, %c8_i32, %c0_i32 : i32
    %c1_i32 = arith.constant 1 : i32
    %279 = arith.select %278, %c1_i32, %c8_i32 : i32
    %280 = vector.broadcast %279 : i32 to vector<32x1xi32>
    %281 = arith.remsi %277, %280 : vector<32x1xi32>
    %c0_i32_108 = arith.constant 0 : i32
    %282 = vector.broadcast %c0_i32_108 : i32 to vector<32x1xi32>
    %283 = arith.cmpi ne, %281, %282 : vector<32x1xi32>
    %c0_i32_109 = arith.constant 0 : i32
    %284 = vector.broadcast %c0_i32_109 : i32 to vector<32x1xi32>
    %285 = arith.cmpi slt, %281, %284 : vector<32x1xi32>
    %c0_i32_110 = arith.constant 0 : i32
    %286 = arith.cmpi slt, %279, %c0_i32_110 : i32
    %287 = vector.broadcast %286 : i1 to vector<32x1xi1>
    %288 = vector.broadcast %287 : vector<32x1xi1> to vector<32x1xi1>
    %289 = arith.xori %285, %288 : vector<32x1xi1>
    %290 = arith.andi %289, %283 : vector<32x1xi1>
    %291 = vector.broadcast %279 : i32 to vector<32x1xi32>
    %292 = arith.addi %281, %291 : vector<32x1xi32>
    %293 = arith.select %290, %292, %281 : vector<32x1xi1>, vector<32x1xi32>
    %c1_i32_111 = arith.constant 1 : i32
    %294 = tpu.dynamic_rotate %276 by %c1_i32_111 dim 0 : vector<32x128xf32>, i32 -> vector<32x128xf32>
    %c-1_i32 = arith.constant -1 : i32
    %295 = vector.broadcast %c-1_i32 : i32 to vector<32x1xi32>
    %296 = arith.addi %293, %295 : vector<32x1xi32>
    %c0_i32_112 = arith.constant 0 : i32
    %297 = vector.broadcast %c0_i32_112 : i32 to vector<32x1xi32>
    %298 = arith.cmpi sge, %296, %297 : vector<32x1xi32>
    %c-1_i32_113 = arith.constant -1 : i32
    %299 = vector.broadcast %c-1_i32_113 : i32 to vector<32x1xi32>
    %300 = arith.addi %293, %299 : vector<32x1xi32>
    %c8_i32_114 = arith.constant 8 : i32
    %301 = vector.broadcast %c8_i32_114 : i32 to vector<32x1xi32>
    %302 = arith.cmpi slt, %300, %301 : vector<32x1xi32>
    %303 = arith.andi %298, %302 : vector<32x1xi1>
    %cst_115 = arith.constant 0.000000e+00 : f32
    %304 = vector.shape_cast %303 : vector<32x1xi1> to vector<32x1xi1>
    %305 = vector.broadcast %304 : vector<32x1xi1> to vector<32x128xi1>
    %306 = vector.broadcast %cst_115 : f32 to vector<32x128xf32>
    %307 = arith.select %305, %294, %306 : vector<32x128xi1>, vector<32x128xf32>
    %c0_116 = arith.constant 0 : index
    %c0_117 = arith.constant 0 : index
    %308 = vector.load %arg10[%c0_116, %c0_117] : memref<32x384xf32, #tpu.memory_space<vmem>>, vector<32x128xf32>
    tpu.vector_store %arg10[%c0_116, %c0_117], %307 {strides = array<i32>} : memref<32x384xf32, #tpu.memory_space<vmem>>, vector<32x128xf32>,
    %c0_118 = arith.constant 0 : index
    %c128 = arith.constant 128 : index
    %309 = vector.load %arg10[%c0_118, %c128] : memref<32x384xf32, #tpu.memory_space<vmem>>, vector<32x128xf32>
    tpu.vector_store %arg10[%c0_118, %c128], %276 {strides = array<i32>} : memref<32x384xf32, #tpu.memory_space<vmem>>, vector<32x128xf32>,
    %c31_i32 = arith.constant 31 : i32
    %310 = tpu.dynamic_rotate %276 by %c31_i32 dim 0 : vector<32x128xf32>, i32 -> vector<32x128xf32>
    %c1_i32_119 = arith.constant 1 : i32
    %311 = vector.broadcast %c1_i32_119 : i32 to vector<32x1xi32>
    %312 = arith.addi %293, %311 : vector<32x1xi32>
    %c0_i32_120 = arith.constant 0 : i32
    %313 = vector.broadcast %c0_i32_120 : i32 to vector<32x1xi32>
    %314 = arith.cmpi sge, %312, %313 : vector<32x1xi32>
    %c1_i32_121 = arith.constant 1 : i32
    %315 = vector.broadcast %c1_i32_121 : i32 to vector<32x1xi32>
    %316 = arith.addi %293, %315 : vector<32x1xi32>
    %c8_i32_122 = arith.constant 8 : i32
    %317 = vector.broadcast %c8_i32_122 : i32 to vector<32x1xi32>
    %318 = arith.cmpi slt, %316, %317 : vector<32x1xi32>
    %319 = arith.andi %314, %318 : vector<32x1xi1>
    %cst_123 = arith.constant 0.000000e+00 : f32
    %320 = vector.shape_cast %319 : vector<32x1xi1> to vector<32x1xi1>
    %321 = vector.broadcast %320 : vector<32x1xi1> to vector<32x128xi1>
    %322 = vector.broadcast %cst_123 : f32 to vector<32x128xf32>
    %323 = arith.select %321, %310, %322 : vector<32x128xi1>, vector<32x128xf32>
    %c0_124 = arith.constant 0 : index
    %c256 = arith.constant 256 : index
    %324 = vector.load %arg10[%c0_124, %c256] : memref<32x384xf32, #tpu.memory_space<vmem>>, vector<32x128xf32>
    tpu.vector_store %arg10[%c0_124, %c256], %323 {strides = array<i32>} : memref<32x384xf32, #tpu.memory_space<vmem>>, vector<32x128xf32>,
    %c0_125 = arith.constant 0 : index
    %c0_126 = arith.constant 0 : index
    %325 = vector.load %arg10[%c0_125, %c0_126] : memref<32x384xf32, #tpu.memory_space<vmem>>, vector<32x384xf32>
    %c0_127 = arith.constant 0 : index
    %c0_128 = arith.constant 0 : index
    %326 = vector.load %arg6[%c0_127, %c0_128] : memref<384x128xf32, #tpu.memory_space<vmem>>, vector<384x128xf32>
    %cst_129 = arith.constant dense<0.000000e+00> : vector<32x128xf32>
    %327 = tpu.matmul %325, %326, %cst_129 {dimension_numbers = #tpu.dot_dimension_numbers<[1], [0], [0], [1], [0, 0, 1, 1], [], []>} : vector<32x384xf32>, vector<384x128xf32>, vector<32x128xf32> -> vector<32x128xf32>
    %c0_130 = arith.constant 0 : index
    %c0_131 = arith.constant 0 : index
    %328 = vector.load %arg7[%c0_130, %c0_131] : memref<1x128xf32, #tpu.memory_space<vmem>>, vector<1x128xf32>
    %329 = vector.shape_cast %328 : vector<1x128xf32> to vector<128xf32>
    %330 = vector.shape_cast %329 : vector<128xf32> to vector<1x128xf32>
    %331 = vector.broadcast %330 : vector<1x128xf32> to vector<32x128xf32>
    %332 = arith.addf %327, %331 : vector<32x128xf32>
    %c0_132 = arith.constant 0 : index
    %c0_133 = arith.constant 0 : index
    %333 = vector.load %arg8[%c0_132, %c0_133] : memref<32x128xf32, #tpu.memory_space<vmem>>, vector<32x128xf32>
    tpu.vector_store %arg8[%c0_132, %c0_133], %332 {strides = array<i32>} : memref<32x128xf32, #tpu.memory_space<vmem>>, vector<32x128xf32>,
    return
  }
  func.func @transform_0(%arg0: i32) -> (i32, i32) {
    %c0_i32 = arith.constant 0 : i32
    %c0_i32_0 = arith.constant 0 : i32
    return %arg0, %c0_i32 : i32, i32
  }
  func.func @transform_1(%arg0: i32) -> (i32, i32) {
    %c0_i32 = arith.constant 0 : i32
    %c0_i32_0 = arith.constant 0 : i32
    %c0_i32_1 = arith.constant 0 : i32
    return %c0_i32, %c0_i32_0 : i32, i32
  }
  func.func @transform_2(%arg0: i32) -> (i32, i32) {
    %c0_i32 = arith.constant 0 : i32
    %c0_i32_0 = arith.constant 0 : i32
    %c0_i32_1 = arith.constant 0 : i32
    return %c0_i32, %c0_i32_0 : i32, i32
  }
  func.func @transform_3(%arg0: i32) -> (i32, i32) {
    %c0_i32 = arith.constant 0 : i32
    %c0_i32_0 = arith.constant 0 : i32
    %c0_i32_1 = arith.constant 0 : i32
    return %c0_i32, %c0_i32_0 : i32, i32
  }
  func.func @transform_4(%arg0: i32) -> (i32, i32) {
    %c0_i32 = arith.constant 0 : i32
    %c0_i32_0 = arith.constant 0 : i32
    %c0_i32_1 = arith.constant 0 : i32
    return %c0_i32, %c0_i32_0 : i32, i32
  }
  func.func @transform_5(%arg0: i32) -> (i32, i32) {
    %c0_i32 = arith.constant 0 : i32
    %c0_i32_0 = arith.constant 0 : i32
    %c0_i32_1 = arith.constant 0 : i32
    return %c0_i32, %c0_i32_0 : i32, i32
  }
  func.func @transform_6(%arg0: i32) -> (i32, i32) {
    %c0_i32 = arith.constant 0 : i32
    %c0_i32_0 = arith.constant 0 : i32
    %c0_i32_1 = arith.constant 0 : i32
    return %c0_i32, %c0_i32_0 : i32, i32
  }
  func.func @transform_7(%arg0: i32) -> (i32, i32) {
    %c0_i32 = arith.constant 0 : i32
    %c0_i32_0 = arith.constant 0 : i32
    return %arg0, %c0_i32 : i32, i32
  }
}

module attributes {stable_mosaic.version = 11 : i64} {
  func.func @_transformer_block_kernel(%arg0: i32, %arg1: memref<32x128xf32, #tpu.memory_space<vmem>>, %arg2: memref<128x384xf32, #tpu.memory_space<vmem>>, %arg3: memref<128x128xf32, #tpu.memory_space<vmem>>, %arg4: memref<1x128xf32, #tpu.memory_space<vmem>>, %arg5: memref<1x128xf32, #tpu.memory_space<vmem>>, %arg6: memref<384x128xf32, #tpu.memory_space<vmem>>, %arg7: memref<1x128xf32, #tpu.memory_space<vmem>>, %arg8: memref<32x128xf32, #tpu.memory_space<vmem>>, %arg9: memref<32x128xf32, #tpu.memory_space<vmem>>, %arg10: memref<32x384xf32, #tpu.memory_space<vmem>>) attributes {dimension_semantics = [#tpu.dimension_semantics<parallel>], iteration_bounds = array<i64: 2>, scalar_prefetch = 0 : i64, scratch_operands = 2 : i64, tpu.core_type = #tpu.core_type<tc>, window_params = [{transform_indices = @transform_0, window_bounds = array<i64: 32, 128>}, {pipeline_mode = #tpu.pipeline_mode<synchronous>, transform_indices = @transform_1, window_bounds = array<i64: 128, 384>}, {pipeline_mode = #tpu.pipeline_mode<synchronous>, transform_indices = @transform_2, window_bounds = array<i64: 128, 128>}, {pipeline_mode = #tpu.pipeline_mode<synchronous>, transform_indices = @transform_3, window_bounds = array<i64: 1, 128>}, {pipeline_mode = #tpu.pipeline_mode<synchronous>, transform_indices = @transform_4, window_bounds = array<i64: 1, 128>}, {pipeline_mode = #tpu.pipeline_mode<synchronous>, transform_indices = @transform_5, window_bounds = array<i64: 384, 128>}, {pipeline_mode = #tpu.pipeline_mode<synchronous>, transform_indices = @transform_6, window_bounds = array<i64: 1, 128>}, {transform_indices = @transform_7, window_bounds = array<i64: 32, 128>}]} {
    %c0 = arith.constant 0 : index
    %c0_0 = arith.constant 0 : index
    %0 = vector.load %arg1[%c0, %c0_0] : memref<32x128xf32, #tpu.memory_space<vmem>>, vector<32x128xf32>
    %c0_1 = arith.constant 0 : index
    %c0_2 = arith.constant 0 : index
    %1 = vector.load %arg2[%c0_1, %c0_2] : memref<128x384xf32, #tpu.memory_space<vmem>>, vector<128x384xf32>
    %cst = arith.constant dense<0.000000e+00> : vector<32x384xf32>
    %2 = tpu.matmul %0, %1, %cst {dimension_numbers = #tpu.dot_dimension_numbers<[1], [0], [0], [1], [0, 0, 1, 1], [], []>} : vector<32x128xf32>, vector<128x384xf32>, vector<32x384xf32> -> vector<32x384xf32>
    %3 = vector.extract_strided_slice %2 {offsets = [0, 0], sizes = [8, 32], strides = [1, 1]} : vector<32x384xf32> to vector<8x32xf32>
    %4 = vector.extract_strided_slice %2 {offsets = [0, 128], sizes = [8, 32], strides = [1, 1]} : vector<32x384xf32> to vector<8x32xf32>
    %5 = vector.extract_strided_slice %2 {offsets = [0, 256], sizes = [8, 32], strides = [1, 1]} : vector<32x384xf32> to vector<8x32xf32>
    %cst_3 = arith.constant dense<0.000000e+00> : vector<8x8xf32>
    %6 = tpu.matmul %3, %4, %cst_3 {dimension_numbers = #tpu.dot_dimension_numbers<[1], [1], [0], [0], [0, 0, 1, 0], [], []>} : vector<8x32xf32>, vector<8x32xf32>, vector<8x8xf32> -> vector<8x8xf32>
    %cst_4 = arith.constant dense<0xFF800000> : vector<8xf32>
    %7 = vector.multi_reduction <maximumf>, %6, %cst_4 [1] : vector<8x8xf32> to vector<8xf32>
    %8 = vector.shape_cast %7 : vector<8xf32> to vector<8x1xf32>
    %9 = vector.broadcast %8 : vector<8x1xf32> to vector<8x8xf32>
    %10 = arith.subf %6, %9 : vector<8x8xf32>
    %11 = math.exp %10 : vector<8x8xf32>
    %cst_5 = arith.constant dense<0.000000e+00> : vector<8xf32>
    %12 = vector.multi_reduction <add>, %11, %cst_5 [1] : vector<8x8xf32> to vector<8xf32>
    %13 = vector.shape_cast %12 : vector<8xf32> to vector<8x1xf32>
    %14 = vector.broadcast %13 : vector<8x1xf32> to vector<8x8xf32>
    %15 = arith.divf %11, %14 : vector<8x8xf32>
    %cst_6 = arith.constant dense<0.000000e+00> : vector<8x32xf32>
    %16 = tpu.matmul %15, %5, %cst_6 {dimension_numbers = #tpu.dot_dimension_numbers<[1], [0], [0], [1], [0, 0, 1, 1], [], []>} : vector<8x8xf32>, vector<8x32xf32>, vector<8x32xf32> -> vector<8x32xf32>
    %c0_7 = arith.constant 0 : index
    %c0_8 = arith.constant 0 : index
    %17 = vector.load %arg9[%c0_7, %c0_8] : memref<32x128xf32, #tpu.memory_space<vmem>>, vector<8x32xf32>
    tpu.vector_store %arg9[%c0_7, %c0_8], %16 {strides = array<i32>} : memref<32x128xf32, #tpu.memory_space<vmem>>, vector<8x32xf32>,
    %18 = vector.extract_strided_slice %2 {offsets = [0, 32], sizes = [8, 32], strides = [1, 1]} : vector<32x384xf32> to vector<8x32xf32>
    %19 = vector.extract_strided_slice %2 {offsets = [0, 160], sizes = [8, 32], strides = [1, 1]} : vector<32x384xf32> to vector<8x32xf32>
    %20 = vector.extract_strided_slice %2 {offsets = [0, 288], sizes = [8, 32], strides = [1, 1]} : vector<32x384xf32> to vector<8x32xf32>
    %cst_9 = arith.constant dense<0.000000e+00> : vector<8x8xf32>
    %21 = tpu.matmul %18, %19, %cst_9 {dimension_numbers = #tpu.dot_dimension_numbers<[1], [1], [0], [0], [0, 0, 1, 0], [], []>} : vector<8x32xf32>, vector<8x32xf32>, vector<8x8xf32> -> vector<8x8xf32>
    %cst_10 = arith.constant dense<0xFF800000> : vector<8xf32>
    %22 = vector.multi_reduction <maximumf>, %21, %cst_10 [1] : vector<8x8xf32> to vector<8xf32>
    %23 = vector.shape_cast %22 : vector<8xf32> to vector<8x1xf32>
    %24 = vector.broadcast %23 : vector<8x1xf32> to vector<8x8xf32>
    %25 = arith.subf %21, %24 : vector<8x8xf32>
    %26 = math.exp %25 : vector<8x8xf32>
    %cst_11 = arith.constant dense<0.000000e+00> : vector<8xf32>
    %27 = vector.multi_reduction <add>, %26, %cst_11 [1] : vector<8x8xf32> to vector<8xf32>
    %28 = vector.shape_cast %27 : vector<8xf32> to vector<8x1xf32>
    %29 = vector.broadcast %28 : vector<8x1xf32> to vector<8x8xf32>
    %30 = arith.divf %26, %29 : vector<8x8xf32>
    %cst_12 = arith.constant dense<0.000000e+00> : vector<8x32xf32>
    %31 = tpu.matmul %30, %20, %cst_12 {dimension_numbers = #tpu.dot_dimension_numbers<[1], [0], [0], [1], [0, 0, 1, 1], [], []>} : vector<8x8xf32>, vector<8x32xf32>, vector<8x32xf32> -> vector<8x32xf32>
    %c0_13 = arith.constant 0 : index
    %c32 = arith.constant 32 : index
    %32 = vector.load %arg9[%c0_13, %c32] : memref<32x128xf32, #tpu.memory_space<vmem>>, vector<8x32xf32>
    tpu.vector_store %arg9[%c0_13, %c32], %31 {strides = array<i32>} : memref<32x128xf32, #tpu.memory_space<vmem>>, vector<8x32xf32>,
    %33 = vector.extract_strided_slice %2 {offsets = [0, 64], sizes = [8, 32], strides = [1, 1]} : vector<32x384xf32> to vector<8x32xf32>
    %34 = vector.extract_strided_slice %2 {offsets = [0, 192], sizes = [8, 32], strides = [1, 1]} : vector<32x384xf32> to vector<8x32xf32>
    %35 = vector.extract_strided_slice %2 {offsets = [0, 320], sizes = [8, 32], strides = [1, 1]} : vector<32x384xf32> to vector<8x32xf32>
    %cst_14 = arith.constant dense<0.000000e+00> : vector<8x8xf32>
    %36 = tpu.matmul %33, %34, %cst_14 {dimension_numbers = #tpu.dot_dimension_numbers<[1], [1], [0], [0], [0, 0, 1, 0], [], []>} : vector<8x32xf32>, vector<8x32xf32>, vector<8x8xf32> -> vector<8x8xf32>
    %cst_15 = arith.constant dense<0xFF800000> : vector<8xf32>
    %37 = vector.multi_reduction <maximumf>, %36, %cst_15 [1] : vector<8x8xf32> to vector<8xf32>
    %38 = vector.shape_cast %37 : vector<8xf32> to vector<8x1xf32>
    %39 = vector.broadcast %38 : vector<8x1xf32> to vector<8x8xf32>
    %40 = arith.subf %36, %39 : vector<8x8xf32>
    %41 = math.exp %40 : vector<8x8xf32>
    %cst_16 = arith.constant dense<0.000000e+00> : vector<8xf32>
    %42 = vector.multi_reduction <add>, %41, %cst_16 [1] : vector<8x8xf32> to vector<8xf32>
    %43 = vector.shape_cast %42 : vector<8xf32> to vector<8x1xf32>
    %44 = vector.broadcast %43 : vector<8x1xf32> to vector<8x8xf32>
    %45 = arith.divf %41, %44 : vector<8x8xf32>
    %cst_17 = arith.constant dense<0.000000e+00> : vector<8x32xf32>
    %46 = tpu.matmul %45, %35, %cst_17 {dimension_numbers = #tpu.dot_dimension_numbers<[1], [0], [0], [1], [0, 0, 1, 1], [], []>} : vector<8x8xf32>, vector<8x32xf32>, vector<8x32xf32> -> vector<8x32xf32>
    %c0_18 = arith.constant 0 : index
    %c64 = arith.constant 64 : index
    %47 = vector.load %arg9[%c0_18, %c64] : memref<32x128xf32, #tpu.memory_space<vmem>>, vector<8x32xf32>
    tpu.vector_store %arg9[%c0_18, %c64], %46 {strides = array<i32>} : memref<32x128xf32, #tpu.memory_space<vmem>>, vector<8x32xf32>,
    %48 = vector.extract_strided_slice %2 {offsets = [0, 96], sizes = [8, 32], strides = [1, 1]} : vector<32x384xf32> to vector<8x32xf32>
    %49 = vector.extract_strided_slice %2 {offsets = [0, 224], sizes = [8, 32], strides = [1, 1]} : vector<32x384xf32> to vector<8x32xf32>
    %50 = vector.extract_strided_slice %2 {offsets = [0, 352], sizes = [8, 32], strides = [1, 1]} : vector<32x384xf32> to vector<8x32xf32>
    %cst_19 = arith.constant dense<0.000000e+00> : vector<8x8xf32>
    %51 = tpu.matmul %48, %49, %cst_19 {dimension_numbers = #tpu.dot_dimension_numbers<[1], [1], [0], [0], [0, 0, 1, 0], [], []>} : vector<8x32xf32>, vector<8x32xf32>, vector<8x8xf32> -> vector<8x8xf32>
    %cst_20 = arith.constant dense<0xFF800000> : vector<8xf32>
    %52 = vector.multi_reduction <maximumf>, %51, %cst_20 [1] : vector<8x8xf32> to vector<8xf32>
    %53 = vector.shape_cast %52 : vector<8xf32> to vector<8x1xf32>
    %54 = vector.broadcast %53 : vector<8x1xf32> to vector<8x8xf32>
    %55 = arith.subf %51, %54 : vector<8x8xf32>
    %56 = math.exp %55 : vector<8x8xf32>
    %cst_21 = arith.constant dense<0.000000e+00> : vector<8xf32>
    %57 = vector.multi_reduction <add>, %56, %cst_21 [1] : vector<8x8xf32> to vector<8xf32>
    %58 = vector.shape_cast %57 : vector<8xf32> to vector<8x1xf32>
    %59 = vector.broadcast %58 : vector<8x1xf32> to vector<8x8xf32>
    %60 = arith.divf %56, %59 : vector<8x8xf32>
    %cst_22 = arith.constant dense<0.000000e+00> : vector<8x32xf32>
    %61 = tpu.matmul %60, %50, %cst_22 {dimension_numbers = #tpu.dot_dimension_numbers<[1], [0], [0], [1], [0, 0, 1, 1], [], []>} : vector<8x8xf32>, vector<8x32xf32>, vector<8x32xf32> -> vector<8x32xf32>
    %c0_23 = arith.constant 0 : index
    %c96 = arith.constant 96 : index
    %62 = vector.load %arg9[%c0_23, %c96] : memref<32x128xf32, #tpu.memory_space<vmem>>, vector<8x32xf32>
    tpu.vector_store %arg9[%c0_23, %c96], %61 {strides = array<i32>} : memref<32x128xf32, #tpu.memory_space<vmem>>, vector<8x32xf32>,
    %63 = vector.extract_strided_slice %2 {offsets = [8, 0], sizes = [8, 32], strides = [1, 1]} : vector<32x384xf32> to vector<8x32xf32>
    %64 = vector.extract_strided_slice %2 {offsets = [8, 128], sizes = [8, 32], strides = [1, 1]} : vector<32x384xf32> to vector<8x32xf32>
    %65 = vector.extract_strided_slice %2 {offsets = [8, 256], sizes = [8, 32], strides = [1, 1]} : vector<32x384xf32> to vector<8x32xf32>
    %cst_24 = arith.constant dense<0.000000e+00> : vector<8x8xf32>
    %66 = tpu.matmul %63, %64, %cst_24 {dimension_numbers = #tpu.dot_dimension_numbers<[1], [1], [0], [0], [0, 0, 1, 0], [], []>} : vector<8x32xf32>, vector<8x32xf32>, vector<8x8xf32> -> vector<8x8xf32>
    %cst_25 = arith.constant dense<0xFF800000> : vector<8xf32>
    %67 = vector.multi_reduction <maximumf>, %66, %cst_25 [1] : vector<8x8xf32> to vector<8xf32>
    %68 = vector.shape_cast %67 : vector<8xf32> to vector<8x1xf32>
    %69 = vector.broadcast %68 : vector<8x1xf32> to vector<8x8xf32>
    %70 = arith.subf %66, %69 : vector<8x8xf32>
    %71 = math.exp %70 : vector<8x8xf32>
    %cst_26 = arith.constant dense<0.000000e+00> : vector<8xf32>
    %72 = vector.multi_reduction <add>, %71, %cst_26 [1] : vector<8x8xf32> to vector<8xf32>
    %73 = vector.shape_cast %72 : vector<8xf32> to vector<8x1xf32>
    %74 = vector.broadcast %73 : vector<8x1xf32> to vector<8x8xf32>
    %75 = arith.divf %71, %74 : vector<8x8xf32>
    %cst_27 = arith.constant dense<0.000000e+00> : vector<8x32xf32>
    %76 = tpu.matmul %75, %65, %cst_27 {dimension_numbers = #tpu.dot_dimension_numbers<[1], [0], [0], [1], [0, 0, 1, 1], [], []>} : vector<8x8xf32>, vector<8x32xf32>, vector<8x32xf32> -> vector<8x32xf32>
    %c8 = arith.constant 8 : index
    %c0_28 = arith.constant 0 : index
    %77 = vector.load %arg9[%c8, %c0_28] : memref<32x128xf32, #tpu.memory_space<vmem>>, vector<8x32xf32>
    tpu.vector_store %arg9[%c8, %c0_28], %76 {strides = array<i32>} : memref<32x128xf32, #tpu.memory_space<vmem>>, vector<8x32xf32>,
    %78 = vector.extract_strided_slice %2 {offsets = [8, 32], sizes = [8, 32], strides = [1, 1]} : vector<32x384xf32> to vector<8x32xf32>
    %79 = vector.extract_strided_slice %2 {offsets = [8, 160], sizes = [8, 32], strides = [1, 1]} : vector<32x384xf32> to vector<8x32xf32>
    %80 = vector.extract_strided_slice %2 {offsets = [8, 288], sizes = [8, 32], strides = [1, 1]} : vector<32x384xf32> to vector<8x32xf32>
    %cst_29 = arith.constant dense<0.000000e+00> : vector<8x8xf32>
    %81 = tpu.matmul %78, %79, %cst_29 {dimension_numbers = #tpu.dot_dimension_numbers<[1], [1], [0], [0], [0, 0, 1, 0], [], []>} : vector<8x32xf32>, vector<8x32xf32>, vector<8x8xf32> -> vector<8x8xf32>
    %cst_30 = arith.constant dense<0xFF800000> : vector<8xf32>
    %82 = vector.multi_reduction <maximumf>, %81, %cst_30 [1] : vector<8x8xf32> to vector<8xf32>
    %83 = vector.shape_cast %82 : vector<8xf32> to vector<8x1xf32>
    %84 = vector.broadcast %83 : vector<8x1xf32> to vector<8x8xf32>
    %85 = arith.subf %81, %84 : vector<8x8xf32>
    %86 = math.exp %85 : vector<8x8xf32>
    %cst_31 = arith.constant dense<0.000000e+00> : vector<8xf32>
    %87 = vector.multi_reduction <add>, %86, %cst_31 [1] : vector<8x8xf32> to vector<8xf32>
    %88 = vector.shape_cast %87 : vector<8xf32> to vector<8x1xf32>
    %89 = vector.broadcast %88 : vector<8x1xf32> to vector<8x8xf32>
    %90 = arith.divf %86, %89 : vector<8x8xf32>
    %cst_32 = arith.constant dense<0.000000e+00> : vector<8x32xf32>
    %91 = tpu.matmul %90, %80, %cst_32 {dimension_numbers = #tpu.dot_dimension_numbers<[1], [0], [0], [1], [0, 0, 1, 1], [], []>} : vector<8x8xf32>, vector<8x32xf32>, vector<8x32xf32> -> vector<8x32xf32>
    %c8_33 = arith.constant 8 : index
    %c32_34 = arith.constant 32 : index
    %92 = vector.load %arg9[%c8_33, %c32_34] : memref<32x128xf32, #tpu.memory_space<vmem>>, vector<8x32xf32>
    tpu.vector_store %arg9[%c8_33, %c32_34], %91 {strides = array<i32>} : memref<32x128xf32, #tpu.memory_space<vmem>>, vector<8x32xf32>,
    %93 = vector.extract_strided_slice %2 {offsets = [8, 64], sizes = [8, 32], strides = [1, 1]} : vector<32x384xf32> to vector<8x32xf32>
    %94 = vector.extract_strided_slice %2 {offsets = [8, 192], sizes = [8, 32], strides = [1, 1]} : vector<32x384xf32> to vector<8x32xf32>
    %95 = vector.extract_strided_slice %2 {offsets = [8, 320], sizes = [8, 32], strides = [1, 1]} : vector<32x384xf32> to vector<8x32xf32>
    %cst_35 = arith.constant dense<0.000000e+00> : vector<8x8xf32>
    %96 = tpu.matmul %93, %94, %cst_35 {dimension_numbers = #tpu.dot_dimension_numbers<[1], [1], [0], [0], [0, 0, 1, 0], [], []>} : vector<8x32xf32>, vector<8x32xf32>, vector<8x8xf32> -> vector<8x8xf32>
    %cst_36 = arith.constant dense<0xFF800000> : vector<8xf32>
    %97 = vector.multi_reduction <maximumf>, %96, %cst_36 [1] : vector<8x8xf32> to vector<8xf32>
    %98 = vector.shape_cast %97 : vector<8xf32> to vector<8x1xf32>
    %99 = vector.broadcast %98 : vector<8x1xf32> to vector<8x8xf32>
    %100 = arith.subf %96, %99 : vector<8x8xf32>
    %101 = math.exp %100 : vector<8x8xf32>
    %cst_37 = arith.constant dense<0.000000e+00> : vector<8xf32>
    %102 = vector.multi_reduction <add>, %101, %cst_37 [1] : vector<8x8xf32> to vector<8xf32>
    %103 = vector.shape_cast %102 : vector<8xf32> to vector<8x1xf32>
    %104 = vector.broadcast %103 : vector<8x1xf32> to vector<8x8xf32>
    %105 = arith.divf %101, %104 : vector<8x8xf32>
    %cst_38 = arith.constant dense<0.000000e+00> : vector<8x32xf32>
    %106 = tpu.matmul %105, %95, %cst_38 {dimension_numbers = #tpu.dot_dimension_numbers<[1], [0], [0], [1], [0, 0, 1, 1], [], []>} : vector<8x8xf32>, vector<8x32xf32>, vector<8x32xf32> -> vector<8x32xf32>
    %c8_39 = arith.constant 8 : index
    %c64_40 = arith.constant 64 : index
    %107 = vector.load %arg9[%c8_39, %c64_40] : memref<32x128xf32, #tpu.memory_space<vmem>>, vector<8x32xf32>
    tpu.vector_store %arg9[%c8_39, %c64_40], %106 {strides = array<i32>} : memref<32x128xf32, #tpu.memory_space<vmem>>, vector<8x32xf32>,
    %108 = vector.extract_strided_slice %2 {offsets = [8, 96], sizes = [8, 32], strides = [1, 1]} : vector<32x384xf32> to vector<8x32xf32>
    %109 = vector.extract_strided_slice %2 {offsets = [8, 224], sizes = [8, 32], strides = [1, 1]} : vector<32x384xf32> to vector<8x32xf32>
    %110 = vector.extract_strided_slice %2 {offsets = [8, 352], sizes = [8, 32], strides = [1, 1]} : vector<32x384xf32> to vector<8x32xf32>
    %cst_41 = arith.constant dense<0.000000e+00> : vector<8x8xf32>
    %111 = tpu.matmul %108, %109, %cst_41 {dimension_numbers = #tpu.dot_dimension_numbers<[1], [1], [0], [0], [0, 0, 1, 0], [], []>} : vector<8x32xf32>, vector<8x32xf32>, vector<8x8xf32> -> vector<8x8xf32>
    %cst_42 = arith.constant dense<0xFF800000> : vector<8xf32>
    %112 = vector.multi_reduction <maximumf>, %111, %cst_42 [1] : vector<8x8xf32> to vector<8xf32>
    %113 = vector.shape_cast %112 : vector<8xf32> to vector<8x1xf32>
    %114 = vector.broadcast %113 : vector<8x1xf32> to vector<8x8xf32>
    %115 = arith.subf %111, %114 : vector<8x8xf32>
    %116 = math.exp %115 : vector<8x8xf32>
    %cst_43 = arith.constant dense<0.000000e+00> : vector<8xf32>
    %117 = vector.multi_reduction <add>, %116, %cst_43 [1] : vector<8x8xf32> to vector<8xf32>
    %118 = vector.shape_cast %117 : vector<8xf32> to vector<8x1xf32>
    %119 = vector.broadcast %118 : vector<8x1xf32> to vector<8x8xf32>
    %120 = arith.divf %116, %119 : vector<8x8xf32>
    %cst_44 = arith.constant dense<0.000000e+00> : vector<8x32xf32>
    %121 = tpu.matmul %120, %110, %cst_44 {dimension_numbers = #tpu.dot_dimension_numbers<[1], [0], [0], [1], [0, 0, 1, 1], [], []>} : vector<8x8xf32>, vector<8x32xf32>, vector<8x32xf32> -> vector<8x32xf32>
    %c8_45 = arith.constant 8 : index
    %c96_46 = arith.constant 96 : index
    %122 = vector.load %arg9[%c8_45, %c96_46] : memref<32x128xf32, #tpu.memory_space<vmem>>, vector<8x32xf32>
    tpu.vector_store %arg9[%c8_45, %c96_46], %121 {strides = array<i32>} : memref<32x128xf32, #tpu.memory_space<vmem>>, vector<8x32xf32>,
    %123 = vector.extract_strided_slice %2 {offsets = [16, 0], sizes = [8, 32], strides = [1, 1]} : vector<32x384xf32> to vector<8x32xf32>
    %124 = vector.extract_strided_slice %2 {offsets = [16, 128], sizes = [8, 32], strides = [1, 1]} : vector<32x384xf32> to vector<8x32xf32>
    %125 = vector.extract_strided_slice %2 {offsets = [16, 256], sizes = [8, 32], strides = [1, 1]} : vector<32x384xf32> to vector<8x32xf32>
    %cst_47 = arith.constant dense<0.000000e+00> : vector<8x8xf32>
    %126 = tpu.matmul %123, %124, %cst_47 {dimension_numbers = #tpu.dot_dimension_numbers<[1], [1], [0], [0], [0, 0, 1, 0], [], []>} : vector<8x32xf32>, vector<8x32xf32>, vector<8x8xf32> -> vector<8x8xf32>
    %cst_48 = arith.constant dense<0xFF800000> : vector<8xf32>
    %127 = vector.multi_reduction <maximumf>, %126, %cst_48 [1] : vector<8x8xf32> to vector<8xf32>
    %128 = vector.shape_cast %127 : vector<8xf32> to vector<8x1xf32>
    %129 = vector.broadcast %128 : vector<8x1xf32> to vector<8x8xf32>
    %130 = arith.subf %126, %129 : vector<8x8xf32>
    %131 = math.exp %130 : vector<8x8xf32>
    %cst_49 = arith.constant dense<0.000000e+00> : vector<8xf32>
    %132 = vector.multi_reduction <add>, %131, %cst_49 [1] : vector<8x8xf32> to vector<8xf32>
    %133 = vector.shape_cast %132 : vector<8xf32> to vector<8x1xf32>
    %134 = vector.broadcast %133 : vector<8x1xf32> to vector<8x8xf32>
    %135 = arith.divf %131, %134 : vector<8x8xf32>
    %cst_50 = arith.constant dense<0.000000e+00> : vector<8x32xf32>
    %136 = tpu.matmul %135, %125, %cst_50 {dimension_numbers = #tpu.dot_dimension_numbers<[1], [0], [0], [1], [0, 0, 1, 1], [], []>} : vector<8x8xf32>, vector<8x32xf32>, vector<8x32xf32> -> vector<8x32xf32>
    %c16 = arith.constant 16 : index
    %c0_51 = arith.constant 0 : index
    %137 = vector.load %arg9[%c16, %c0_51] : memref<32x128xf32, #tpu.memory_space<vmem>>, vector<8x32xf32>
    tpu.vector_store %arg9[%c16, %c0_51], %136 {strides = array<i32>} : memref<32x128xf32, #tpu.memory_space<vmem>>, vector<8x32xf32>,
    %138 = vector.extract_strided_slice %2 {offsets = [16, 32], sizes = [8, 32], strides = [1, 1]} : vector<32x384xf32> to vector<8x32xf32>
    %139 = vector.extract_strided_slice %2 {offsets = [16, 160], sizes = [8, 32], strides = [1, 1]} : vector<32x384xf32> to vector<8x32xf32>
    %140 = vector.extract_strided_slice %2 {offsets = [16, 288], sizes = [8, 32], strides = [1, 1]} : vector<32x384xf32> to vector<8x32xf32>
    %cst_52 = arith.constant dense<0.000000e+00> : vector<8x8xf32>
    %141 = tpu.matmul %138, %139, %cst_52 {dimension_numbers = #tpu.dot_dimension_numbers<[1], [1], [0], [0], [0, 0, 1, 0], [], []>} : vector<8x32xf32>, vector<8x32xf32>, vector<8x8xf32> -> vector<8x8xf32>
    %cst_53 = arith.constant dense<0xFF800000> : vector<8xf32>
    %142 = vector.multi_reduction <maximumf>, %141, %cst_53 [1] : vector<8x8xf32> to vector<8xf32>
    %143 = vector.shape_cast %142 : vector<8xf32> to vector<8x1xf32>
    %144 = vector.broadcast %143 : vector<8x1xf32> to vector<8x8xf32>
    %145 = arith.subf %141, %144 : vector<8x8xf32>
    %146 = math.exp %145 : vector<8x8xf32>
    %cst_54 = arith.constant dense<0.000000e+00> : vector<8xf32>
    %147 = vector.multi_reduction <add>, %146, %cst_54 [1] : vector<8x8xf32> to vector<8xf32>
    %148 = vector.shape_cast %147 : vector<8xf32> to vector<8x1xf32>
    %149 = vector.broadcast %148 : vector<8x1xf32> to vector<8x8xf32>
    %150 = arith.divf %146, %149 : vector<8x8xf32>
    %cst_55 = arith.constant dense<0.000000e+00> : vector<8x32xf32>
    %151 = tpu.matmul %150, %140, %cst_55 {dimension_numbers = #tpu.dot_dimension_numbers<[1], [0], [0], [1], [0, 0, 1, 1], [], []>} : vector<8x8xf32>, vector<8x32xf32>, vector<8x32xf32> -> vector<8x32xf32>
    %c16_56 = arith.constant 16 : index
    %c32_57 = arith.constant 32 : index
    %152 = vector.load %arg9[%c16_56, %c32_57] : memref<32x128xf32, #tpu.memory_space<vmem>>, vector<8x32xf32>
    tpu.vector_store %arg9[%c16_56, %c32_57], %151 {strides = array<i32>} : memref<32x128xf32, #tpu.memory_space<vmem>>, vector<8x32xf32>,
    %153 = vector.extract_strided_slice %2 {offsets = [16, 64], sizes = [8, 32], strides = [1, 1]} : vector<32x384xf32> to vector<8x32xf32>
    %154 = vector.extract_strided_slice %2 {offsets = [16, 192], sizes = [8, 32], strides = [1, 1]} : vector<32x384xf32> to vector<8x32xf32>
    %155 = vector.extract_strided_slice %2 {offsets = [16, 320], sizes = [8, 32], strides = [1, 1]} : vector<32x384xf32> to vector<8x32xf32>
    %cst_58 = arith.constant dense<0.000000e+00> : vector<8x8xf32>
    %156 = tpu.matmul %153, %154, %cst_58 {dimension_numbers = #tpu.dot_dimension_numbers<[1], [1], [0], [0], [0, 0, 1, 0], [], []>} : vector<8x32xf32>, vector<8x32xf32>, vector<8x8xf32> -> vector<8x8xf32>
    %cst_59 = arith.constant dense<0xFF800000> : vector<8xf32>
    %157 = vector.multi_reduction <maximumf>, %156, %cst_59 [1] : vector<8x8xf32> to vector<8xf32>
    %158 = vector.shape_cast %157 : vector<8xf32> to vector<8x1xf32>
    %159 = vector.broadcast %158 : vector<8x1xf32> to vector<8x8xf32>
    %160 = arith.subf %156, %159 : vector<8x8xf32>
    %161 = math.exp %160 : vector<8x8xf32>
    %cst_60 = arith.constant dense<0.000000e+00> : vector<8xf32>
    %162 = vector.multi_reduction <add>, %161, %cst_60 [1] : vector<8x8xf32> to vector<8xf32>
    %163 = vector.shape_cast %162 : vector<8xf32> to vector<8x1xf32>
    %164 = vector.broadcast %163 : vector<8x1xf32> to vector<8x8xf32>
    %165 = arith.divf %161, %164 : vector<8x8xf32>
    %cst_61 = arith.constant dense<0.000000e+00> : vector<8x32xf32>
    %166 = tpu.matmul %165, %155, %cst_61 {dimension_numbers = #tpu.dot_dimension_numbers<[1], [0], [0], [1], [0, 0, 1, 1], [], []>} : vector<8x8xf32>, vector<8x32xf32>, vector<8x32xf32> -> vector<8x32xf32>
    %c16_62 = arith.constant 16 : index
    %c64_63 = arith.constant 64 : index
    %167 = vector.load %arg9[%c16_62, %c64_63] : memref<32x128xf32, #tpu.memory_space<vmem>>, vector<8x32xf32>
    tpu.vector_store %arg9[%c16_62, %c64_63], %166 {strides = array<i32>} : memref<32x128xf32, #tpu.memory_space<vmem>>, vector<8x32xf32>,
    %168 = vector.extract_strided_slice %2 {offsets = [16, 96], sizes = [8, 32], strides = [1, 1]} : vector<32x384xf32> to vector<8x32xf32>
    %169 = vector.extract_strided_slice %2 {offsets = [16, 224], sizes = [8, 32], strides = [1, 1]} : vector<32x384xf32> to vector<8x32xf32>
    %170 = vector.extract_strided_slice %2 {offsets = [16, 352], sizes = [8, 32], strides = [1, 1]} : vector<32x384xf32> to vector<8x32xf32>
    %cst_64 = arith.constant dense<0.000000e+00> : vector<8x8xf32>
    %171 = tpu.matmul %168, %169, %cst_64 {dimension_numbers = #tpu.dot_dimension_numbers<[1], [1], [0], [0], [0, 0, 1, 0], [], []>} : vector<8x32xf32>, vector<8x32xf32>, vector<8x8xf32> -> vector<8x8xf32>
    %cst_65 = arith.constant dense<0xFF800000> : vector<8xf32>
    %172 = vector.multi_reduction <maximumf>, %171, %cst_65 [1] : vector<8x8xf32> to vector<8xf32>
    %173 = vector.shape_cast %172 : vector<8xf32> to vector<8x1xf32>
    %174 = vector.broadcast %173 : vector<8x1xf32> to vector<8x8xf32>
    %175 = arith.subf %171, %174 : vector<8x8xf32>
    %176 = math.exp %175 : vector<8x8xf32>
    %cst_66 = arith.constant dense<0.000000e+00> : vector<8xf32>
    %177 = vector.multi_reduction <add>, %176, %cst_66 [1] : vector<8x8xf32> to vector<8xf32>
    %178 = vector.shape_cast %177 : vector<8xf32> to vector<8x1xf32>
    %179 = vector.broadcast %178 : vector<8x1xf32> to vector<8x8xf32>
    %180 = arith.divf %176, %179 : vector<8x8xf32>
    %cst_67 = arith.constant dense<0.000000e+00> : vector<8x32xf32>
    %181 = tpu.matmul %180, %170, %cst_67 {dimension_numbers = #tpu.dot_dimension_numbers<[1], [0], [0], [1], [0, 0, 1, 1], [], []>} : vector<8x8xf32>, vector<8x32xf32>, vector<8x32xf32> -> vector<8x32xf32>
    %c16_68 = arith.constant 16 : index
    %c96_69 = arith.constant 96 : index
    %182 = vector.load %arg9[%c16_68, %c96_69] : memref<32x128xf32, #tpu.memory_space<vmem>>, vector<8x32xf32>
    tpu.vector_store %arg9[%c16_68, %c96_69], %181 {strides = array<i32>} : memref<32x128xf32, #tpu.memory_space<vmem>>, vector<8x32xf32>,
    %183 = vector.extract_strided_slice %2 {offsets = [24, 0], sizes = [8, 32], strides = [1, 1]} : vector<32x384xf32> to vector<8x32xf32>
    %184 = vector.extract_strided_slice %2 {offsets = [24, 128], sizes = [8, 32], strides = [1, 1]} : vector<32x384xf32> to vector<8x32xf32>
    %185 = vector.extract_strided_slice %2 {offsets = [24, 256], sizes = [8, 32], strides = [1, 1]} : vector<32x384xf32> to vector<8x32xf32>
    %cst_70 = arith.constant dense<0.000000e+00> : vector<8x8xf32>
    %186 = tpu.matmul %183, %184, %cst_70 {dimension_numbers = #tpu.dot_dimension_numbers<[1], [1], [0], [0], [0, 0, 1, 0], [], []>} : vector<8x32xf32>, vector<8x32xf32>, vector<8x8xf32> -> vector<8x8xf32>
    %cst_71 = arith.constant dense<0xFF800000> : vector<8xf32>
    %187 = vector.multi_reduction <maximumf>, %186, %cst_71 [1] : vector<8x8xf32> to vector<8xf32>
    %188 = vector.shape_cast %187 : vector<8xf32> to vector<8x1xf32>
    %189 = vector.broadcast %188 : vector<8x1xf32> to vector<8x8xf32>
    %190 = arith.subf %186, %189 : vector<8x8xf32>
    %191 = math.exp %190 : vector<8x8xf32>
    %cst_72 = arith.constant dense<0.000000e+00> : vector<8xf32>
    %192 = vector.multi_reduction <add>, %191, %cst_72 [1] : vector<8x8xf32> to vector<8xf32>
    %193 = vector.shape_cast %192 : vector<8xf32> to vector<8x1xf32>
    %194 = vector.broadcast %193 : vector<8x1xf32> to vector<8x8xf32>
    %195 = arith.divf %191, %194 : vector<8x8xf32>
    %cst_73 = arith.constant dense<0.000000e+00> : vector<8x32xf32>
    %196 = tpu.matmul %195, %185, %cst_73 {dimension_numbers = #tpu.dot_dimension_numbers<[1], [0], [0], [1], [0, 0, 1, 1], [], []>} : vector<8x8xf32>, vector<8x32xf32>, vector<8x32xf32> -> vector<8x32xf32>
    %c24 = arith.constant 24 : index
    %c0_74 = arith.constant 0 : index
    %197 = vector.load %arg9[%c24, %c0_74] : memref<32x128xf32, #tpu.memory_space<vmem>>, vector<8x32xf32>
    tpu.vector_store %arg9[%c24, %c0_74], %196 {strides = array<i32>} : memref<32x128xf32, #tpu.memory_space<vmem>>, vector<8x32xf32>,
    %198 = vector.extract_strided_slice %2 {offsets = [24, 32], sizes = [8, 32], strides = [1, 1]} : vector<32x384xf32> to vector<8x32xf32>
    %199 = vector.extract_strided_slice %2 {offsets = [24, 160], sizes = [8, 32], strides = [1, 1]} : vector<32x384xf32> to vector<8x32xf32>
    %200 = vector.extract_strided_slice %2 {offsets = [24, 288], sizes = [8, 32], strides = [1, 1]} : vector<32x384xf32> to vector<8x32xf32>
    %cst_75 = arith.constant dense<0.000000e+00> : vector<8x8xf32>
    %201 = tpu.matmul %198, %199, %cst_75 {dimension_numbers = #tpu.dot_dimension_numbers<[1], [1], [0], [0], [0, 0, 1, 0], [], []>} : vector<8x32xf32>, vector<8x32xf32>, vector<8x8xf32> -> vector<8x8xf32>
    %cst_76 = arith.constant dense<0xFF800000> : vector<8xf32>
    %202 = vector.multi_reduction <maximumf>, %201, %cst_76 [1] : vector<8x8xf32> to vector<8xf32>
    %203 = vector.shape_cast %202 : vector<8xf32> to vector<8x1xf32>
    %204 = vector.broadcast %203 : vector<8x1xf32> to vector<8x8xf32>
    %205 = arith.subf %201, %204 : vector<8x8xf32>
    %206 = math.exp %205 : vector<8x8xf32>
    %cst_77 = arith.constant dense<0.000000e+00> : vector<8xf32>
    %207 = vector.multi_reduction <add>, %206, %cst_77 [1] : vector<8x8xf32> to vector<8xf32>
    %208 = vector.shape_cast %207 : vector<8xf32> to vector<8x1xf32>
    %209 = vector.broadcast %208 : vector<8x1xf32> to vector<8x8xf32>
    %210 = arith.divf %206, %209 : vector<8x8xf32>
    %cst_78 = arith.constant dense<0.000000e+00> : vector<8x32xf32>
    %211 = tpu.matmul %210, %200, %cst_78 {dimension_numbers = #tpu.dot_dimension_numbers<[1], [0], [0], [1], [0, 0, 1, 1], [], []>} : vector<8x8xf32>, vector<8x32xf32>, vector<8x32xf32> -> vector<8x32xf32>
    %c24_79 = arith.constant 24 : index
    %c32_80 = arith.constant 32 : index
    %212 = vector.load %arg9[%c24_79, %c32_80] : memref<32x128xf32, #tpu.memory_space<vmem>>, vector<8x32xf32>
    tpu.vector_store %arg9[%c24_79, %c32_80], %211 {strides = array<i32>} : memref<32x128xf32, #tpu.memory_space<vmem>>, vector<8x32xf32>,
    %213 = vector.extract_strided_slice %2 {offsets = [24, 64], sizes = [8, 32], strides = [1, 1]} : vector<32x384xf32> to vector<8x32xf32>
    %214 = vector.extract_strided_slice %2 {offsets = [24, 192], sizes = [8, 32], strides = [1, 1]} : vector<32x384xf32> to vector<8x32xf32>
    %215 = vector.extract_strided_slice %2 {offsets = [24, 320], sizes = [8, 32], strides = [1, 1]} : vector<32x384xf32> to vector<8x32xf32>
    %cst_81 = arith.constant dense<0.000000e+00> : vector<8x8xf32>
    %216 = tpu.matmul %213, %214, %cst_81 {dimension_numbers = #tpu.dot_dimension_numbers<[1], [1], [0], [0], [0, 0, 1, 0], [], []>} : vector<8x32xf32>, vector<8x32xf32>, vector<8x8xf32> -> vector<8x8xf32>
    %cst_82 = arith.constant dense<0xFF800000> : vector<8xf32>
    %217 = vector.multi_reduction <maximumf>, %216, %cst_82 [1] : vector<8x8xf32> to vector<8xf32>
    %218 = vector.shape_cast %217 : vector<8xf32> to vector<8x1xf32>
    %219 = vector.broadcast %218 : vector<8x1xf32> to vector<8x8xf32>
    %220 = arith.subf %216, %219 : vector<8x8xf32>
    %221 = math.exp %220 : vector<8x8xf32>
    %cst_83 = arith.constant dense<0.000000e+00> : vector<8xf32>
    %222 = vector.multi_reduction <add>, %221, %cst_83 [1] : vector<8x8xf32> to vector<8xf32>
    %223 = vector.shape_cast %222 : vector<8xf32> to vector<8x1xf32>
    %224 = vector.broadcast %223 : vector<8x1xf32> to vector<8x8xf32>
    %225 = arith.divf %221, %224 : vector<8x8xf32>
    %cst_84 = arith.constant dense<0.000000e+00> : vector<8x32xf32>
    %226 = tpu.matmul %225, %215, %cst_84 {dimension_numbers = #tpu.dot_dimension_numbers<[1], [0], [0], [1], [0, 0, 1, 1], [], []>} : vector<8x8xf32>, vector<8x32xf32>, vector<8x32xf32> -> vector<8x32xf32>
    %c24_85 = arith.constant 24 : index
    %c64_86 = arith.constant 64 : index
    %227 = vector.load %arg9[%c24_85, %c64_86] : memref<32x128xf32, #tpu.memory_space<vmem>>, vector<8x32xf32>
    tpu.vector_store %arg9[%c24_85, %c64_86], %226 {strides = array<i32>} : memref<32x128xf32, #tpu.memory_space<vmem>>, vector<8x32xf32>,
    %228 = vector.extract_strided_slice %2 {offsets = [24, 96], sizes = [8, 32], strides = [1, 1]} : vector<32x384xf32> to vector<8x32xf32>
    %229 = vector.extract_strided_slice %2 {offsets = [24, 224], sizes = [8, 32], strides = [1, 1]} : vector<32x384xf32> to vector<8x32xf32>
    %230 = vector.extract_strided_slice %2 {offsets = [24, 352], sizes = [8, 32], strides = [1, 1]} : vector<32x384xf32> to vector<8x32xf32>
    %cst_87 = arith.constant dense<0.000000e+00> : vector<8x8xf32>
    %231 = tpu.matmul %228, %229, %cst_87 {dimension_numbers = #tpu.dot_dimension_numbers<[1], [1], [0], [0], [0, 0, 1, 0], [], []>} : vector<8x32xf32>, vector<8x32xf32>, vector<8x8xf32> -> vector<8x8xf32>
    %cst_88 = arith.constant dense<0xFF800000> : vector<8xf32>
    %232 = vector.multi_reduction <maximumf>, %231, %cst_88 [1] : vector<8x8xf32> to vector<8xf32>
    %233 = vector.shape_cast %232 : vector<8xf32> to vector<8x1xf32>
    %234 = vector.broadcast %233 : vector<8x1xf32> to vector<8x8xf32>
    %235 = arith.subf %231, %234 : vector<8x8xf32>
    %236 = math.exp %235 : vector<8x8xf32>
    %cst_89 = arith.constant dense<0.000000e+00> : vector<8xf32>
    %237 = vector.multi_reduction <add>, %236, %cst_89 [1] : vector<8x8xf32> to vector<8xf32>
    %238 = vector.shape_cast %237 : vector<8xf32> to vector<8x1xf32>
    %239 = vector.broadcast %238 : vector<8x1xf32> to vector<8x8xf32>
    %240 = arith.divf %236, %239 : vector<8x8xf32>
    %cst_90 = arith.constant dense<0.000000e+00> : vector<8x32xf32>
    %241 = tpu.matmul %240, %230, %cst_90 {dimension_numbers = #tpu.dot_dimension_numbers<[1], [0], [0], [1], [0, 0, 1, 1], [], []>} : vector<8x8xf32>, vector<8x32xf32>, vector<8x32xf32> -> vector<8x32xf32>
    %c24_91 = arith.constant 24 : index
    %c96_92 = arith.constant 96 : index
    %242 = vector.load %arg9[%c24_91, %c96_92] : memref<32x128xf32, #tpu.memory_space<vmem>>, vector<8x32xf32>
    tpu.vector_store %arg9[%c24_91, %c96_92], %241 {strides = array<i32>} : memref<32x128xf32, #tpu.memory_space<vmem>>, vector<8x32xf32>,
    %c0_93 = arith.constant 0 : index
    %c0_94 = arith.constant 0 : index
    %243 = vector.load %arg9[%c0_93, %c0_94] : memref<32x128xf32, #tpu.memory_space<vmem>>, vector<32x128xf32>
    %c0_95 = arith.constant 0 : index
    %c0_96 = arith.constant 0 : index
    %244 = vector.load %arg3[%c0_95, %c0_96] : memref<128x128xf32, #tpu.memory_space<vmem>>, vector<128x128xf32>
    %cst_97 = arith.constant dense<0.000000e+00> : vector<32x128xf32>
    %245 = tpu.matmul %243, %244, %cst_97 {dimension_numbers = #tpu.dot_dimension_numbers<[1], [0], [0], [1], [0, 0, 1, 1], [], []>} : vector<32x128xf32>, vector<128x128xf32>, vector<32x128xf32> -> vector<32x128xf32>
    %246 = arith.addf %0, %245 : vector<32x128xf32>
    %cst_98 = arith.constant dense<0.000000e+00> : vector<32xf32>
    %247 = vector.multi_reduction <add>, %246, %cst_98 [1] : vector<32x128xf32> to vector<32xf32>
    %248 = vector.shape_cast %247 : vector<32xf32> to vector<32x1xf32>
    %cst_99 = arith.constant 3.125000e-02 : f32
    %249 = vector.broadcast %cst_99 : f32 to vector<32x1xf32>
    %250 = arith.mulf %248, %249 : vector<32x1xf32>
    %251 = vector.broadcast %250 : vector<32x1xf32> to vector<32x128xf32>
    %252 = arith.subf %246, %251 : vector<32x128xf32>
    %253 = arith.mulf %252, %252 : vector<32x128xf32>
    %cst_100 = arith.constant dense<0.000000e+00> : vector<32xf32>
    %254 = vector.multi_reduction <add>, %253, %cst_100 [1] : vector<32x128xf32> to vector<32xf32>
    %255 = vector.shape_cast %254 : vector<32xf32> to vector<32x1xf32>
    %256 = arith.mulf %250, %250 : vector<32x1xf32>
    %cst_101 = arith.constant 9.600000e+01 : f32
    %257 = vector.broadcast %cst_101 : f32 to vector<32x1xf32>
    %258 = arith.mulf %257, %256 : vector<32x1xf32>
    %259 = arith.subf %255, %258 : vector<32x1xf32>
    %cst_102 = arith.constant 3.125000e-02 : f32
    %260 = vector.broadcast %cst_102 : f32 to vector<32x1xf32>
    %261 = arith.mulf %259, %260 : vector<32x1xf32>
    %cst_103 = arith.constant 9.99999974E-6 : f32
    %262 = vector.broadcast %cst_103 : f32 to vector<32x1xf32>
    %263 = arith.addf %261, %262 : vector<32x1xf32>
    %264 = math.rsqrt %263 : vector<32x1xf32>
    %265 = vector.broadcast %264 : vector<32x1xf32> to vector<32x128xf32>
    %266 = arith.mulf %252, %265 : vector<32x128xf32>
    %c0_104 = arith.constant 0 : index
    %c0_105 = arith.constant 0 : index
    %267 = vector.load %arg4[%c0_104, %c0_105] : memref<1x128xf32, #tpu.memory_space<vmem>>, vector<1x128xf32>
    %268 = vector.shape_cast %267 : vector<1x128xf32> to vector<128xf32>
    %269 = vector.shape_cast %268 : vector<128xf32> to vector<1x128xf32>
    %270 = vector.broadcast %269 : vector<1x128xf32> to vector<32x128xf32>
    %271 = arith.mulf %266, %270 : vector<32x128xf32>
    %c0_106 = arith.constant 0 : index
    %c0_107 = arith.constant 0 : index
    %272 = vector.load %arg5[%c0_106, %c0_107] : memref<1x128xf32, #tpu.memory_space<vmem>>, vector<1x128xf32>
    %273 = vector.shape_cast %272 : vector<1x128xf32> to vector<128xf32>
    %274 = vector.shape_cast %273 : vector<128xf32> to vector<1x128xf32>
    %275 = vector.broadcast %274 : vector<1x128xf32> to vector<32x128xf32>
    %276 = arith.addf %271, %275 : vector<32x128xf32>
    %277 = tpu.iota {dimensions = array<i32: 0>} : vector<32x1xi32>
    %c8_i32 = arith.constant 8 : i32
    %c0_i32 = arith.constant 0 : i32
    %278 = arith.cmpi eq, %c8_i32, %c0_i32 : i32
    %c1_i32 = arith.constant 1 : i32
    %279 = arith.select %278, %c1_i32, %c8_i32 : i32
    %280 = vector.broadcast %279 : i32 to vector<32x1xi32>
    %281 = arith.remsi %277, %280 : vector<32x1xi32>
    %c0_i32_108 = arith.constant 0 : i32
    %282 = vector.broadcast %c0_i32_108 : i32 to vector<32x1xi32>
    %283 = arith.cmpi ne, %281, %282 : vector<32x1xi32>
    %c0_i32_109 = arith.constant 0 : i32
    %284 = vector.broadcast %c0_i32_109 : i32 to vector<32x1xi32>
    %285 = arith.cmpi slt, %281, %284 : vector<32x1xi32>
    %c0_i32_110 = arith.constant 0 : i32
    %286 = arith.cmpi slt, %279, %c0_i32_110 : i32
    %287 = vector.broadcast %286 : i1 to vector<32x1xi1>
    %288 = vector.broadcast %287 : vector<32x1xi1> to vector<32x1xi1>
    %289 = arith.xori %285, %288 : vector<32x1xi1>
    %290 = arith.andi %289, %283 : vector<32x1xi1>
    %291 = vector.broadcast %279 : i32 to vector<32x1xi32>
    %292 = arith.addi %281, %291 : vector<32x1xi32>
    %293 = arith.select %290, %292, %281 : vector<32x1xi1>, vector<32x1xi32>
    %c1_i32_111 = arith.constant 1 : i32
    %294 = tpu.dynamic_rotate %276 by %c1_i32_111 dim 0 : vector<32x128xf32>, i32 -> vector<32x128xf32>
    %c-1_i32 = arith.constant -1 : i32
    %295 = vector.broadcast %c-1_i32 : i32 to vector<32x1xi32>
    %296 = arith.addi %293, %295 : vector<32x1xi32>
    %c0_i32_112 = arith.constant 0 : i32
    %297 = vector.broadcast %c0_i32_112 : i32 to vector<32x1xi32>
    %298 = arith.cmpi sge, %296, %297 : vector<32x1xi32>
    %c-1_i32_113 = arith.constant -1 : i32
    %299 = vector.broadcast %c-1_i32_113 : i32 to vector<32x1xi32>
    %300 = arith.addi %293, %299 : vector<32x1xi32>
    %c8_i32_114 = arith.constant 8 : i32
    %301 = vector.broadcast %c8_i32_114 : i32 to vector<32x1xi32>
    %302 = arith.cmpi slt, %300, %301 : vector<32x1xi32>
    %303 = arith.andi %298, %302 : vector<32x1xi1>
    %cst_115 = arith.constant 0.000000e+00 : f32
    %304 = vector.shape_cast %303 : vector<32x1xi1> to vector<32x1xi1>
    %305 = vector.broadcast %304 : vector<32x1xi1> to vector<32x128xi1>
    %306 = vector.broadcast %cst_115 : f32 to vector<32x128xf32>
    %307 = arith.select %305, %294, %306 : vector<32x128xi1>, vector<32x128xf32>
    %c0_116 = arith.constant 0 : index
    %c0_117 = arith.constant 0 : index
    %308 = vector.load %arg10[%c0_116, %c0_117] : memref<32x384xf32, #tpu.memory_space<vmem>>, vector<32x128xf32>
    tpu.vector_store %arg10[%c0_116, %c0_117], %307 {strides = array<i32>} : memref<32x384xf32, #tpu.memory_space<vmem>>, vector<32x128xf32>,
    %c0_118 = arith.constant 0 : index
    %c128 = arith.constant 128 : index
    %309 = vector.load %arg10[%c0_118, %c128] : memref<32x384xf32, #tpu.memory_space<vmem>>, vector<32x128xf32>
    tpu.vector_store %arg10[%c0_118, %c128], %276 {strides = array<i32>} : memref<32x384xf32, #tpu.memory_space<vmem>>, vector<32x128xf32>,
    %c31_i32 = arith.constant 31 : i32
    %310 = tpu.dynamic_rotate %276 by %c31_i32 dim 0 : vector<32x128xf32>, i32 -> vector<32x128xf32>
    %c1_i32_119 = arith.constant 1 : i32
    %311 = vector.broadcast %c1_i32_119 : i32 to vector<32x1xi32>
    %312 = arith.addi %293, %311 : vector<32x1xi32>
    %c0_i32_120 = arith.constant 0 : i32
    %313 = vector.broadcast %c0_i32_120 : i32 to vector<32x1xi32>
    %314 = arith.cmpi sge, %312, %313 : vector<32x1xi32>
    %c1_i32_121 = arith.constant 1 : i32
    %315 = vector.broadcast %c1_i32_121 : i32 to vector<32x1xi32>
    %316 = arith.addi %293, %315 : vector<32x1xi32>
    %c8_i32_122 = arith.constant 8 : i32
    %317 = vector.broadcast %c8_i32_122 : i32 to vector<32x1xi32>
    %318 = arith.cmpi slt, %316, %317 : vector<32x1xi32>
    %319 = arith.andi %314, %318 : vector<32x1xi1>
    %cst_123 = arith.constant 0.000000e+00 : f32
    %320 = vector.shape_cast %319 : vector<32x1xi1> to vector<32x1xi1>
    %321 = vector.broadcast %320 : vector<32x1xi1> to vector<32x128xi1>
    %322 = vector.broadcast %cst_123 : f32 to vector<32x128xf32>
    %323 = arith.select %321, %310, %322 : vector<32x128xi1>, vector<32x128xf32>
    %c0_124 = arith.constant 0 : index
    %c256 = arith.constant 256 : index
    %324 = vector.load %arg10[%c0_124, %c256] : memref<32x384xf32, #tpu.memory_space<vmem>>, vector<32x128xf32>
    tpu.vector_store %arg10[%c0_124, %c256], %323 {strides = array<i32>} : memref<32x384xf32, #tpu.memory_space<vmem>>, vector<32x128xf32>,
    %c0_125 = arith.constant 0 : index
    %c0_126 = arith.constant 0 : index
    %325 = vector.load %arg10[%c0_125, %c0_126] : memref<32x384xf32, #tpu.memory_space<vmem>>, vector<32x384xf32>
    %c0_127 = arith.constant 0 : index
    %c0_128 = arith.constant 0 : index
    %326 = vector.load %arg6[%c0_127, %c0_128] : memref<384x128xf32, #tpu.memory_space<vmem>>, vector<384x128xf32>
    %cst_129 = arith.constant dense<0.000000e+00> : vector<32x128xf32>
    %327 = tpu.matmul %325, %326, %cst_129 {dimension_numbers = #tpu.dot_dimension_numbers<[1], [0], [0], [1], [0, 0, 1, 1], [], []>} : vector<32x384xf32>, vector<384x128xf32>, vector<32x128xf32> -> vector<32x128xf32>
    %c0_130 = arith.constant 0 : index
    %c0_131 = arith.constant 0 : index
    %328 = vector.load %arg7[%c0_130, %c0_131] : memref<1x128xf32, #tpu.memory_space<vmem>>, vector<1x128xf32>
    %329 = vector.shape_cast %328 : vector<1x128xf32> to vector<128xf32>
    %330 = vector.shape_cast %329 : vector<128xf32> to vector<1x128xf32>
    %331 = vector.broadcast %330 : vector<1x128xf32> to vector<32x128xf32>
    %332 = arith.addf %327, %331 : vector<32x128xf32>
    %c0_132 = arith.constant 0 : index
    %c0_133 = arith.constant 0 : index
    %333 = vector.load %arg8[%c0_132, %c0_133] : memref<32x128xf32, #tpu.memory_space<vmem>>, vector<32x128xf32>
    tpu.vector_store %arg8[%c0_132, %c0_133], %332 {strides = array<i32>} : memref<32x128xf32, #tpu.memory_space<vmem>>, vector<32x128xf32>,
    return
  }
  func.func @transform_0(%arg0: i32) -> (i32, i32) {
    %c0_i32 = arith.constant 0 : i32
    %c0_i32_0 = arith.constant 0 : i32
    return %arg0, %c0_i32 : i32, i32
  }
  func.func @transform_1(%arg0: i32) -> (i32, i32) {
    %c0_i32 = arith.constant 0 : i32
    %c0_i32_0 = arith.constant 0 : i32
    %c0_i32_1 = arith.constant 0 : i32
    return %c0_i32, %c0_i32_0 : i32, i32
  }
  func.func @transform_2(%arg0: i32) -> (i32, i32) {
    %c0_i32 = arith.constant 0 : i32
    %c0_i32_0 = arith.constant 0 : i32
    %c0_i32_1 = arith.constant 0 : i32
    return %c0_i32, %c0_i32_0 : i32, i32
  }
  func.func @transform_3(%arg0: i32) -> (i32, i32) {
    %c0_i32 = arith.constant 0 : i32
    %c0_i32_0 = arith.constant 0 : i32
    %c0_i32_1 = arith.constant 0 : i32
    return %c0_i32, %c0_i32_0 : i32, i32
  }
  func.func @transform_4(%arg0: i32) -> (i32, i32) {
    %c0_i32 = arith.constant 0 : i32
    %c0_i32_0 = arith.constant 0 : i32
    %c0_i32_1 = arith.constant 0 : i32
    return %c0_i32, %c0_i32_0 : i32, i32
  }
  func.func @transform_5(%arg0: i32) -> (i32, i32) {
    %c0_i32 = arith.constant 0 : i32
    %c0_i32_0 = arith.constant 0 : i32
    %c0_i32_1 = arith.constant 0 : i32
    return %c0_i32, %c0_i32_0 : i32, i32
  }
  func.func @transform_6(%arg0: i32) -> (i32, i32) {
    %c0_i32 = arith.constant 0 : i32
    %c0_i32_0 = arith.constant 0 : i32
    %c0_i32_1 = arith.constant 0 : i32
    return %c0_i32, %c0_i32_0 : i32, i32
  }
  func.func @transform_7(%arg0: i32) -> (i32, i32) {
    %c0_i32 = arith.constant 0 : i32
    %c0_i32_0 = arith.constant 0 : i32
    return %arg0, %c0_i32 : i32, i32
  }
}

</mosaic_0001>

<llo_original>
// kernel: tpu_custom_call.1
$region0: #{tpu_custom_call.1}
  #allocation0 [shape = 'u32[]', space=smem, size = 0x4, offset = 0x4, fixed_abs, tag = 'smem constant byte address 0x4 - core index']
  #allocation1 [shape = 'u32[144,128]{1,0:T(1,128)}', space=vmem, size = 0x12000, scoped, tag = 'internal scratch']
  #allocation2 [shape = 'f32[32,128]{1,0:T(8,128)}', space=vmem, size = 0x4000, scoped, tag = 'scratch operand']
  #allocation3 [shape = 'f32[32,384]{1,0:T(8,128)}', space=vmem, size = 0xc000, scoped, tag = 'scratch operand']
  %s0 = inlined_call_operand.hbm [shape: f32[64,128], index: 0, kind: input, shape index: {}]
  %s1 = inlined_call_operand.hbm [shape: f32[128,384], index: 1, kind: input, shape index: {}]
  %s2 = inlined_call_operand.hbm [shape: f32[128,128], index: 2, kind: input, shape index: {}]
  %s3 = inlined_call_operand.vmem [shape: f32[1,128], index: 3, kind: input, shape index: {}]
  %s4 = inlined_call_operand.vmem [shape: f32[1,128], index: 4, kind: input, shape index: {}]
  %s5 = inlined_call_operand.hbm [shape: f32[384,128], index: 5, kind: input, shape index: {}]
  %s6 = inlined_call_operand.vmem [shape: f32[1,128], index: 6, kind: input, shape index: {}]
  %s7 = inlined_call_operand.hbm [shape: f32[64,128], index: 7, kind: output, shape index: {}]
  %s8 = sld [smem:[#allocation0]]
  $region77: #{tpu_custom_call.1} parent=0
    _
  %s10 = ssub.s32 1, %s8
  %s11 = scalar_select 0, %s10, %s8
  $region1: #{tpu_custom_call.1} parent=0
    #allocation4 [shape = 'u8[32768]{0}', space=vmem, size = 0x8000, scoped, tag = 'input window, operand 0']
    #allocation5 [shape = 's32[2]{0}', space=sflag, size = 0x8, scoped, tag = 'scoped memory for tpu_custom_call.1']
    #allocation6 [shape = 's32[2]{0}', space=sflag, size = 0x8, scoped, tag = 'scoped memory for tpu_custom_call.1']
    #allocation7 [shape = 'u8[196608]{0}', space=vmem, size = 0x30000, scoped, tag = 'input window, operand 1, single buffered']
    #allocation8 [shape = 's32[1]{0}', space=sflag, size = 0x4, scoped, tag = 'scoped memory for tpu_custom_call.1']
    #allocation9 [shape = 'u8[65536]{0}', space=vmem, size = 0x10000, scoped, tag = 'input window, operand 2, single buffered']
    #allocation10 [shape = 'u8[196608]{0}', space=vmem, size = 0x30000, scoped, tag = 'input window, operand 5, single buffered']
    #allocation11 [shape = 's32[1]{0}', space=sflag, size = 0x4, scoped, tag = 'scoped memory for tpu_custom_call.1']
    #allocation12 [shape = 'u8[32768]{0}', space=vmem, size = 0x8000, scoped, tag = 'output window, operand 0']
    %12 = vsyncpa [#allocation5], 0
    %s13 = scalar_lea.sflag [#allocation5], 1
    %14 = vsyncpa %s13, 0
    %15 = vsyncpa [#allocation8], 0
    %16 = vsyncpa [#allocation11], 0
    %17 = vsyncpa [#allocation6], 0
    %s18 = scalar_lea.sflag [#allocation6], 1
    %19 = vsyncpa %s18, 0
    loop: start=0, step=1, limit=4
    $region2: #{tpu_custom_call.1} parent=1 // loop_pre_header
      _
    $region3: #{tpu_custom_call.1} parent=1 // loop_header
      %s21 = sphi 0, %s25
      %p22 = scmp.ge.s32.totalorder %s21, 4
      %s31 = sphi 0, %s33
      %s34 = sphi 0, %s31
      %s35 = sphi 0, %s34
      %s51 = sphi 0, %s35
      %s55 = sphi 0, %s55
      %s57 = sphi 0, %s55
      %s58 = sphi 0, %s57
      %s72 = sphi 0, %s58
      %s76 = sphi 0, %s76
      %s78 = sphi 0, %s76
      %s79 = sphi 0, %s78
      %s93 = sphi 0, %s79
      %s97 = sphi 0, %s97
      %s99 = sphi 0, %s97
      %s100 = sphi 0, %s99
      %s114 = sphi 0, %s100
      %s118 = sphi 0, %s118
      %s120 = sphi 0, %s118
      %s121 = sphi 0, %s120
      %s135 = sphi 0, %s121
      %s139 = sphi 0, %s139
      %s141 = sphi 0, %s139
      %s142 = sphi 0, %s141
      %s156 = sphi 0, %s142
      %s160 = sphi 0, %s160
      %s162 = sphi 0, %s160
      %s163 = sphi 0, %s162
      %s177 = sphi 0, %s163
      %s183 = sphi 0, %s185
      %s186 = sphi 0, %s183
      %s187 = sphi 0, %s186
      %s203 = sphi 0, %s187
    $region4: #{tpu_custom_call.1} parent=1 // loop_header_branch
      %24 = sbr.rel (%p22) target = $region8
    $region5: #{tpu_custom_call.1} parent=1 // loop_body
      %s26 = ssub.s32 %s21, 1
      %s27 = ssub.s32 %s21, 2
      %s28 = sadd.s32 %s21, 1
      %s29 = ssub.s32 %s21, %s28
      %p30 = scmp.eq.s32.totalorder %s29, 0
      %s32 = sadd.s32 %s31, 1
      %s33 = scalar_select %p30, %s31, %s32
      %p36 = pneg %p30
      %p37 = scmp.eq.s32.totalorder %s21, 1
      %p38 = por %p36, %p37
      %p39 = scmp.ne.s32.totalorder %s31, %s34
      %p40 = scmp.eq.s32.totalorder %s21, 0
      %p41 = por %p39, %p40
      %p42 = scmp.ne.s32.totalorder %s31, %s34
      %p43 = scmp.eq.s32.totalorder %s26, 1
      %p44 = por %p42, %p43
      %p45 = scmp.ne.s32.totalorder %s34, %s35
      %p46 = scmp.eq.s32.totalorder %s26, 0
      %p47 = por %p45, %p46
      %p48 = scmp.ne.s32.totalorder %s34, %s35
      %p49 = scmp.eq.s32.totalorder %s27, 1
      %p50 = por %p48, %p49
      %p52 = scmp.ne.s32.totalorder %s35, %s51
      %p53 = scmp.eq.s32.totalorder %s27, 0
      %p54 = por %p52, %p53
      %s56 = sadd.s32 %s55, 1
      %p59 = scmp.eq.s32.totalorder %s21, 1
      %p60 = scmp.ne.s32.totalorder %s55, %s57
      %p61 = scmp.eq.s32.totalorder %s21, 0
      %p62 = por %p60, %p61
      %p63 = scmp.ne.s32.totalorder %s55, %s57
      %p64 = scmp.eq.s32.totalorder %s26, 1
      %p65 = por %p63, %p64
      %p66 = scmp.ne.s32.totalorder %s57, %s58
      %p67 = scmp.eq.s32.totalorder %s26, 0
      %p68 = por %p66, %p67
      %p69 = scmp.ne.s32.totalorder %s57, %s58
      %p70 = scmp.eq.s32.totalorder %s27, 1
      %p71 = por %p69, %p70
      %p73 = scmp.ne.s32.totalorder %s58, %s72
      %p74 = scmp.eq.s32.totalorder %s27, 0
      %p75 = por %p73, %p74
      %s77 = sadd.s32 %s76, 1
      %p80 = scmp.eq.s32.totalorder %s21, 1
      %p81 = scmp.ne.s32.totalorder %s76, %s78
      %p82 = scmp.eq.s32.totalorder %s21, 0
      %p83 = por %p81, %p82
      %p84 = scmp.ne.s32.totalorder %s76, %s78
      %p85 = scmp.eq.s32.totalorder %s26, 1
      %p86 = por %p84, %p85
      %p87 = scmp.ne.s32.totalorder %s78, %s79
      %p88 = scmp.eq.s32.totalorder %s26, 0
      %p89 = por %p87, %p88
      %p90 = scmp.ne.s32.totalorder %s78, %s79
      %p91 = scmp.eq.s32.totalorder %s27, 1
      %p92 = por %p90, %p91
      %p94 = scmp.ne.s32.totalorder %s79, %s93
      %p95 = scmp.eq.s32.totalorder %s27, 0
      %p96 = por %p94, %p95
      %s98 = sadd.s32 %s97, 1
      %p101 = scmp.eq.s32.totalorder %s21, 1
      %p102 = scmp.ne.s32.totalorder %s97, %s99
      %p103 = scmp.eq.s32.totalorder %s21, 0
      %p104 = por %p102, %p103
      %p105 = scmp.ne.s32.totalorder %s97, %s99
      %p106 = scmp.eq.s32.totalorder %s26, 1
      %p107 = por %p105, %p106
      %p108 = scmp.ne.s32.totalorder %s99, %s100
      %p109 = scmp.eq.s32.totalorder %s26, 0
      %p110 = por %p108, %p109
      %p111 = scmp.ne.s32.totalorder %s99, %s100
      %p112 = scmp.eq.s32.totalorder %s27, 1
      %p113 = por %p111, %p112
      %p115 = scmp.ne.s32.totalorder %s100, %s114
      %p116 = scmp.eq.s32.totalorder %s27, 0
      %p117 = por %p115, %p116
      %s119 = sadd.s32 %s118, 1
      %p122 = scmp.eq.s32.totalorder %s21, 1
      %p123 = scmp.ne.s32.totalorder %s118, %s120
      %p124 = scmp.eq.s32.totalorder %s21, 0
      %p125 = por %p123, %p124
      %p126 = scmp.ne.s32.totalorder %s118, %s120
      %p127 = scmp.eq.s32.totalorder %s26, 1
      %p128 = por %p126, %p127
      %p129 = scmp.ne.s32.totalorder %s120, %s121
      %p130 = scmp.eq.s32.totalorder %s26, 0
      %p131 = por %p129, %p130
      %p132 = scmp.ne.s32.totalorder %s120, %s121
      %p133 = scmp.eq.s32.totalorder %s27, 1
      %p134 = por %p132, %p133
      %p136 = scmp.ne.s32.totalorder %s121, %s135
      %p137 = scmp.eq.s32.totalorder %s27, 0
      %p138 = por %p136, %p137
      %s140 = sadd.s32 %s139, 1
      %p143 = scmp.eq.s32.totalorder %s21, 1
      %p144 = scmp.ne.s32.totalorder %s139, %s141
      %p145 = scmp.eq.s32.totalorder %s21, 0
      %p146 = por %p144, %p145
      %p147 = scmp.ne.s32.totalorder %s139, %s141
      %p148 = scmp.eq.s32.totalorder %s26, 1
      %p149 = por %p147, %p148
      %p150 = scmp.ne.s32.totalorder %s141, %s142
      %p151 = scmp.eq.s32.totalorder %s26, 0
      %p152 = por %p150, %p151
      %p153 = scmp.ne.s32.totalorder %s141, %s142
      %p154 = scmp.eq.s32.totalorder %s27, 1
      %p155 = por %p153, %p154
      %p157 = scmp.ne.s32.totalorder %s142, %s156
      %p158 = scmp.eq.s32.totalorder %s27, 0
      %p159 = por %p157, %p158
      %s161 = sadd.s32 %s160, 1
      %p164 = scmp.eq.s32.totalorder %s21, 1
      %p165 = scmp.ne.s32.totalorder %s160, %s162
      %p166 = scmp.eq.s32.totalorder %s21, 0
      %p167 = por %p165, %p166
      %p168 = scmp.ne.s32.totalorder %s160, %s162
      %p169 = scmp.eq.s32.totalorder %s26, 1
      %p170 = por %p168, %p169
      %p171 = scmp.ne.s32.totalorder %s162, %s163
      %p172 = scmp.eq.s32.totalorder %s26, 0
      %p173 = por %p171, %p172
      %p174 = scmp.ne.s32.totalorder %s162, %s163
      %p175 = scmp.eq.s32.totalorder %s27, 1
      %p176 = por %p174, %p175
      %p178 = scmp.ne.s32.totalorder %s163, %s177
      %p179 = scmp.eq.s32.totalorder %s27, 0
      %p180 = por %p178, %p179
      %s181 = ssub.s32 %s21, %s28
      %p182 = scmp.eq.s32.totalorder %s181, 0
      %s184 = sadd.s32 %s183, 1
      %s185 = scalar_select %p182, %s183, %s184
      %p188 = pneg %p182
      %p189 = scmp.eq.s32.totalorder %s21, 1
      %p190 = por %p188, %p189
      %p191 = scmp.ne.s32.totalorder %s183, %s186
      %p192 = scmp.eq.s32.totalorder %s21, 0
      %p193 = por %p191, %p192
      %p194 = scmp.ne.s32.totalorder %s183, %s186
      %p195 = scmp.eq.s32.totalorder %s26, 1
      %p196 = por %p194, %p195
      %p197 = scmp.ne.s32.totalorder %s186, %s187
      %p198 = scmp.eq.s32.totalorder %s26, 0
      %p199 = por %p197, %p198
      %p200 = scmp.ne.s32.totalorder %s186, %s187
      %p201 = scmp.eq.s32.totalorder %s27, 1
      %p202 = por %p200, %p201
      %p204 = scmp.ne.s32.totalorder %s187, %s203
      %p205 = scmp.eq.s32.totalorder %s27, 0
      %p206 = por %p204, %p205
      %p207 = scmp.le.s32.totalorder 1, %s21
      %p208 = scmp.lt.s32.totalorder %s21, 3
      %p209 = pnand %p207, %p208
      %p210 = pneg %p209
      // Predicated region
      $region9: #{tpu_custom_call.1} parent=5 // pred_check
        _
      $region10: #{tpu_custom_call.1} parent=5 // pred_check_branch
        %212 = sbr.rel (%p209) target = $region12
      $region11: #{tpu_custom_call.1} parent=5 // pred_region
        %s213 = ssub.s32 %s21, 1
        // Predicated region
        $region13: #{tpu_custom_call.1} parent=11 // pred_check
          %p214 = pneg %p68
        $region14: #{tpu_custom_call.1} parent=11 // pred_check_branch
          %216 = sbr.rel (%p214) target = $region16
        $region15: #{tpu_custom_call.1} parent=11 // pred_region
          %s218 = ssub.s32 6144, 6144
          %219 = vsyncadd [#allocation8], %s218
          %s220 = sshll.u32 [#allocation7], 4
          %s221 = int_to_ptr.vmem [resolvable:$true] %s220
          %226 = dma.hbm_to_vmem [thread:$0]  %s1, 6144, %s221, [#allocation8], 384, 384, 24
        $region16: #{tpu_custom_call.1} parent=11 // pred_fallthru
          _
        // Predicated region
        $region17: #{tpu_custom_call.1} parent=11 // pred_check
          %p227 = pneg %p89
        $region18: #{tpu_custom_call.1} parent=11 // pred_check_branch
          %229 = sbr.rel (%p227) target = $region20
        $region19: #{tpu_custom_call.1} parent=11 // pred_region
          %s231 = ssub.s32 2048, 2048
          %232 = vsyncadd [#allocation8], %s231
          %s233 = sshll.u32 [#allocation9], 4
          %s234 = int_to_ptr.vmem [resolvable:$true] %s233
          %239 = dma.hbm_to_vmem [thread:$0]  %s2, 2048, %s234, [#allocation8], 128, 128, 8
        $region20: #{tpu_custom_call.1} parent=11 // pred_fallthru
          _
        // Predicated region
        $region21: #{tpu_custom_call.1} parent=11 // pred_check
          %p240 = pneg %p110
        $region22: #{tpu_custom_call.1} parent=11 // pred_check_branch
          %242 = sbr.rel (%p240) target = $region24
        $region23: #{tpu_custom_call.1} parent=11 // pred_region
          _
        $region24: #{tpu_custom_call.1} parent=11 // pred_fallthru
          _
        // Predicated region
        $region25: #{tpu_custom_call.1} parent=11 // pred_check
          %p243 = pneg %p131
        $region26: #{tpu_custom_call.1} parent=11 // pred_check_branch
          %245 = sbr.rel (%p243) target = $region28
        $region27: #{tpu_custom_call.1} parent=11 // pred_region
          _
        $region28: #{tpu_custom_call.1} parent=11 // pred_fallthru
          _
        // Predicated region
        $region29: #{tpu_custom_call.1} parent=11 // pred_check
          %p246 = pneg %p152
        $region30: #{tpu_custom_call.1} parent=11 // pred_check_branch
          %248 = sbr.rel (%p246) target = $region32
        $region31: #{tpu_custom_call.1} parent=11 // pred_region
          %s250 = ssub.s32 6144, 6144
          %251 = vsyncadd [#allocation11], %s250
          %s252 = sshll.u32 [#allocation10], 4
          %s253 = int_to_ptr.vmem [resolvable:$true] %s252
          %258 = dma.hbm_to_vmem [thread:$0]  %s5, 6144, %s253, [#allocation11], 128, 128, 8
        $region32: #{tpu_custom_call.1} parent=11 // pred_fallthru
          _
        // Predicated region
        $region33: #{tpu_custom_call.1} parent=11 // pred_check
          %p259 = pneg %p173
        $region34: #{tpu_custom_call.1} parent=11 // pred_check_branch
          %261 = sbr.rel (%p259) target = $region36
        $region35: #{tpu_custom_call.1} parent=11 // pred_region
          _
        $region36: #{tpu_custom_call.1} parent=11 // pred_fallthru
          _
      $region12: #{tpu_custom_call.1} parent=5 // pred_fallthru
        _
      %p262 = scmp.lt.s32.totalorder %s21, 2
      // Predicated region
      $region37: #{tpu_custom_call.1} parent=5 // pred_check
        %p263 = pneg %p262
      $region38: #{tpu_custom_call.1} parent=5 // pred_check_branch
        %265 = sbr.rel (%p263) target = $region40
      $region39: #{tpu_custom_call.1} parent=5 // pred_region
        // Predicated region
        $region41: #{tpu_custom_call.1} parent=39 // pred_check
          %p266 = pneg %p41
        $region42: #{tpu_custom_call.1} parent=39 // pred_check_branch
          %268 = sbr.rel (%p266) target = $region44
        $region43: #{tpu_custom_call.1} parent=39 // pred_region
          %s269 = sand.u32 %s31, 1
          %s270 = scalar_lea.sflag [#allocation5], %s269
          %s271 = sand.u32 %s31, 1
          %s272 = smul.addr %s271, 32
          %s273 = scalar_lea.vmem [#allocation4], %s272
          %s274 = smul.u32 4, %s21
          %s276 = ssub.s32 512, 512
          %277 = vsyncadd %s270, %s276
          %s278 = smul.addr %s274, 128
          %s279 = scalar_lea.hbm %s0, %s278
          %s280 = sshll.u32 %s273, 4
          %s281 = int_to_ptr.vmem [resolvable:$true] %s280
          %286 = dma.hbm_to_vmem [thread:$0]  %s279, 512, %s281, %s270, 128, 128, 8
        $region44: #{tpu_custom_call.1} parent=39 // pred_fallthru
          _
      $region40: #{tpu_custom_call.1} parent=5 // pred_fallthru
        _
      %p287 = scmp.le.s32.totalorder 1, %s21
      %p288 = scmp.lt.s32.totalorder %s21, 3
      %p289 = pnand %p287, %p288
      %p290 = pneg %p289
      // Predicated region
      $region45: #{tpu_custom_call.1} parent=5 // pred_check
        _
      $region46: #{tpu_custom_call.1} parent=5 // pred_check_branch
        %292 = sbr.rel (%p289) target = $region48
      $region47: #{tpu_custom_call.1} parent=5 // pred_region
        %s293 = ssub.s32 %s21, 1
        %s294 = sand.u32 %s34, 1
        %s295 = scalar_lea.sflag [#allocation5], %s294
        %s296 = sand.u32 %s34, 1
        %s297 = smul.addr %s296, 32
        %s298 = scalar_lea.vmem [#allocation4], %s297
        // Predicated region
        $region49: #{tpu_custom_call.1} parent=47 // pred_check
          %p299 = pneg %p47
        $region50: #{tpu_custom_call.1} parent=47 // pred_check_branch
          %301 = sbr.rel (%p299) target = $region52
        $region51: #{tpu_custom_call.1} parent=47 // pred_region
          %302 = dma.done %s295, 512
        $region52: #{tpu_custom_call.1} parent=47 // pred_fallthru
          _
        // Predicated region
        $region53: #{tpu_custom_call.1} parent=47 // pred_check
          %p303 = pneg %p68
        $region54: #{tpu_custom_call.1} parent=47 // pred_check_branch
          %305 = sbr.rel (%p303) target = $region56
        $region55: #{tpu_custom_call.1} parent=47 // pred_region
          %306 = dma.done [#allocation8], 6144
        $region56: #{tpu_custom_call.1} parent=47 // pred_fallthru
          _
        // Predicated region
        $region57: #{tpu_custom_call.1} parent=47 // pred_check
          %p307 = pneg %p89
        $region58: #{tpu_custom_call.1} parent=47 // pred_check_branch
          %309 = sbr.rel (%p307) target = $region60
        $region59: #{tpu_custom_call.1} parent=47 // pred_region
          %310 = dma.done [#allocation8], 2048
        $region60: #{tpu_custom_call.1} parent=47 // pred_fallthru
          _
        // Predicated region
        $region61: #{tpu_custom_call.1} parent=47 // pred_check
          %p311 = pneg %p152
        $region62: #{tpu_custom_call.1} parent=47 // pred_check_branch
          %313 = sbr.rel (%p311) target = $region64
        $region63: #{tpu_custom_call.1} parent=47 // pred_region
          %314 = dma.done [#allocation11], 6144
        $region64: #{tpu_custom_call.1} parent=47 // pred_fallthru
          _
        %s315 = sand.u32 %s34, 1
        %s316 = scalar_lea.sflag [#allocation5], %s315
        %s317 = sand.u32 %s34, 1
        %s318 = smul.addr %s317, 32
        %s319 = scalar_lea.vmem [#allocation4], %s318
        %p320 = pneg %p47
        %p321 = pneg %p44
        %p322 = pneg %p68
        %p323 = pneg %p65
        %p324 = pneg %p89
        %p325 = pneg %p86
        %p326 = pneg %p110
        %p327 = pneg %p107
        %p328 = pneg %p131
        %p329 = pneg %p128
        %p330 = pneg %p152
        %p331 = pneg %p149
        %p332 = pneg %p173
        %p333 = pneg %p170
        %p334 = pneg %p199
        %p335 = pneg %p196
        %s336 = sand.u32 %s186, 1
        %s337 = scalar_lea.sflag [#allocation6], %s336
        %s338 = sand.u32 %s186, 1
        %s339 = smul.addr %s338, 32
        %s340 = scalar_lea.vmem [#allocation12], %s339
        %s341 = smul.u32 4, %s26
        %s342 = smul.u32 4, %s26
        %v343 = vld [vmem:[%s298] sm:$0xff]
        %v344 = vld [vmem:[%s298 + $0x8] sm:$0xff]
        %v345 = vld [vmem:[%s298 + $0x10] sm:$0xff]
        %v346 = vld [vmem:[%s298 + $0x18] sm:$0xff]
        %v347 = vld [vmem:[#allocation7] sm:$0xff]
        %v348 = vld [vmem:[#allocation7 + $0x8] sm:$0xff]
        %v349 = vld [vmem:[#allocation7 + $0x10] sm:$0xff]
        %v350 = vld [vmem:[#allocation7 + $0x18] sm:$0xff]
        %v351 = vld [vmem:[#allocation7 + $0x20] sm:$0xff]
        %v352 = vld [vmem:[#allocation7 + $0x28] sm:$0xff]
        %v353 = vld [vmem:[#allocation7 + $0x30] sm:$0xff]
        %v354 = vld [vmem:[#allocation7 + $0x38] sm:$0xff]
        %v355 = vld [vmem:[#allocation7 + $0x40] sm:$0xff]
        %v356 = vld [vmem:[#allocation7 + $0x48] sm:$0xff]
        %v357 = vld [vmem:[#allocation7 + $0x50] sm:$0xff]
        %v358 = vld [vmem:[#allocation7 + $0x58] sm:$0xff]
        %v359 = vld [vmem:[#allocation7 + $0x60] sm:$0xff]
        %v360 = vld [vmem:[#allocation7 + $0x68] sm:$0xff]
        %v361 = vld [vmem:[#allocation7 + $0x70] sm:$0xff]
        %v362 = vld [vmem:[#allocation7 + $0x78] sm:$0xff]
        %v363 = vld [vmem:[#allocation7 + $0x80] sm:$0xff]
        %v364 = vld [vmem:[#allocation7 + $0x88] sm:$0xff]
        %v365 = vld [vmem:[#allocation7 + $0x90] sm:$0xff]
        %v366 = vld [vmem:[#allocation7 + $0x98] sm:$0xff]
        %v367 = vld [vmem:[#allocation7 + $0xa0] sm:$0xff]
        %v368 = vld [vmem:[#allocation7 + $0xa8] sm:$0xff]
        %v369 = vld [vmem:[#allocation7 + $0xb0] sm:$0xff]
        %v370 = vld [vmem:[#allocation7 + $0xb8] sm:$0xff]
        %v371 = vld [vmem:[#allocation7 + $0xc0] sm:$0xff]
        %v372 = vld [vmem:[#allocation7 + $0xc8] sm:$0xff]
        %v373 = vld [vmem:[#allocation7 + $0xd0] sm:$0xff]
        %v374 = vld [vmem:[#allocation7 + $0xd8] sm:$0xff]
        %v375 = vld [vmem:[#allocation7 + $0xe0] sm:$0xff]
        %v376 = vld [vmem:[#allocation7 + $0xe8] sm:$0xff]
        %v377 = vld [vmem:[#allocation7 + $0xf0] sm:$0xff]
        %v378 = vld [vmem:[#allocation7 + $0xf8] sm:$0xff]
        %v379 = vld [vmem:[#allocation7 + $0x100] sm:$0xff]
        %v380 = vld [vmem:[#allocation7 + $0x108] sm:$0xff]
        %v381 = vld [vmem:[#allocation7 + $0x110] sm:$0xff]
        %v382 = vld [vmem:[#allocation7 + $0x118] sm:$0xff]
        %v383 = vld [vmem:[#allocation7 + $0x120] sm:$0xff]
        %v384 = vld [vmem:[#allocation7 + $0x128] sm:$0xff]
        %v385 = vld [vmem:[#allocation7 + $0x130] sm:$0xff]
        %v386 = vld [vmem:[#allocation7 + $0x138] sm:$0xff]
        %v387 = vld [vmem:[#allocation7 + $0x140] sm:$0xff]
        %v388 = vld [vmem:[#allocation7 + $0x148] sm:$0xff]
        %v389 = vld [vmem:[#allocation7 + $0x150] sm:$0xff]
        %v390 = vld [vmem:[#allocation7 + $0x158] sm:$0xff]
        %v391 = vld [vmem:[#allocation7 + $0x160] sm:$0xff]
        %v392 = vld [vmem:[#allocation7 + $0x168] sm:$0xff]
        %v393 = vld [vmem:[#allocation7 + $0x170] sm:$0xff]
        %v394 = vld [vmem:[#allocation7 + $0x178] sm:$0xff]
        %395 = vmatprep.subr.mxu0 %v393
        %396 = vmatpush1.msra.mxu0 %v392
        %397 = vmatprep.subr.mxu0 %v390
        %398 = vmatpush1.msra.mxu0 %v389
        %399 = vmatprep.subr.mxu0 %v387
        %400 = vmatpush1.msra.mxu0 %v386
        %401 = vmatprep.subr.mxu0 %v384
        %402 = vmatpush1.msra.mxu0 %v383
        %403 = vmatprep.subr.mxu0 %v381
        %404 = vmatpush1.msra.mxu0 %v380
        %405 = vmatprep.subr.mxu0 %v378
        %406 = vmatpush1.msra.mxu0 %v377
        %407 = vmatprep.subr.mxu0 %v375
        %408 = vmatpush1.msra.mxu0 %v374
        %409 = vmatprep.subr.mxu0 %v372
        %410 = vmatpush1.msra.mxu0 %v371
        %411 = vmatprep.subr.mxu0 %v369
        %412 = vmatpush1.msra.mxu0 %v368
        %413 = vmatprep.subr.mxu0 %v366
        %414 = vmatpush1.msra.mxu0 %v365
        %415 = vmatprep.subr.mxu0 %v363
        %416 = vmatpush1.msra.mxu0 %v362
        %417 = vmatprep.subr.mxu0 %v360
        %418 = vmatpush1.msra.mxu0 %v359
        %419 = vmatprep.subr.mxu0 %v357
        %420 = vmatpush1.msra.mxu0 %v356
        %421 = vmatprep.subr.mxu0 %v354
        %422 = vmatpush1.msra.mxu0 %v353
        %423 = vmatprep.subr.mxu0 %v351
        %424 = vmatpush1.msra.mxu0 %v350
        %425 = vmatprep.subr.mxu0 %v348
        %426 = vmatpush1.msra.mxu0 %v347
        %427 = vmatprep.subr.mxu0 0.0
        %428 = vmatpush2.msra.mxu0 0.0
        %429 = vmatprep.subr.mxu0 0.0
        %430 = vmatpush2.msra.mxu0 0.0
        %431 = vmatprep.subr.mxu0 0.0
        %432 = vmatpush2.msra.mxu0 0.0
        %433 = vmatprep.subr.mxu0 0.0
        %434 = vmatpush2.msra.mxu0 0.0
        %435 = vmatprep.subr.mxu0 0.0
        %436 = vmatpush2.msra.mxu0 0.0
        %437 = vmatprep.subr.mxu0 0.0
        %438 = vmatpush2.msra.mxu0 0.0
        %439 = vmatprep.subr.mxu0 0.0
        %440 = vmatpush2.msra.mxu0 0.0
        %441 = vmatprep.subr.mxu0 0.0
        %442 = vmatpush2.msra.mxu0 0.0
        %443 = vmatprep.subr.mxu0 0.0
        %444 = vmatpush2.msra.mxu0 0.0
        %445 = vmatprep.subr.mxu0 0.0
        %446 = vmatpush2.msra.mxu0 0.0
        %447 = vmatprep.subr.mxu0 0.0
        %448 = vmatpush2.msra.mxu0 0.0
        %449 = vmatprep.subr.mxu0 0.0
        %450 = vmatpush2.msra.mxu0 0.0
        %451 = vmatprep.subr.mxu0 0.0
        %452 = vmatpush2.msra.mxu0 0.0
        %453 = vmatprep.subr.mxu0 0.0
        %454 = vmatpush2.msra.mxu0 0.0
        %455 = vmatprep.subr.mxu0 0.0
        %456 = vmatpush2.msra.mxu0 0.0
        %457 = vmatprep.subr.mxu0 0.0
        %458 = vmatpush2.msra.mxu0 0.0
        %459 = vmatprep.mubr.f32.mxu0 0.0
        %460 = vmatmul.mubr.f32.gmra.mxu0 %v343
        %v461 = vpop.f32.mrf.mxu0
        %v462 = vadd.f32 0.0, %v461
        %v463 = vpop.f32.mrf.mxu0
        %v464 = vadd.f32 0.0, %v463
        %465 = vmatprep.mubr.f32.mxu0 0.0
        %466 = vmatmul.mubr.f32.gmra.mxu0 %v344
        %v467 = vpop.f32.mrf.mxu0
        %v468 = vadd.f32 0.0, %v467
        %v469 = vpop.f32.mrf.mxu0
        %v470 = vadd.f32 0.0, %v469
        %471 = vmatprep.mubr.f32.mxu0 0.0
        %472 = vmatmul.mubr.f32.gmra.mxu0 %v345
        %v473 = vpop.f32.mrf.mxu0
        %v474 = vadd.f32 0.0, %v473
        %v475 = vpop.f32.mrf.mxu0
        %v476 = vadd.f32 0.0, %v475
        %477 = vmatprep.mubr.f32.mxu0 0.0
        %478 = vmatmul.mubr.f32.gmra.mxu0 %v346
        %v479 = vpop.f32.mrf.mxu0
        %v480 = vadd.f32 0.0, %v479
        %v481 = vpop.f32.mrf.mxu0
        %v482 = vadd.f32 0.0, %v481
        %483 = vdwg.mxu0
        %484 = vmatprep.subr.mxu0 0.0
        %485 = vmatpush1.msra.mxu0 %v394
        %486 = vmatprep.subr.mxu0 0.0
        %487 = vmatpush1.msra.mxu0 %v391
        %488 = vmatprep.subr.mxu0 0.0
        %489 = vmatpush1.msra.mxu0 %v388
        %490 = vmatprep.subr.mxu0 0.0
        %491 = vmatpush1.msra.mxu0 %v385
        %492 = vmatprep.subr.mxu0 0.0
        %493 = vmatpush1.msra.mxu0 %v382
        %494 = vmatprep.subr.mxu0 0.0
        %495 = vmatpush1.msra.mxu0 %v379
        %496 = vmatprep.subr.mxu0 0.0
        %497 = vmatpush1.msra.mxu0 %v376
        %498 = vmatprep.subr.mxu0 0.0
        %499 = vmatpush1.msra.mxu0 %v373
        %500 = vmatprep.subr.mxu0 0.0
        %501 = vmatpush1.msra.mxu0 %v370
        %502 = vmatprep.subr.mxu0 0.0
        %503 = vmatpush1.msra.mxu0 %v367
        %504 = vmatprep.subr.mxu0 0.0
        %505 = vmatpush1.msra.mxu0 %v364
        %506 = vmatprep.subr.mxu0 0.0
        %507 = vmatpush1.msra.mxu0 %v361
        %508 = vmatprep.subr.mxu0 0.0
        %509 = vmatpush1.msra.mxu0 %v358
        %510 = vmatprep.subr.mxu0 0.0
        %511 = vmatpush1.msra.mxu0 %v355
        %512 = vmatprep.subr.mxu0 0.0
        %513 = vmatpush1.msra.mxu0 %v352
        %514 = vmatprep.subr.mxu0 0.0
        %515 = vmatpush1.msra.mxu0 %v349
        %516 = vmatprep.subr.mxu0 0.0
        %517 = vmatpush2.msra.mxu0 0.0
        %518 = vmatprep.subr.mxu0 0.0
        %519 = vmatpush2.msra.mxu0 0.0
        %520 = vmatprep.subr.mxu0 0.0
        %521 = vmatpush2.msra.mxu0 0.0
        %522 = vmatprep.subr.mxu0 0.0
        %523 = vmatpush2.msra.mxu0 0.0
        %524 = vmatprep.subr.mxu0 0.0
        %525 = vmatpush2.msra.mxu0 0.0
        %526 = vmatprep.subr.mxu0 0.0
        %527 = vmatpush2.msra.mxu0 0.0
        %528 = vmatprep.subr.mxu0 0.0
        %529 = vmatpush2.msra.mxu0 0.0
        %530 = vmatprep.subr.mxu0 0.0
        %531 = vmatpush2.msra.mxu0 0.0
        %532 = vmatprep.subr.mxu0 0.0
        %533 = vmatpush2.msra.mxu0 0.0
        %534 = vmatprep.subr.mxu0 0.0
        %535 = vmatpush2.msra.mxu0 0.0
        %536 = vmatprep.subr.mxu0 0.0
        %537 = vmatpush2.msra.mxu0 0.0
        %538 = vmatprep.subr.mxu0 0.0
        %539 = vmatpush2.msra.mxu0 0.0
        %540 = vmatprep.subr.mxu0 0.0
        %541 = vmatpush2.msra.mxu0 0.0
        %542 = vmatprep.subr.mxu0 0.0
        %543 = vmatpush2.msra.mxu0 0.0
        %544 = vmatprep.subr.mxu0 0.0
        %545 = vmatpush2.msra.mxu0 0.0
        %546 = vmatprep.subr.mxu0 0.0
        %547 = vmatpush2.msra.mxu0 0.0
        %548 = vmatprep.mubr.f32.mxu0 0.0
        %549 = vmatmul.mubr.f32.gmra.mxu0 %v343
        %v550 = vpop.f32.mrf.mxu0
        %v551 = vadd.f32 0.0, %v550
        %v552 = vpop.f32.mrf.mxu0
        %553 = vmatprep.mubr.f32.mxu0 0.0
        %554 = vmatmul.mubr.f32.gmra.mxu0 %v344
        %v555 = vpop.f32.mrf.mxu0
        %v556 = vadd.f32 0.0, %v555
        %v557 = vpop.f32.mrf.mxu0
        %558 = vmatprep.mubr.f32.mxu0 0.0
        %559 = vmatmul.mubr.f32.gmra.mxu0 %v345
        %v560 = vpop.f32.mrf.mxu0
        %v561 = vadd.f32 0.0, %v560
        %v562 = vpop.f32.mrf.mxu0
        %563 = vmatprep.mubr.f32.mxu0 0.0
        %564 = vmatmul.mubr.f32.gmra.mxu0 %v346
        %v565 = vpop.f32.mrf.mxu0
        %v566 = vadd.f32 0.0, %v565
        %v567 = vpop.f32.mrf.mxu0
        %568 = vdwg.mxu0
        %vm569 = vcmask 261120
        %v571 = vsel %vm569, %v462, 0
        %v574 = vsel %vm569, %v464, 0
        %576 = vmatprep.subr.mxu0 0.0
        %577 = vmatpush1.xpose.msra.mxu0 0.0
        %578 = vmatprep.subr.mxu0 0.0
        %579 = vmatpush1.xpose.msra.mxu0 0.0
        %580 = vmatprep.subr.mxu0 0.0
        %581 = vmatpush1.xpose.msra.mxu0 0.0
        %582 = vmatprep.subr.mxu0 0.0
        %583 = vmatpush1.xpose.msra.mxu0 0.0
        %584 = vmatprep.subr.mxu0 0.0
        %585 = vmatpush1.xpose.msra.mxu0 0.0
        %586 = vmatprep.subr.mxu0 0.0
        %587 = vmatpush1.xpose.msra.mxu0 0.0
        %588 = vmatprep.subr.mxu0 0.0
        %589 = vmatpush1.xpose.msra.mxu0 0.0
        %590 = vmatprep.subr.mxu0 0.0
        %591 = vmatpush1.xpose.msra.mxu0 0.0
        %592 = vmatprep.subr.mxu0 0.0
        %593 = vmatpush1.xpose.msra.mxu0 0.0
        %594 = vmatprep.subr.mxu0 0.0
        %595 = vmatpush1.xpose.msra.mxu0 0.0
        %596 = vmatprep.subr.mxu0 0.0
        %597 = vmatpush1.xpose.msra.mxu0 0.0
        %598 = vmatprep.subr.mxu0 0.0
        %599 = vmatpush1.xpose.msra.mxu0 0.0
        %600 = vmatprep.subr.mxu0 0.0
        %601 = vmatpush1.xpose.msra.mxu0 0.0
        %602 = vmatprep.subr.mxu0 0.0
        %603 = vmatpush1.xpose.msra.mxu0 0.0
        %604 = vmatprep.subr.mxu0 0.0
        %605 = vmatpush1.xpose.msra.mxu0 0.0
        %606 = vmatprep.subr.mxu0 0.0
        %607 = vmatpush1.xpose.msra.mxu0 %v574
        %608 = vmatprep.subr.mxu0 0.0
        %609 = vmatpush2.xpose.msra.mxu0 0.0
        %610 = vmatprep.subr.mxu0 0.0
        %611 = vmatpush2.xpose.msra.mxu0 0.0
        %612 = vmatprep.subr.mxu0 0.0
        %613 = vmatpush2.xpose.msra.mxu0 0.0
        %614 = vmatprep.subr.mxu0 0.0
        %615 = vmatpush2.xpose.msra.mxu0 0.0
        %616 = vmatprep.subr.mxu0 0.0
        %617 = vmatpush2.xpose.msra.mxu0 0.0
        %618 = vmatprep.subr.mxu0 0.0
        %619 = vmatpush2.xpose.msra.mxu0 0.0
        %620 = vmatprep.subr.mxu0 0.0
        %621 = vmatpush2.xpose.msra.mxu0 0.0
        %622 = vmatprep.subr.mxu0 0.0
        %623 = vmatpush2.xpose.msra.mxu0 0.0
        %624 = vmatprep.subr.mxu0 0.0
        %625 = vmatpush2.xpose.msra.mxu0 0.0
        %626 = vmatprep.subr.mxu0 0.0
        %627 = vmatpush2.xpose.msra.mxu0 0.0
        %628 = vmatprep.subr.mxu0 0.0
        %629 = vmatpush2.xpose.msra.mxu0 0.0
        %630 = vmatprep.subr.mxu0 0.0
        %631 = vmatpush2.xpose.msra.mxu0 0.0
        %632 = vmatprep.subr.mxu0 0.0
        %633 = vmatpush2.xpose.msra.mxu0 0.0
        %634 = vmatprep.subr.mxu0 0.0
        %635 = vmatpush2.xpose.msra.mxu0 0.0
        %636 = vmatprep.subr.mxu0 0.0
        %637 = vmatpush2.xpose.msra.mxu0 0.0
        %638 = vmatprep.subr.mxu0 0.0
        %639 = vmatpush2.xpose.msra.mxu0 0.0
        %640 = vmatprep.mubr.f32.mxu0 0.0
        %641 = vmatmul.mubr.f32.gmra.mxu0 %v571
        %v642 = vpop.f32.mrf.mxu0
        %v643 = vadd.f32 0.0, %v642
        %v644 = vpop.f32.mrf.mxu0
        %645 = vdwg.mxu0
        %vm646 = vcmask 64512
        %v647 = vsel %vm646, %v643, -inf
        %648 = vmax.xlane.f32.xlu0 %v647
        %v649 = vpop.xlane.xlu0 %648
        %v650 = vsub.f32 %v643, %v649
        %v651 = vmul.f32 %v650, 1.442695
        %v652 = vpow.pop %v651
        %v653 = vsel %vm646, %v652, 0.0
        %654 = vadd.xlane.f32.xlu0 %v653
        %v655 = vpop.xlane.xlu0 %654
        %v656 = vrcp.pop %v655
        %v657 = vmul.f32 %v652, %v656
        %v659 = vsel %vm646, %v657, 0
        %661 = vmatprep.subr.mxu0 0.0
        %662 = vmatpush1.msra.mxu0 0.0
        %663 = vmatprep.subr.mxu0 0.0
        %664 = vmatpush1.msra.mxu0 0.0
        %665 = vmatprep.subr.mxu0 0.0
        %666 = vmatpush1.msra.mxu0 0.0
        %667 = vmatprep.subr.mxu0 0.0
        %668 = vmatpush1.msra.mxu0 0.0
        %669 = vmatprep.subr.mxu0 0.0
        %670 = vmatpush1.msra.mxu0 0.0
        %671 = vmatprep.subr.mxu0 0.0
        %672 = vmatpush1.msra.mxu0 0.0
        %673 = vmatprep.subr.mxu0 0.0
        %674 = vmatpush1.msra.mxu0 0.0
        %675 = vmatprep.subr.mxu0 0.0
        %676 = vmatpush1.msra.mxu0 0.0
        %677 = vmatprep.subr.mxu0 0.0
        %678 = vmatpush1.msra.mxu0 0.0
        %679 = vmatprep.subr.mxu0 0.0
        %680 = vmatpush1.msra.mxu0 0.0
        %681 = vmatprep.subr.mxu0 0.0
        %682 = vmatpush1.msra.mxu0 0.0
        %683 = vmatprep.subr.mxu0 0.0
        %684 = vmatpush1.msra.mxu0 0.0
        %685 = vmatprep.subr.mxu0 0.0
        %686 = vmatpush1.msra.mxu0 0.0
        %687 = vmatprep.subr.mxu0 0.0
        %688 = vmatpush1.msra.mxu0 0.0
        %689 = vmatprep.subr.mxu0 0.0
        %690 = vmatpush1.msra.mxu0 0.0
        %691 = vmatprep.subr.mxu0 0.0
        %692 = vmatpush1.msra.mxu0 %v551
        %693 = vmatprep.subr.mxu0 0.0
        %694 = vmatpush2.msra.mxu0 0.0
        %695 = vmatprep.subr.mxu0 0.0
        %696 = vmatpush2.msra.mxu0 0.0
        %697 = vmatprep.subr.mxu0 0.0
        %698 = vmatpush2.msra.mxu0 0.0
        %699 = vmatprep.subr.mxu0 0.0
        %700 = vmatpush2.msra.mxu0 0.0
        %701 = vmatprep.subr.mxu0 0.0
        %702 = vmatpush2.msra.mxu0 0.0
        %703 = vmatprep.subr.mxu0 0.0
        %704 = vmatpush2.msra.mxu0 0.0
        %705 = vmatprep.subr.mxu0 0.0
        %706 = vmatpush2.msra.mxu0 0.0
        %707 = vmatprep.subr.mxu0 0.0
        %708 = vmatpush2.msra.mxu0 0.0
        %709 = vmatprep.subr.mxu0 0.0
        %710 = vmatpush2.msra.mxu0 0.0
        %711 = vmatprep.subr.mxu0 0.0
        %712 = vmatpush2.msra.mxu0 0.0
        %713 = vmatprep.subr.mxu0 0.0
        %714 = vmatpush2.msra.mxu0 0.0
        %715 = vmatprep.subr.mxu0 0.0
        %716 = vmatpush2.msra.mxu0 0.0
        %717 = vmatprep.subr.mxu0 0.0
        %718 = vmatpush2.msra.mxu0 0.0
        %719 = vmatprep.subr.mxu0 0.0
        %720 = vmatpush2.msra.mxu0 0.0
        %721 = vmatprep.subr.mxu0 0.0
        %722 = vmatpush2.msra.mxu0 0.0
        %723 = vmatprep.subr.mxu0 0.0
        %724 = vmatpush2.msra.mxu0 0.0
        %725 = vmatprep.mubr.f32.mxu0 0.0
        %726 = vmatmul.mubr.f32.gmra.mxu0 %v659
        %v727 = vpop.f32.mrf.mxu0
        %v728 = vadd.f32 0.0, %v727
        %v729 = vpop.f32.mrf.mxu0
        %730 = vdwg.mxu0
        %731 = vst.msk [vmem:[#allocation2] sm:$0xff] %vm569, %v728
        %732 = vrot.lane.b32.xlu0 %v462, 96
        %v733 = vpop.permute.xlu0 %732
        %734 = vrot.lane.b32.xlu0 %v464, 96
        %v735 = vpop.permute.xlu0 %734
        %v736 = vsel %vm569, %v733, 0
        %v738 = vsel %vm569, %v735, 0
        %740 = vmatprep.subr.mxu0 0.0
        %741 = vmatpush1.xpose.msra.mxu0 0.0
        %742 = vmatprep.subr.mxu0 0.0
        %743 = vmatpush1.xpose.msra.mxu0 0.0
        %744 = vmatprep.subr.mxu0 0.0
        %745 = vmatpush1.xpose.msra.mxu0 0.0
        %746 = vmatprep.subr.mxu0 0.0
        %747 = vmatpush1.xpose.msra.mxu0 0.0
        %748 = vmatprep.subr.mxu0 0.0
        %749 = vmatpush1.xpose.msra.mxu0 0.0
        %750 = vmatprep.subr.mxu0 0.0
        %751 = vmatpush1.xpose.msra.mxu0 0.0
        %752 = vmatprep.subr.mxu0 0.0
        %753 = vmatpush1.xpose.msra.mxu0 0.0
        %754 = vmatprep.subr.mxu0 0.0
        %755 = vmatpush1.xpose.msra.mxu0 0.0
        %756 = vmatprep.subr.mxu0 0.0
        %757 = vmatpush1.xpose.msra.mxu0 0.0
        %758 = vmatprep.subr.mxu0 0.0
        %759 = vmatpush1.xpose.msra.mxu0 0.0
        %760 = vmatprep.subr.mxu0 0.0
        %761 = vmatpush1.xpose.msra.mxu0 0.0
        %762 = vmatprep.subr.mxu0 0.0
        %763 = vmatpush1.xpose.msra.mxu0 0.0
        %764 = vmatprep.subr.mxu0 0.0
        %765 = vmatpush1.xpose.msra.mxu0 0.0
        %766 = vmatprep.subr.mxu0 0.0
        %767 = vmatpush1.xpose.msra.mxu0 0.0
        %768 = vmatprep.subr.mxu0 0.0
        %769 = vmatpush1.xpose.msra.mxu0 0.0
        %770 = vmatprep.subr.mxu0 0.0
        %771 = vmatpush1.xpose.msra.mxu0 %v738
        %772 = vmatprep.subr.mxu0 0.0
        %773 = vmatpush2.xpose.msra.mxu0 0.0
        %774 = vmatprep.subr.mxu0 0.0
        %775 = vmatpush2.xpose.msra.mxu0 0.0
        %776 = vmatprep.subr.mxu0 0.0
        %777 = vmatpush2.xpose.msra.mxu0 0.0
        %778 = vmatprep.subr.mxu0 0.0
        %779 = vmatpush2.xpose.msra.mxu0 0.0
        %780 = vmatprep.subr.mxu0 0.0
        %781 = vmatpush2.xpose.msra.mxu0 0.0
        %782 = vmatprep.subr.mxu0 0.0
        %783 = vmatpush2.xpose.msra.mxu0 0.0
        %784 = vmatprep.subr.mxu0 0.0
        %785 = vmatpush2.xpose.msra.mxu0 0.0
        %786 = vmatprep.subr.mxu0 0.0
        %787 = vmatpush2.xpose.msra.mxu0 0.0
        %788 = vmatprep.subr.mxu0 0.0
        %789 = vmatpush2.xpose.msra.mxu0 0.0
        %790 = vmatprep.subr.mxu0 0.0
        %791 = vmatpush2.xpose.msra.mxu0 0.0
        %792 = vmatprep.subr.mxu0 0.0
        %793 = vmatpush2.xpose.msra.mxu0 0.0
        %794 = vmatprep.subr.mxu0 0.0
        %795 = vmatpush2.xpose.msra.mxu0 0.0
        %796 = vmatprep.subr.mxu0 0.0
        %797 = vmatpush2.xpose.msra.mxu0 0.0
        %798 = vmatprep.subr.mxu0 0.0
        %799 = vmatpush2.xpose.msra.mxu0 0.0
        %800 = vmatprep.subr.mxu0 0.0
        %801 = vmatpush2.xpose.msra.mxu0 0.0
        %802 = vmatprep.subr.mxu0 0.0
        %803 = vmatpush2.xpose.msra.mxu0 0.0
        %804 = vmatprep.mubr.f32.mxu0 0.0
        %805 = vmatmul.mubr.f32.gmra.mxu0 %v736
        %v806 = vpop.f32.mrf.mxu0
        %v807 = vadd.f32 0.0, %v806
        %v808 = vpop.f32.mrf.mxu0
        %809 = vdwg.mxu0
        %v810 = vsel %vm646, %v807, -inf
        %811 = vmax.xlane.f32.xlu0 %v810
        %v812 = vpop.xlane.xlu0 %811
        %v813 = vsub.f32 %v807, %v812
        %v814 = vmul.f32 %v813, 1.442695
        %v815 = vpow.pop %v814
        %v816 = vsel %vm646, %v815, 0.0
        %817 = vadd.xlane.f32.xlu0 %v816
        %v818 = vpop.xlane.xlu0 %817
        %v819 = vrcp.pop %v818
        %v820 = vmul.f32 %v815, %v819
        %822 = vrot.lane.b32.xlu0 %v551, 96
        %v823 = vpop.permute.xlu0 %822
        %v826 = vsel %vm646, %v820, 0
        %828 = vmatprep.subr.mxu0 0.0
        %829 = vmatpush1.msra.mxu0 0.0
        %830 = vmatprep.subr.mxu0 0.0
        %831 = vmatpush1.msra.mxu0 0.0
        %832 = vmatprep.subr.mxu0 0.0
        %833 = vmatpush1.msra.mxu0 0.0
        %834 = vmatprep.subr.mxu0 0.0
        %835 = vmatpush1.msra.mxu0 0.0
        %836 = vmatprep.subr.mxu0 0.0
        %837 = vmatpush1.msra.mxu0 0.0
        %838 = vmatprep.subr.mxu0 0.0
        %839 = vmatpush1.msra.mxu0 0.0
        %840 = vmatprep.subr.mxu0 0.0
        %841 = vmatpush1.msra.mxu0 0.0
        %842 = vmatprep.subr.mxu0 0.0
        %843 = vmatpush1.msra.mxu0 0.0
        %844 = vmatprep.subr.mxu0 0.0
        %845 = vmatpush1.msra.mxu0 0.0
        %846 = vmatprep.subr.mxu0 0.0
        %847 = vmatpush1.msra.mxu0 0.0
        %848 = vmatprep.subr.mxu0 0.0
        %849 = vmatpush1.msra.mxu0 0.0
        %850 = vmatprep.subr.mxu0 0.0
        %851 = vmatpush1.msra.mxu0 0.0
        %852 = vmatprep.subr.mxu0 0.0
        %853 = vmatpush1.msra.mxu0 0.0
        %854 = vmatprep.subr.mxu0 0.0
        %855 = vmatpush1.msra.mxu0 0.0
        %856 = vmatprep.subr.mxu0 0.0
        %857 = vmatpush1.msra.mxu0 0.0
        %858 = vmatprep.subr.mxu0 0.0
        %859 = vmatpush1.msra.mxu0 %v823
        %860 = vmatprep.subr.mxu0 0.0
        %861 = vmatpush2.msra.mxu0 0.0
        %862 = vmatprep.subr.mxu0 0.0
        %863 = vmatpush2.msra.mxu0 0.0
        %864 = vmatprep.subr.mxu0 0.0
        %865 = vmatpush2.msra.mxu0 0.0
        %866 = vmatprep.subr.mxu0 0.0
        %867 = vmatpush2.msra.mxu0 0.0
        %868 = vmatprep.subr.mxu0 0.0
        %869 = vmatpush2.msra.mxu0 0.0
        %870 = vmatprep.subr.mxu0 0.0
        %871 = vmatpush2.msra.mxu0 0.0
        %872 = vmatprep.subr.mxu0 0.0
        %873 = vmatpush2.msra.mxu0 0.0
        %874 = vmatprep.subr.mxu0 0.0
        %875 = vmatpush2.msra.mxu0 0.0
        %876 = vmatprep.subr.mxu0 0.0
        %877 = vmatpush2.msra.mxu0 0.0
        %878 = vmatprep.subr.mxu0 0.0
        %879 = vmatpush2.msra.mxu0 0.0
        %880 = vmatprep.subr.mxu0 0.0
        %881 = vmatpush2.msra.mxu0 0.0
        %882 = vmatprep.subr.mxu0 0.0
        %883 = vmatpush2.msra.mxu0 0.0
        %884 = vmatprep.subr.mxu0 0.0
        %885 = vmatpush2.msra.mxu0 0.0
        %886 = vmatprep.subr.mxu0 0.0
        %887 = vmatpush2.msra.mxu0 0.0
        %888 = vmatprep.subr.mxu0 0.0
        %889 = vmatpush2.msra.mxu0 0.0
        %890 = vmatprep.subr.mxu0 0.0
        %891 = vmatpush2.msra.mxu0 0.0
        %892 = vmatprep.mubr.f32.mxu0 0.0
        %893 = vmatmul.mubr.f32.gmra.mxu0 %v826
        %v894 = vpop.f32.mrf.mxu0
        %v895 = vadd.f32 0.0, %v894
        %v896 = vpop.f32.mrf.mxu0
        %897 = vdwg.mxu0
        %899 = vrot.lane.b32.xlu0 %v895, 32
        %v900 = vpop.permute.xlu0 %899
        %vm902 = vcmask 523520
        %903 = vst.msk [vmem:[#allocation2] sm:$0xff] %vm902, %v900
        %904 = vrot.lane.b32.xlu0 %v462, 64
        %v905 = vpop.permute.xlu0 %904
        %906 = vrot.lane.b32.xlu0 %v464, 64
        %v907 = vpop.permute.xlu0 %906
        %v908 = vsel %vm569, %v905, 0
        %v910 = vsel %vm569, %v907, 0
        %912 = vmatprep.subr.mxu0 0.0
        %913 = vmatpush1.xpose.msra.mxu0 0.0
        %914 = vmatprep.subr.mxu0 0.0
        %915 = vmatpush1.xpose.msra.mxu0 0.0
        %916 = vmatprep.subr.mxu0 0.0
        %917 = vmatpush1.xpose.msra.mxu0 0.0
        %918 = vmatprep.subr.mxu0 0.0
        %919 = vmatpush1.xpose.msra.mxu0 0.0
        %920 = vmatprep.subr.mxu0 0.0
        %921 = vmatpush1.xpose.msra.mxu0 0.0
        %922 = vmatprep.subr.mxu0 0.0
        %923 = vmatpush1.xpose.msra.mxu0 0.0
        %924 = vmatprep.subr.mxu0 0.0
        %925 = vmatpush1.xpose.msra.mxu0 0.0
        %926 = vmatprep.subr.mxu0 0.0
        %927 = vmatpush1.xpose.msra.mxu0 0.0
        %928 = vmatprep.subr.mxu0 0.0
        %929 = vmatpush1.xpose.msra.mxu0 0.0
        %930 = vmatprep.subr.mxu0 0.0
        %931 = vmatpush1.xpose.msra.mxu0 0.0
        %932 = vmatprep.subr.mxu0 0.0
        %933 = vmatpush1.xpose.msra.mxu0 0.0
        %934 = vmatprep.subr.mxu0 0.0
        %935 = vmatpush1.xpose.msra.mxu0 0.0
        %936 = vmatprep.subr.mxu0 0.0
        %937 = vmatpush1.xpose.msra.mxu0 0.0
        %938 = vmatprep.subr.mxu0 0.0
        %939 = vmatpush1.xpose.msra.mxu0 0.0
        %940 = vmatprep.subr.mxu0 0.0
        %941 = vmatpush1.xpose.msra.mxu0 0.0
        %942 = vmatprep.subr.mxu0 0.0
        %943 = vmatpush1.xpose.msra.mxu0 %v910
        %944 = vmatprep.subr.mxu0 0.0
        %945 = vmatpush2.xpose.msra.mxu0 0.0
        %946 = vmatprep.subr.mxu0 0.0
        %947 = vmatpush2.xpose.msra.mxu0 0.0
        %948 = vmatprep.subr.mxu0 0.0
        %949 = vmatpush2.xpose.msra.mxu0 0.0
        %950 = vmatprep.subr.mxu0 0.0
        %951 = vmatpush2.xpose.msra.mxu0 0.0
        %952 = vmatprep.subr.mxu0 0.0
        %953 = vmatpush2.xpose.msra.mxu0 0.0
        %954 = vmatprep.subr.mxu0 0.0
        %955 = vmatpush2.xpose.msra.mxu0 0.0
        %956 = vmatprep.subr.mxu0 0.0
        %957 = vmatpush2.xpose.msra.mxu0 0.0
        %958 = vmatprep.subr.mxu0 0.0
        %959 = vmatpush2.xpose.msra.mxu0 0.0
        %960 = vmatprep.subr.mxu0 0.0
        %961 = vmatpush2.xpose.msra.mxu0 0.0
        %962 = vmatprep.subr.mxu0 0.0
        %963 = vmatpush2.xpose.msra.mxu0 0.0
        %964 = vmatprep.subr.mxu0 0.0
        %965 = vmatpush2.xpose.msra.mxu0 0.0
        %966 = vmatprep.subr.mxu0 0.0
        %967 = vmatpush2.xpose.msra.mxu0 0.0
        %968 = vmatprep.subr.mxu0 0.0
        %969 = vmatpush2.xpose.msra.mxu0 0.0
        %970 = vmatprep.subr.mxu0 0.0
        %971 = vmatpush2.xpose.msra.mxu0 0.0
        %972 = vmatprep.subr.mxu0 0.0
        %973 = vmatpush2.xpose.msra.mxu0 0.0
        %974 = vmatprep.subr.mxu0 0.0
        %975 = vmatpush2.xpose.msra.mxu0 0.0
        %976 = vmatprep.mubr.f32.mxu0 0.0
        %977 = vmatmul.mubr.f32.gmra.mxu0 %v908
        %v978 = vpop.f32.mrf.mxu0
        %v979 = vadd.f32 0.0, %v978
        %v980 = vpop.f32.mrf.mxu0
        %981 = vdwg.mxu0
        %v982 = vsel %vm646, %v979, -inf
        %983 = vmax.xlane.f32.xlu0 %v982
        %v984 = vpop.xlane.xlu0 %983
        %v985 = vsub.f32 %v979, %v984
        %v986 = vmul.f32 %v985, 1.442695
        %v987 = vpow.pop %v986
        %v988 = vsel %vm646, %v987, 0.0
        %989 = vadd.xlane.f32.xlu0 %v988
        %v990 = vpop.xlane.xlu0 %989
        %v991 = vrcp.pop %v990
        %v992 = vmul.f32 %v987, %v991
        %993 = vrot.lane.b32.xlu0 %v551, 64
        %v994 = vpop.permute.xlu0 %993
        %v997 = vsel %vm646, %v992, 0
        %999 = vmatprep.subr.mxu0 0.0
        %1000 = vmatpush1.msra.mxu0 0.0
        %1001 = vmatprep.subr.mxu0 0.0
        %1002 = vmatpush1.msra.mxu0 0.0
        %1003 = vmatprep.subr.mxu0 0.0
        %1004 = vmatpush1.msra.mxu0 0.0
        %1005 = vmatprep.subr.mxu0 0.0
        %1006 = vmatpush1.msra.mxu0 0.0
        %1007 = vmatprep.subr.mxu0 0.0
        %1008 = vmatpush1.msra.mxu0 0.0
        %1009 = vmatprep.subr.mxu0 0.0
        %1010 = vmatpush1.msra.mxu0 0.0
        %1011 = vmatprep.subr.mxu0 0.0
        %1012 = vmatpush1.msra.mxu0 0.0
        %1013 = vmatprep.subr.mxu0 0.0
        %1014 = vmatpush1.msra.mxu0 0.0
        %1015 = vmatprep.subr.mxu0 0.0
        %1016 = vmatpush1.msra.mxu0 0.0
        %1017 = vmatprep.subr.mxu0 0.0
        %1018 = vmatpush1.msra.mxu0 0.0
        %1019 = vmatprep.subr.mxu0 0.0
        %1020 = vmatpush1.msra.mxu0 0.0
        %1021 = vmatprep.subr.mxu0 0.0
        %1022 = vmatpush1.msra.mxu0 0.0
        %1023 = vmatprep.subr.mxu0 0.0
        %1024 = vmatpush1.msra.mxu0 0.0
        %1025 = vmatprep.subr.mxu0 0.0
        %1026 = vmatpush1.msra.mxu0 0.0
        %1027 = vmatprep.subr.mxu0 0.0
        %1028 = vmatpush1.msra.mxu0 0.0
        %1029 = vmatprep.subr.mxu0 0.0
        %1030 = vmatpush1.msra.mxu0 %v994
        %1031 = vmatprep.subr.mxu0 0.0
        %1032 = vmatpush2.msra.mxu0 0.0
        %1033 = vmatprep.subr.mxu0 0.0
        %1034 = vmatpush2.msra.mxu0 0.0
        %1035 = vmatprep.subr.mxu0 0.0
        %1036 = vmatpush2.msra.mxu0 0.0
        %1037 = vmatprep.subr.mxu0 0.0
        %1038 = vmatpush2.msra.mxu0 0.0
        %1039 = vmatprep.subr.mxu0 0.0
        %1040 = vmatpush2.msra.mxu0 0.0
        %1041 = vmatprep.subr.mxu0 0.0
        %1042 = vmatpush2.msra.mxu0 0.0
        %1043 = vmatprep.subr.mxu0 0.0
        %1044 = vmatpush2.msra.mxu0 0.0
        %1045 = vmatprep.subr.mxu0 0.0
        %1046 = vmatpush2.msra.mxu0 0.0
        %1047 = vmatprep.subr.mxu0 0.0
        %1048 = vmatpush2.msra.mxu0 0.0
        %1049 = vmatprep.subr.mxu0 0.0
        %1050 = vmatpush2.msra.mxu0 0.0
        %1051 = vmatprep.subr.mxu0 0.0
        %1052 = vmatpush2.msra.mxu0 0.0
        %1053 = vmatprep.subr.mxu0 0.0
        %1054 = vmatpush2.msra.mxu0 0.0
        %1055 = vmatprep.subr.mxu0 0.0
        %1056 = vmatpush2.msra.mxu0 0.0
        %1057 = vmatprep.subr.mxu0 0.0
        %1058 = vmatpush2.msra.mxu0 0.0
        %1059 = vmatprep.subr.mxu0 0.0
        %1060 = vmatpush2.msra.mxu0 0.0
        %1061 = vmatprep.subr.mxu0 0.0
        %1062 = vmatpush2.msra.mxu0 0.0
        %1063 = vmatprep.mubr.f32.mxu0 0.0
        %1064 = vmatmul.mubr.f32.gmra.mxu0 %v997
        %v1065 = vpop.f32.mrf.mxu0
        %v1066 = vadd.f32 0.0, %v1065
        %v1067 = vpop.f32.mrf.mxu0
        %1068 = vdwg.mxu0
        %1070 = vrot.lane.b32.xlu0 %v1066, 64
        %v1071 = vpop.permute.xlu0 %1070
        %vm1073 = vcmask 785920
        %1074 = vst.msk [vmem:[#allocation2] sm:$0xff] %vm1073, %v1071
        %1075 = vrot.lane.b32.xlu0 %v462, 32
        %v1076 = vpop.permute.xlu0 %1075
        %1077 = vrot.lane.b32.xlu0 %v464, 32
        %v1078 = vpop.permute.xlu0 %1077
        %v1079 = vsel %vm569, %v1076, 0
        %v1081 = vsel %vm569, %v1078, 0
        %1083 = vmatprep.subr.mxu0 0.0
        %1084 = vmatpush1.xpose.msra.mxu0 0.0
        %1085 = vmatprep.subr.mxu0 0.0
        %1086 = vmatpush1.xpose.msra.mxu0 0.0
        %1087 = vmatprep.subr.mxu0 0.0
        %1088 = vmatpush1.xpose.msra.mxu0 0.0
        %1089 = vmatprep.subr.mxu0 0.0
        %1090 = vmatpush1.xpose.msra.mxu0 0.0
        %1091 = vmatprep.subr.mxu0 0.0
        %1092 = vmatpush1.xpose.msra.mxu0 0.0
        %1093 = vmatprep.subr.mxu0 0.0
        %1094 = vmatpush1.xpose.msra.mxu0 0.0
        %1095 = vmatprep.subr.mxu0 0.0
        %1096 = vmatpush1.xpose.msra.mxu0 0.0
        %1097 = vmatprep.subr.mxu0 0.0
        %1098 = vmatpush1.xpose.msra.mxu0 0.0
        %1099 = vmatprep.subr.mxu0 0.0
        %1100 = vmatpush1.xpose.msra.mxu0 0.0
        %1101 = vmatprep.subr.mxu0 0.0
        %1102 = vmatpush1.xpose.msra.mxu0 0.0
        %1103 = vmatprep.subr.mxu0 0.0
        %1104 = vmatpush1.xpose.msra.mxu0 0.0
        %1105 = vmatprep.subr.mxu0 0.0
        %1106 = vmatpush1.xpose.msra.mxu0 0.0
        %1107 = vmatprep.subr.mxu0 0.0
        %1108 = vmatpush1.xpose.msra.mxu0 0.0
        %1109 = vmatprep.subr.mxu0 0.0
        %1110 = vmatpush1.xpose.msra.mxu0 0.0
        %1111 = vmatprep.subr.mxu0 0.0
        %1112 = vmatpush1.xpose.msra.mxu0 0.0
        %1113 = vmatprep.subr.mxu0 0.0
        %1114 = vmatpush1.xpose.msra.mxu0 %v1081
        %1115 = vmatprep.subr.mxu0 0.0
        %1116 = vmatpush2.xpose.msra.mxu0 0.0
        %1117 = vmatprep.subr.mxu0 0.0
        %1118 = vmatpush2.xpose.msra.mxu0 0.0
        %1119 = vmatprep.subr.mxu0 0.0
        %1120 = vmatpush2.xpose.msra.mxu0 0.0
        %1121 = vmatprep.subr.mxu0 0.0
        %1122 = vmatpush2.xpose.msra.mxu0 0.0
        %1123 = vmatprep.subr.mxu0 0.0
        %1124 = vmatpush2.xpose.msra.mxu0 0.0
        %1125 = vmatprep.subr.mxu0 0.0
        %1126 = vmatpush2.xpose.msra.mxu0 0.0
        %1127 = vmatprep.subr.mxu0 0.0
        %1128 = vmatpush2.xpose.msra.mxu0 0.0
        %1129 = vmatprep.subr.mxu0 0.0
        %1130 = vmatpush2.xpose.msra.mxu0 0.0
        %1131 = vmatprep.subr.mxu0 0.0
        %1132 = vmatpush2.xpose.msra.mxu0 0.0
        %1133 = vmatprep.subr.mxu0 0.0
        %1134 = vmatpush2.xpose.msra.mxu0 0.0
        %1135 = vmatprep.subr.mxu0 0.0
        %1136 = vmatpush2.xpose.msra.mxu0 0.0
        %1137 = vmatprep.subr.mxu0 0.0
        %1138 = vmatpush2.xpose.msra.mxu0 0.0
        %1139 = vmatprep.subr.mxu0 0.0
        %1140 = vmatpush2.xpose.msra.mxu0 0.0
        %1141 = vmatprep.subr.mxu0 0.0
        %1142 = vmatpush2.xpose.msra.mxu0 0.0
        %1143 = vmatprep.subr.mxu0 0.0
        %1144 = vmatpush2.xpose.msra.mxu0 0.0
        %1145 = vmatprep.subr.mxu0 0.0
        %1146 = vmatpush2.xpose.msra.mxu0 0.0
        %1147 = vmatprep.mubr.f32.mxu0 0.0
        %1148 = vmatmul.mubr.f32.gmra.mxu0 %v1079
        %v1149 = vpop.f32.mrf.mxu0
        %v1150 = vadd.f32 0.0, %v1149
        %v1151 = vpop.f32.mrf.mxu0
        %1152 = vdwg.mxu0
        %v1153 = vsel %vm646, %v1150, -inf
        %1154 = vmax.xlane.f32.xlu0 %v1153
        %v1155 = vpop.xlane.xlu0 %1154
        %v1156 = vsub.f32 %v1150, %v1155
        %v1157 = vmul.f32 %v1156, 1.442695
        %v1158 = vpow.pop %v1157
        %v1159 = vsel %vm646, %v1158, 0.0
        %1160 = vadd.xlane.f32.xlu0 %v1159
        %v1161 = vpop.xlane.xlu0 %1160
        %v1162 = vrcp.pop %v1161
        %v1163 = vmul.f32 %v1158, %v1162
        %1164 = vrot.lane.b32.xlu0 %v551, 32
        %v1165 = vpop.permute.xlu0 %1164
        %v1168 = vsel %vm646, %v1163, 0
        %1170 = vmatprep.subr.mxu0 0.0
        %1171 = vmatpush1.msra.mxu0 0.0
        %1172 = vmatprep.subr.mxu0 0.0
        %1173 = vmatpush1.msra.mxu0 0.0
        %1174 = vmatprep.subr.mxu0 0.0
        %1175 = vmatpush1.msra.mxu0 0.0
        %1176 = vmatprep.subr.mxu0 0.0
        %1177 = vmatpush1.msra.mxu0 0.0
        %1178 = vmatprep.subr.mxu0 0.0
        %1179 = vmatpush1.msra.mxu0 0.0
        %1180 = vmatprep.subr.mxu0 0.0
        %1181 = vmatpush1.msra.mxu0 0.0
        %1182 = vmatprep.subr.mxu0 0.0
        %1183 = vmatpush1.msra.mxu0 0.0
        %1184 = vmatprep.subr.mxu0 0.0
        %1185 = vmatpush1.msra.mxu0 0.0
        %1186 = vmatprep.subr.mxu0 0.0
        %1187 = vmatpush1.msra.mxu0 0.0
        %1188 = vmatprep.subr.mxu0 0.0
        %1189 = vmatpush1.msra.mxu0 0.0
        %1190 = vmatprep.subr.mxu0 0.0
        %1191 = vmatpush1.msra.mxu0 0.0
        %1192 = vmatprep.subr.mxu0 0.0
        %1193 = vmatpush1.msra.mxu0 0.0
        %1194 = vmatprep.subr.mxu0 0.0
        %1195 = vmatpush1.msra.mxu0 0.0
        %1196 = vmatprep.subr.mxu0 0.0
        %1197 = vmatpush1.msra.mxu0 0.0
        %1198 = vmatprep.subr.mxu0 0.0
        %1199 = vmatpush1.msra.mxu0 0.0
        %1200 = vmatprep.subr.mxu0 0.0
        %1201 = vmatpush1.msra.mxu0 %v1165
        %1202 = vmatprep.subr.mxu0 0.0
        %1203 = vmatpush2.msra.mxu0 0.0
        %1204 = vmatprep.subr.mxu0 0.0
        %1205 = vmatpush2.msra.mxu0 0.0
        %1206 = vmatprep.subr.mxu0 0.0
        %1207 = vmatpush2.msra.mxu0 0.0
        %1208 = vmatprep.subr.mxu0 0.0
        %1209 = vmatpush2.msra.mxu0 0.0
        %1210 = vmatprep.subr.mxu0 0.0
        %1211 = vmatpush2.msra.mxu0 0.0
        %1212 = vmatprep.subr.mxu0 0.0
        %1213 = vmatpush2.msra.mxu0 0.0
        %1214 = vmatprep.subr.mxu0 0.0
        %1215 = vmatpush2.msra.mxu0 0.0
        %1216 = vmatprep.subr.mxu0 0.0
        %1217 = vmatpush2.msra.mxu0 0.0
        %1218 = vmatprep.subr.mxu0 0.0
        %1219 = vmatpush2.msra.mxu0 0.0
        %1220 = vmatprep.subr.mxu0 0.0
        %1221 = vmatpush2.msra.mxu0 0.0
        %1222 = vmatprep.subr.mxu0 0.0
        %1223 = vmatpush2.msra.mxu0 0.0
        %1224 = vmatprep.subr.mxu0 0.0
        %1225 = vmatpush2.msra.mxu0 0.0
        %1226 = vmatprep.subr.mxu0 0.0
        %1227 = vmatpush2.msra.mxu0 0.0
        %1228 = vmatprep.subr.mxu0 0.0
        %1229 = vmatpush2.msra.mxu0 0.0
        %1230 = vmatprep.subr.mxu0 0.0
        %1231 = vmatpush2.msra.mxu0 0.0
        %1232 = vmatprep.subr.mxu0 0.0
        %1233 = vmatpush2.msra.mxu0 0.0
        %1234 = vmatprep.mubr.f32.mxu0 0.0
        %1235 = vmatmul.mubr.f32.gmra.mxu0 %v1168
        %v1236 = vpop.f32.mrf.mxu0
        %v1237 = vadd.f32 0.0, %v1236
        %v1238 = vpop.f32.mrf.mxu0
        %1239 = vdwg.mxu0
        %1241 = vrot.lane.b32.xlu0 %v1237, 96
        %v1242 = vpop.permute.xlu0 %1241
        %vm1244 = vcmask 1048320
        %1245 = vst.msk [vmem:[#allocation2] sm:$0xff] %vm1244, %v1242
        %v1247 = vsel %vm569, %v468, 0
        %v1250 = vsel %vm569, %v470, 0
        %1252 = vmatprep.subr.mxu0 0.0
        %1253 = vmatpush1.xpose.msra.mxu0 0.0
        %1254 = vmatprep.subr.mxu0 0.0
        %1255 = vmatpush1.xpose.msra.mxu0 0.0
        %1256 = vmatprep.subr.mxu0 0.0
        %1257 = vmatpush1.xpose.msra.mxu0 0.0
        %1258 = vmatprep.subr.mxu0 0.0
        %1259 = vmatpush1.xpose.msra.mxu0 0.0
        %1260 = vmatprep.subr.mxu0 0.0
        %1261 = vmatpush1.xpose.msra.mxu0 0.0
        %1262 = vmatprep.subr.mxu0 0.0
        %1263 = vmatpush1.xpose.msra.mxu0 0.0
        %1264 = vmatprep.subr.mxu0 0.0
        %1265 = vmatpush1.xpose.msra.mxu0 0.0
        %1266 = vmatprep.subr.mxu0 0.0
        %1267 = vmatpush1.xpose.msra.mxu0 0.0
        %1268 = vmatprep.subr.mxu0 0.0
        %1269 = vmatpush1.xpose.msra.mxu0 0.0
        %1270 = vmatprep.subr.mxu0 0.0
        %1271 = vmatpush1.xpose.msra.mxu0 0.0
        %1272 = vmatprep.subr.mxu0 0.0
        %1273 = vmatpush1.xpose.msra.mxu0 0.0
        %1274 = vmatprep.subr.mxu0 0.0
        %1275 = vmatpush1.xpose.msra.mxu0 0.0
        %1276 = vmatprep.subr.mxu0 0.0
        %1277 = vmatpush1.xpose.msra.mxu0 0.0
        %1278 = vmatprep.subr.mxu0 0.0
        %1279 = vmatpush1.xpose.msra.mxu0 0.0
        %1280 = vmatprep.subr.mxu0 0.0
        %1281 = vmatpush1.xpose.msra.mxu0 0.0
        %1282 = vmatprep.subr.mxu0 0.0
        %1283 = vmatpush1.xpose.msra.mxu0 %v1250
        %1284 = vmatprep.subr.mxu0 0.0
        %1285 = vmatpush2.xpose.msra.mxu0 0.0
        %1286 = vmatprep.subr.mxu0 0.0
        %1287 = vmatpush2.xpose.msra.mxu0 0.0
        %1288 = vmatprep.subr.mxu0 0.0
        %1289 = vmatpush2.xpose.msra.mxu0 0.0
        %1290 = vmatprep.subr.mxu0 0.0
        %1291 = vmatpush2.xpose.msra.mxu0 0.0
        %1292 = vmatprep.subr.mxu0 0.0
        %1293 = vmatpush2.xpose.msra.mxu0 0.0
        %1294 = vmatprep.subr.mxu0 0.0
        %1295 = vmatpush2.xpose.msra.mxu0 0.0
        %1296 = vmatprep.subr.mxu0 0.0
        %1297 = vmatpush2.xpose.msra.mxu0 0.0
        %1298 = vmatprep.subr.mxu0 0.0
        %1299 = vmatpush2.xpose.msra.mxu0 0.0
        %1300 = vmatprep.subr.mxu0 0.0
        %1301 = vmatpush2.xpose.msra.mxu0 0.0
        %1302 = vmatprep.subr.mxu0 0.0
        %1303 = vmatpush2.xpose.msra.mxu0 0.0
        %1304 = vmatprep.subr.mxu0 0.0
        %1305 = vmatpush2.xpose.msra.mxu0 0.0
        %1306 = vmatprep.subr.mxu0 0.0
        %1307 = vmatpush2.xpose.msra.mxu0 0.0
        %1308 = vmatprep.subr.mxu0 0.0
        %1309 = vmatpush2.xpose.msra.mxu0 0.0
        %1310 = vmatprep.subr.mxu0 0.0
        %1311 = vmatpush2.xpose.msra.mxu0 0.0
        %1312 = vmatprep.subr.mxu0 0.0
        %1313 = vmatpush2.xpose.msra.mxu0 0.0
        %1314 = vmatprep.subr.mxu0 0.0
        %1315 = vmatpush2.xpose.msra.mxu0 0.0
        %1316 = vmatprep.mubr.f32.mxu0 0.0
        %1317 = vmatmul.mubr.f32.gmra.mxu0 %v1247
        %v1318 = vpop.f32.mrf.mxu0
        %v1319 = vadd.f32 0.0, %v1318
        %v1320 = vpop.f32.mrf.mxu0
        %1321 = vdwg.mxu0
        %v1322 = vsel %vm646, %v1319, -inf
        %1323 = vmax.xlane.f32.xlu0 %v1322
        %v1324 = vpop.xlane.xlu0 %1323
        %v1325 = vsub.f32 %v1319, %v1324
        %v1326 = vmul.f32 %v1325, 1.442695
        %v1327 = vpow.pop %v1326
        %v1328 = vsel %vm646, %v1327, 0.0
        %1329 = vadd.xlane.f32.xlu0 %v1328
        %v1330 = vpop.xlane.xlu0 %1329
        %v1331 = vrcp.pop %v1330
        %v1332 = vmul.f32 %v1327, %v1331
        %v1334 = vsel %vm646, %v1332, 0
        %1336 = vmatprep.subr.mxu0 0.0
        %1337 = vmatpush1.msra.mxu0 0.0
        %1338 = vmatprep.subr.mxu0 0.0
        %1339 = vmatpush1.msra.mxu0 0.0
        %1340 = vmatprep.subr.mxu0 0.0
        %1341 = vmatpush1.msra.mxu0 0.0
        %1342 = vmatprep.subr.mxu0 0.0
        %1343 = vmatpush1.msra.mxu0 0.0
        %1344 = vmatprep.subr.mxu0 0.0
        %1345 = vmatpush1.msra.mxu0 0.0
        %1346 = vmatprep.subr.mxu0 0.0
        %1347 = vmatpush1.msra.mxu0 0.0
        %1348 = vmatprep.subr.mxu0 0.0
        %1349 = vmatpush1.msra.mxu0 0.0
        %1350 = vmatprep.subr.mxu0 0.0
        %1351 = vmatpush1.msra.mxu0 0.0
        %1352 = vmatprep.subr.mxu0 0.0
        %1353 = vmatpush1.msra.mxu0 0.0
        %1354 = vmatprep.subr.mxu0 0.0
        %1355 = vmatpush1.msra.mxu0 0.0
        %1356 = vmatprep.subr.mxu0 0.0
        %1357 = vmatpush1.msra.mxu0 0.0
        %1358 = vmatprep.subr.mxu0 0.0
        %1359 = vmatpush1.msra.mxu0 0.0
        %1360 = vmatprep.subr.mxu0 0.0
        %1361 = vmatpush1.msra.mxu0 0.0
        %1362 = vmatprep.subr.mxu0 0.0
        %1363 = vmatpush1.msra.mxu0 0.0
        %1364 = vmatprep.subr.mxu0 0.0
        %1365 = vmatpush1.msra.mxu0 0.0
        %1366 = vmatprep.subr.mxu0 0.0
        %1367 = vmatpush1.msra.mxu0 %v556
        %1368 = vmatprep.subr.mxu0 0.0
        %1369 = vmatpush2.msra.mxu0 0.0
        %1370 = vmatprep.subr.mxu0 0.0
        %1371 = vmatpush2.msra.mxu0 0.0
        %1372 = vmatprep.subr.mxu0 0.0
        %1373 = vmatpush2.msra.mxu0 0.0
        %1374 = vmatprep.subr.mxu0 0.0
        %1375 = vmatpush2.msra.mxu0 0.0
        %1376 = vmatprep.subr.mxu0 0.0
        %1377 = vmatpush2.msra.mxu0 0.0
        %1378 = vmatprep.subr.mxu0 0.0
        %1379 = vmatpush2.msra.mxu0 0.0
        %1380 = vmatprep.subr.mxu0 0.0
        %1381 = vmatpush2.msra.mxu0 0.0
        %1382 = vmatprep.subr.mxu0 0.0
        %1383 = vmatpush2.msra.mxu0 0.0
        %1384 = vmatprep.subr.mxu0 0.0
        %1385 = vmatpush2.msra.mxu0 0.0
        %1386 = vmatprep.subr.mxu0 0.0
        %1387 = vmatpush2.msra.mxu0 0.0
        %1388 = vmatprep.subr.mxu0 0.0
        %1389 = vmatpush2.msra.mxu0 0.0
        %1390 = vmatprep.subr.mxu0 0.0
        %1391 = vmatpush2.msra.mxu0 0.0
        %1392 = vmatprep.subr.mxu0 0.0
        %1393 = vmatpush2.msra.mxu0 0.0
        %1394 = vmatprep.subr.mxu0 0.0
        %1395 = vmatpush2.msra.mxu0 0.0
        %1396 = vmatprep.subr.mxu0 0.0
        %1397 = vmatpush2.msra.mxu0 0.0
        %1398 = vmatprep.subr.mxu0 0.0
        %1399 = vmatpush2.msra.mxu0 0.0
        %1400 = vmatprep.mubr.f32.mxu0 0.0
        %1401 = vmatmul.mubr.f32.gmra.mxu0 %v1334
        %v1402 = vpop.f32.mrf.mxu0
        %v1403 = vadd.f32 0.0, %v1402
        %v1404 = vpop.f32.mrf.mxu0
        %1405 = vdwg.mxu0
        %1406 = vst.msk [vmem:[#allocation2 + $0x8] sm:$0xff] %vm569, %v1403
        %1407 = vrot.lane.b32.xlu0 %v468, 96
        %v1408 = vpop.permute.xlu0 %1407
        %1409 = vrot.lane.b32.xlu0 %v470, 96
        %v1410 = vpop.permute.xlu0 %1409
        %v1411 = vsel %vm569, %v1408, 0
        %v1413 = vsel %vm569, %v1410, 0
        %1415 = vmatprep.subr.mxu0 0.0
        %1416 = vmatpush1.xpose.msra.mxu0 0.0
        %1417 = vmatprep.subr.mxu0 0.0
        %1418 = vmatpush1.xpose.msra.mxu0 0.0
        %1419 = vmatprep.subr.mxu0 0.0
        %1420 = vmatpush1.xpose.msra.mxu0 0.0
        %1421 = vmatprep.subr.mxu0 0.0
        %1422 = vmatpush1.xpose.msra.mxu0 0.0
        %1423 = vmatprep.subr.mxu0 0.0
        %1424 = vmatpush1.xpose.msra.mxu0 0.0
        %1425 = vmatprep.subr.mxu0 0.0
        %1426 = vmatpush1.xpose.msra.mxu0 0.0
        %1427 = vmatprep.subr.mxu0 0.0
        %1428 = vmatpush1.xpose.msra.mxu0 0.0
        %1429 = vmatprep.subr.mxu0 0.0
        %1430 = vmatpush1.xpose.msra.mxu0 0.0
        %1431 = vmatprep.subr.mxu0 0.0
        %1432 = vmatpush1.xpose.msra.mxu0 0.0
        %1433 = vmatprep.subr.mxu0 0.0
        %1434 = vmatpush1.xpose.msra.mxu0 0.0
        %1435 = vmatprep.subr.mxu0 0.0
        %1436 = vmatpush1.xpose.msra.mxu0 0.0
        %1437 = vmatprep.subr.mxu0 0.0
        %1438 = vmatpush1.xpose.msra.mxu0 0.0
        %1439 = vmatprep.subr.mxu0 0.0
        %1440 = vmatpush1.xpose.msra.mxu0 0.0
        %1441 = vmatprep.subr.mxu0 0.0
        %1442 = vmatpush1.xpose.msra.mxu0 0.0
        %1443 = vmatprep.subr.mxu0 0.0
        %1444 = vmatpush1.xpose.msra.mxu0 0.0
        %1445 = vmatprep.subr.mxu0 0.0
        %1446 = vmatpush1.xpose.msra.mxu0 %v1413
        %1447 = vmatprep.subr.mxu0 0.0
        %1448 = vmatpush2.xpose.msra.mxu0 0.0
        %1449 = vmatprep.subr.mxu0 0.0
        %1450 = vmatpush2.xpose.msra.mxu0 0.0
        %1451 = vmatprep.subr.mxu0 0.0
        %1452 = vmatpush2.xpose.msra.mxu0 0.0
        %1453 = vmatprep.subr.mxu0 0.0
        %1454 = vmatpush2.xpose.msra.mxu0 0.0
        %1455 = vmatprep.subr.mxu0 0.0
        %1456 = vmatpush2.xpose.msra.mxu0 0.0
        %1457 = vmatprep.subr.mxu0 0.0
        %1458 = vmatpush2.xpose.msra.mxu0 0.0
        %1459 = vmatprep.subr.mxu0 0.0
        %1460 = vmatpush2.xpose.msra.mxu0 0.0
        %1461 = vmatprep.subr.mxu0 0.0
        %1462 = vmatpush2.xpose.msra.mxu0 0.0
        %1463 = vmatprep.subr.mxu0 0.0
        %1464 = vmatpush2.xpose.msra.mxu0 0.0
        %1465 = vmatprep.subr.mxu0 0.0
        %1466 = vmatpush2.xpose.msra.mxu0 0.0
        %1467 = vmatprep.subr.mxu0 0.0
        %1468 = vmatpush2.xpose.msra.mxu0 0.0
        %1469 = vmatprep.subr.mxu0 0.0
        %1470 = vmatpush2.xpose.msra.mxu0 0.0
        %1471 = vmatprep.subr.mxu0 0.0
        %1472 = vmatpush2.xpose.msra.mxu0 0.0
        %1473 = vmatprep.subr.mxu0 0.0
        %1474 = vmatpush2.xpose.msra.mxu0 0.0
        %1475 = vmatprep.subr.mxu0 0.0
        %1476 = vmatpush2.xpose.msra.mxu0 0.0
        %1477 = vmatprep.subr.mxu0 0.0
        %1478 = vmatpush2.xpose.msra.mxu0 0.0
        %1479 = vmatprep.mubr.f32.mxu0 0.0
        %1480 = vmatmul.mubr.f32.gmra.mxu0 %v1411
        %v1481 = vpop.f32.mrf.mxu0
        %v1482 = vadd.f32 0.0, %v1481
        %v1483 = vpop.f32.mrf.mxu0
        %1484 = vdwg.mxu0
        %v1485 = vsel %vm646, %v1482, -inf
        %1486 = vmax.xlane.f32.xlu0 %v1485
        %v1487 = vpop.xlane.xlu0 %1486
        %v1488 = vsub.f32 %v1482, %v1487
        %v1489 = vmul.f32 %v1488, 1.442695
        %v1490 = vpow.pop %v1489
        %v1491 = vsel %vm646, %v1490, 0.0
        %1492 = vadd.xlane.f32.xlu0 %v1491
        %v1493 = vpop.xlane.xlu0 %1492
        %v1494 = vrcp.pop %v1493
        %v1495 = vmul.f32 %v1490, %v1494
        %1497 = vrot.lane.b32.xlu0 %v556, 96
        %v1498 = vpop.permute.xlu0 %1497
        %v1501 = vsel %vm646, %v1495, 0
        %1503 = vmatprep.subr.mxu0 0.0
        %1504 = vmatpush1.msra.mxu0 0.0
        %1505 = vmatprep.subr.mxu0 0.0
        %1506 = vmatpush1.msra.mxu0 0.0
        %1507 = vmatprep.subr.mxu0 0.0
        %1508 = vmatpush1.msra.mxu0 0.0
        %1509 = vmatprep.subr.mxu0 0.0
        %1510 = vmatpush1.msra.mxu0 0.0
        %1511 = vmatprep.subr.mxu0 0.0
        %1512 = vmatpush1.msra.mxu0 0.0
        %1513 = vmatprep.subr.mxu0 0.0
        %1514 = vmatpush1.msra.mxu0 0.0
        %1515 = vmatprep.subr.mxu0 0.0
        %1516 = vmatpush1.msra.mxu0 0.0
        %1517 = vmatprep.subr.mxu0 0.0
        %1518 = vmatpush1.msra.mxu0 0.0
        %1519 = vmatprep.subr.mxu0 0.0
        %1520 = vmatpush1.msra.mxu0 0.0
        %1521 = vmatprep.subr.mxu0 0.0
        %1522 = vmatpush1.msra.mxu0 0.0
        %1523 = vmatprep.subr.mxu0 0.0
        %1524 = vmatpush1.msra.mxu0 0.0
        %1525 = vmatprep.subr.mxu0 0.0
        %1526 = vmatpush1.msra.mxu0 0.0
        %1527 = vmatprep.subr.mxu0 0.0
        %1528 = vmatpush1.msra.mxu0 0.0
        %1529 = vmatprep.subr.mxu0 0.0
        %1530 = vmatpush1.msra.mxu0 0.0
        %1531 = vmatprep.subr.mxu0 0.0
        %1532 = vmatpush1.msra.mxu0 0.0
        %1533 = vmatprep.subr.mxu0 0.0
        %1534 = vmatpush1.msra.mxu0 %v1498
        %1535 = vmatprep.subr.mxu0 0.0
        %1536 = vmatpush2.msra.mxu0 0.0
        %1537 = vmatprep.subr.mxu0 0.0
        %1538 = vmatpush2.msra.mxu0 0.0
        %1539 = vmatprep.subr.mxu0 0.0
        %1540 = vmatpush2.msra.mxu0 0.0
        %1541 = vmatprep.subr.mxu0 0.0
        %1542 = vmatpush2.msra.mxu0 0.0
        %1543 = vmatprep.subr.mxu0 0.0
        %1544 = vmatpush2.msra.mxu0 0.0
        %1545 = vmatprep.subr.mxu0 0.0
        %1546 = vmatpush2.msra.mxu0 0.0
        %1547 = vmatprep.subr.mxu0 0.0
        %1548 = vmatpush2.msra.mxu0 0.0
        %1549 = vmatprep.subr.mxu0 0.0
        %1550 = vmatpush2.msra.mxu0 0.0
        %1551 = vmatprep.subr.mxu0 0.0
        %1552 = vmatpush2.msra.mxu0 0.0
        %1553 = vmatprep.subr.mxu0 0.0
        %1554 = vmatpush2.msra.mxu0 0.0
        %1555 = vmatprep.subr.mxu0 0.0
        %1556 = vmatpush2.msra.mxu0 0.0
        %1557 = vmatprep.subr.mxu0 0.0
        %1558 = vmatpush2.msra.mxu0 0.0
        %1559 = vmatprep.subr.mxu0 0.0
        %1560 = vmatpush2.msra.mxu0 0.0
        %1561 = vmatprep.subr.mxu0 0.0
        %1562 = vmatpush2.msra.mxu0 0.0
        %1563 = vmatprep.subr.mxu0 0.0
        %1564 = vmatpush2.msra.mxu0 0.0
        %1565 = vmatprep.subr.mxu0 0.0
        %1566 = vmatpush2.msra.mxu0 0.0
        %1567 = vmatprep.mubr.f32.mxu0 0.0
        %1568 = vmatmul.mubr.f32.gmra.mxu0 %v1501
        %v1569 = vpop.f32.mrf.mxu0
        %v1570 = vadd.f32 0.0, %v1569
        %v1571 = vpop.f32.mrf.mxu0
        %1572 = vdwg.mxu0
        %1574 = vrot.lane.b32.xlu0 %v1570, 32
        %v1575 = vpop.permute.xlu0 %1574
        %1577 = vst.msk [vmem:[#allocation2 + $0x8] sm:$0xff] %vm902, %v1575
        %1578 = vrot.lane.b32.xlu0 %v468, 64
        %v1579 = vpop.permute.xlu0 %1578
        %1580 = vrot.lane.b32.xlu0 %v470, 64
        %v1581 = vpop.permute.xlu0 %1580
        %v1582 = vsel %vm569, %v1579, 0
        %v1584 = vsel %vm569, %v1581, 0
        %1586 = vmatprep.subr.mxu0 0.0
        %1587 = vmatpush1.xpose.msra.mxu0 0.0
        %1588 = vmatprep.subr.mxu0 0.0
        %1589 = vmatpush1.xpose.msra.mxu0 0.0
        %1590 = vmatprep.subr.mxu0 0.0
        %1591 = vmatpush1.xpose.msra.mxu0 0.0
        %1592 = vmatprep.subr.mxu0 0.0
        %1593 = vmatpush1.xpose.msra.mxu0 0.0
        %1594 = vmatprep.subr.mxu0 0.0
        %1595 = vmatpush1.xpose.msra.mxu0 0.0
        %1596 = vmatprep.subr.mxu0 0.0
        %1597 = vmatpush1.xpose.msra.mxu0 0.0
        %1598 = vmatprep.subr.mxu0 0.0
        %1599 = vmatpush1.xpose.msra.mxu0 0.0
        %1600 = vmatprep.subr.mxu0 0.0
        %1601 = vmatpush1.xpose.msra.mxu0 0.0
        %1602 = vmatprep.subr.mxu0 0.0
        %1603 = vmatpush1.xpose.msra.mxu0 0.0
        %1604 = vmatprep.subr.mxu0 0.0
        %1605 = vmatpush1.xpose.msra.mxu0 0.0
        %1606 = vmatprep.subr.mxu0 0.0
        %1607 = vmatpush1.xpose.msra.mxu0 0.0
        %1608 = vmatprep.subr.mxu0 0.0
        %1609 = vmatpush1.xpose.msra.mxu0 0.0
        %1610 = vmatprep.subr.mxu0 0.0
        %1611 = vmatpush1.xpose.msra.mxu0 0.0
        %1612 = vmatprep.subr.mxu0 0.0
        %1613 = vmatpush1.xpose.msra.mxu0 0.0
        %1614 = vmatprep.subr.mxu0 0.0
        %1615 = vmatpush1.xpose.msra.mxu0 0.0
        %1616 = vmatprep.subr.mxu0 0.0
        %1617 = vmatpush1.xpose.msra.mxu0 %v1584
        %1618 = vmatprep.subr.mxu0 0.0
        %1619 = vmatpush2.xpose.msra.mxu0 0.0
        %1620 = vmatprep.subr.mxu0 0.0
        %1621 = vmatpush2.xpose.msra.mxu0 0.0
        %1622 = vmatprep.subr.mxu0 0.0
        %1623 = vmatpush2.xpose.msra.mxu0 0.0
        %1624 = vmatprep.subr.mxu0 0.0
        %1625 = vmatpush2.xpose.msra.mxu0 0.0
        %1626 = vmatprep.subr.mxu0 0.0
        %1627 = vmatpush2.xpose.msra.mxu0 0.0
        %1628 = vmatprep.subr.mxu0 0.0
        %1629 = vmatpush2.xpose.msra.mxu0 0.0
        %1630 = vmatprep.subr.mxu0 0.0
        %1631 = vmatpush2.xpose.msra.mxu0 0.0
        %1632 = vmatprep.subr.mxu0 0.0
        %1633 = vmatpush2.xpose.msra.mxu0 0.0
        %1634 = vmatprep.subr.mxu0 0.0
        %1635 = vmatpush2.xpose.msra.mxu0 0.0
        %1636 = vmatprep.subr.mxu0 0.0
        %1637 = vmatpush2.xpose.msra.mxu0 0.0
        %1638 = vmatprep.subr.mxu0 0.0
        %1639 = vmatpush2.xpose.msra.mxu0 0.0
        %1640 = vmatprep.subr.mxu0 0.0
        %1641 = vmatpush2.xpose.msra.mxu0 0.0
        %1642 = vmatprep.subr.mxu0 0.0
        %1643 = vmatpush2.xpose.msra.mxu0 0.0
        %1644 = vmatprep.subr.mxu0 0.0
        %1645 = vmatpush2.xpose.msra.mxu0 0.0
        %1646 = vmatprep.subr.mxu0 0.0
        %1647 = vmatpush2.xpose.msra.mxu0 0.0
        %1648 = vmatprep.subr.mxu0 0.0
        %1649 = vmatpush2.xpose.msra.mxu0 0.0
        %1650 = vmatprep.mubr.f32.mxu0 0.0
        %1651 = vmatmul.mubr.f32.gmra.mxu0 %v1582
        %v1652 = vpop.f32.mrf.mxu0
        %v1653 = vadd.f32 0.0, %v1652
        %v1654 = vpop.f32.mrf.mxu0
        %1655 = vdwg.mxu0
        %v1656 = vsel %vm646, %v1653, -inf
        %1657 = vmax.xlane.f32.xlu0 %v1656
        %v1658 = vpop.xlane.xlu0 %1657
        %v1659 = vsub.f32 %v1653, %v1658
        %v1660 = vmul.f32 %v1659, 1.442695
        %v1661 = vpow.pop %v1660
        %v1662 = vsel %vm646, %v1661, 0.0
        %1663 = vadd.xlane.f32.xlu0 %v1662
        %v1664 = vpop.xlane.xlu0 %1663
        %v1665 = vrcp.pop %v1664
        %v1666 = vmul.f32 %v1661, %v1665
        %1667 = vrot.lane.b32.xlu0 %v556, 64
        %v1668 = vpop.permute.xlu0 %1667
        %v1671 = vsel %vm646, %v1666, 0
        %1673 = vmatprep.subr.mxu0 0.0
        %1674 = vmatpush1.msra.mxu0 0.0
        %1675 = vmatprep.subr.mxu0 0.0
        %1676 = vmatpush1.msra.mxu0 0.0
        %1677 = vmatprep.subr.mxu0 0.0
        %1678 = vmatpush1.msra.mxu0 0.0
        %1679 = vmatprep.subr.mxu0 0.0
        %1680 = vmatpush1.msra.mxu0 0.0
        %1681 = vmatprep.subr.mxu0 0.0
        %1682 = vmatpush1.msra.mxu0 0.0
        %1683 = vmatprep.subr.mxu0 0.0
        %1684 = vmatpush1.msra.mxu0 0.0
        %1685 = vmatprep.subr.mxu0 0.0
        %1686 = vmatpush1.msra.mxu0 0.0
        %1687 = vmatprep.subr.mxu0 0.0
        %1688 = vmatpush1.msra.mxu0 0.0
        %1689 = vmatprep.subr.mxu0 0.0
        %1690 = vmatpush1.msra.mxu0 0.0
        %1691 = vmatprep.subr.mxu0 0.0
        %1692 = vmatpush1.msra.mxu0 0.0
        %1693 = vmatprep.subr.mxu0 0.0
        %1694 = vmatpush1.msra.mxu0 0.0
        %1695 = vmatprep.subr.mxu0 0.0
        %1696 = vmatpush1.msra.mxu0 0.0
        %1697 = vmatprep.subr.mxu0 0.0
        %1698 = vmatpush1.msra.mxu0 0.0
        %1699 = vmatprep.subr.mxu0 0.0
        %1700 = vmatpush1.msra.mxu0 0.0
        %1701 = vmatprep.subr.mxu0 0.0
        %1702 = vmatpush1.msra.mxu0 0.0
        %1703 = vmatprep.subr.mxu0 0.0
        %1704 = vmatpush1.msra.mxu0 %v1668
        %1705 = vmatprep.subr.mxu0 0.0
        %1706 = vmatpush2.msra.mxu0 0.0
        %1707 = vmatprep.subr.mxu0 0.0
        %1708 = vmatpush2.msra.mxu0 0.0
        %1709 = vmatprep.subr.mxu0 0.0
        %1710 = vmatpush2.msra.mxu0 0.0
        %1711 = vmatprep.subr.mxu0 0.0
        %1712 = vmatpush2.msra.mxu0 0.0
        %1713 = vmatprep.subr.mxu0 0.0
        %1714 = vmatpush2.msra.mxu0 0.0
        %1715 = vmatprep.subr.mxu0 0.0
        %1716 = vmatpush2.msra.mxu0 0.0
        %1717 = vmatprep.subr.mxu0 0.0
        %1718 = vmatpush2.msra.mxu0 0.0
        %1719 = vmatprep.subr.mxu0 0.0
        %1720 = vmatpush2.msra.mxu0 0.0
        %1721 = vmatprep.subr.mxu0 0.0
        %1722 = vmatpush2.msra.mxu0 0.0
        %1723 = vmatprep.subr.mxu0 0.0
        %1724 = vmatpush2.msra.mxu0 0.0
        %1725 = vmatprep.subr.mxu0 0.0
        %1726 = vmatpush2.msra.mxu0 0.0
        %1727 = vmatprep.subr.mxu0 0.0
        %1728 = vmatpush2.msra.mxu0 0.0
        %1729 = vmatprep.subr.mxu0 0.0
        %1730 = vmatpush2.msra.mxu0 0.0
        %1731 = vmatprep.subr.mxu0 0.0
        %1732 = vmatpush2.msra.mxu0 0.0
        %1733 = vmatprep.subr.mxu0 0.0
        %1734 = vmatpush2.msra.mxu0 0.0
        %1735 = vmatprep.subr.mxu0 0.0
        %1736 = vmatpush2.msra.mxu0 0.0
        %1737 = vmatprep.mubr.f32.mxu0 0.0
        %1738 = vmatmul.mubr.f32.gmra.mxu0 %v1671
        %v1739 = vpop.f32.mrf.mxu0
        %v1740 = vadd.f32 0.0, %v1739
        %v1741 = vpop.f32.mrf.mxu0
        %1742 = vdwg.mxu0
        %1744 = vrot.lane.b32.xlu0 %v1740, 64
        %v1745 = vpop.permute.xlu0 %1744
        %1747 = vst.msk [vmem:[#allocation2 + $0x8] sm:$0xff] %vm1073, %v1745
        %1748 = vrot.lane.b32.xlu0 %v468, 32
        %v1749 = vpop.permute.xlu0 %1748
        %1750 = vrot.lane.b32.xlu0 %v470, 32
        %v1751 = vpop.permute.xlu0 %1750
        %v1752 = vsel %vm569, %v1749, 0
        %v1754 = vsel %vm569, %v1751, 0
        %1756 = vmatprep.subr.mxu0 0.0
        %1757 = vmatpush1.xpose.msra.mxu0 0.0
        %1758 = vmatprep.subr.mxu0 0.0
        %1759 = vmatpush1.xpose.msra.mxu0 0.0
        %1760 = vmatprep.subr.mxu0 0.0
        %1761 = vmatpush1.xpose.msra.mxu0 0.0
        %1762 = vmatprep.subr.mxu0 0.0
        %1763 = vmatpush1.xpose.msra.mxu0 0.0
        %1764 = vmatprep.subr.mxu0 0.0
        %1765 = vmatpush1.xpose.msra.mxu0 0.0
        %1766 = vmatprep.subr.mxu0 0.0
        %1767 = vmatpush1.xpose.msra.mxu0 0.0
        %1768 = vmatprep.subr.mxu0 0.0
        %1769 = vmatpush1.xpose.msra.mxu0 0.0
        %1770 = vmatprep.subr.mxu0 0.0
        %1771 = vmatpush1.xpose.msra.mxu0 0.0
        %1772 = vmatprep.subr.mxu0 0.0
        %1773 = vmatpush1.xpose.msra.mxu0 0.0
        %1774 = vmatprep.subr.mxu0 0.0
        %1775 = vmatpush1.xpose.msra.mxu0 0.0
        %1776 = vmatprep.subr.mxu0 0.0
        %1777 = vmatpush1.xpose.msra.mxu0 0.0
        %1778 = vmatprep.subr.mxu0 0.0
        %1779 = vmatpush1.xpose.msra.mxu0 0.0
        %1780 = vmatprep.subr.mxu0 0.0
        %1781 = vmatpush1.xpose.msra.mxu0 0.0
        %1782 = vmatprep.subr.mxu0 0.0
        %1783 = vmatpush1.xpose.msra.mxu0 0.0
        %1784 = vmatprep.subr.mxu0 0.0
        %1785 = vmatpush1.xpose.msra.mxu0 0.0
        %1786 = vmatprep.subr.mxu0 0.0
        %1787 = vmatpush1.xpose.msra.mxu0 %v1754
        %1788 = vmatprep.subr.mxu0 0.0
        %1789 = vmatpush2.xpose.msra.mxu0 0.0
        %1790 = vmatprep.subr.mxu0 0.0
        %1791 = vmatpush2.xpose.msra.mxu0 0.0
        %1792 = vmatprep.subr.mxu0 0.0
        %1793 = vmatpush2.xpose.msra.mxu0 0.0
        %1794 = vmatprep.subr.mxu0 0.0
        %1795 = vmatpush2.xpose.msra.mxu0 0.0
        %1796 = vmatprep.subr.mxu0 0.0
        %1797 = vmatpush2.xpose.msra.mxu0 0.0
        %1798 = vmatprep.subr.mxu0 0.0
        %1799 = vmatpush2.xpose.msra.mxu0 0.0
        %1800 = vmatprep.subr.mxu0 0.0
        %1801 = vmatpush2.xpose.msra.mxu0 0.0
        %1802 = vmatprep.subr.mxu0 0.0
        %1803 = vmatpush2.xpose.msra.mxu0 0.0
        %1804 = vmatprep.subr.mxu0 0.0
        %1805 = vmatpush2.xpose.msra.mxu0 0.0
        %1806 = vmatprep.subr.mxu0 0.0
        %1807 = vmatpush2.xpose.msra.mxu0 0.0
        %1808 = vmatprep.subr.mxu0 0.0
        %1809 = vmatpush2.xpose.msra.mxu0 0.0
        %1810 = vmatprep.subr.mxu0 0.0
        %1811 = vmatpush2.xpose.msra.mxu0 0.0
        %1812 = vmatprep.subr.mxu0 0.0
        %1813 = vmatpush2.xpose.msra.mxu0 0.0
        %1814 = vmatprep.subr.mxu0 0.0
        %1815 = vmatpush2.xpose.msra.mxu0 0.0
        %1816 = vmatprep.subr.mxu0 0.0
        %1817 = vmatpush2.xpose.msra.mxu0 0.0
        %1818 = vmatprep.subr.mxu0 0.0
        %1819 = vmatpush2.xpose.msra.mxu0 0.0
        %1820 = vmatprep.mubr.f32.mxu0 0.0
        %1821 = vmatmul.mubr.f32.gmra.mxu0 %v1752
        %v1822 = vpop.f32.mrf.mxu0
        %v1823 = vadd.f32 0.0, %v1822
        %v1824 = vpop.f32.mrf.mxu0
        %1825 = vdwg.mxu0
        %v1826 = vsel %vm646, %v1823, -inf
        %1827 = vmax.xlane.f32.xlu0 %v1826
        %v1828 = vpop.xlane.xlu0 %1827
        %v1829 = vsub.f32 %v1823, %v1828
        %v1830 = vmul.f32 %v1829, 1.442695
        %v1831 = vpow.pop %v1830
        %v1832 = vsel %vm646, %v1831, 0.0
        %1833 = vadd.xlane.f32.xlu0 %v1832
        %v1834 = vpop.xlane.xlu0 %1833
        %v1835 = vrcp.pop %v1834
        %v1836 = vmul.f32 %v1831, %v1835
        %1837 = vrot.lane.b32.xlu0 %v556, 32
        %v1838 = vpop.permute.xlu0 %1837
        %v1841 = vsel %vm646, %v1836, 0
        %1843 = vmatprep.subr.mxu0 0.0
        %1844 = vmatpush1.msra.mxu0 0.0
        %1845 = vmatprep.subr.mxu0 0.0
        %1846 = vmatpush1.msra.mxu0 0.0
        %1847 = vmatprep.subr.mxu0 0.0
        %1848 = vmatpush1.msra.mxu0 0.0
        %1849 = vmatprep.subr.mxu0 0.0
        %1850 = vmatpush1.msra.mxu0 0.0
        %1851 = vmatprep.subr.mxu0 0.0
        %1852 = vmatpush1.msra.mxu0 0.0
        %1853 = vmatprep.subr.mxu0 0.0
        %1854 = vmatpush1.msra.mxu0 0.0
        %1855 = vmatprep.subr.mxu0 0.0
        %1856 = vmatpush1.msra.mxu0 0.0
        %1857 = vmatprep.subr.mxu0 0.0
        %1858 = vmatpush1.msra.mxu0 0.0
        %1859 = vmatprep.subr.mxu0 0.0
        %1860 = vmatpush1.msra.mxu0 0.0
        %1861 = vmatprep.subr.mxu0 0.0
        %1862 = vmatpush1.msra.mxu0 0.0
        %1863 = vmatprep.subr.mxu0 0.0
        %1864 = vmatpush1.msra.mxu0 0.0
        %1865 = vmatprep.subr.mxu0 0.0
        %1866 = vmatpush1.msra.mxu0 0.0
        %1867 = vmatprep.subr.mxu0 0.0
        %1868 = vmatpush1.msra.mxu0 0.0
        %1869 = vmatprep.subr.mxu0 0.0
        %1870 = vmatpush1.msra.mxu0 0.0
        %1871 = vmatprep.subr.mxu0 0.0
        %1872 = vmatpush1.msra.mxu0 0.0
        %1873 = vmatprep.subr.mxu0 0.0
        %1874 = vmatpush1.msra.mxu0 %v1838
        %1875 = vmatprep.subr.mxu0 0.0
        %1876 = vmatpush2.msra.mxu0 0.0
        %1877 = vmatprep.subr.mxu0 0.0
        %1878 = vmatpush2.msra.mxu0 0.0
        %1879 = vmatprep.subr.mxu0 0.0
        %1880 = vmatpush2.msra.mxu0 0.0
        %1881 = vmatprep.subr.mxu0 0.0
        %1882 = vmatpush2.msra.mxu0 0.0
        %1883 = vmatprep.subr.mxu0 0.0
        %1884 = vmatpush2.msra.mxu0 0.0
        %1885 = vmatprep.subr.mxu0 0.0
        %1886 = vmatpush2.msra.mxu0 0.0
        %1887 = vmatprep.subr.mxu0 0.0
        %1888 = vmatpush2.msra.mxu0 0.0
        %1889 = vmatprep.subr.mxu0 0.0
        %1890 = vmatpush2.msra.mxu0 0.0
        %1891 = vmatprep.subr.mxu0 0.0
        %1892 = vmatpush2.msra.mxu0 0.0
        %1893 = vmatprep.subr.mxu0 0.0
        %1894 = vmatpush2.msra.mxu0 0.0
        %1895 = vmatprep.subr.mxu0 0.0
        %1896 = vmatpush2.msra.mxu0 0.0
        %1897 = vmatprep.subr.mxu0 0.0
        %1898 = vmatpush2.msra.mxu0 0.0
        %1899 = vmatprep.subr.mxu0 0.0
        %1900 = vmatpush2.msra.mxu0 0.0
        %1901 = vmatprep.subr.mxu0 0.0
        %1902 = vmatpush2.msra.mxu0 0.0
        %1903 = vmatprep.subr.mxu0 0.0
        %1904 = vmatpush2.msra.mxu0 0.0
        %1905 = vmatprep.subr.mxu0 0.0
        %1906 = vmatpush2.msra.mxu0 0.0
        %1907 = vmatprep.mubr.f32.mxu0 0.0
        %1908 = vmatmul.mubr.f32.gmra.mxu0 %v1841
        %v1909 = vpop.f32.mrf.mxu0
        %v1910 = vadd.f32 0.0, %v1909
        %v1911 = vpop.f32.mrf.mxu0
        %1912 = vdwg.mxu0
        %1914 = vrot.lane.b32.xlu0 %v1910, 96
        %v1915 = vpop.permute.xlu0 %1914
        %1917 = vst.msk [vmem:[#allocation2 + $0x8] sm:$0xff] %vm1244, %v1915
        %v1919 = vsel %vm569, %v474, 0
        %v1922 = vsel %vm569, %v476, 0
        %1924 = vmatprep.subr.mxu0 0.0
        %1925 = vmatpush1.xpose.msra.mxu0 0.0
        %1926 = vmatprep.subr.mxu0 0.0
        %1927 = vmatpush1.xpose.msra.mxu0 0.0
        %1928 = vmatprep.subr.mxu0 0.0
        %1929 = vmatpush1.xpose.msra.mxu0 0.0
        %1930 = vmatprep.subr.mxu0 0.0
        %1931 = vmatpush1.xpose.msra.mxu0 0.0
        %1932 = vmatprep.subr.mxu0 0.0
        %1933 = vmatpush1.xpose.msra.mxu0 0.0
        %1934 = vmatprep.subr.mxu0 0.0
        %1935 = vmatpush1.xpose.msra.mxu0 0.0
        %1936 = vmatprep.subr.mxu0 0.0
        %1937 = vmatpush1.xpose.msra.mxu0 0.0
        %1938 = vmatprep.subr.mxu0 0.0
        %1939 = vmatpush1.xpose.msra.mxu0 0.0
        %1940 = vmatprep.subr.mxu0 0.0
        %1941 = vmatpush1.xpose.msra.mxu0 0.0
        %1942 = vmatprep.subr.mxu0 0.0
        %1943 = vmatpush1.xpose.msra.mxu0 0.0
        %1944 = vmatprep.subr.mxu0 0.0
        %1945 = vmatpush1.xpose.msra.mxu0 0.0
        %1946 = vmatprep.subr.mxu0 0.0
        %1947 = vmatpush1.xpose.msra.mxu0 0.0
        %1948 = vmatprep.subr.mxu0 0.0
        %1949 = vmatpush1.xpose.msra.mxu0 0.0
        %1950 = vmatprep.subr.mxu0 0.0
        %1951 = vmatpush1.xpose.msra.mxu0 0.0
        %1952 = vmatprep.subr.mxu0 0.0
        %1953 = vmatpush1.xpose.msra.mxu0 0.0
        %1954 = vmatprep.subr.mxu0 0.0
        %1955 = vmatpush1.xpose.msra.mxu0 %v1922
        %1956 = vmatprep.subr.mxu0 0.0
        %1957 = vmatpush2.xpose.msra.mxu0 0.0
        %1958 = vmatprep.subr.mxu0 0.0
        %1959 = vmatpush2.xpose.msra.mxu0 0.0
        %1960 = vmatprep.subr.mxu0 0.0
        %1961 = vmatpush2.xpose.msra.mxu0 0.0
        %1962 = vmatprep.subr.mxu0 0.0
        %1963 = vmatpush2.xpose.msra.mxu0 0.0
        %1964 = vmatprep.subr.mxu0 0.0
        %1965 = vmatpush2.xpose.msra.mxu0 0.0
        %1966 = vmatprep.subr.mxu0 0.0
        %1967 = vmatpush2.xpose.msra.mxu0 0.0
        %1968 = vmatprep.subr.mxu0 0.0
        %1969 = vmatpush2.xpose.msra.mxu0 0.0
        %1970 = vmatprep.subr.mxu0 0.0
        %1971 = vmatpush2.xpose.msra.mxu0 0.0
        %1972 = vmatprep.subr.mxu0 0.0
        %1973 = vmatpush2.xpose.msra.mxu0 0.0
        %1974 = vmatprep.subr.mxu0 0.0
        %1975 = vmatpush2.xpose.msra.mxu0 0.0
        %1976 = vmatprep.subr.mxu0 0.0
        %1977 = vmatpush2.xpose.msra.mxu0 0.0
        %1978 = vmatprep.subr.mxu0 0.0
        %1979 = vmatpush2.xpose.msra.mxu0 0.0
        %1980 = vmatprep.subr.mxu0 0.0
        %1981 = vmatpush2.xpose.msra.mxu0 0.0
        %1982 = vmatprep.subr.mxu0 0.0
        %1983 = vmatpush2.xpose.msra.mxu0 0.0
        %1984 = vmatprep.subr.mxu0 0.0
        %1985 = vmatpush2.xpose.msra.mxu0 0.0
        %1986 = vmatprep.subr.mxu0 0.0
        %1987 = vmatpush2.xpose.msra.mxu0 0.0
        %1988 = vmatprep.mubr.f32.mxu0 0.0
        %1989 = vmatmul.mubr.f32.gmra.mxu0 %v1919
        %v1990 = vpop.f32.mrf.mxu0
        %v1991 = vadd.f32 0.0, %v1990
        %v1992 = vpop.f32.mrf.mxu0
        %1993 = vdwg.mxu0
        %v1994 = vsel %vm646, %v1991, -inf
        %1995 = vmax.xlane.f32.xlu0 %v1994
        %v1996 = vpop.xlane.xlu0 %1995
        %v1997 = vsub.f32 %v1991, %v1996
        %v1998 = vmul.f32 %v1997, 1.442695
        %v1999 = vpow.pop %v1998
        %v2000 = vsel %vm646, %v1999, 0.0
        %2001 = vadd.xlane.f32.xlu0 %v2000
        %v2002 = vpop.xlane.xlu0 %2001
        %v2003 = vrcp.pop %v2002
        %v2004 = vmul.f32 %v1999, %v2003
        %v2006 = vsel %vm646, %v2004, 0
        %2008 = vmatprep.subr.mxu0 0.0
        %2009 = vmatpush1.msra.mxu0 0.0
        %2010 = vmatprep.subr.mxu0 0.0
        %2011 = vmatpush1.msra.mxu0 0.0
        %2012 = vmatprep.subr.mxu0 0.0
        %2013 = vmatpush1.msra.mxu0 0.0
        %2014 = vmatprep.subr.mxu0 0.0
        %2015 = vmatpush1.msra.mxu0 0.0
        %2016 = vmatprep.subr.mxu0 0.0
        %2017 = vmatpush1.msra.mxu0 0.0
        %2018 = vmatprep.subr.mxu0 0.0
        %2019 = vmatpush1.msra.mxu0 0.0
        %2020 = vmatprep.subr.mxu0 0.0
        %2021 = vmatpush1.msra.mxu0 0.0
        %2022 = vmatprep.subr.mxu0 0.0
        %2023 = vmatpush1.msra.mxu0 0.0
        %2024 = vmatprep.subr.mxu0 0.0
        %2025 = vmatpush1.msra.mxu0 0.0
        %2026 = vmatprep.subr.mxu0 0.0
        %2027 = vmatpush1.msra.mxu0 0.0
        %2028 = vmatprep.subr.mxu0 0.0
        %2029 = vmatpush1.msra.mxu0 0.0
        %2030 = vmatprep.subr.mxu0 0.0
        %2031 = vmatpush1.msra.mxu0 0.0
        %2032 = vmatprep.subr.mxu0 0.0
        %2033 = vmatpush1.msra.mxu0 0.0
        %2034 = vmatprep.subr.mxu0 0.0
        %2035 = vmatpush1.msra.mxu0 0.0
        %2036 = vmatprep.subr.mxu0 0.0
        %2037 = vmatpush1.msra.mxu0 0.0
        %2038 = vmatprep.subr.mxu0 0.0
        %2039 = vmatpush1.msra.mxu0 %v561
        %2040 = vmatprep.subr.mxu0 0.0
        %2041 = vmatpush2.msra.mxu0 0.0
        %2042 = vmatprep.subr.mxu0 0.0
        %2043 = vmatpush2.msra.mxu0 0.0
        %2044 = vmatprep.subr.mxu0 0.0
        %2045 = vmatpush2.msra.mxu0 0.0
        %2046 = vmatprep.subr.mxu0 0.0
        %2047 = vmatpush2.msra.mxu0 0.0
        %2048 = vmatprep.subr.mxu0 0.0
        %2049 = vmatpush2.msra.mxu0 0.0
        %2050 = vmatprep.subr.mxu0 0.0
        %2051 = vmatpush2.msra.mxu0 0.0
        %2052 = vmatprep.subr.mxu0 0.0
        %2053 = vmatpush2.msra.mxu0 0.0
        %2054 = vmatprep.subr.mxu0 0.0
        %2055 = vmatpush2.msra.mxu0 0.0
        %2056 = vmatprep.subr.mxu0 0.0
        %2057 = vmatpush2.msra.mxu0 0.0
        %2058 = vmatprep.subr.mxu0 0.0
        %2059 = vmatpush2.msra.mxu0 0.0
        %2060 = vmatprep.subr.mxu0 0.0
        %2061 = vmatpush2.msra.mxu0 0.0
        %2062 = vmatprep.subr.mxu0 0.0
        %2063 = vmatpush2.msra.mxu0 0.0
        %2064 = vmatprep.subr.mxu0 0.0
        %2065 = vmatpush2.msra.mxu0 0.0
        %2066 = vmatprep.subr.mxu0 0.0
        %2067 = vmatpush2.msra.mxu0 0.0
        %2068 = vmatprep.subr.mxu0 0.0
        %2069 = vmatpush2.msra.mxu0 0.0
        %2070 = vmatprep.subr.mxu0 0.0
        %2071 = vmatpush2.msra.mxu0 0.0
        %2072 = vmatprep.mubr.f32.mxu0 0.0
        %2073 = vmatmul.mubr.f32.gmra.mxu0 %v2006
        %v2074 = vpop.f32.mrf.mxu0
        %v2075 = vadd.f32 0.0, %v2074
        %v2076 = vpop.f32.mrf.mxu0
        %2077 = vdwg.mxu0
        %2078 = vst.msk [vmem:[#allocation2 + $0x10] sm:$0xff] %vm569, %v2075
        %2079 = vrot.lane.b32.xlu0 %v474, 96
        %v2080 = vpop.permute.xlu0 %2079
        %2081 = vrot.lane.b32.xlu0 %v476, 96
        %v2082 = vpop.permute.xlu0 %2081
        %v2083 = vsel %vm569, %v2080, 0
        %v2085 = vsel %vm569, %v2082, 0
        %2087 = vmatprep.subr.mxu0 0.0
        %2088 = vmatpush1.xpose.msra.mxu0 0.0
        %2089 = vmatprep.subr.mxu0 0.0
        %2090 = vmatpush1.xpose.msra.mxu0 0.0
        %2091 = vmatprep.subr.mxu0 0.0
        %2092 = vmatpush1.xpose.msra.mxu0 0.0
        %2093 = vmatprep.subr.mxu0 0.0
        %2094 = vmatpush1.xpose.msra.mxu0 0.0
        %2095 = vmatprep.subr.mxu0 0.0
        %2096 = vmatpush1.xpose.msra.mxu0 0.0
        %2097 = vmatprep.subr.mxu0 0.0
        %2098 = vmatpush1.xpose.msra.mxu0 0.0
        %2099 = vmatprep.subr.mxu0 0.0
        %2100 = vmatpush1.xpose.msra.mxu0 0.0
        %2101 = vmatprep.subr.mxu0 0.0
        %2102 = vmatpush1.xpose.msra.mxu0 0.0
        %2103 = vmatprep.subr.mxu0 0.0
        %2104 = vmatpush1.xpose.msra.mxu0 0.0
        %2105 = vmatprep.subr.mxu0 0.0
        %2106 = vmatpush1.xpose.msra.mxu0 0.0
        %2107 = vmatprep.subr.mxu0 0.0
        %2108 = vmatpush1.xpose.msra.mxu0 0.0
        %2109 = vmatprep.subr.mxu0 0.0
        %2110 = vmatpush1.xpose.msra.mxu0 0.0
        %2111 = vmatprep.subr.mxu0 0.0
        %2112 = vmatpush1.xpose.msra.mxu0 0.0
        %2113 = vmatprep.subr.mxu0 0.0
        %2114 = vmatpush1.xpose.msra.mxu0 0.0
        %2115 = vmatprep.subr.mxu0 0.0
        %2116 = vmatpush1.xpose.msra.mxu0 0.0
        %2117 = vmatprep.subr.mxu0 0.0
        %2118 = vmatpush1.xpose.msra.mxu0 %v2085
        %2119 = vmatprep.subr.mxu0 0.0
        %2120 = vmatpush2.xpose.msra.mxu0 0.0
        %2121 = vmatprep.subr.mxu0 0.0
        %2122 = vmatpush2.xpose.msra.mxu0 0.0
        %2123 = vmatprep.subr.mxu0 0.0
        %2124 = vmatpush2.xpose.msra.mxu0 0.0
        %2125 = vmatprep.subr.mxu0 0.0
        %2126 = vmatpush2.xpose.msra.mxu0 0.0
        %2127 = vmatprep.subr.mxu0 0.0
        %2128 = vmatpush2.xpose.msra.mxu0 0.0
        %2129 = vmatprep.subr.mxu0 0.0
        %2130 = vmatpush2.xpose.msra.mxu0 0.0
        %2131 = vmatprep.subr.mxu0 0.0
        %2132 = vmatpush2.xpose.msra.mxu0 0.0
        %2133 = vmatprep.subr.mxu0 0.0
        %2134 = vmatpush2.xpose.msra.mxu0 0.0
        %2135 = vmatprep.subr.mxu0 0.0
        %2136 = vmatpush2.xpose.msra.mxu0 0.0
        %2137 = vmatprep.subr.mxu0 0.0
        %2138 = vmatpush2.xpose.msra.mxu0 0.0
        %2139 = vmatprep.subr.mxu0 0.0
        %2140 = vmatpush2.xpose.msra.mxu0 0.0
        %2141 = vmatprep.subr.mxu0 0.0
        %2142 = vmatpush2.xpose.msra.mxu0 0.0
        %2143 = vmatprep.subr.mxu0 0.0
        %2144 = vmatpush2.xpose.msra.mxu0 0.0
        %2145 = vmatprep.subr.mxu0 0.0
        %2146 = vmatpush2.xpose.msra.mxu0 0.0
        %2147 = vmatprep.subr.mxu0 0.0
        %2148 = vmatpush2.xpose.msra.mxu0 0.0
        %2149 = vmatprep.subr.mxu0 0.0
        %2150 = vmatpush2.xpose.msra.mxu0 0.0
        %2151 = vmatprep.mubr.f32.mxu0 0.0
        %2152 = vmatmul.mubr.f32.gmra.mxu0 %v2083
        %v2153 = vpop.f32.mrf.mxu0
        %v2154 = vadd.f32 0.0, %v2153
        %v2155 = vpop.f32.mrf.mxu0
        %2156 = vdwg.mxu0
        %v2157 = vsel %vm646, %v2154, -inf
        %2158 = vmax.xlane.f32.xlu0 %v2157
        %v2159 = vpop.xlane.xlu0 %2158
        %v2160 = vsub.f32 %v2154, %v2159
        %v2161 = vmul.f32 %v2160, 1.442695
        %v2162 = vpow.pop %v2161
        %v2163 = vsel %vm646, %v2162, 0.0
        %2164 = vadd.xlane.f32.xlu0 %v2163
        %v2165 = vpop.xlane.xlu0 %2164
        %v2166 = vrcp.pop %v2165
        %v2167 = vmul.f32 %v2162, %v2166
        %2169 = vrot.lane.b32.xlu0 %v561, 96
        %v2170 = vpop.permute.xlu0 %2169
        %v2173 = vsel %vm646, %v2167, 0
        %2175 = vmatprep.subr.mxu0 0.0
        %2176 = vmatpush1.msra.mxu0 0.0
        %2177 = vmatprep.subr.mxu0 0.0
        %2178 = vmatpush1.msra.mxu0 0.0
        %2179 = vmatprep.subr.mxu0 0.0
        %2180 = vmatpush1.msra.mxu0 0.0
        %2181 = vmatprep.subr.mxu0 0.0
        %2182 = vmatpush1.msra.mxu0 0.0
        %2183 = vmatprep.subr.mxu0 0.0
        %2184 = vmatpush1.msra.mxu0 0.0
        %2185 = vmatprep.subr.mxu0 0.0
        %2186 = vmatpush1.msra.mxu0 0.0
        %2187 = vmatprep.subr.mxu0 0.0
        %2188 = vmatpush1.msra.mxu0 0.0
        %2189 = vmatprep.subr.mxu0 0.0
        %2190 = vmatpush1.msra.mxu0 0.0
        %2191 = vmatprep.subr.mxu0 0.0
        %2192 = vmatpush1.msra.mxu0 0.0
        %2193 = vmatprep.subr.mxu0 0.0
        %2194 = vmatpush1.msra.mxu0 0.0
        %2195 = vmatprep.subr.mxu0 0.0
        %2196 = vmatpush1.msra.mxu0 0.0
        %2197 = vmatprep.subr.mxu0 0.0
        %2198 = vmatpush1.msra.mxu0 0.0
        %2199 = vmatprep.subr.mxu0 0.0
        %2200 = vmatpush1.msra.mxu0 0.0
        %2201 = vmatprep.subr.mxu0 0.0
        %2202 = vmatpush1.msra.mxu0 0.0
        %2203 = vmatprep.subr.mxu0 0.0
        %2204 = vmatpush1.msra.mxu0 0.0
        %2205 = vmatprep.subr.mxu0 0.0
        %2206 = vmatpush1.msra.mxu0 %v2170
        %2207 = vmatprep.subr.mxu0 0.0
        %2208 = vmatpush2.msra.mxu0 0.0
        %2209 = vmatprep.subr.mxu0 0.0
        %2210 = vmatpush2.msra.mxu0 0.0
        %2211 = vmatprep.subr.mxu0 0.0
        %2212 = vmatpush2.msra.mxu0 0.0
        %2213 = vmatprep.subr.mxu0 0.0
        %2214 = vmatpush2.msra.mxu0 0.0
        %2215 = vmatprep.subr.mxu0 0.0
        %2216 = vmatpush2.msra.mxu0 0.0
        %2217 = vmatprep.subr.mxu0 0.0
        %2218 = vmatpush2.msra.mxu0 0.0
        %2219 = vmatprep.subr.mxu0 0.0
        %2220 = vmatpush2.msra.mxu0 0.0
        %2221 = vmatprep.subr.mxu0 0.0
        %2222 = vmatpush2.msra.mxu0 0.0
        %2223 = vmatprep.subr.mxu0 0.0
        %2224 = vmatpush2.msra.mxu0 0.0
        %2225 = vmatprep.subr.mxu0 0.0
        %2226 = vmatpush2.msra.mxu0 0.0
        %2227 = vmatprep.subr.mxu0 0.0
        %2228 = vmatpush2.msra.mxu0 0.0
        %2229 = vmatprep.subr.mxu0 0.0
        %2230 = vmatpush2.msra.mxu0 0.0
        %2231 = vmatprep.subr.mxu0 0.0
        %2232 = vmatpush2.msra.mxu0 0.0
        %2233 = vmatprep.subr.mxu0 0.0
        %2234 = vmatpush2.msra.mxu0 0.0
        %2235 = vmatprep.subr.mxu0 0.0
        %2236 = vmatpush2.msra.mxu0 0.0
        %2237 = vmatprep.subr.mxu0 0.0
        %2238 = vmatpush2.msra.mxu0 0.0
        %2239 = vmatprep.mubr.f32.mxu0 0.0
        %2240 = vmatmul.mubr.f32.gmra.mxu0 %v2173
        %v2241 = vpop.f32.mrf.mxu0
        %v2242 = vadd.f32 0.0, %v2241
        %v2243 = vpop.f32.mrf.mxu0
        %2244 = vdwg.mxu0
        %2246 = vrot.lane.b32.xlu0 %v2242, 32
        %v2247 = vpop.permute.xlu0 %2246
        %2249 = vst.msk [vmem:[#allocation2 + $0x10] sm:$0xff] %vm902, %v2247
        %2250 = vrot.lane.b32.xlu0 %v474, 64
        %v2251 = vpop.permute.xlu0 %2250
        %2252 = vrot.lane.b32.xlu0 %v476, 64
        %v2253 = vpop.permute.xlu0 %2252
        %v2254 = vsel %vm569, %v2251, 0
        %v2256 = vsel %vm569, %v2253, 0
        %2258 = vmatprep.subr.mxu0 0.0
        %2259 = vmatpush1.xpose.msra.mxu0 0.0
        %2260 = vmatprep.subr.mxu0 0.0
        %2261 = vmatpush1.xpose.msra.mxu0 0.0
        %2262 = vmatprep.subr.mxu0 0.0
        %2263 = vmatpush1.xpose.msra.mxu0 0.0
        %2264 = vmatprep.subr.mxu0 0.0
        %2265 = vmatpush1.xpose.msra.mxu0 0.0
        %2266 = vmatprep.subr.mxu0 0.0
        %2267 = vmatpush1.xpose.msra.mxu0 0.0
        %2268 = vmatprep.subr.mxu0 0.0
        %2269 = vmatpush1.xpose.msra.mxu0 0.0
        %2270 = vmatprep.subr.mxu0 0.0
        %2271 = vmatpush1.xpose.msra.mxu0 0.0
        %2272 = vmatprep.subr.mxu0 0.0
        %2273 = vmatpush1.xpose.msra.mxu0 0.0
        %2274 = vmatprep.subr.mxu0 0.0
        %2275 = vmatpush1.xpose.msra.mxu0 0.0
        %2276 = vmatprep.subr.mxu0 0.0
        %2277 = vmatpush1.xpose.msra.mxu0 0.0
        %2278 = vmatprep.subr.mxu0 0.0
        %2279 = vmatpush1.xpose.msra.mxu0 0.0
        %2280 = vmatprep.subr.mxu0 0.0
        %2281 = vmatpush1.xpose.msra.mxu0 0.0
        %2282 = vmatprep.subr.mxu0 0.0
        %2283 = vmatpush1.xpose.msra.mxu0 0.0
        %2284 = vmatprep.subr.mxu0 0.0
        %2285 = vmatpush1.xpose.msra.mxu0 0.0
        %2286 = vmatprep.subr.mxu0 0.0
        %2287 = vmatpush1.xpose.msra.mxu0 0.0
        %2288 = vmatprep.subr.mxu0 0.0
        %2289 = vmatpush1.xpose.msra.mxu0 %v2256
        %2290 = vmatprep.subr.mxu0 0.0
        %2291 = vmatpush2.xpose.msra.mxu0 0.0
        %2292 = vmatprep.subr.mxu0 0.0
        %2293 = vmatpush2.xpose.msra.mxu0 0.0
        %2294 = vmatprep.subr.mxu0 0.0
        %2295 = vmatpush2.xpose.msra.mxu0 0.0
        %2296 = vmatprep.subr.mxu0 0.0
        %2297 = vmatpush2.xpose.msra.mxu0 0.0
        %2298 = vmatprep.subr.mxu0 0.0
        %2299 = vmatpush2.xpose.msra.mxu0 0.0
        %2300 = vmatprep.subr.mxu0 0.0
        %2301 = vmatpush2.xpose.msra.mxu0 0.0
        %2302 = vmatprep.subr.mxu0 0.0
        %2303 = vmatpush2.xpose.msra.mxu0 0.0
        %2304 = vmatprep.subr.mxu0 0.0
        %2305 = vmatpush2.xpose.msra.mxu0 0.0
        %2306 = vmatprep.subr.mxu0 0.0
        %2307 = vmatpush2.xpose.msra.mxu0 0.0
        %2308 = vmatprep.subr.mxu0 0.0
        %2309 = vmatpush2.xpose.msra.mxu0 0.0
        %2310 = vmatprep.subr.mxu0 0.0
        %2311 = vmatpush2.xpose.msra.mxu0 0.0
        %2312 = vmatprep.subr.mxu0 0.0
        %2313 = vmatpush2.xpose.msra.mxu0 0.0
        %2314 = vmatprep.subr.mxu0 0.0
        %2315 = vmatpush2.xpose.msra.mxu0 0.0
        %2316 = vmatprep.subr.mxu0 0.0
        %2317 = vmatpush2.xpose.msra.mxu0 0.0
        %2318 = vmatprep.subr.mxu0 0.0
        %2319 = vmatpush2.xpose.msra.mxu0 0.0
        %2320 = vmatprep.subr.mxu0 0.0
        %2321 = vmatpush2.xpose.msra.mxu0 0.0
        %2322 = vmatprep.mubr.f32.mxu0 0.0
        %2323 = vmatmul.mubr.f32.gmra.mxu0 %v2254
        %v2324 = vpop.f32.mrf.mxu0
        %v2325 = vadd.f32 0.0, %v2324
        %v2326 = vpop.f32.mrf.mxu0
        %2327 = vdwg.mxu0
        %v2328 = vsel %vm646, %v2325, -inf
        %2329 = vmax.xlane.f32.xlu0 %v2328
        %v2330 = vpop.xlane.xlu0 %2329
        %v2331 = vsub.f32 %v2325, %v2330
        %v2332 = vmul.f32 %v2331, 1.442695
        %v2333 = vpow.pop %v2332
        %v2334 = vsel %vm646, %v2333, 0.0
        %2335 = vadd.xlane.f32.xlu0 %v2334
        %v2336 = vpop.xlane.xlu0 %2335
        %v2337 = vrcp.pop %v2336
        %v2338 = vmul.f32 %v2333, %v2337
        %2339 = vrot.lane.b32.xlu0 %v561, 64
        %v2340 = vpop.permute.xlu0 %2339
        %v2343 = vsel %vm646, %v2338, 0
        %2345 = vmatprep.subr.mxu0 0.0
        %2346 = vmatpush1.msra.mxu0 0.0
        %2347 = vmatprep.subr.mxu0 0.0
        %2348 = vmatpush1.msra.mxu0 0.0
        %2349 = vmatprep.subr.mxu0 0.0
        %2350 = vmatpush1.msra.mxu0 0.0
        %2351 = vmatprep.subr.mxu0 0.0
        %2352 = vmatpush1.msra.mxu0 0.0
        %2353 = vmatprep.subr.mxu0 0.0
        %2354 = vmatpush1.msra.mxu0 0.0
        %2355 = vmatprep.subr.mxu0 0.0
        %2356 = vmatpush1.msra.mxu0 0.0
        %2357 = vmatprep.subr.mxu0 0.0
        %2358 = vmatpush1.msra.mxu0 0.0
        %2359 = vmatprep.subr.mxu0 0.0
        %2360 = vmatpush1.msra.mxu0 0.0
        %2361 = vmatprep.subr.mxu0 0.0
        %2362 = vmatpush1.msra.mxu0 0.0
        %2363 = vmatprep.subr.mxu0 0.0
        %2364 = vmatpush1.msra.mxu0 0.0
        %2365 = vmatprep.subr.mxu0 0.0
        %2366 = vmatpush1.msra.mxu0 0.0
        %2367 = vmatprep.subr.mxu0 0.0
        %2368 = vmatpush1.msra.mxu0 0.0
        %2369 = vmatprep.subr.mxu0 0.0
        %2370 = vmatpush1.msra.mxu0 0.0
        %2371 = vmatprep.subr.mxu0 0.0
        %2372 = vmatpush1.msra.mxu0 0.0
        %2373 = vmatprep.subr.mxu0 0.0
        %2374 = vmatpush1.msra.mxu0 0.0
        %2375 = vmatprep.subr.mxu0 0.0
        %2376 = vmatpush1.msra.mxu0 %v2340
        %2377 = vmatprep.subr.mxu0 0.0
        %2378 = vmatpush2.msra.mxu0 0.0
        %2379 = vmatprep.subr.mxu0 0.0
        %2380 = vmatpush2.msra.mxu0 0.0
        %2381 = vmatprep.subr.mxu0 0.0
        %2382 = vmatpush2.msra.mxu0 0.0
        %2383 = vmatprep.subr.mxu0 0.0
        %2384 = vmatpush2.msra.mxu0 0.0
        %2385 = vmatprep.subr.mxu0 0.0
        %2386 = vmatpush2.msra.mxu0 0.0
        %2387 = vmatprep.subr.mxu0 0.0
        %2388 = vmatpush2.msra.mxu0 0.0
        %2389 = vmatprep.subr.mxu0 0.0
        %2390 = vmatpush2.msra.mxu0 0.0
        %2391 = vmatprep.subr.mxu0 0.0
        %2392 = vmatpush2.msra.mxu0 0.0
        %2393 = vmatprep.subr.mxu0 0.0
        %2394 = vmatpush2.msra.mxu0 0.0
        %2395 = vmatprep.subr.mxu0 0.0
        %2396 = vmatpush2.msra.mxu0 0.0
        %2397 = vmatprep.subr.mxu0 0.0
        %2398 = vmatpush2.msra.mxu0 0.0
        %2399 = vmatprep.subr.mxu0 0.0
        %2400 = vmatpush2.msra.mxu0 0.0
        %2401 = vmatprep.subr.mxu0 0.0
        %2402 = vmatpush2.msra.mxu0 0.0
        %2403 = vmatprep.subr.mxu0 0.0
        %2404 = vmatpush2.msra.mxu0 0.0
        %2405 = vmatprep.subr.mxu0 0.0
        %2406 = vmatpush2.msra.mxu0 0.0
        %2407 = vmatprep.subr.mxu0 0.0
        %2408 = vmatpush2.msra.mxu0 0.0
        %2409 = vmatprep.mubr.f32.mxu0 0.0
        %2410 = vmatmul.mubr.f32.gmra.mxu0 %v2343
        %v2411 = vpop.f32.mrf.mxu0
        %v2412 = vadd.f32 0.0, %v2411
        %v2413 = vpop.f32.mrf.mxu0
        %2414 = vdwg.mxu0
        %2416 = vrot.lane.b32.xlu0 %v2412, 64
        %v2417 = vpop.permute.xlu0 %2416
        %2419 = vst.msk [vmem:[#allocation2 + $0x10] sm:$0xff] %vm1073, %v2417
        %2420 = vrot.lane.b32.xlu0 %v474, 32
        %v2421 = vpop.permute.xlu0 %2420
        %2422 = vrot.lane.b32.xlu0 %v476, 32
        %v2423 = vpop.permute.xlu0 %2422
        %v2424 = vsel %vm569, %v2421, 0
        %v2426 = vsel %vm569, %v2423, 0
        %2428 = vmatprep.subr.mxu0 0.0
        %2429 = vmatpush1.xpose.msra.mxu0 0.0
        %2430 = vmatprep.subr.mxu0 0.0
        %2431 = vmatpush1.xpose.msra.mxu0 0.0
        %2432 = vmatprep.subr.mxu0 0.0
        %2433 = vmatpush1.xpose.msra.mxu0 0.0
        %2434 = vmatprep.subr.mxu0 0.0
        %2435 = vmatpush1.xpose.msra.mxu0 0.0
        %2436 = vmatprep.subr.mxu0 0.0
        %2437 = vmatpush1.xpose.msra.mxu0 0.0
        %2438 = vmatprep.subr.mxu0 0.0
        %2439 = vmatpush1.xpose.msra.mxu0 0.0
        %2440 = vmatprep.subr.mxu0 0.0
        %2441 = vmatpush1.xpose.msra.mxu0 0.0
        %2442 = vmatprep.subr.mxu0 0.0
        %2443 = vmatpush1.xpose.msra.mxu0 0.0
        %2444 = vmatprep.subr.mxu0 0.0
        %2445 = vmatpush1.xpose.msra.mxu0 0.0
        %2446 = vmatprep.subr.mxu0 0.0
        %2447 = vmatpush1.xpose.msra.mxu0 0.0
        %2448 = vmatprep.subr.mxu0 0.0
        %2449 = vmatpush1.xpose.msra.mxu0 0.0
        %2450 = vmatprep.subr.mxu0 0.0
        %2451 = vmatpush1.xpose.msra.mxu0 0.0
        %2452 = vmatprep.subr.mxu0 0.0
        %2453 = vmatpush1.xpose.msra.mxu0 0.0
        %2454 = vmatprep.subr.mxu0 0.0
        %2455 = vmatpush1.xpose.msra.mxu0 0.0
        %2456 = vmatprep.subr.mxu0 0.0
        %2457 = vmatpush1.xpose.msra.mxu0 0.0
        %2458 = vmatprep.subr.mxu0 0.0
        %2459 = vmatpush1.xpose.msra.mxu0 %v2426
        %2460 = vmatprep.subr.mxu0 0.0
        %2461 = vmatpush2.xpose.msra.mxu0 0.0
        %2462 = vmatprep.subr.mxu0 0.0
        %2463 = vmatpush2.xpose.msra.mxu0 0.0
        %2464 = vmatprep.subr.mxu0 0.0
        %2465 = vmatpush2.xpose.msra.mxu0 0.0
        %2466 = vmatprep.subr.mxu0 0.0
        %2467 = vmatpush2.xpose.msra.mxu0 0.0
        %2468 = vmatprep.subr.mxu0 0.0
        %2469 = vmatpush2.xpose.msra.mxu0 0.0
        %2470 = vmatprep.subr.mxu0 0.0
        %2471 = vmatpush2.xpose.msra.mxu0 0.0
        %2472 = vmatprep.subr.mxu0 0.0
        %2473 = vmatpush2.xpose.msra.mxu0 0.0
        %2474 = vmatprep.subr.mxu0 0.0
        %2475 = vmatpush2.xpose.msra.mxu0 0.0
        %2476 = vmatprep.subr.mxu0 0.0
        %2477 = vmatpush2.xpose.msra.mxu0 0.0
        %2478 = vmatprep.subr.mxu0 0.0
        %2479 = vmatpush2.xpose.msra.mxu0 0.0
        %2480 = vmatprep.subr.mxu0 0.0
        %2481 = vmatpush2.xpose.msra.mxu0 0.0
        %2482 = vmatprep.subr.mxu0 0.0
        %2483 = vmatpush2.xpose.msra.mxu0 0.0
        %2484 = vmatprep.subr.mxu0 0.0
        %2485 = vmatpush2.xpose.msra.mxu0 0.0
        %2486 = vmatprep.subr.mxu0 0.0
        %2487 = vmatpush2.xpose.msra.mxu0 0.0
        %2488 = vmatprep.subr.mxu0 0.0
        %2489 = vmatpush2.xpose.msra.mxu0 0.0
        %2490 = vmatprep.subr.mxu0 0.0
        %2491 = vmatpush2.xpose.msra.mxu0 0.0
        %2492 = vmatprep.mubr.f32.mxu0 0.0
        %2493 = vmatmul.mubr.f32.gmra.mxu0 %v2424
        %v2494 = vpop.f32.mrf.mxu0
        %v2495 = vadd.f32 0.0, %v2494
        %v2496 = vpop.f32.mrf.mxu0
        %2497 = vdwg.mxu0
        %v2498 = vsel %vm646, %v2495, -inf
        %2499 = vmax.xlane.f32.xlu0 %v2498
        %v2500 = vpop.xlane.xlu0 %2499
        %v2501 = vsub.f32 %v2495, %v2500
        %v2502 = vmul.f32 %v2501, 1.442695
        %v2503 = vpow.pop %v2502
        %v2504 = vsel %vm646, %v2503, 0.0
        %2505 = vadd.xlane.f32.xlu0 %v2504
        %v2506 = vpop.xlane.xlu0 %2505
        %v2507 = vrcp.pop %v2506
        %v2508 = vmul.f32 %v2503, %v2507
        %2509 = vrot.lane.b32.xlu0 %v561, 32
        %v2510 = vpop.permute.xlu0 %2509
        %v2513 = vsel %vm646, %v2508, 0
        %2515 = vmatprep.subr.mxu0 0.0
        %2516 = vmatpush1.msra.mxu0 0.0
        %2517 = vmatprep.subr.mxu0 0.0
        %2518 = vmatpush1.msra.mxu0 0.0
        %2519 = vmatprep.subr.mxu0 0.0
        %2520 = vmatpush1.msra.mxu0 0.0
        %2521 = vmatprep.subr.mxu0 0.0
        %2522 = vmatpush1.msra.mxu0 0.0
        %2523 = vmatprep.subr.mxu0 0.0
        %2524 = vmatpush1.msra.mxu0 0.0
        %2525 = vmatprep.subr.mxu0 0.0
        %2526 = vmatpush1.msra.mxu0 0.0
        %2527 = vmatprep.subr.mxu0 0.0
        %2528 = vmatpush1.msra.mxu0 0.0
        %2529 = vmatprep.subr.mxu0 0.0
        %2530 = vmatpush1.msra.mxu0 0.0
        %2531 = vmatprep.subr.mxu0 0.0
        %2532 = vmatpush1.msra.mxu0 0.0
        %2533 = vmatprep.subr.mxu0 0.0
        %2534 = vmatpush1.msra.mxu0 0.0
        %2535 = vmatprep.subr.mxu0 0.0
        %2536 = vmatpush1.msra.mxu0 0.0
        %2537 = vmatprep.subr.mxu0 0.0
        %2538 = vmatpush1.msra.mxu0 0.0
        %2539 = vmatprep.subr.mxu0 0.0
        %2540 = vmatpush1.msra.mxu0 0.0
        %2541 = vmatprep.subr.mxu0 0.0
        %2542 = vmatpush1.msra.mxu0 0.0
        %2543 = vmatprep.subr.mxu0 0.0
        %2544 = vmatpush1.msra.mxu0 0.0
        %2545 = vmatprep.subr.mxu0 0.0
        %2546 = vmatpush1.msra.mxu0 %v2510
        %2547 = vmatprep.subr.mxu0 0.0
        %2548 = vmatpush2.msra.mxu0 0.0
        %2549 = vmatprep.subr.mxu0 0.0
        %2550 = vmatpush2.msra.mxu0 0.0
        %2551 = vmatprep.subr.mxu0 0.0
        %2552 = vmatpush2.msra.mxu0 0.0
        %2553 = vmatprep.subr.mxu0 0.0
        %2554 = vmatpush2.msra.mxu0 0.0
        %2555 = vmatprep.subr.mxu0 0.0
        %2556 = vmatpush2.msra.mxu0 0.0
        %2557 = vmatprep.subr.mxu0 0.0
        %2558 = vmatpush2.msra.mxu0 0.0
        %2559 = vmatprep.subr.mxu0 0.0
        %2560 = vmatpush2.msra.mxu0 0.0
        %2561 = vmatprep.subr.mxu0 0.0
        %2562 = vmatpush2.msra.mxu0 0.0
        %2563 = vmatprep.subr.mxu0 0.0
        %2564 = vmatpush2.msra.mxu0 0.0
        %2565 = vmatprep.subr.mxu0 0.0
        %2566 = vmatpush2.msra.mxu0 0.0
        %2567 = vmatprep.subr.mxu0 0.0
        %2568 = vmatpush2.msra.mxu0 0.0
        %2569 = vmatprep.subr.mxu0 0.0
        %2570 = vmatpush2.msra.mxu0 0.0
        %2571 = vmatprep.subr.mxu0 0.0
        %2572 = vmatpush2.msra.mxu0 0.0
        %2573 = vmatprep.subr.mxu0 0.0
        %2574 = vmatpush2.msra.mxu0 0.0
        %2575 = vmatprep.subr.mxu0 0.0
        %2576 = vmatpush2.msra.mxu0 0.0
        %2577 = vmatprep.subr.mxu0 0.0
        %2578 = vmatpush2.msra.mxu0 0.0
        %2579 = vmatprep.mubr.f32.mxu0 0.0
        %2580 = vmatmul.mubr.f32.gmra.mxu0 %v2513
        %v2581 = vpop.f32.mrf.mxu0
        %v2582 = vadd.f32 0.0, %v2581
        %v2583 = vpop.f32.mrf.mxu0
        %2584 = vdwg.mxu0
        %2586 = vrot.lane.b32.xlu0 %v2582, 96
        %v2587 = vpop.permute.xlu0 %2586
        %2589 = vst.msk [vmem:[#allocation2 + $0x10] sm:$0xff] %vm1244, %v2587
        %v2591 = vsel %vm569, %v480, 0
        %v2594 = vsel %vm569, %v482, 0
        %2596 = vmatprep.subr.mxu0 0.0
        %2597 = vmatpush1.xpose.msra.mxu0 0.0
        %2598 = vmatprep.subr.mxu0 0.0
        %2599 = vmatpush1.xpose.msra.mxu0 0.0
        %2600 = vmatprep.subr.mxu0 0.0
        %2601 = vmatpush1.xpose.msra.mxu0 0.0
        %2602 = vmatprep.subr.mxu0 0.0
        %2603 = vmatpush1.xpose.msra.mxu0 0.0
        %2604 = vmatprep.subr.mxu0 0.0
        %2605 = vmatpush1.xpose.msra.mxu0 0.0
        %2606 = vmatprep.subr.mxu0 0.0
        %2607 = vmatpush1.xpose.msra.mxu0 0.0
        %2608 = vmatprep.subr.mxu0 0.0
        %2609 = vmatpush1.xpose.msra.mxu0 0.0
        %2610 = vmatprep.subr.mxu0 0.0
        %2611 = vmatpush1.xpose.msra.mxu0 0.0
        %2612 = vmatprep.subr.mxu0 0.0
        %2613 = vmatpush1.xpose.msra.mxu0 0.0
        %2614 = vmatprep.subr.mxu0 0.0
        %2615 = vmatpush1.xpose.msra.mxu0 0.0
        %2616 = vmatprep.subr.mxu0 0.0
        %2617 = vmatpush1.xpose.msra.mxu0 0.0
        %2618 = vmatprep.subr.mxu0 0.0
        %2619 = vmatpush1.xpose.msra.mxu0 0.0
        %2620 = vmatprep.subr.mxu0 0.0
        %2621 = vmatpush1.xpose.msra.mxu0 0.0
        %2622 = vmatprep.subr.mxu0 0.0
        %2623 = vmatpush1.xpose.msra.mxu0 0.0
        %2624 = vmatprep.subr.mxu0 0.0
        %2625 = vmatpush1.xpose.msra.mxu0 0.0
        %2626 = vmatprep.subr.mxu0 0.0
        %2627 = vmatpush1.xpose.msra.mxu0 %v2594
        %2628 = vmatprep.subr.mxu0 0.0
        %2629 = vmatpush2.xpose.msra.mxu0 0.0
        %2630 = vmatprep.subr.mxu0 0.0
        %2631 = vmatpush2.xpose.msra.mxu0 0.0
        %2632 = vmatprep.subr.mxu0 0.0
        %2633 = vmatpush2.xpose.msra.mxu0 0.0
        %2634 = vmatprep.subr.mxu0 0.0
        %2635 = vmatpush2.xpose.msra.mxu0 0.0
        %2636 = vmatprep.subr.mxu0 0.0
        %2637 = vmatpush2.xpose.msra.mxu0 0.0
        %2638 = vmatprep.subr.mxu0 0.0
        %2639 = vmatpush2.xpose.msra.mxu0 0.0
        %2640 = vmatprep.subr.mxu0 0.0
        %2641 = vmatpush2.xpose.msra.mxu0 0.0
        %2642 = vmatprep.subr.mxu0 0.0
        %2643 = vmatpush2.xpose.msra.mxu0 0.0
        %2644 = vmatprep.subr.mxu0 0.0
        %2645 = vmatpush2.xpose.msra.mxu0 0.0
        %2646 = vmatprep.subr.mxu0 0.0
        %2647 = vmatpush2.xpose.msra.mxu0 0.0
        %2648 = vmatprep.subr.mxu0 0.0
        %2649 = vmatpush2.xpose.msra.mxu0 0.0
        %2650 = vmatprep.subr.mxu0 0.0
        %2651 = vmatpush2.xpose.msra.mxu0 0.0
        %2652 = vmatprep.subr.mxu0 0.0
        %2653 = vmatpush2.xpose.msra.mxu0 0.0
        %2654 = vmatprep.subr.mxu0 0.0
        %2655 = vmatpush2.xpose.msra.mxu0 0.0
        %2656 = vmatprep.subr.mxu0 0.0
        %2657 = vmatpush2.xpose.msra.mxu0 0.0
        %2658 = vmatprep.subr.mxu0 0.0
        %2659 = vmatpush2.xpose.msra.mxu0 0.0
        %2660 = vmatprep.mubr.f32.mxu0 0.0
        %2661 = vmatmul.mubr.f32.gmra.mxu0 %v2591
        %v2662 = vpop.f32.mrf.mxu0
        %v2663 = vadd.f32 0.0, %v2662
        %v2664 = vpop.f32.mrf.mxu0
        %2665 = vdwg.mxu0
        %v2666 = vsel %vm646, %v2663, -inf
        %2667 = vmax.xlane.f32.xlu0 %v2666
        %v2668 = vpop.xlane.xlu0 %2667
        %v2669 = vsub.f32 %v2663, %v2668
        %v2670 = vmul.f32 %v2669, 1.442695
        %v2671 = vpow.pop %v2670
        %v2672 = vsel %vm646, %v2671, 0.0
        %2673 = vadd.xlane.f32.xlu0 %v2672
        %v2674 = vpop.xlane.xlu0 %2673
        %v2675 = vrcp.pop %v2674
        %v2676 = vmul.f32 %v2671, %v2675
        %v2678 = vsel %vm646, %v2676, 0
        %2680 = vmatprep.subr.mxu0 0.0
        %2681 = vmatpush1.msra.mxu0 0.0
        %2682 = vmatprep.subr.mxu0 0.0
        %2683 = vmatpush1.msra.mxu0 0.0
        %2684 = vmatprep.subr.mxu0 0.0
        %2685 = vmatpush1.msra.mxu0 0.0
        %2686 = vmatprep.subr.mxu0 0.0
        %2687 = vmatpush1.msra.mxu0 0.0
        %2688 = vmatprep.subr.mxu0 0.0
        %2689 = vmatpush1.msra.mxu0 0.0
        %2690 = vmatprep.subr.mxu0 0.0
        %2691 = vmatpush1.msra.mxu0 0.0
        %2692 = vmatprep.subr.mxu0 0.0
        %2693 = vmatpush1.msra.mxu0 0.0
        %2694 = vmatprep.subr.mxu0 0.0
        %2695 = vmatpush1.msra.mxu0 0.0
        %2696 = vmatprep.subr.mxu0 0.0
        %2697 = vmatpush1.msra.mxu0 0.0
        %2698 = vmatprep.subr.mxu0 0.0
        %2699 = vmatpush1.msra.mxu0 0.0
        %2700 = vmatprep.subr.mxu0 0.0
        %2701 = vmatpush1.msra.mxu0 0.0
        %2702 = vmatprep.subr.mxu0 0.0
        %2703 = vmatpush1.msra.mxu0 0.0
        %2704 = vmatprep.subr.mxu0 0.0
        %2705 = vmatpush1.msra.mxu0 0.0
        %2706 = vmatprep.subr.mxu0 0.0
        %2707 = vmatpush1.msra.mxu0 0.0
        %2708 = vmatprep.subr.mxu0 0.0
        %2709 = vmatpush1.msra.mxu0 0.0
        %2710 = vmatprep.subr.mxu0 0.0
        %2711 = vmatpush1.msra.mxu0 %v566
        %2712 = vmatprep.subr.mxu0 0.0
        %2713 = vmatpush2.msra.mxu0 0.0
        %2714 = vmatprep.subr.mxu0 0.0
        %2715 = vmatpush2.msra.mxu0 0.0
        %2716 = vmatprep.subr.mxu0 0.0
        %2717 = vmatpush2.msra.mxu0 0.0
        %2718 = vmatprep.subr.mxu0 0.0
        %2719 = vmatpush2.msra.mxu0 0.0
        %2720 = vmatprep.subr.mxu0 0.0
        %2721 = vmatpush2.msra.mxu0 0.0
        %2722 = vmatprep.subr.mxu0 0.0
        %2723 = vmatpush2.msra.mxu0 0.0
        %2724 = vmatprep.subr.mxu0 0.0
        %2725 = vmatpush2.msra.mxu0 0.0
        %2726 = vmatprep.subr.mxu0 0.0
        %2727 = vmatpush2.msra.mxu0 0.0
        %2728 = vmatprep.subr.mxu0 0.0
        %2729 = vmatpush2.msra.mxu0 0.0
        %2730 = vmatprep.subr.mxu0 0.0
        %2731 = vmatpush2.msra.mxu0 0.0
        %2732 = vmatprep.subr.mxu0 0.0
        %2733 = vmatpush2.msra.mxu0 0.0
        %2734 = vmatprep.subr.mxu0 0.0
        %2735 = vmatpush2.msra.mxu0 0.0
        %2736 = vmatprep.subr.mxu0 0.0
        %2737 = vmatpush2.msra.mxu0 0.0
        %2738 = vmatprep.subr.mxu0 0.0
        %2739 = vmatpush2.msra.mxu0 0.0
        %2740 = vmatprep.subr.mxu0 0.0
        %2741 = vmatpush2.msra.mxu0 0.0
        %2742 = vmatprep.subr.mxu0 0.0
        %2743 = vmatpush2.msra.mxu0 0.0
        %2744 = vmatprep.mubr.f32.mxu0 0.0
        %2745 = vmatmul.mubr.f32.gmra.mxu0 %v2678
        %v2746 = vpop.f32.mrf.mxu0
        %v2747 = vadd.f32 0.0, %v2746
        %v2748 = vpop.f32.mrf.mxu0
        %2749 = vdwg.mxu0
        %2750 = vst.msk [vmem:[#allocation2 + $0x18] sm:$0xff] %vm569, %v2747
        %2751 = vrot.lane.b32.xlu0 %v480, 96
        %v2752 = vpop.permute.xlu0 %2751
        %2753 = vrot.lane.b32.xlu0 %v482, 96
        %v2754 = vpop.permute.xlu0 %2753
        %v2755 = vsel %vm569, %v2752, 0
        %v2757 = vsel %vm569, %v2754, 0
        %2759 = vmatprep.subr.mxu0 0.0
        %2760 = vmatpush1.xpose.msra.mxu0 0.0
        %2761 = vmatprep.subr.mxu0 0.0
        %2762 = vmatpush1.xpose.msra.mxu0 0.0
        %2763 = vmatprep.subr.mxu0 0.0
        %2764 = vmatpush1.xpose.msra.mxu0 0.0
        %2765 = vmatprep.subr.mxu0 0.0
        %2766 = vmatpush1.xpose.msra.mxu0 0.0
        %2767 = vmatprep.subr.mxu0 0.0
        %2768 = vmatpush1.xpose.msra.mxu0 0.0
        %2769 = vmatprep.subr.mxu0 0.0
        %2770 = vmatpush1.xpose.msra.mxu0 0.0
        %2771 = vmatprep.subr.mxu0 0.0
        %2772 = vmatpush1.xpose.msra.mxu0 0.0
        %2773 = vmatprep.subr.mxu0 0.0
        %2774 = vmatpush1.xpose.msra.mxu0 0.0
        %2775 = vmatprep.subr.mxu0 0.0
        %2776 = vmatpush1.xpose.msra.mxu0 0.0
        %2777 = vmatprep.subr.mxu0 0.0
        %2778 = vmatpush1.xpose.msra.mxu0 0.0
        %2779 = vmatprep.subr.mxu0 0.0
        %2780 = vmatpush1.xpose.msra.mxu0 0.0
        %2781 = vmatprep.subr.mxu0 0.0
        %2782 = vmatpush1.xpose.msra.mxu0 0.0
        %2783 = vmatprep.subr.mxu0 0.0
        %2784 = vmatpush1.xpose.msra.mxu0 0.0
        %2785 = vmatprep.subr.mxu0 0.0
        %2786 = vmatpush1.xpose.msra.mxu0 0.0
        %2787 = vmatprep.subr.mxu0 0.0
        %2788 = vmatpush1.xpose.msra.mxu0 0.0
        %2789 = vmatprep.subr.mxu0 0.0
        %2790 = vmatpush1.xpose.msra.mxu0 %v2757
        %2791 = vmatprep.subr.mxu0 0.0
        %2792 = vmatpush2.xpose.msra.mxu0 0.0
        %2793 = vmatprep.subr.mxu0 0.0
        %2794 = vmatpush2.xpose.msra.mxu0 0.0
        %2795 = vmatprep.subr.mxu0 0.0
        %2796 = vmatpush2.xpose.msra.mxu0 0.0
        %2797 = vmatprep.subr.mxu0 0.0
        %2798 = vmatpush2.xpose.msra.mxu0 0.0
        %2799 = vmatprep.subr.mxu0 0.0
        %2800 = vmatpush2.xpose.msra.mxu0 0.0
        %2801 = vmatprep.subr.mxu0 0.0
        %2802 = vmatpush2.xpose.msra.mxu0 0.0
        %2803 = vmatprep.subr.mxu0 0.0
        %2804 = vmatpush2.xpose.msra.mxu0 0.0
        %2805 = vmatprep.subr.mxu0 0.0
        %2806 = vmatpush2.xpose.msra.mxu0 0.0
        %2807 = vmatprep.subr.mxu0 0.0
        %2808 = vmatpush2.xpose.msra.mxu0 0.0
        %2809 = vmatprep.subr.mxu0 0.0
        %2810 = vmatpush2.xpose.msra.mxu0 0.0
        %2811 = vmatprep.subr.mxu0 0.0
        %2812 = vmatpush2.xpose.msra.mxu0 0.0
        %2813 = vmatprep.subr.mxu0 0.0
        %2814 = vmatpush2.xpose.msra.mxu0 0.0
        %2815 = vmatprep.subr.mxu0 0.0
        %2816 = vmatpush2.xpose.msra.mxu0 0.0
        %2817 = vmatprep.subr.mxu0 0.0
        %2818 = vmatpush2.xpose.msra.mxu0 0.0
        %2819 = vmatprep.subr.mxu0 0.0
        %2820 = vmatpush2.xpose.msra.mxu0 0.0
        %2821 = vmatprep.subr.mxu0 0.0
        %2822 = vmatpush2.xpose.msra.mxu0 0.0
        %2823 = vmatprep.mubr.f32.mxu0 0.0
        %2824 = vmatmul.mubr.f32.gmra.mxu0 %v2755
        %v2825 = vpop.f32.mrf.mxu0
        %v2826 = vadd.f32 0.0, %v2825
        %v2827 = vpop.f32.mrf.mxu0
        %2828 = vdwg.mxu0
        %v2829 = vsel %vm646, %v2826, -inf
        %2830 = vmax.xlane.f32.xlu0 %v2829
        %v2831 = vpop.xlane.xlu0 %2830
        %v2832 = vsub.f32 %v2826, %v2831
        %v2833 = vmul.f32 %v2832, 1.442695
        %v2834 = vpow.pop %v2833
        %v2835 = vsel %vm646, %v2834, 0.0
        %2836 = vadd.xlane.f32.xlu0 %v2835
        %v2837 = vpop.xlane.xlu0 %2836
        %v2838 = vrcp.pop %v2837
        %v2839 = vmul.f32 %v2834, %v2838
        %2841 = vrot.lane.b32.xlu0 %v566, 96
        %v2842 = vpop.permute.xlu0 %2841
        %v2845 = vsel %vm646, %v2839, 0
        %2847 = vmatprep.subr.mxu0 0.0
        %2848 = vmatpush1.msra.mxu0 0.0
        %2849 = vmatprep.subr.mxu0 0.0
        %2850 = vmatpush1.msra.mxu0 0.0
        %2851 = vmatprep.subr.mxu0 0.0
        %2852 = vmatpush1.msra.mxu0 0.0
        %2853 = vmatprep.subr.mxu0 0.0
        %2854 = vmatpush1.msra.mxu0 0.0
        %2855 = vmatprep.subr.mxu0 0.0
        %2856 = vmatpush1.msra.mxu0 0.0
        %2857 = vmatprep.subr.mxu0 0.0
        %2858 = vmatpush1.msra.mxu0 0.0
        %2859 = vmatprep.subr.mxu0 0.0
        %2860 = vmatpush1.msra.mxu0 0.0
        %2861 = vmatprep.subr.mxu0 0.0
        %2862 = vmatpush1.msra.mxu0 0.0
        %2863 = vmatprep.subr.mxu0 0.0
        %2864 = vmatpush1.msra.mxu0 0.0
        %2865 = vmatprep.subr.mxu0 0.0
        %2866 = vmatpush1.msra.mxu0 0.0
        %2867 = vmatprep.subr.mxu0 0.0
        %2868 = vmatpush1.msra.mxu0 0.0
        %2869 = vmatprep.subr.mxu0 0.0
        %2870 = vmatpush1.msra.mxu0 0.0
        %2871 = vmatprep.subr.mxu0 0.0
        %2872 = vmatpush1.msra.mxu0 0.0
        %2873 = vmatprep.subr.mxu0 0.0
        %2874 = vmatpush1.msra.mxu0 0.0
        %2875 = vmatprep.subr.mxu0 0.0
        %2876 = vmatpush1.msra.mxu0 0.0
        %2877 = vmatprep.subr.mxu0 0.0
        %2878 = vmatpush1.msra.mxu0 %v2842
        %2879 = vmatprep.subr.mxu0 0.0
        %2880 = vmatpush2.msra.mxu0 0.0
        %2881 = vmatprep.subr.mxu0 0.0
        %2882 = vmatpush2.msra.mxu0 0.0
        %2883 = vmatprep.subr.mxu0 0.0
        %2884 = vmatpush2.msra.mxu0 0.0
        %2885 = vmatprep.subr.mxu0 0.0
        %2886 = vmatpush2.msra.mxu0 0.0
        %2887 = vmatprep.subr.mxu0 0.0
        %2888 = vmatpush2.msra.mxu0 0.0
        %2889 = vmatprep.subr.mxu0 0.0
        %2890 = vmatpush2.msra.mxu0 0.0
        %2891 = vmatprep.subr.mxu0 0.0
        %2892 = vmatpush2.msra.mxu0 0.0
        %2893 = vmatprep.subr.mxu0 0.0
        %2894 = vmatpush2.msra.mxu0 0.0
        %2895 = vmatprep.subr.mxu0 0.0
        %2896 = vmatpush2.msra.mxu0 0.0
        %2897 = vmatprep.subr.mxu0 0.0
        %2898 = vmatpush2.msra.mxu0 0.0
        %2899 = vmatprep.subr.mxu0 0.0
        %2900 = vmatpush2.msra.mxu0 0.0
        %2901 = vmatprep.subr.mxu0 0.0
        %2902 = vmatpush2.msra.mxu0 0.0
        %2903 = vmatprep.subr.mxu0 0.0
        %2904 = vmatpush2.msra.mxu0 0.0
        %2905 = vmatprep.subr.mxu0 0.0
        %2906 = vmatpush2.msra.mxu0 0.0
        %2907 = vmatprep.subr.mxu0 0.0
        %2908 = vmatpush2.msra.mxu0 0.0
        %2909 = vmatprep.subr.mxu0 0.0
        %2910 = vmatpush2.msra.mxu0 0.0
        %2911 = vmatprep.mubr.f32.mxu0 0.0
        %2912 = vmatmul.mubr.f32.gmra.mxu0 %v2845
        %v2913 = vpop.f32.mrf.mxu0
        %v2914 = vadd.f32 0.0, %v2913
        %v2915 = vpop.f32.mrf.mxu0
        %2916 = vdwg.mxu0
        %2918 = vrot.lane.b32.xlu0 %v2914, 32
        %v2919 = vpop.permute.xlu0 %2918
        %2921 = vst.msk [vmem:[#allocation2 + $0x18] sm:$0xff] %vm902, %v2919
        %2922 = vrot.lane.b32.xlu0 %v480, 64
        %v2923 = vpop.permute.xlu0 %2922
        %2924 = vrot.lane.b32.xlu0 %v482, 64
        %v2925 = vpop.permute.xlu0 %2924
        %v2926 = vsel %vm569, %v2923, 0
        %v2928 = vsel %vm569, %v2925, 0
        %2930 = vmatprep.subr.mxu0 0.0
        %2931 = vmatpush1.xpose.msra.mxu0 0.0
        %2932 = vmatprep.subr.mxu0 0.0
        %2933 = vmatpush1.xpose.msra.mxu0 0.0
        %2934 = vmatprep.subr.mxu0 0.0
        %2935 = vmatpush1.xpose.msra.mxu0 0.0
        %2936 = vmatprep.subr.mxu0 0.0
        %2937 = vmatpush1.xpose.msra.mxu0 0.0
        %2938 = vmatprep.subr.mxu0 0.0
        %2939 = vmatpush1.xpose.msra.mxu0 0.0
        %2940 = vmatprep.subr.mxu0 0.0
        %2941 = vmatpush1.xpose.msra.mxu0 0.0
        %2942 = vmatprep.subr.mxu0 0.0
        %2943 = vmatpush1.xpose.msra.mxu0 0.0
        %2944 = vmatprep.subr.mxu0 0.0
        %2945 = vmatpush1.xpose.msra.mxu0 0.0
        %2946 = vmatprep.subr.mxu0 0.0
        %2947 = vmatpush1.xpose.msra.mxu0 0.0
        %2948 = vmatprep.subr.mxu0 0.0
        %2949 = vmatpush1.xpose.msra.mxu0 0.0
        %2950 = vmatprep.subr.mxu0 0.0
        %2951 = vmatpush1.xpose.msra.mxu0 0.0
        %2952 = vmatprep.subr.mxu0 0.0
        %2953 = vmatpush1.xpose.msra.mxu0 0.0
        %2954 = vmatprep.subr.mxu0 0.0
        %2955 = vmatpush1.xpose.msra.mxu0 0.0
        %2956 = vmatprep.subr.mxu0 0.0
        %2957 = vmatpush1.xpose.msra.mxu0 0.0
        %2958 = vmatprep.subr.mxu0 0.0
        %2959 = vmatpush1.xpose.msra.mxu0 0.0
        %2960 = vmatprep.subr.mxu0 0.0
        %2961 = vmatpush1.xpose.msra.mxu0 %v2928
        %2962 = vmatprep.subr.mxu0 0.0
        %2963 = vmatpush2.xpose.msra.mxu0 0.0
        %2964 = vmatprep.subr.mxu0 0.0
        %2965 = vmatpush2.xpose.msra.mxu0 0.0
        %2966 = vmatprep.subr.mxu0 0.0
        %2967 = vmatpush2.xpose.msra.mxu0 0.0
        %2968 = vmatprep.subr.mxu0 0.0
        %2969 = vmatpush2.xpose.msra.mxu0 0.0
        %2970 = vmatprep.subr.mxu0 0.0
        %2971 = vmatpush2.xpose.msra.mxu0 0.0
        %2972 = vmatprep.subr.mxu0 0.0
        %2973 = vmatpush2.xpose.msra.mxu0 0.0
        %2974 = vmatprep.subr.mxu0 0.0
        %2975 = vmatpush2.xpose.msra.mxu0 0.0
        %2976 = vmatprep.subr.mxu0 0.0
        %2977 = vmatpush2.xpose.msra.mxu0 0.0
        %2978 = vmatprep.subr.mxu0 0.0
        %2979 = vmatpush2.xpose.msra.mxu0 0.0
        %2980 = vmatprep.subr.mxu0 0.0
        %2981 = vmatpush2.xpose.msra.mxu0 0.0
        %2982 = vmatprep.subr.mxu0 0.0
        %2983 = vmatpush2.xpose.msra.mxu0 0.0
        %2984 = vmatprep.subr.mxu0 0.0
        %2985 = vmatpush2.xpose.msra.mxu0 0.0
        %2986 = vmatprep.subr.mxu0 0.0
        %2987 = vmatpush2.xpose.msra.mxu0 0.0
        %2988 = vmatprep.subr.mxu0 0.0
        %2989 = vmatpush2.xpose.msra.mxu0 0.0
        %2990 = vmatprep.subr.mxu0 0.0
        %2991 = vmatpush2.xpose.msra.mxu0 0.0
        %2992 = vmatprep.subr.mxu0 0.0
        %2993 = vmatpush2.xpose.msra.mxu0 0.0
        %2994 = vmatprep.mubr.f32.mxu0 0.0
        %2995 = vmatmul.mubr.f32.gmra.mxu0 %v2926
        %v2996 = vpop.f32.mrf.mxu0
        %v2997 = vadd.f32 0.0, %v2996
        %v2998 = vpop.f32.mrf.mxu0
        %2999 = vdwg.mxu0
        %v3000 = vsel %vm646, %v2997, -inf
        %3001 = vmax.xlane.f32.xlu0 %v3000
        %v3002 = vpop.xlane.xlu0 %3001
        %v3003 = vsub.f32 %v2997, %v3002
        %v3004 = vmul.f32 %v3003, 1.442695
        %v3005 = vpow.pop %v3004
        %v3006 = vsel %vm646, %v3005, 0.0
        %3007 = vadd.xlane.f32.xlu0 %v3006
        %v3008 = vpop.xlane.xlu0 %3007
        %v3009 = vrcp.pop %v3008
        %v3010 = vmul.f32 %v3005, %v3009
        %3011 = vrot.lane.b32.xlu0 %v566, 64
        %v3012 = vpop.permute.xlu0 %3011
        %v3015 = vsel %vm646, %v3010, 0
        %3017 = vmatprep.subr.mxu0 0.0
        %3018 = vmatpush1.msra.mxu0 0.0
        %3019 = vmatprep.subr.mxu0 0.0
        %3020 = vmatpush1.msra.mxu0 0.0
        %3021 = vmatprep.subr.mxu0 0.0
        %3022 = vmatpush1.msra.mxu0 0.0
        %3023 = vmatprep.subr.mxu0 0.0
        %3024 = vmatpush1.msra.mxu0 0.0
        %3025 = vmatprep.subr.mxu0 0.0
        %3026 = vmatpush1.msra.mxu0 0.0
        %3027 = vmatprep.subr.mxu0 0.0
        %3028 = vmatpush1.msra.mxu0 0.0
        %3029 = vmatprep.subr.mxu0 0.0
        %3030 = vmatpush1.msra.mxu0 0.0
        %3031 = vmatprep.subr.mxu0 0.0
        %3032 = vmatpush1.msra.mxu0 0.0
        %3033 = vmatprep.subr.mxu0 0.0
        %3034 = vmatpush1.msra.mxu0 0.0
        %3035 = vmatprep.subr.mxu0 0.0
        %3036 = vmatpush1.msra.mxu0 0.0
        %3037 = vmatprep.subr.mxu0 0.0
        %3038 = vmatpush1.msra.mxu0 0.0
        %3039 = vmatprep.subr.mxu0 0.0
        %3040 = vmatpush1.msra.mxu0 0.0
        %3041 = vmatprep.subr.mxu0 0.0
        %3042 = vmatpush1.msra.mxu0 0.0
        %3043 = vmatprep.subr.mxu0 0.0
        %3044 = vmatpush1.msra.mxu0 0.0
        %3045 = vmatprep.subr.mxu0 0.0
        %3046 = vmatpush1.msra.mxu0 0.0
        %3047 = vmatprep.subr.mxu0 0.0
        %3048 = vmatpush1.msra.mxu0 %v3012
        %3049 = vmatprep.subr.mxu0 0.0
        %3050 = vmatpush2.msra.mxu0 0.0
        %3051 = vmatprep.subr.mxu0 0.0
        %3052 = vmatpush2.msra.mxu0 0.0
        %3053 = vmatprep.subr.mxu0 0.0
        %3054 = vmatpush2.msra.mxu0 0.0
        %3055 = vmatprep.subr.mxu0 0.0
        %3056 = vmatpush2.msra.mxu0 0.0
        %3057 = vmatprep.subr.mxu0 0.0
        %3058 = vmatpush2.msra.mxu0 0.0
        %3059 = vmatprep.subr.mxu0 0.0
        %3060 = vmatpush2.msra.mxu0 0.0
        %3061 = vmatprep.subr.mxu0 0.0
        %3062 = vmatpush2.msra.mxu0 0.0
        %3063 = vmatprep.subr.mxu0 0.0
        %3064 = vmatpush2.msra.mxu0 0.0
        %3065 = vmatprep.subr.mxu0 0.0
        %3066 = vmatpush2.msra.mxu0 0.0
        %3067 = vmatprep.subr.mxu0 0.0
        %3068 = vmatpush2.msra.mxu0 0.0
        %3069 = vmatprep.subr.mxu0 0.0
        %3070 = vmatpush2.msra.mxu0 0.0
        %3071 = vmatprep.subr.mxu0 0.0
        %3072 = vmatpush2.msra.mxu0 0.0
        %3073 = vmatprep.subr.mxu0 0.0
        %3074 = vmatpush2.msra.mxu0 0.0
        %3075 = vmatprep.subr.mxu0 0.0
        %3076 = vmatpush2.msra.mxu0 0.0
        %3077 = vmatprep.subr.mxu0 0.0
        %3078 = vmatpush2.msra.mxu0 0.0
        %3079 = vmatprep.subr.mxu0 0.0
        %3080 = vmatpush2.msra.mxu0 0.0
        %3081 = vmatprep.mubr.f32.mxu0 0.0
        %3082 = vmatmul.mubr.f32.gmra.mxu0 %v3015
        %v3083 = vpop.f32.mrf.mxu0
        %v3084 = vadd.f32 0.0, %v3083
        %v3085 = vpop.f32.mrf.mxu0
        %3086 = vdwg.mxu0
        %3088 = vrot.lane.b32.xlu0 %v3084, 64
        %v3089 = vpop.permute.xlu0 %3088
        %3091 = vst.msk [vmem:[#allocation2 + $0x18] sm:$0xff] %vm1073, %v3089
        %3092 = vrot.lane.b32.xlu0 %v480, 32
        %v3093 = vpop.permute.xlu0 %3092
        %3094 = vrot.lane.b32.xlu0 %v482, 32
        %v3095 = vpop.permute.xlu0 %3094
        %v3096 = vsel %vm569, %v3093, 0
        %v3098 = vsel %vm569, %v3095, 0
        %3100 = vmatprep.subr.mxu0 0.0
        %3101 = vmatpush1.xpose.msra.mxu0 0.0
        %3102 = vmatprep.subr.mxu0 0.0
        %3103 = vmatpush1.xpose.msra.mxu0 0.0
        %3104 = vmatprep.subr.mxu0 0.0
        %3105 = vmatpush1.xpose.msra.mxu0 0.0
        %3106 = vmatprep.subr.mxu0 0.0
        %3107 = vmatpush1.xpose.msra.mxu0 0.0
        %3108 = vmatprep.subr.mxu0 0.0
        %3109 = vmatpush1.xpose.msra.mxu0 0.0
        %3110 = vmatprep.subr.mxu0 0.0
        %3111 = vmatpush1.xpose.msra.mxu0 0.0
        %3112 = vmatprep.subr.mxu0 0.0
        %3113 = vmatpush1.xpose.msra.mxu0 0.0
        %3114 = vmatprep.subr.mxu0 0.0
        %3115 = vmatpush1.xpose.msra.mxu0 0.0
        %3116 = vmatprep.subr.mxu0 0.0
        %3117 = vmatpush1.xpose.msra.mxu0 0.0
        %3118 = vmatprep.subr.mxu0 0.0
        %3119 = vmatpush1.xpose.msra.mxu0 0.0
        %3120 = vmatprep.subr.mxu0 0.0
        %3121 = vmatpush1.xpose.msra.mxu0 0.0
        %3122 = vmatprep.subr.mxu0 0.0
        %3123 = vmatpush1.xpose.msra.mxu0 0.0
        %3124 = vmatprep.subr.mxu0 0.0
        %3125 = vmatpush1.xpose.msra.mxu0 0.0
        %3126 = vmatprep.subr.mxu0 0.0
        %3127 = vmatpush1.xpose.msra.mxu0 0.0
        %3128 = vmatprep.subr.mxu0 0.0
        %3129 = vmatpush1.xpose.msra.mxu0 0.0
        %3130 = vmatprep.subr.mxu0 0.0
        %3131 = vmatpush1.xpose.msra.mxu0 %v3098
        %3132 = vmatprep.subr.mxu0 0.0
        %3133 = vmatpush2.xpose.msra.mxu0 0.0
        %3134 = vmatprep.subr.mxu0 0.0
        %3135 = vmatpush2.xpose.msra.mxu0 0.0
        %3136 = vmatprep.subr.mxu0 0.0
        %3137 = vmatpush2.xpose.msra.mxu0 0.0
        %3138 = vmatprep.subr.mxu0 0.0
        %3139 = vmatpush2.xpose.msra.mxu0 0.0
        %3140 = vmatprep.subr.mxu0 0.0
        %3141 = vmatpush2.xpose.msra.mxu0 0.0
        %3142 = vmatprep.subr.mxu0 0.0
        %3143 = vmatpush2.xpose.msra.mxu0 0.0
        %3144 = vmatprep.subr.mxu0 0.0
        %3145 = vmatpush2.xpose.msra.mxu0 0.0
        %3146 = vmatprep.subr.mxu0 0.0
        %3147 = vmatpush2.xpose.msra.mxu0 0.0
        %3148 = vmatprep.subr.mxu0 0.0
        %3149 = vmatpush2.xpose.msra.mxu0 0.0
        %3150 = vmatprep.subr.mxu0 0.0
        %3151 = vmatpush2.xpose.msra.mxu0 0.0
        %3152 = vmatprep.subr.mxu0 0.0
        %3153 = vmatpush2.xpose.msra.mxu0 0.0
        %3154 = vmatprep.subr.mxu0 0.0
        %3155 = vmatpush2.xpose.msra.mxu0 0.0
        %3156 = vmatprep.subr.mxu0 0.0
        %3157 = vmatpush2.xpose.msra.mxu0 0.0
        %3158 = vmatprep.subr.mxu0 0.0
        %3159 = vmatpush2.xpose.msra.mxu0 0.0
        %3160 = vmatprep.subr.mxu0 0.0
        %3161 = vmatpush2.xpose.msra.mxu0 0.0
        %3162 = vmatprep.subr.mxu0 0.0
        %3163 = vmatpush2.xpose.msra.mxu0 0.0
        %3164 = vmatprep.mubr.f32.mxu0 0.0
        %3165 = vmatmul.mubr.f32.gmra.mxu0 %v3096
        %v3166 = vpop.f32.mrf.mxu0
        %v3167 = vadd.f32 0.0, %v3166
        %v3168 = vpop.f32.mrf.mxu0
        %3169 = vdwg.mxu0
        %v3170 = vsel %vm646, %v3167, -inf
        %3171 = vmax.xlane.f32.xlu0 %v3170
        %v3172 = vpop.xlane.xlu0 %3171
        %v3173 = vsub.f32 %v3167, %v3172
        %v3174 = vmul.f32 %v3173, 1.442695
        %v3175 = vpow.pop %v3174
        %v3176 = vsel %vm646, %v3175, 0.0
        %3177 = vadd.xlane.f32.xlu0 %v3176
        %v3178 = vpop.xlane.xlu0 %3177
        %v3179 = vrcp.pop %v3178
        %v3180 = vmul.f32 %v3175, %v3179
        %3181 = vrot.lane.b32.xlu0 %v566, 32
        %v3182 = vpop.permute.xlu0 %3181
        %v3185 = vsel %vm646, %v3180, 0
        %3187 = vmatprep.subr.mxu0 0.0
        %3188 = vmatpush1.msra.mxu0 0.0
        %3189 = vmatprep.subr.mxu0 0.0
        %3190 = vmatpush1.msra.mxu0 0.0
        %3191 = vmatprep.subr.mxu0 0.0
        %3192 = vmatpush1.msra.mxu0 0.0
        %3193 = vmatprep.subr.mxu0 0.0
        %3194 = vmatpush1.msra.mxu0 0.0
        %3195 = vmatprep.subr.mxu0 0.0
        %3196 = vmatpush1.msra.mxu0 0.0
        %3197 = vmatprep.subr.mxu0 0.0
        %3198 = vmatpush1.msra.mxu0 0.0
        %3199 = vmatprep.subr.mxu0 0.0
        %3200 = vmatpush1.msra.mxu0 0.0
        %3201 = vmatprep.subr.mxu0 0.0
        %3202 = vmatpush1.msra.mxu0 0.0
        %3203 = vmatprep.subr.mxu0 0.0
        %3204 = vmatpush1.msra.mxu0 0.0
        %3205 = vmatprep.subr.mxu0 0.0
        %3206 = vmatpush1.msra.mxu0 0.0
        %3207 = vmatprep.subr.mxu0 0.0
        %3208 = vmatpush1.msra.mxu0 0.0
        %3209 = vmatprep.subr.mxu0 0.0
        %3210 = vmatpush1.msra.mxu0 0.0
        %3211 = vmatprep.subr.mxu0 0.0
        %3212 = vmatpush1.msra.mxu0 0.0
        %3213 = vmatprep.subr.mxu0 0.0
        %3214 = vmatpush1.msra.mxu0 0.0
        %3215 = vmatprep.subr.mxu0 0.0
        %3216 = vmatpush1.msra.mxu0 0.0
        %3217 = vmatprep.subr.mxu0 0.0
        %3218 = vmatpush1.msra.mxu0 %v3182
        %3219 = vmatprep.subr.mxu0 0.0
        %3220 = vmatpush2.msra.mxu0 0.0
        %3221 = vmatprep.subr.mxu0 0.0
        %3222 = vmatpush2.msra.mxu0 0.0
        %3223 = vmatprep.subr.mxu0 0.0
        %3224 = vmatpush2.msra.mxu0 0.0
        %3225 = vmatprep.subr.mxu0 0.0
        %3226 = vmatpush2.msra.mxu0 0.0
        %3227 = vmatprep.subr.mxu0 0.0
        %3228 = vmatpush2.msra.mxu0 0.0
        %3229 = vmatprep.subr.mxu0 0.0
        %3230 = vmatpush2.msra.mxu0 0.0
        %3231 = vmatprep.subr.mxu0 0.0
        %3232 = vmatpush2.msra.mxu0 0.0
        %3233 = vmatprep.subr.mxu0 0.0
        %3234 = vmatpush2.msra.mxu0 0.0
        %3235 = vmatprep.subr.mxu0 0.0
        %3236 = vmatpush2.msra.mxu0 0.0
        %3237 = vmatprep.subr.mxu0 0.0
        %3238 = vmatpush2.msra.mxu0 0.0
        %3239 = vmatprep.subr.mxu0 0.0
        %3240 = vmatpush2.msra.mxu0 0.0
        %3241 = vmatprep.subr.mxu0 0.0
        %3242 = vmatpush2.msra.mxu0 0.0
        %3243 = vmatprep.subr.mxu0 0.0
        %3244 = vmatpush2.msra.mxu0 0.0
        %3245 = vmatprep.subr.mxu0 0.0
        %3246 = vmatpush2.msra.mxu0 0.0
        %3247 = vmatprep.subr.mxu0 0.0
        %3248 = vmatpush2.msra.mxu0 0.0
        %3249 = vmatprep.subr.mxu0 0.0
        %3250 = vmatpush2.msra.mxu0 0.0
        %3251 = vmatprep.mubr.f32.mxu0 0.0
        %3252 = vmatmul.mubr.f32.gmra.mxu0 %v3185
        %v3253 = vpop.f32.mrf.mxu0
        %v3254 = vadd.f32 0.0, %v3253
        %v3255 = vpop.f32.mrf.mxu0
        %3256 = vdwg.mxu0
        %3258 = vrot.lane.b32.xlu0 %v3254, 96
        %v3259 = vpop.permute.xlu0 %3258
        %3261 = vst.msk [vmem:[#allocation2 + $0x18] sm:$0xff] %vm1244, %v3259
        %v3262 = vld [vmem:[#allocation2] sm:$0xff]
        %v3263 = vld [vmem:[#allocation2 + $0x8] sm:$0xff]
        %v3264 = vld [vmem:[#allocation2 + $0x10] sm:$0xff]
        %v3265 = vld [vmem:[#allocation2 + $0x18] sm:$0xff]
        %v3266 = vld [vmem:[#allocation9] sm:$0xff]
        %v3267 = vld [vmem:[#allocation9 + $0x8] sm:$0xff]
        %v3268 = vld [vmem:[#allocation9 + $0x10] sm:$0xff]
        %v3269 = vld [vmem:[#allocation9 + $0x18] sm:$0xff]
        %v3270 = vld [vmem:[#allocation9 + $0x20] sm:$0xff]
        %v3271 = vld [vmem:[#allocation9 + $0x28] sm:$0xff]
        %v3272 = vld [vmem:[#allocation9 + $0x30] sm:$0xff]
        %v3273 = vld [vmem:[#allocation9 + $0x38] sm:$0xff]
        %v3274 = vld [vmem:[#allocation9 + $0x40] sm:$0xff]
        %v3275 = vld [vmem:[#allocation9 + $0x48] sm:$0xff]
        %v3276 = vld [vmem:[#allocation9 + $0x50] sm:$0xff]
        %v3277 = vld [vmem:[#allocation9 + $0x58] sm:$0xff]
        %v3278 = vld [vmem:[#allocation9 + $0x60] sm:$0xff]
        %v3279 = vld [vmem:[#allocation9 + $0x68] sm:$0xff]
        %v3280 = vld [vmem:[#allocation9 + $0x70] sm:$0xff]
        %v3281 = vld [vmem:[#allocation9 + $0x78] sm:$0xff]
        %3282 = vmatprep.subr.mxu0 0.0
        %3283 = vmatpush1.msra.mxu0 %v3281
        %3284 = vmatprep.subr.mxu0 0.0
        %3285 = vmatpush1.msra.mxu0 %v3280
        %3286 = vmatprep.subr.mxu0 0.0
        %3287 = vmatpush1.msra.mxu0 %v3279
        %3288 = vmatprep.subr.mxu0 0.0
        %3289 = vmatpush1.msra.mxu0 %v3278
        %3290 = vmatprep.subr.mxu0 0.0
        %3291 = vmatpush1.msra.mxu0 %v3277
        %3292 = vmatprep.subr.mxu0 0.0
        %3293 = vmatpush1.msra.mxu0 %v3276
        %3294 = vmatprep.subr.mxu0 0.0
        %3295 = vmatpush1.msra.mxu0 %v3275
        %3296 = vmatprep.subr.mxu0 0.0
        %3297 = vmatpush1.msra.mxu0 %v3274
        %3298 = vmatprep.subr.mxu0 0.0
        %3299 = vmatpush1.msra.mxu0 %v3273
        %3300 = vmatprep.subr.mxu0 0.0
        %3301 = vmatpush1.msra.mxu0 %v3272
        %3302 = vmatprep.subr.mxu0 0.0
        %3303 = vmatpush1.msra.mxu0 %v3271
        %3304 = vmatprep.subr.mxu0 0.0
        %3305 = vmatpush1.msra.mxu0 %v3270
        %3306 = vmatprep.subr.mxu0 0.0
        %3307 = vmatpush1.msra.mxu0 %v3269
        %3308 = vmatprep.subr.mxu0 0.0
        %3309 = vmatpush1.msra.mxu0 %v3268
        %3310 = vmatprep.subr.mxu0 0.0
        %3311 = vmatpush1.msra.mxu0 %v3267
        %3312 = vmatprep.subr.mxu0 0.0
        %3313 = vmatpush1.msra.mxu0 %v3266
        %3314 = vmatprep.subr.mxu0 0.0
        %3315 = vmatpush2.msra.mxu0 0.0
        %3316 = vmatprep.subr.mxu0 0.0
        %3317 = vmatpush2.msra.mxu0 0.0
        %3318 = vmatprep.subr.mxu0 0.0
        %3319 = vmatpush2.msra.mxu0 0.0
        %3320 = vmatprep.subr.mxu0 0.0
        %3321 = vmatpush2.msra.mxu0 0.0
        %3322 = vmatprep.subr.mxu0 0.0
        %3323 = vmatpush2.msra.mxu0 0.0
        %3324 = vmatprep.subr.mxu0 0.0
        %3325 = vmatpush2.msra.mxu0 0.0
        %3326 = vmatprep.subr.mxu0 0.0
        %3327 = vmatpush2.msra.mxu0 0.0
        %3328 = vmatprep.subr.mxu0 0.0
        %3329 = vmatpush2.msra.mxu0 0.0
        %3330 = vmatprep.subr.mxu0 0.0
        %3331 = vmatpush2.msra.mxu0 0.0
        %3332 = vmatprep.subr.mxu0 0.0
        %3333 = vmatpush2.msra.mxu0 0.0
        %3334 = vmatprep.subr.mxu0 0.0
        %3335 = vmatpush2.msra.mxu0 0.0
        %3336 = vmatprep.subr.mxu0 0.0
        %3337 = vmatpush2.msra.mxu0 0.0
        %3338 = vmatprep.subr.mxu0 0.0
        %3339 = vmatpush2.msra.mxu0 0.0
        %3340 = vmatprep.subr.mxu0 0.0
        %3341 = vmatpush2.msra.mxu0 0.0
        %3342 = vmatprep.subr.mxu0 0.0
        %3343 = vmatpush2.msra.mxu0 0.0
        %3344 = vmatprep.subr.mxu0 0.0
        %3345 = vmatpush2.msra.mxu0 0.0
        %3346 = vmatprep.mubr.f32.mxu0 0.0
        %3347 = vmatmul.mubr.f32.gmra.mxu0 %v3262
        %v3348 = vpop.f32.mrf.mxu0
        %v3349 = vadd.f32 0.0, %v3348
        %v3350 = vpop.f32.mrf.mxu0
        %3351 = vmatprep.mubr.f32.mxu0 0.0
        %3352 = vmatmul.mubr.f32.gmra.mxu0 %v3263
        %v3353 = vpop.f32.mrf.mxu0
        %v3354 = vadd.f32 0.0, %v3353
        %v3355 = vpop.f32.mrf.mxu0
        %3356 = vmatprep.mubr.f32.mxu0 0.0
        %3357 = vmatmul.mubr.f32.gmra.mxu0 %v3264
        %v3358 = vpop.f32.mrf.mxu0
        %v3359 = vadd.f32 0.0, %v3358
        %v3360 = vpop.f32.mrf.mxu0
        %3361 = vmatprep.mubr.f32.mxu0 0.0
        %3362 = vmatmul.mubr.f32.gmra.mxu0 %v3265
        %v3363 = vpop.f32.mrf.mxu0
        %v3364 = vadd.f32 0.0, %v3363
        %v3365 = vpop.f32.mrf.mxu0
        %3366 = vdwg.mxu0
        %v3367 = vadd.f32 %v343, %v3349
        %v3368 = vadd.f32 %v344, %v3354
        %v3369 = vadd.f32 %v345, %v3359
        %v3370 = vadd.f32 %v346, %v3364
        %3371 = vadd.xlane.f32.xlu0 %v3367
        %v3372 = vpop.xlane.xlu0 %3371
        %3373 = vadd.xlane.f32.xlu0 %v3368
        %v3374 = vpop.xlane.xlu0 %3373
        %3375 = vadd.xlane.f32.xlu0 %v3369
        %v3376 = vpop.xlane.xlu0 %3375
        %3377 = vadd.xlane.f32.xlu0 %v3370
        %v3378 = vpop.xlane.xlu0 %3377
        %v3379 = vmul.f32 %v3372, 0.03125
        %v3380 = vmul.f32 %v3374, 0.03125
        %v3381 = vmul.f32 %v3376, 0.03125
        %v3382 = vmul.f32 %v3378, 0.03125
        %v3383 = vsub.f32 %v3367, %v3379
        %v3384 = vsub.f32 %v3368, %v3380
        %v3385 = vsub.f32 %v3369, %v3381
        %v3386 = vsub.f32 %v3370, %v3382
        %v3387 = vmul.f32 %v3383, %v3383
        %v3388 = vmul.f32 %v3384, %v3384
        %v3389 = vmul.f32 %v3385, %v3385
        %v3390 = vmul.f32 %v3386, %v3386
        %3391 = vadd.xlane.f32.xlu0 %v3387
        %v3392 = vpop.xlane.xlu0 %3391
        %3393 = vadd.xlane.f32.xlu0 %v3388
        %v3394 = vpop.xlane.xlu0 %3393
        %3395 = vadd.xlane.f32.xlu0 %v3389
        %v3396 = vpop.xlane.xlu0 %3395
        %3397 = vadd.xlane.f32.xlu0 %v3390
        %v3398 = vpop.xlane.xlu0 %3397
        %v3399 = vmul.f32 %v3379, %v3379
        %v3400 = vmul.f32 %v3380, %v3380
        %v3401 = vmul.f32 %v3381, %v3381
        %v3402 = vmul.f32 %v3382, %v3382
        %v3403 = vmul.f32 %v3399, 96.0
        %v3404 = vmul.f32 %v3400, 96.0
        %v3405 = vmul.f32 %v3401, 96.0
        %v3406 = vmul.f32 %v3402, 96.0
        %v3407 = vsub.f32 %v3392, %v3403
        %v3408 = vsub.f32 %v3394, %v3404
        %v3409 = vsub.f32 %v3396, %v3405
        %v3410 = vsub.f32 %v3398, %v3406
        %v3411 = vmul.f32 %v3407, 0.03125
        %v3412 = vmul.f32 %v3408, 0.03125
        %v3413 = vmul.f32 %v3409, 0.03125
        %v3414 = vmul.f32 %v3410, 0.03125
        %v3415 = vadd.f32 %v3411, 1e-05
        %v3416 = vadd.f32 %v3412, 1e-05
        %v3417 = vadd.f32 %v3413, 1e-05
        %v3418 = vadd.f32 %v3414, 1e-05
        %v3419 = vrsqrt.pop %v3415
        %v3420 = vrsqrt.pop %v3416
        %v3421 = vrsqrt.pop %v3417
        %v3422 = vrsqrt.pop %v3418
        %v3423 = vmul.f32 %v3383, %v3419
        %v3424 = vmul.f32 %v3384, %v3420
        %v3425 = vmul.f32 %v3385, %v3421
        %v3426 = vmul.f32 %v3386, %v3422
        %v3427 = vld [vmem:[%s3] sm:$0x1]
        %v3429 = vlaneseq
        %v3430 = vshrl.u32 %v3429, 7
        %v3431 = vsub.s32 0, %v3430
        %v3432 = vrot.slane %v3427, %v3431
        %v3434 = vmul.f32 %v3423, %v3432
        %v3435 = vmul.f32 %v3424, %v3432
        %v3436 = vmul.f32 %v3425, %v3432
        %v3437 = vmul.f32 %v3426, %v3432
        %v3438 = vld [vmem:[%s4] sm:$0x1]
        %v3440 = vlaneseq
        %v3441 = vshrl.u32 %v3440, 7
        %v3442 = vsub.s32 0, %v3441
        %v3443 = vrot.slane %v3438, %v3442
        %v3445 = vadd.f32 %v3434, %v3443
        %v3446 = vadd.f32 %v3435, %v3443
        %v3447 = vadd.f32 %v3436, %v3443
        %v3448 = vadd.f32 %v3437, %v3443
        %v3449 = vlaneseq
        %v3450 = vshrl.u32 %v3449, 7
        %v3451 = vadd.s32 %v3450, 8
        %v3452 = vadd.s32 %v3450, 16
        %v3453 = vadd.s32 %v3450, 24
        %vm3454 = vcmp.lt.s32.totalorder %v3450, 0
        %v3455 = vsub.s32 0, %v3450
        %v3456 = vsel %vm3454, %v3455, %v3450
        %v3457 = vshrl.u32 %v3456, 3
        %v3458 = vand.u32 %v3456, 7
        %v3459 = vsub.s32 0, %v3458
        %v3460 = vsel %vm3454, %v3459, %v3458
        %vm3461 = vcmp.lt.s32.totalorder %v3451, 0
        %v3462 = vsub.s32 0, %v3451
        %v3463 = vsel %vm3461, %v3462, %v3451
        %v3464 = vshrl.u32 %v3463, 3
        %v3465 = vand.u32 %v3463, 7
        %v3466 = vsub.s32 0, %v3465
        %v3467 = vsel %vm3461, %v3466, %v3465
        %vm3468 = vcmp.lt.s32.totalorder %v3452, 0
        %v3469 = vsub.s32 0, %v3452
        %v3470 = vsel %vm3468, %v3469, %v3452
        %v3471 = vshrl.u32 %v3470, 3
        %v3472 = vand.u32 %v3470, 7
        %v3473 = vsub.s32 0, %v3472
        %v3474 = vsel %vm3468, %v3473, %v3472
        %vm3475 = vcmp.lt.s32.totalorder %v3453, 0
        %v3476 = vsub.s32 0, %v3453
        %v3477 = vsel %vm3475, %v3476, %v3453
        %v3478 = vshrl.u32 %v3477, 3
        %v3479 = vand.u32 %v3477, 7
        %v3480 = vsub.s32 0, %v3479
        %v3481 = vsel %vm3475, %v3480, %v3479
        %vm3482 = vcmp.ne.s32.totalorder %v3460, 0
        %vm3483 = vcmp.ne.s32.totalorder %v3467, 0
        %vm3484 = vcmp.ne.s32.totalorder %v3474, 0
        %vm3485 = vcmp.ne.s32.totalorder %v3481, 0
        %vm3486 = vcmp.lt.s32.totalorder %v3460, 0
        %vm3487 = vcmp.lt.s32.totalorder %v3467, 0
        %vm3488 = vcmp.lt.s32.totalorder %v3474, 0
        %vm3489 = vcmp.lt.s32.totalorder %v3481, 0
        %vm3490 = vmand %vm3486, %vm3482
        %vm3491 = vmand %vm3487, %vm3483
        %vm3492 = vmand %vm3488, %vm3484
        %vm3493 = vmand %vm3489, %vm3485
        %v3494 = vadd.s32 %v3460, 8
        %v3495 = vadd.s32 %v3467, 8
        %v3496 = vadd.s32 %v3474, 8
        %v3497 = vadd.s32 %v3481, 8
        %v3498 = vsel %vm3490, %v3494, %v3460
        %v3499 = vsel %vm3491, %v3495, %v3467
        %v3500 = vsel %vm3492, %v3496, %v3474
        %v3501 = vsel %vm3493, %v3497, %v3481
        %v3502 = vrot.slane %v3445, 7
        %v3503 = vrot.slane %v3446, 7
        %v3504 = vrot.slane %v3447, 7
        %v3505 = vrot.slane %v3448, 7
        %vm3506 = vcmp.lt.s32.totalorder %v3450, 1
        %v3507 = vsel %vm3506, %v3504, %v3505
        %v3508 = vsel %vm3506, %v3503, %v3504
        %v3509 = vsel %vm3506, %v3502, %v3503
        %v3510 = vsel %vm3506, %v3505, %v3502
        %v3511 = vadd.s32 %v3498, 4294967295
        %v3512 = vadd.s32 %v3499, 4294967295
        %v3513 = vadd.s32 %v3500, 4294967295
        %v3514 = vadd.s32 %v3501, 4294967295
        %vm3515 = vcmp.ge.s32.totalorder %v3511, 0
        %vm3516 = vcmp.ge.s32.totalorder %v3512, 0
        %vm3517 = vcmp.ge.s32.totalorder %v3513, 0
        %vm3518 = vcmp.ge.s32.totalorder %v3514, 0
        %vm3519 = vcmp.lt.s32.totalorder %v3511, 8
        %vm3520 = vcmp.lt.s32.totalorder %v3512, 8
        %vm3521 = vcmp.lt.s32.totalorder %v3513, 8
        %vm3522 = vcmp.lt.s32.totalorder %v3514, 8
        %vm3523 = vmand %vm3515, %vm3519
        %vm3524 = vmand %vm3516, %vm3520
        %vm3525 = vmand %vm3517, %vm3521
        %vm3526 = vmand %vm3518, %vm3522
        %v3527 = vsel %vm3523, 1, 0
        %v3528 = vsel %vm3524, 1, 0
        %v3529 = vsel %vm3525, 1, 0
        %v3530 = vsel %vm3526, 1, 0
        %vm3531 = vcmp.eq.s32.totalorder %v3527, 1
        %vm3532 = vcmp.eq.s32.totalorder %v3528, 1
        %vm3533 = vcmp.eq.s32.totalorder %v3529, 1
        %vm3534 = vcmp.eq.s32.totalorder %v3530, 1
        %v3535 = vsel %vm3531, %v3510, 0.0
        %v3536 = vsel %vm3532, %v3509, 0.0
        %v3537 = vsel %vm3533, %v3508, 0.0
        %v3538 = vsel %vm3534, %v3507, 0.0
        %3539 = vst [vmem:[#allocation3] sm:$0xff] %v3535
        %3540 = vst [vmem:[#allocation3 + $0x18] sm:$0xff] %v3536
        %3541 = vst [vmem:[#allocation3 + $0x30] sm:$0xff] %v3537
        %3542 = vst [vmem:[#allocation3 + $0x48] sm:$0xff] %v3538
        %3543 = vst [vmem:[#allocation3 + $0x8] sm:$0xff] %v3445
        %3544 = vst [vmem:[#allocation3 + $0x20] sm:$0xff] %v3446
        %3545 = vst [vmem:[#allocation3 + $0x38] sm:$0xff] %v3447
        %3546 = vst [vmem:[#allocation3 + $0x50] sm:$0xff] %v3448
        %v3547 = vrot.slane %v3445, 1
        %v3548 = vrot.slane %v3446, 1
        %v3549 = vrot.slane %v3447, 1
        %v3550 = vrot.slane %v3448, 1
        %vm3551 = vcmp.lt.s32.totalorder %v3450, 7
        %v3552 = vsel %vm3551, %v3549, %v3550
        %v3553 = vsel %vm3551, %v3548, %v3549
        %v3554 = vsel %vm3551, %v3547, %v3548
        %v3555 = vsel %vm3551, %v3550, %v3547
        %v3556 = vadd.s32 %v3498, 1
        %v3557 = vadd.s32 %v3499, 1
        %v3558 = vadd.s32 %v3500, 1
        %v3559 = vadd.s32 %v3501, 1
        %vm3560 = vcmp.ge.s32.totalorder %v3556, 0
        %vm3561 = vcmp.ge.s32.totalorder %v3557, 0
        %vm3562 = vcmp.ge.s32.totalorder %v3558, 0
        %vm3563 = vcmp.ge.s32.totalorder %v3559, 0
        %vm3564 = vcmp.lt.s32.totalorder %v3556, 8
        %vm3565 = vcmp.lt.s32.totalorder %v3557, 8
        %vm3566 = vcmp.lt.s32.totalorder %v3558, 8
        %vm3567 = vcmp.lt.s32.totalorder %v3559, 8
        %vm3568 = vmand %vm3560, %vm3564
        %vm3569 = vmand %vm3561, %vm3565
        %vm3570 = vmand %vm3562, %vm3566
        %vm3571 = vmand %vm3563, %vm3567
        %v3572 = vsel %vm3568, 1, 0
        %v3573 = vsel %vm3569, 1, 0
        %v3574 = vsel %vm3570, 1, 0
        %v3575 = vsel %vm3571, 1, 0
        %vm3576 = vcmp.eq.s32.totalorder %v3572, 1
        %vm3577 = vcmp.eq.s32.totalorder %v3573, 1
        %vm3578 = vcmp.eq.s32.totalorder %v3574, 1
        %vm3579 = vcmp.eq.s32.totalorder %v3575, 1
        %v3580 = vsel %vm3576, %v3554, 0.0
        %v3581 = vsel %vm3577, %v3553, 0.0
        %v3582 = vsel %vm3578, %v3552, 0.0
        %v3583 = vsel %vm3579, %v3555, 0.0
        %3584 = vst [vmem:[#allocation3 + $0x10] sm:$0xff] %v3580
        %3585 = vst [vmem:[#allocation3 + $0x28] sm:$0xff] %v3581
        %3586 = vst [vmem:[#allocation3 + $0x40] sm:$0xff] %v3582
        %3587 = vst [vmem:[#allocation3 + $0x58] sm:$0xff] %v3583
        %v3588 = vld [vmem:[#allocation3] sm:$0xff]
        %v3589 = vld [vmem:[#allocation3 + $0x8] sm:$0xff]
        %v3590 = vld [vmem:[#allocation3 + $0x10] sm:$0xff]
        %v3591 = vld [vmem:[#allocation3 + $0x18] sm:$0xff]
        %v3592 = vld [vmem:[#allocation3 + $0x20] sm:$0xff]
        %v3593 = vld [vmem:[#allocation3 + $0x28] sm:$0xff]
        %v3594 = vld [vmem:[#allocation3 + $0x30] sm:$0xff]
        %v3595 = vld [vmem:[#allocation3 + $0x38] sm:$0xff]
        %v3596 = vld [vmem:[#allocation3 + $0x40] sm:$0xff]
        %v3597 = vld [vmem:[#allocation3 + $0x48] sm:$0xff]
        %v3598 = vld [vmem:[#allocation3 + $0x50] sm:$0xff]
        %v3599 = vld [vmem:[#allocation3 + $0x58] sm:$0xff]
        %v3600 = vld [vmem:[#allocation10] sm:$0xff]
        %v3601 = vld [vmem:[#allocation10 + $0x8] sm:$0xff]
        %v3602 = vld [vmem:[#allocation10 + $0x10] sm:$0xff]
        %v3603 = vld [vmem:[#allocation10 + $0x18] sm:$0xff]
        %v3604 = vld [vmem:[#allocation10 + $0x20] sm:$0xff]
        %v3605 = vld [vmem:[#allocation10 + $0x28] sm:$0xff]
        %v3606 = vld [vmem:[#allocation10 + $0x30] sm:$0xff]
        %v3607 = vld [vmem:[#allocation10 + $0x38] sm:$0xff]
        %v3608 = vld [vmem:[#allocation10 + $0x40] sm:$0xff]
        %v3609 = vld [vmem:[#allocation10 + $0x48] sm:$0xff]
        %v3610 = vld [vmem:[#allocation10 + $0x50] sm:$0xff]
        %v3611 = vld [vmem:[#allocation10 + $0x58] sm:$0xff]
        %v3612 = vld [vmem:[#allocation10 + $0x60] sm:$0xff]
        %v3613 = vld [vmem:[#allocation10 + $0x68] sm:$0xff]
        %v3614 = vld [vmem:[#allocation10 + $0x70] sm:$0xff]
        %v3615 = vld [vmem:[#allocation10 + $0x78] sm:$0xff]
        %v3616 = vld [vmem:[#allocation10 + $0x80] sm:$0xff]
        %v3617 = vld [vmem:[#allocation10 + $0x88] sm:$0xff]
        %v3618 = vld [vmem:[#allocation10 + $0x90] sm:$0xff]
        %v3619 = vld [vmem:[#allocation10 + $0x98] sm:$0xff]
        %v3620 = vld [vmem:[#allocation10 + $0xa0] sm:$0xff]
        %v3621 = vld [vmem:[#allocation10 + $0xa8] sm:$0xff]
        %v3622 = vld [vmem:[#allocation10 + $0xb0] sm:$0xff]
        %v3623 = vld [vmem:[#allocation10 + $0xb8] sm:$0xff]
        %v3624 = vld [vmem:[#allocation10 + $0xc0] sm:$0xff]
        %v3625 = vld [vmem:[#allocation10 + $0xc8] sm:$0xff]
        %v3626 = vld [vmem:[#allocation10 + $0xd0] sm:$0xff]
        %v3627 = vld [vmem:[#allocation10 + $0xd8] sm:$0xff]
        %v3628 = vld [vmem:[#allocation10 + $0xe0] sm:$0xff]
        %v3629 = vld [vmem:[#allocation10 + $0xe8] sm:$0xff]
        %v3630 = vld [vmem:[#allocation10 + $0xf0] sm:$0xff]
        %v3631 = vld [vmem:[#allocation10 + $0xf8] sm:$0xff]
        %v3632 = vld [vmem:[#allocation10 + $0x100] sm:$0xff]
        %v3633 = vld [vmem:[#allocation10 + $0x108] sm:$0xff]
        %v3634 = vld [vmem:[#allocation10 + $0x110] sm:$0xff]
        %v3635 = vld [vmem:[#allocation10 + $0x118] sm:$0xff]
        %v3636 = vld [vmem:[#allocation10 + $0x120] sm:$0xff]
        %v3637 = vld [vmem:[#allocation10 + $0x128] sm:$0xff]
        %v3638 = vld [vmem:[#allocation10 + $0x130] sm:$0xff]
        %v3639 = vld [vmem:[#allocation10 + $0x138] sm:$0xff]
        %v3640 = vld [vmem:[#allocation10 + $0x140] sm:$0xff]
        %v3641 = vld [vmem:[#allocation10 + $0x148] sm:$0xff]
        %v3642 = vld [vmem:[#allocation10 + $0x150] sm:$0xff]
        %v3643 = vld [vmem:[#allocation10 + $0x158] sm:$0xff]
        %v3644 = vld [vmem:[#allocation10 + $0x160] sm:$0xff]
        %v3645 = vld [vmem:[#allocation10 + $0x168] sm:$0xff]
        %v3646 = vld [vmem:[#allocation10 + $0x170] sm:$0xff]
        %v3647 = vld [vmem:[#allocation10 + $0x178] sm:$0xff]
        %v3648 = vld [vmem:[%s6] sm:$0x1]
        %v3650 = vlaneseq
        %v3651 = vshrl.u32 %v3650, 7
        %v3652 = vsub.s32 0, %v3651
        %v3653 = vrot.slane %v3648, %v3652
        %3655 = vmatprep.subr.mxu0 0.0
        %3656 = vmatpush1.msra.mxu0 %v3615
        %3657 = vmatprep.subr.mxu0 0.0
        %3658 = vmatpush1.msra.mxu0 %v3614
        %3659 = vmatprep.subr.mxu0 0.0
        %3660 = vmatpush1.msra.mxu0 %v3613
        %3661 = vmatprep.subr.mxu0 0.0
        %3662 = vmatpush1.msra.mxu0 %v3612
        %3663 = vmatprep.subr.mxu0 0.0
        %3664 = vmatpush1.msra.mxu0 %v3611
        %3665 = vmatprep.subr.mxu0 0.0
        %3666 = vmatpush1.msra.mxu0 %v3610
        %3667 = vmatprep.subr.mxu0 0.0
        %3668 = vmatpush1.msra.mxu0 %v3609
        %3669 = vmatprep.subr.mxu0 0.0
        %3670 = vmatpush1.msra.mxu0 %v3608
        %3671 = vmatprep.subr.mxu0 0.0
        %3672 = vmatpush1.msra.mxu0 %v3607
        %3673 = vmatprep.subr.mxu0 0.0
        %3674 = vmatpush1.msra.mxu0 %v3606
        %3675 = vmatprep.subr.mxu0 0.0
        %3676 = vmatpush1.msra.mxu0 %v3605
        %3677 = vmatprep.subr.mxu0 0.0
        %3678 = vmatpush1.msra.mxu0 %v3604
        %3679 = vmatprep.subr.mxu0 0.0
        %3680 = vmatpush1.msra.mxu0 %v3603
        %3681 = vmatprep.subr.mxu0 0.0
        %3682 = vmatpush1.msra.mxu0 %v3602
        %3683 = vmatprep.subr.mxu0 0.0
        %3684 = vmatpush1.msra.mxu0 %v3601
        %3685 = vmatprep.subr.mxu0 0.0
        %3686 = vmatpush1.msra.mxu0 %v3600
        %3687 = vmatprep.subr.mxu0 0.0
        %3688 = vmatpush2.msra.mxu0 %v3631
        %3689 = vmatprep.subr.mxu0 0.0
        %3690 = vmatpush2.msra.mxu0 %v3630
        %3691 = vmatprep.subr.mxu0 0.0
        %3692 = vmatpush2.msra.mxu0 %v3629
        %3693 = vmatprep.subr.mxu0 0.0
        %3694 = vmatpush2.msra.mxu0 %v3628
        %3695 = vmatprep.subr.mxu0 0.0
        %3696 = vmatpush2.msra.mxu0 %v3627
        %3697 = vmatprep.subr.mxu0 0.0
        %3698 = vmatpush2.msra.mxu0 %v3626
        %3699 = vmatprep.subr.mxu0 0.0
        %3700 = vmatpush2.msra.mxu0 %v3625
        %3701 = vmatprep.subr.mxu0 0.0
        %3702 = vmatpush2.msra.mxu0 %v3624
        %3703 = vmatprep.subr.mxu0 0.0
        %3704 = vmatpush2.msra.mxu0 %v3623
        %3705 = vmatprep.subr.mxu0 0.0
        %3706 = vmatpush2.msra.mxu0 %v3622
        %3707 = vmatprep.subr.mxu0 0.0
        %3708 = vmatpush2.msra.mxu0 %v3621
        %3709 = vmatprep.subr.mxu0 0.0
        %3710 = vmatpush2.msra.mxu0 %v3620
        %3711 = vmatprep.subr.mxu0 0.0
        %3712 = vmatpush2.msra.mxu0 %v3619
        %3713 = vmatprep.subr.mxu0 0.0
        %3714 = vmatpush2.msra.mxu0 %v3618
        %3715 = vmatprep.subr.mxu0 0.0
        %3716 = vmatpush2.msra.mxu0 %v3617
        %3717 = vmatprep.subr.mxu0 0.0
        %3718 = vmatpush2.msra.mxu0 %v3616
        %3719 = vmatprep.mubr.f32.mxu0 %v3589
        %3720 = vmatmul.mubr.f32.gmra.mxu0 %v3588
        %v3721 = vpop.f32.mrf.mxu0
        %v3722 = vadd.f32 %v3653, %v3721
        %v3723 = vpop.f32.mrf.mxu0
        %3724 = vmatprep.mubr.f32.mxu0 %v3592
        %3725 = vmatmul.mubr.f32.gmra.mxu0 %v3591
        %v3726 = vpop.f32.mrf.mxu0
        %v3727 = vadd.f32 %v3653, %v3726
        %v3728 = vpop.f32.mrf.mxu0
        %3729 = vmatprep.mubr.f32.mxu0 %v3595
        %3730 = vmatmul.mubr.f32.gmra.mxu0 %v3594
        %v3731 = vpop.f32.mrf.mxu0
        %v3732 = vadd.f32 %v3653, %v3731
        %v3733 = vpop.f32.mrf.mxu0
        %3734 = vmatprep.mubr.f32.mxu0 %v3598
        %3735 = vmatmul.mubr.f32.gmra.mxu0 %v3597
        %v3736 = vpop.f32.mrf.mxu0
        %v3737 = vadd.f32 %v3653, %v3736
        %v3738 = vpop.f32.mrf.mxu0
        %3739 = vdwg.mxu0
        %3740 = vmatprep.subr.mxu0 0.0
        %3741 = vmatpush1.msra.mxu0 %v3647
        %3742 = vmatprep.subr.mxu0 0.0
        %3743 = vmatpush1.msra.mxu0 %v3646
        %3744 = vmatprep.subr.mxu0 0.0
        %3745 = vmatpush1.msra.mxu0 %v3645
        %3746 = vmatprep.subr.mxu0 0.0
        %3747 = vmatpush1.msra.mxu0 %v3644
        %3748 = vmatprep.subr.mxu0 0.0
        %3749 = vmatpush1.msra.mxu0 %v3643
        %3750 = vmatprep.subr.mxu0 0.0
        %3751 = vmatpush1.msra.mxu0 %v3642
        %3752 = vmatprep.subr.mxu0 0.0
        %3753 = vmatpush1.msra.mxu0 %v3641
        %3754 = vmatprep.subr.mxu0 0.0
        %3755 = vmatpush1.msra.mxu0 %v3640
        %3756 = vmatprep.subr.mxu0 0.0
        %3757 = vmatpush1.msra.mxu0 %v3639
        %3758 = vmatprep.subr.mxu0 0.0
        %3759 = vmatpush1.msra.mxu0 %v3638
        %3760 = vmatprep.subr.mxu0 0.0
        %3761 = vmatpush1.msra.mxu0 %v3637
        %3762 = vmatprep.subr.mxu0 0.0
        %3763 = vmatpush1.msra.mxu0 %v3636
        %3764 = vmatprep.subr.mxu0 0.0
        %3765 = vmatpush1.msra.mxu0 %v3635
        %3766 = vmatprep.subr.mxu0 0.0
        %3767 = vmatpush1.msra.mxu0 %v3634
        %3768 = vmatprep.subr.mxu0 0.0
        %3769 = vmatpush1.msra.mxu0 %v3633
        %3770 = vmatprep.subr.mxu0 0.0
        %3771 = vmatpush1.msra.mxu0 %v3632
        %3772 = vmatprep.subr.mxu0 0.0
        %3773 = vmatpush2.msra.mxu0 0.0
        %3774 = vmatprep.subr.mxu0 0.0
        %3775 = vmatpush2.msra.mxu0 0.0
        %3776 = vmatprep.subr.mxu0 0.0
        %3777 = vmatpush2.msra.mxu0 0.0
        %3778 = vmatprep.subr.mxu0 0.0
        %3779 = vmatpush2.msra.mxu0 0.0
        %3780 = vmatprep.subr.mxu0 0.0
        %3781 = vmatpush2.msra.mxu0 0.0
        %3782 = vmatprep.subr.mxu0 0.0
        %3783 = vmatpush2.msra.mxu0 0.0
        %3784 = vmatprep.subr.mxu0 0.0
        %3785 = vmatpush2.msra.mxu0 0.0
        %3786 = vmatprep.subr.mxu0 0.0
        %3787 = vmatpush2.msra.mxu0 0.0
        %3788 = vmatprep.subr.mxu0 0.0
        %3789 = vmatpush2.msra.mxu0 0.0
        %3790 = vmatprep.subr.mxu0 0.0
        %3791 = vmatpush2.msra.mxu0 0.0
        %3792 = vmatprep.subr.mxu0 0.0
        %3793 = vmatpush2.msra.mxu0 0.0
        %3794 = vmatprep.subr.mxu0 0.0
        %3795 = vmatpush2.msra.mxu0 0.0
        %3796 = vmatprep.subr.mxu0 0.0
        %3797 = vmatpush2.msra.mxu0 0.0
        %3798 = vmatprep.subr.mxu0 0.0
        %3799 = vmatpush2.msra.mxu0 0.0
        %3800 = vmatprep.subr.mxu0 0.0
        %3801 = vmatpush2.msra.mxu0 0.0
        %3802 = vmatprep.subr.mxu0 0.0
        %3803 = vmatpush2.msra.mxu0 0.0
        %3804 = vmatprep.mubr.f32.mxu0 0.0
        %3805 = vmatmul.mubr.f32.gmra.mxu0 %v3590
        %v3806 = vpop.f32.mrf.mxu0
        %v3807 = vadd.f32 %v3722, %v3806
        %v3808 = vpop.f32.mrf.mxu0
        %3809 = vmatprep.mubr.f32.mxu0 0.0
        %3810 = vmatmul.mubr.f32.gmra.mxu0 %v3593
        %v3811 = vpop.f32.mrf.mxu0
        %v3812 = vadd.f32 %v3727, %v3811
        %v3813 = vpop.f32.mrf.mxu0
        %3814 = vmatprep.mubr.f32.mxu0 0.0
        %3815 = vmatmul.mubr.f32.gmra.mxu0 %v3596
        %v3816 = vpop.f32.mrf.mxu0
        %v3817 = vadd.f32 %v3732, %v3816
        %v3818 = vpop.f32.mrf.mxu0
        %3819 = vmatprep.mubr.f32.mxu0 0.0
        %3820 = vmatmul.mubr.f32.gmra.mxu0 %v3599
        %v3821 = vpop.f32.mrf.mxu0
        %v3822 = vadd.f32 %v3737, %v3821
        %v3823 = vpop.f32.mrf.mxu0
        %3824 = vdwg.mxu0
        %3825 = vst [vmem:[%s340] sm:$0xff] %v3807
        %3826 = vst [vmem:[%s340 + $0x8] sm:$0xff] %v3812
        %3827 = vst [vmem:[%s340 + $0x10] sm:$0xff] %v3817
        %3828 = vst [vmem:[%s340 + $0x18] sm:$0xff] %v3822
        %s3829 = sand.u32 %s186, 1
        %s3830 = scalar_lea.sflag [#allocation6], %s3829
        %s3831 = sand.u32 %s186, 1
        %s3832 = smul.addr %s3831, 32
        %s3833 = scalar_lea.vmem [#allocation12], %s3832
        // Predicated region
        $region65: #{tpu_custom_call.1} parent=47 // pred_check
          %p3834 = pneg %p196
        $region66: #{tpu_custom_call.1} parent=47 // pred_check_branch
          %3836 = sbr.rel (%p3834) target = $region68
        $region67: #{tpu_custom_call.1} parent=47 // pred_region
          %s3837 = smul.u32 4, %s26
          %s3839 = ssub.s32 512, 512
          %3840 = vsyncadd %s3830, %s3839
          %s3841 = smul.addr %s3837, 128
          %s3842 = scalar_lea.hbm %s7, %s3841
          %s3843 = sshll.u32 %s3833, 4
          %s3844 = int_to_ptr.vmem [resolvable:$true] %s3843
          %3849 = dma.vmem_to_hbm [thread:$0]  %s3844, 512, %s3842, %s3830, 128, 128, 8
        $region68: #{tpu_custom_call.1} parent=47 // pred_fallthru
          _
      $region48: #{tpu_custom_call.1} parent=5 // pred_fallthru
        _
      %p3850 = scmp.le.s32.totalorder 2, %s21
      // Predicated region
      $region69: #{tpu_custom_call.1} parent=5 // pred_check
        %p3851 = pneg %p3850
      $region70: #{tpu_custom_call.1} parent=5 // pred_check_branch
        %3853 = sbr.rel (%p3851) target = $region72
      $region71: #{tpu_custom_call.1} parent=5 // pred_region
        %s3854 = ssub.s32 %s21, 2
        // Predicated region
        $region73: #{tpu_custom_call.1} parent=71 // pred_check
          %p3855 = pneg %p202
        $region74: #{tpu_custom_call.1} parent=71 // pred_check_branch
          %3857 = sbr.rel (%p3855) target = $region76
        $region75: #{tpu_custom_call.1} parent=71 // pred_region
          %s3858 = sand.u32 %s187, 1
          %s3859 = scalar_lea.sflag [#allocation6], %s3858
          %s3860 = sand.u32 %s187, 1
          %s3861 = smul.addr %s3860, 32
          %s3862 = scalar_lea.vmem [#allocation12], %s3861
          %3863 = dma.done %s3859, 512
        $region76: #{tpu_custom_call.1} parent=71 // pred_fallthru
          _
      $region72: #{tpu_custom_call.1} parent=5 // pred_fallthru
        _
    $region6: #{tpu_custom_call.1} parent=1 // loop_footer
      %s25 = sadd.s32 1, %s21
    $region7: #{tpu_custom_call.1} parent=1 // loop_footer_branch
      %20 = sbr.rel target = $region3
    $region8: #{tpu_custom_call.1} parent=1 // loop_exit
      _
    %3864 = vsyncpa [#allocation5], 1
    %s3865 = scalar_lea.sflag [#allocation5], 1
    %3866 = vsyncpa %s3865, 1
    %3867 = vsyncpa [#allocation8], 1
    %3868 = vsyncpa [#allocation11], 1
    %3869 = vsyncpa [#allocation6], 1
    %s3870 = scalar_lea.sflag [#allocation6], 1
    %3871 = vsyncpa %s3870, 1

// kernel: tpu_custom_call.1
$region0: #{tpu_custom_call.1}
  #allocation0 [shape = 'u32[]', space=smem, size = 0x4, offset = 0x4, fixed_abs, tag = 'smem constant byte address 0x4 - core index']
  #allocation1 [shape = 'u32[144,128]{1,0:T(1,128)}', space=vmem, size = 0x12000, scoped, tag = 'internal scratch']
  #allocation2 [shape = 'f32[32,128]{1,0:T(8,128)}', space=vmem, size = 0x4000, scoped, tag = 'scratch operand']
  #allocation3 [shape = 'f32[32,384]{1,0:T(8,128)}', space=vmem, size = 0xc000, scoped, tag = 'scratch operand']
  %s0 = inlined_call_operand.hbm [shape: f32[64,128], index: 0, kind: input, shape index: {}]
  %s1 = inlined_call_operand.hbm [shape: f32[128,384], index: 1, kind: input, shape index: {}]
  %s2 = inlined_call_operand.hbm [shape: f32[128,128], index: 2, kind: input, shape index: {}]
  %s3 = inlined_call_operand.vmem [shape: f32[1,128], index: 3, kind: input, shape index: {}]
  %s4 = inlined_call_operand.vmem [shape: f32[1,128], index: 4, kind: input, shape index: {}]
  %s5 = inlined_call_operand.hbm [shape: f32[384,128], index: 5, kind: input, shape index: {}]
  %s6 = inlined_call_operand.vmem [shape: f32[1,128], index: 6, kind: input, shape index: {}]
  %s7 = inlined_call_operand.hbm [shape: f32[64,128], index: 7, kind: output, shape index: {}]
  %s8 = sld [smem:[#allocation0]]
  $region77: #{tpu_custom_call.1} parent=0
    _
  %s10 = ssub.s32 1, %s8
  %s11 = scalar_select 0, %s10, %s8
  $region1: #{tpu_custom_call.1} parent=0
    #allocation4 [shape = 'u8[32768]{0}', space=vmem, size = 0x8000, scoped, tag = 'input window, operand 0']
    #allocation5 [shape = 's32[2]{0}', space=sflag, size = 0x8, scoped, tag = 'scoped memory for tpu_custom_call.1']
    #allocation6 [shape = 's32[2]{0}', space=sflag, size = 0x8, scoped, tag = 'scoped memory for tpu_custom_call.1']
    #allocation7 [shape = 'u8[196608]{0}', space=vmem, size = 0x30000, scoped, tag = 'input window, operand 1, single buffered']
    #allocation8 [shape = 's32[1]{0}', space=sflag, size = 0x4, scoped, tag = 'scoped memory for tpu_custom_call.1']
    #allocation9 [shape = 'u8[65536]{0}', space=vmem, size = 0x10000, scoped, tag = 'input window, operand 2, single buffered']
    #allocation10 [shape = 'u8[196608]{0}', space=vmem, size = 0x30000, scoped, tag = 'input window, operand 5, single buffered']
    #allocation11 [shape = 's32[1]{0}', space=sflag, size = 0x4, scoped, tag = 'scoped memory for tpu_custom_call.1']
    #allocation12 [shape = 'u8[32768]{0}', space=vmem, size = 0x8000, scoped, tag = 'output window, operand 0']
    %12 = vsyncpa [#allocation5], 0
    %s13 = scalar_lea.sflag [#allocation5], 1
    %14 = vsyncpa %s13, 0
    %15 = vsyncpa [#allocation8], 0
    %16 = vsyncpa [#allocation11], 0
    %17 = vsyncpa [#allocation6], 0
    %s18 = scalar_lea.sflag [#allocation6], 1
    %19 = vsyncpa %s18, 0
    loop: start=0, step=1, limit=4
    $region2: #{tpu_custom_call.1} parent=1 // loop_pre_header
      _
    $region3: #{tpu_custom_call.1} parent=1 // loop_header
      %s21 = sphi 0, %s25
      %p22 = scmp.ge.s32.totalorder %s21, 4
      %s31 = sphi 0, %s33
      %s34 = sphi 0, %s31
      %s35 = sphi 0, %s34
      %s51 = sphi 0, %s35
      %s55 = sphi 0, %s55
      %s57 = sphi 0, %s55
      %s58 = sphi 0, %s57
      %s72 = sphi 0, %s58
      %s76 = sphi 0, %s76
      %s78 = sphi 0, %s76
      %s79 = sphi 0, %s78
      %s93 = sphi 0, %s79
      %s97 = sphi 0, %s97
      %s99 = sphi 0, %s97
      %s100 = sphi 0, %s99
      %s114 = sphi 0, %s100
      %s118 = sphi 0, %s118
      %s120 = sphi 0, %s118
      %s121 = sphi 0, %s120
      %s135 = sphi 0, %s121
      %s139 = sphi 0, %s139
      %s141 = sphi 0, %s139
      %s142 = sphi 0, %s141
      %s156 = sphi 0, %s142
      %s160 = sphi 0, %s160
      %s162 = sphi 0, %s160
      %s163 = sphi 0, %s162
      %s177 = sphi 0, %s163
      %s183 = sphi 0, %s185
      %s186 = sphi 0, %s183
      %s187 = sphi 0, %s186
      %s203 = sphi 0, %s187
    $region4: #{tpu_custom_call.1} parent=1 // loop_header_branch
      %24 = sbr.rel (%p22) target = $region8
    $region5: #{tpu_custom_call.1} parent=1 // loop_body
      %s26 = ssub.s32 %s21, 1
      %s27 = ssub.s32 %s21, 2
      %s28 = sadd.s32 %s21, 1
      %s29 = ssub.s32 %s21, %s28
      %p30 = scmp.eq.s32.totalorder %s29, 0
      %s32 = sadd.s32 %s31, 1
      %s33 = scalar_select %p30, %s31, %s32
      %p36 = pneg %p30
      %p37 = scmp.eq.s32.totalorder %s21, 1
      %p38 = por %p36, %p37
      %p39 = scmp.ne.s32.totalorder %s31, %s34
      %p40 = scmp.eq.s32.totalorder %s21, 0
      %p41 = por %p39, %p40
      %p42 = scmp.ne.s32.totalorder %s31, %s34
      %p43 = scmp.eq.s32.totalorder %s26, 1
      %p44 = por %p42, %p43
      %p45 = scmp.ne.s32.totalorder %s34, %s35
      %p46 = scmp.eq.s32.totalorder %s26, 0
      %p47 = por %p45, %p46
      %p48 = scmp.ne.s32.totalorder %s34, %s35
      %p49 = scmp.eq.s32.totalorder %s27, 1
      %p50 = por %p48, %p49
      %p52 = scmp.ne.s32.totalorder %s35, %s51
      %p53 = scmp.eq.s32.totalorder %s27, 0
      %p54 = por %p52, %p53
      %s56 = sadd.s32 %s55, 1
      %p59 = scmp.eq.s32.totalorder %s21, 1
      %p60 = scmp.ne.s32.totalorder %s55, %s57
      %p61 = scmp.eq.s32.totalorder %s21, 0
      %p62 = por %p60, %p61
      %p63 = scmp.ne.s32.totalorder %s55, %s57
      %p64 = scmp.eq.s32.totalorder %s26, 1
      %p65 = por %p63, %p64
      %p66 = scmp.ne.s32.totalorder %s57, %s58
      %p67 = scmp.eq.s32.totalorder %s26, 0
      %p68 = por %p66, %p67
      %p69 = scmp.ne.s32.totalorder %s57, %s58
      %p70 = scmp.eq.s32.totalorder %s27, 1
      %p71 = por %p69, %p70
      %p73 = scmp.ne.s32.totalorder %s58, %s72
      %p74 = scmp.eq.s32.totalorder %s27, 0
      %p75 = por %p73, %p74
      %s77 = sadd.s32 %s76, 1
      %p80 = scmp.eq.s32.totalorder %s21, 1
      %p81 = scmp.ne.s32.totalorder %s76, %s78
      %p82 = scmp.eq.s32.totalorder %s21, 0
      %p83 = por %p81, %p82
      %p84 = scmp.ne.s32.totalorder %s76, %s78
      %p85 = scmp.eq.s32.totalorder %s26, 1
      %p86 = por %p84, %p85
      %p87 = scmp.ne.s32.totalorder %s78, %s79
      %p88 = scmp.eq.s32.totalorder %s26, 0
      %p89 = por %p87, %p88
      %p90 = scmp.ne.s32.totalorder %s78, %s79
      %p91 = scmp.eq.s32.totalorder %s27, 1
      %p92 = por %p90, %p91
      %p94 = scmp.ne.s32.totalorder %s79, %s93
      %p95 = scmp.eq.s32.totalorder %s27, 0
      %p96 = por %p94, %p95
      %s98 = sadd.s32 %s97, 1
      %p101 = scmp.eq.s32.totalorder %s21, 1
      %p102 = scmp.ne.s32.totalorder %s97, %s99
      %p103 = scmp.eq.s32.totalorder %s21, 0
      %p104 = por %p102, %p103
      %p105 = scmp.ne.s32.totalorder %s97, %s99
      %p106 = scmp.eq.s32.totalorder %s26, 1
      %p107 = por %p105, %p106
      %p108 = scmp.ne.s32.totalorder %s99, %s100
      %p109 = scmp.eq.s32.totalorder %s26, 0
      %p110 = por %p108, %p109
      %p111 = scmp.ne.s32.totalorder %s99, %s100
      %p112 = scmp.eq.s32.totalorder %s27, 1
      %p113 = por %p111, %p112
      %p115 = scmp.ne.s32.totalorder %s100, %s114
      %p116 = scmp.eq.s32.totalorder %s27, 0
      %p117 = por %p115, %p116
      %s119 = sadd.s32 %s118, 1
      %p122 = scmp.eq.s32.totalorder %s21, 1
      %p123 = scmp.ne.s32.totalorder %s118, %s120
      %p124 = scmp.eq.s32.totalorder %s21, 0
      %p125 = por %p123, %p124
      %p126 = scmp.ne.s32.totalorder %s118, %s120
      %p127 = scmp.eq.s32.totalorder %s26, 1
      %p128 = por %p126, %p127
      %p129 = scmp.ne.s32.totalorder %s120, %s121
      %p130 = scmp.eq.s32.totalorder %s26, 0
      %p131 = por %p129, %p130
      %p132 = scmp.ne.s32.totalorder %s120, %s121
      %p133 = scmp.eq.s32.totalorder %s27, 1
      %p134 = por %p132, %p133
      %p136 = scmp.ne.s32.totalorder %s121, %s135
      %p137 = scmp.eq.s32.totalorder %s27, 0
      %p138 = por %p136, %p137
      %s140 = sadd.s32 %s139, 1
      %p143 = scmp.eq.s32.totalorder %s21, 1
      %p144 = scmp.ne.s32.totalorder %s139, %s141
      %p145 = scmp.eq.s32.totalorder %s21, 0
      %p146 = por %p144, %p145
      %p147 = scmp.ne.s32.totalorder %s139, %s141
      %p148 = scmp.eq.s32.totalorder %s26, 1
      %p149 = por %p147, %p148
      %p150 = scmp.ne.s32.totalorder %s141, %s142
      %p151 = scmp.eq.s32.totalorder %s26, 0
      %p152 = por %p150, %p151
      %p153 = scmp.ne.s32.totalorder %s141, %s142
      %p154 = scmp.eq.s32.totalorder %s27, 1
      %p155 = por %p153, %p154
      %p157 = scmp.ne.s32.totalorder %s142, %s156
      %p158 = scmp.eq.s32.totalorder %s27, 0
      %p159 = por %p157, %p158
      %s161 = sadd.s32 %s160, 1
      %p164 = scmp.eq.s32.totalorder %s21, 1
      %p165 = scmp.ne.s32.totalorder %s160, %s162
      %p166 = scmp.eq.s32.totalorder %s21, 0
      %p167 = por %p165, %p166
      %p168 = scmp.ne.s32.totalorder %s160, %s162
      %p169 = scmp.eq.s32.totalorder %s26, 1
      %p170 = por %p168, %p169
      %p171 = scmp.ne.s32.totalorder %s162, %s163
      %p172 = scmp.eq.s32.totalorder %s26, 0
      %p173 = por %p171, %p172
      %p174 = scmp.ne.s32.totalorder %s162, %s163
      %p175 = scmp.eq.s32.totalorder %s27, 1
      %p176 = por %p174, %p175
      %p178 = scmp.ne.s32.totalorder %s163, %s177
      %p179 = scmp.eq.s32.totalorder %s27, 0
      %p180 = por %p178, %p179
      %s181 = ssub.s32 %s21, %s28
      %p182 = scmp.eq.s32.totalorder %s181, 0
      %s184 = sadd.s32 %s183, 1
      %s185 = scalar_select %p182, %s183, %s184
      %p188 = pneg %p182
      %p189 = scmp.eq.s32.totalorder %s21, 1
      %p190 = por %p188, %p189
      %p191 = scmp.ne.s32.totalorder %s183, %s186
      %p192 = scmp.eq.s32.totalorder %s21, 0
      %p193 = por %p191, %p192
      %p194 = scmp.ne.s32.totalorder %s183, %s186
      %p195 = scmp.eq.s32.totalorder %s26, 1
      %p196 = por %p194, %p195
      %p197 = scmp.ne.s32.totalorder %s186, %s187
      %p198 = scmp.eq.s32.totalorder %s26, 0
      %p199 = por %p197, %p198
      %p200 = scmp.ne.s32.totalorder %s186, %s187
      %p201 = scmp.eq.s32.totalorder %s27, 1
      %p202 = por %p200, %p201
      %p204 = scmp.ne.s32.totalorder %s187, %s203
      %p205 = scmp.eq.s32.totalorder %s27, 0
      %p206 = por %p204, %p205
      %p207 = scmp.le.s32.totalorder 1, %s21
      %p208 = scmp.lt.s32.totalorder %s21, 3
      %p209 = pnand %p207, %p208
      %p210 = pneg %p209
      // Predicated region
      $region9: #{tpu_custom_call.1} parent=5 // pred_check
        _
      $region10: #{tpu_custom_call.1} parent=5 // pred_check_branch
        %212 = sbr.rel (%p209) target = $region12
      $region11: #{tpu_custom_call.1} parent=5 // pred_region
        %s213 = ssub.s32 %s21, 1
        // Predicated region
        $region13: #{tpu_custom_call.1} parent=11 // pred_check
          %p214 = pneg %p68
        $region14: #{tpu_custom_call.1} parent=11 // pred_check_branch
          %216 = sbr.rel (%p214) target = $region16
        $region15: #{tpu_custom_call.1} parent=11 // pred_region
          %s218 = ssub.s32 6144, 6144
          %219 = vsyncadd [#allocation8], %s218
          %s220 = sshll.u32 [#allocation7], 4
          %s221 = int_to_ptr.vmem [resolvable:$true] %s220
          %226 = dma.hbm_to_vmem [thread:$0]  %s1, 6144, %s221, [#allocation8], 384, 384, 24
        $region16: #{tpu_custom_call.1} parent=11 // pred_fallthru
          _
        // Predicated region
        $region17: #{tpu_custom_call.1} parent=11 // pred_check
          %p227 = pneg %p89
        $region18: #{tpu_custom_call.1} parent=11 // pred_check_branch
          %229 = sbr.rel (%p227) target = $region20
        $region19: #{tpu_custom_call.1} parent=11 // pred_region
          %s231 = ssub.s32 2048, 2048
          %232 = vsyncadd [#allocation8], %s231
          %s233 = sshll.u32 [#allocation9], 4
          %s234 = int_to_ptr.vmem [resolvable:$true] %s233
          %239 = dma.hbm_to_vmem [thread:$0]  %s2, 2048, %s234, [#allocation8], 128, 128, 8
        $region20: #{tpu_custom_call.1} parent=11 // pred_fallthru
          _
        // Predicated region
        $region21: #{tpu_custom_call.1} parent=11 // pred_check
          %p240 = pneg %p110
        $region22: #{tpu_custom_call.1} parent=11 // pred_check_branch
          %242 = sbr.rel (%p240) target = $region24
        $region23: #{tpu_custom_call.1} parent=11 // pred_region
          _
        $region24: #{tpu_custom_call.1} parent=11 // pred_fallthru
          _
        // Predicated region
        $region25: #{tpu_custom_call.1} parent=11 // pred_check
          %p243 = pneg %p131
        $region26: #{tpu_custom_call.1} parent=11 // pred_check_branch
          %245 = sbr.rel (%p243) target = $region28
        $region27: #{tpu_custom_call.1} parent=11 // pred_region
          _
        $region28: #{tpu_custom_call.1} parent=11 // pred_fallthru
          _
        // Predicated region
        $region29: #{tpu_custom_call.1} parent=11 // pred_check
          %p246 = pneg %p152
        $region30: #{tpu_custom_call.1} parent=11 // pred_check_branch
          %248 = sbr.rel (%p246) target = $region32
        $region31: #{tpu_custom_call.1} parent=11 // pred_region
          %s250 = ssub.s32 6144, 6144
          %251 = vsyncadd [#allocation11], %s250
          %s252 = sshll.u32 [#allocation10], 4
          %s253 = int_to_ptr.vmem [resolvable:$true] %s252
          %258 = dma.hbm_to_vmem [thread:$0]  %s5, 6144, %s253, [#allocation11], 128, 128, 8
        $region32: #{tpu_custom_call.1} parent=11 // pred_fallthru
          _
        // Predicated region
        $region33: #{tpu_custom_call.1} parent=11 // pred_check
          %p259 = pneg %p173
        $region34: #{tpu_custom_call.1} parent=11 // pred_check_branch
          %261 = sbr.rel (%p259) target = $region36
        $region35: #{tpu_custom_call.1} parent=11 // pred_region
          _
        $region36: #{tpu_custom_call.1} parent=11 // pred_fallthru
          _
      $region12: #{tpu_custom_call.1} parent=5 // pred_fallthru
        _
      %p262 = scmp.lt.s32.totalorder %s21, 2
      // Predicated region
      $region37: #{tpu_custom_call.1} parent=5 // pred_check
        %p263 = pneg %p262
      $region38: #{tpu_custom_call.1} parent=5 // pred_check_branch
        %265 = sbr.rel (%p263) target = $region40
      $region39: #{tpu_custom_call.1} parent=5 // pred_region
        // Predicated region
        $region41: #{tpu_custom_call.1} parent=39 // pred_check
          %p266 = pneg %p41
        $region42: #{tpu_custom_call.1} parent=39 // pred_check_branch
          %268 = sbr.rel (%p266) target = $region44
        $region43: #{tpu_custom_call.1} parent=39 // pred_region
          %s269 = sand.u32 %s31, 1
          %s270 = scalar_lea.sflag [#allocation5], %s269
          %s271 = sand.u32 %s31, 1
          %s272 = smul.addr %s271, 32
          %s273 = scalar_lea.vmem [#allocation4], %s272
          %s274 = smul.u32 4, %s21
          %s276 = ssub.s32 512, 512
          %277 = vsyncadd %s270, %s276
          %s278 = smul.addr %s274, 128
          %s279 = scalar_lea.hbm %s0, %s278
          %s280 = sshll.u32 %s273, 4
          %s281 = int_to_ptr.vmem [resolvable:$true] %s280
          %286 = dma.hbm_to_vmem [thread:$0]  %s279, 512, %s281, %s270, 128, 128, 8
        $region44: #{tpu_custom_call.1} parent=39 // pred_fallthru
          _
      $region40: #{tpu_custom_call.1} parent=5 // pred_fallthru
        _
      %p287 = scmp.le.s32.totalorder 1, %s21
      %p288 = scmp.lt.s32.totalorder %s21, 3
      %p289 = pnand %p287, %p288
      %p290 = pneg %p289
      // Predicated region
      $region45: #{tpu_custom_call.1} parent=5 // pred_check
        _
      $region46: #{tpu_custom_call.1} parent=5 // pred_check_branch
        %292 = sbr.rel (%p289) target = $region48
      $region47: #{tpu_custom_call.1} parent=5 // pred_region
        %s293 = ssub.s32 %s21, 1
        %s294 = sand.u32 %s34, 1
        %s295 = scalar_lea.sflag [#allocation5], %s294
        %s296 = sand.u32 %s34, 1
        %s297 = smul.addr %s296, 32
        %s298 = scalar_lea.vmem [#allocation4], %s297
        // Predicated region
        $region49: #{tpu_custom_call.1} parent=47 // pred_check
          %p299 = pneg %p47
        $region50: #{tpu_custom_call.1} parent=47 // pred_check_branch
          %301 = sbr.rel (%p299) target = $region52
        $region51: #{tpu_custom_call.1} parent=47 // pred_region
          %302 = dma.done %s295, 512
        $region52: #{tpu_custom_call.1} parent=47 // pred_fallthru
          _
        // Predicated region
        $region53: #{tpu_custom_call.1} parent=47 // pred_check
          %p303 = pneg %p68
        $region54: #{tpu_custom_call.1} parent=47 // pred_check_branch
          %305 = sbr.rel (%p303) target = $region56
        $region55: #{tpu_custom_call.1} parent=47 // pred_region
          %306 = dma.done [#allocation8], 6144
        $region56: #{tpu_custom_call.1} parent=47 // pred_fallthru
          _
        // Predicated region
        $region57: #{tpu_custom_call.1} parent=47 // pred_check
          %p307 = pneg %p89
        $region58: #{tpu_custom_call.1} parent=47 // pred_check_branch
          %309 = sbr.rel (%p307) target = $region60
        $region59: #{tpu_custom_call.1} parent=47 // pred_region
          %310 = dma.done [#allocation8], 2048
        $region60: #{tpu_custom_call.1} parent=47 // pred_fallthru
          _
        // Predicated region
        $region61: #{tpu_custom_call.1} parent=47 // pred_check
          %p311 = pneg %p152
        $region62: #{tpu_custom_call.1} parent=47 // pred_check_branch
          %313 = sbr.rel (%p311) target = $region64
        $region63: #{tpu_custom_call.1} parent=47 // pred_region
          %314 = dma.done [#allocation11], 6144
        $region64: #{tpu_custom_call.1} parent=47 // pred_fallthru
          _
        %s315 = sand.u32 %s34, 1
        %s316 = scalar_lea.sflag [#allocation5], %s315
        %s317 = sand.u32 %s34, 1
        %s318 = smul.addr %s317, 32
        %s319 = scalar_lea.vmem [#allocation4], %s318
        %p320 = pneg %p47
        %p321 = pneg %p44
        %p322 = pneg %p68
        %p323 = pneg %p65
        %p324 = pneg %p89
        %p325 = pneg %p86
        %p326 = pneg %p110
        %p327 = pneg %p107
        %p328 = pneg %p131
        %p329 = pneg %p128
        %p330 = pneg %p152
        %p331 = pneg %p149
        %p332 = pneg %p173
        %p333 = pneg %p170
        %p334 = pneg %p199
        %p335 = pneg %p196
        %s336 = sand.u32 %s186, 1
        %s337 = scalar_lea.sflag [#allocation6], %s336
        %s338 = sand.u32 %s186, 1
        %s339 = smul.addr %s338, 32
        %s340 = scalar_lea.vmem [#allocation12], %s339
        %s341 = smul.u32 4, %s26
        %s342 = smul.u32 4, %s26
        %v343 = vld [vmem:[%s298] sm:$0xff]
        %v344 = vld [vmem:[%s298 + $0x8] sm:$0xff]
        %v345 = vld [vmem:[%s298 + $0x10] sm:$0xff]
        %v346 = vld [vmem:[%s298 + $0x18] sm:$0xff]
        %v347 = vld [vmem:[#allocation7] sm:$0xff]
        %v348 = vld [vmem:[#allocation7 + $0x8] sm:$0xff]
        %v349 = vld [vmem:[#allocation7 + $0x10] sm:$0xff]
        %v350 = vld [vmem:[#allocation7 + $0x18] sm:$0xff]
        %v351 = vld [vmem:[#allocation7 + $0x20] sm:$0xff]
        %v352 = vld [vmem:[#allocation7 + $0x28] sm:$0xff]
        %v353 = vld [vmem:[#allocation7 + $0x30] sm:$0xff]
        %v354 = vld [vmem:[#allocation7 + $0x38] sm:$0xff]
        %v355 = vld [vmem:[#allocation7 + $0x40] sm:$0xff]
        %v356 = vld [vmem:[#allocation7 + $0x48] sm:$0xff]
        %v357 = vld [vmem:[#allocation7 + $0x50] sm:$0xff]
        %v358 = vld [vmem:[#allocation7 + $0x58] sm:$0xff]
        %v359 = vld [vmem:[#allocation7 + $0x60] sm:$0xff]
        %v360 = vld [vmem:[#allocation7 + $0x68] sm:$0xff]
        %v361 = vld [vmem:[#allocation7 + $0x70] sm:$0xff]
        %v362 = vld [vmem:[#allocation7 + $0x78] sm:$0xff]
        %v363 = vld [vmem:[#allocation7 + $0x80] sm:$0xff]
        %v364 = vld [vmem:[#allocation7 + $0x88] sm:$0xff]
        %v365 = vld [vmem:[#allocation7 + $0x90] sm:$0xff]
        %v366 = vld [vmem:[#allocation7 + $0x98] sm:$0xff]
        %v367 = vld [vmem:[#allocation7 + $0xa0] sm:$0xff]
        %v368 = vld [vmem:[#allocation7 + $0xa8] sm:$0xff]
        %v369 = vld [vmem:[#allocation7 + $0xb0] sm:$0xff]
        %v370 = vld [vmem:[#allocation7 + $0xb8] sm:$0xff]
        %v371 = vld [vmem:[#allocation7 + $0xc0] sm:$0xff]
        %v372 = vld [vmem:[#allocation7 + $0xc8] sm:$0xff]
        %v373 = vld [vmem:[#allocation7 + $0xd0] sm:$0xff]
        %v374 = vld [vmem:[#allocation7 + $0xd8] sm:$0xff]
        %v375 = vld [vmem:[#allocation7 + $0xe0] sm:$0xff]
        %v376 = vld [vmem:[#allocation7 + $0xe8] sm:$0xff]
        %v377 = vld [vmem:[#allocation7 + $0xf0] sm:$0xff]
        %v378 = vld [vmem:[#allocation7 + $0xf8] sm:$0xff]
        %v379 = vld [vmem:[#allocation7 + $0x100] sm:$0xff]
        %v380 = vld [vmem:[#allocation7 + $0x108] sm:$0xff]
        %v381 = vld [vmem:[#allocation7 + $0x110] sm:$0xff]
        %v382 = vld [vmem:[#allocation7 + $0x118] sm:$0xff]
        %v383 = vld [vmem:[#allocation7 + $0x120] sm:$0xff]
        %v384 = vld [vmem:[#allocation7 + $0x128] sm:$0xff]
        %v385 = vld [vmem:[#allocation7 + $0x130] sm:$0xff]
        %v386 = vld [vmem:[#allocation7 + $0x138] sm:$0xff]
        %v387 = vld [vmem:[#allocation7 + $0x140] sm:$0xff]
        %v388 = vld [vmem:[#allocation7 + $0x148] sm:$0xff]
        %v389 = vld [vmem:[#allocation7 + $0x150] sm:$0xff]
        %v390 = vld [vmem:[#allocation7 + $0x158] sm:$0xff]
        %v391 = vld [vmem:[#allocation7 + $0x160] sm:$0xff]
        %v392 = vld [vmem:[#allocation7 + $0x168] sm:$0xff]
        %v393 = vld [vmem:[#allocation7 + $0x170] sm:$0xff]
        %v394 = vld [vmem:[#allocation7 + $0x178] sm:$0xff]
        %395 = vmatprep.subr.mxu0 %v393
        %396 = vmatpush1.msra.mxu0 %v392
        %397 = vmatprep.subr.mxu0 %v390
        %398 = vmatpush1.msra.mxu0 %v389
        %399 = vmatprep.subr.mxu0 %v387
        %400 = vmatpush1.msra.mxu0 %v386
        %401 = vmatprep.subr.mxu0 %v384
        %402 = vmatpush1.msra.mxu0 %v383
        %403 = vmatprep.subr.mxu0 %v381
        %404 = vmatpush1.msra.mxu0 %v380
        %405 = vmatprep.subr.mxu0 %v378
        %406 = vmatpush1.msra.mxu0 %v377
        %407 = vmatprep.subr.mxu0 %v375
        %408 = vmatpush1.msra.mxu0 %v374
        %409 = vmatprep.subr.mxu0 %v372
        %410 = vmatpush1.msra.mxu0 %v371
        %411 = vmatprep.subr.mxu0 %v369
        %412 = vmatpush1.msra.mxu0 %v368
        %413 = vmatprep.subr.mxu0 %v366
        %414 = vmatpush1.msra.mxu0 %v365
        %415 = vmatprep.subr.mxu0 %v363
        %416 = vmatpush1.msra.mxu0 %v362
        %417 = vmatprep.subr.mxu0 %v360
        %418 = vmatpush1.msra.mxu0 %v359
        %419 = vmatprep.subr.mxu0 %v357
        %420 = vmatpush1.msra.mxu0 %v356
        %421 = vmatprep.subr.mxu0 %v354
        %422 = vmatpush1.msra.mxu0 %v353
        %423 = vmatprep.subr.mxu0 %v351
        %424 = vmatpush1.msra.mxu0 %v350
        %425 = vmatprep.subr.mxu0 %v348
        %426 = vmatpush1.msra.mxu0 %v347
        %427 = vmatprep.subr.mxu0 0.0
        %428 = vmatpush2.msra.mxu0 0.0
        %429 = vmatprep.subr.mxu0 0.0
        %430 = vmatpush2.msra.mxu0 0.0
        %431 = vmatprep.subr.mxu0 0.0
        %432 = vmatpush2.msra.mxu0 0.0
        %433 = vmatprep.subr.mxu0 0.0
        %434 = vmatpush2.msra.mxu0 0.0
        %435 = vmatprep.subr.mxu0 0.0
        %436 = vmatpush2.msra.mxu0 0.0
        %437 = vmatprep.subr.mxu0 0.0
        %438 = vmatpush2.msra.mxu0 0.0
        %439 = vmatprep.subr.mxu0 0.0
        %440 = vmatpush2.msra.mxu0 0.0
        %441 = vmatprep.subr.mxu0 0.0
        %442 = vmatpush2.msra.mxu0 0.0
        %443 = vmatprep.subr.mxu0 0.0
        %444 = vmatpush2.msra.mxu0 0.0
        %445 = vmatprep.subr.mxu0 0.0
        %446 = vmatpush2.msra.mxu0 0.0
        %447 = vmatprep.subr.mxu0 0.0
        %448 = vmatpush2.msra.mxu0 0.0
        %449 = vmatprep.subr.mxu0 0.0
        %450 = vmatpush2.msra.mxu0 0.0
        %451 = vmatprep.subr.mxu0 0.0
        %452 = vmatpush2.msra.mxu0 0.0
        %453 = vmatprep.subr.mxu0 0.0
        %454 = vmatpush2.msra.mxu0 0.0
        %455 = vmatprep.subr.mxu0 0.0
        %456 = vmatpush2.msra.mxu0 0.0
        %457 = vmatprep.subr.mxu0 0.0
        %458 = vmatpush2.msra.mxu0 0.0
        %459 = vmatprep.mubr.f32.mxu0 0.0
        %460 = vmatmul.mubr.f32.gmra.mxu0 %v343
        %v461 = vpop.f32.mrf.mxu0
        %v462 = vadd.f32 0.0, %v461
        %v463 = vpop.f32.mrf.mxu0
        %v464 = vadd.f32 0.0, %v463
        %465 = vmatprep.mubr.f32.mxu0 0.0
        %466 = vmatmul.mubr.f32.gmra.mxu0 %v344
        %v467 = vpop.f32.mrf.mxu0
        %v468 = vadd.f32 0.0, %v467
        %v469 = vpop.f32.mrf.mxu0
        %v470 = vadd.f32 0.0, %v469
        %471 = vmatprep.mubr.f32.mxu0 0.0
        %472 = vmatmul.mubr.f32.gmra.mxu0 %v345
        %v473 = vpop.f32.mrf.mxu0
        %v474 = vadd.f32 0.0, %v473
        %v475 = vpop.f32.mrf.mxu0
        %v476 = vadd.f32 0.0, %v475
        %477 = vmatprep.mubr.f32.mxu0 0.0
        %478 = vmatmul.mubr.f32.gmra.mxu0 %v346
        %v479 = vpop.f32.mrf.mxu0
        %v480 = vadd.f32 0.0, %v479
        %v481 = vpop.f32.mrf.mxu0
        %v482 = vadd.f32 0.0, %v481
        %483 = vdwg.mxu0
        %484 = vmatprep.subr.mxu0 0.0
        %485 = vmatpush1.msra.mxu0 %v394
        %486 = vmatprep.subr.mxu0 0.0
        %487 = vmatpush1.msra.mxu0 %v391
        %488 = vmatprep.subr.mxu0 0.0
        %489 = vmatpush1.msra.mxu0 %v388
        %490 = vmatprep.subr.mxu0 0.0
        %491 = vmatpush1.msra.mxu0 %v385
        %492 = vmatprep.subr.mxu0 0.0
        %493 = vmatpush1.msra.mxu0 %v382
        %494 = vmatprep.subr.mxu0 0.0
        %495 = vmatpush1.msra.mxu0 %v379
        %496 = vmatprep.subr.mxu0 0.0
        %497 = vmatpush1.msra.mxu0 %v376
        %498 = vmatprep.subr.mxu0 0.0
        %499 = vmatpush1.msra.mxu0 %v373
        %500 = vmatprep.subr.mxu0 0.0
        %501 = vmatpush1.msra.mxu0 %v370
        %502 = vmatprep.subr.mxu0 0.0
        %503 = vmatpush1.msra.mxu0 %v367
        %504 = vmatprep.subr.mxu0 0.0
        %505 = vmatpush1.msra.mxu0 %v364
        %506 = vmatprep.subr.mxu0 0.0
        %507 = vmatpush1.msra.mxu0 %v361
        %508 = vmatprep.subr.mxu0 0.0
        %509 = vmatpush1.msra.mxu0 %v358
        %510 = vmatprep.subr.mxu0 0.0
        %511 = vmatpush1.msra.mxu0 %v355
        %512 = vmatprep.subr.mxu0 0.0
        %513 = vmatpush1.msra.mxu0 %v352
        %514 = vmatprep.subr.mxu0 0.0
        %515 = vmatpush1.msra.mxu0 %v349
        %516 = vmatprep.subr.mxu0 0.0
        %517 = vmatpush2.msra.mxu0 0.0
        %518 = vmatprep.subr.mxu0 0.0
        %519 = vmatpush2.msra.mxu0 0.0
        %520 = vmatprep.subr.mxu0 0.0
        %521 = vmatpush2.msra.mxu0 0.0
        %522 = vmatprep.subr.mxu0 0.0
        %523 = vmatpush2.msra.mxu0 0.0
        %524 = vmatprep.subr.mxu0 0.0
        %525 = vmatpush2.msra.mxu0 0.0
        %526 = vmatprep.subr.mxu0 0.0
        %527 = vmatpush2.msra.mxu0 0.0
        %528 = vmatprep.subr.mxu0 0.0
        %529 = vmatpush2.msra.mxu0 0.0
        %530 = vmatprep.subr.mxu0 0.0
        %531 = vmatpush2.msra.mxu0 0.0
        %532 = vmatprep.subr.mxu0 0.0
        %533 = vmatpush2.msra.mxu0 0.0
        %534 = vmatprep.subr.mxu0 0.0
        %535 = vmatpush2.msra.mxu0 0.0
        %536 = vmatprep.subr.mxu0 0.0
        %537 = vmatpush2.msra.mxu0 0.0
        %538 = vmatprep.subr.mxu0 0.0
        %539 = vmatpush2.msra.mxu0 0.0
        %540 = vmatprep.subr.mxu0 0.0
        %541 = vmatpush2.msra.mxu0 0.0
        %542 = vmatprep.subr.mxu0 0.0
        %543 = vmatpush2.msra.mxu0 0.0
        %544 = vmatprep.subr.mxu0 0.0
        %545 = vmatpush2.msra.mxu0 0.0
        %546 = vmatprep.subr.mxu0 0.0
        %547 = vmatpush2.msra.mxu0 0.0
        %548 = vmatprep.mubr.f32.mxu0 0.0
        %549 = vmatmul.mubr.f32.gmra.mxu0 %v343
        %v550 = vpop.f32.mrf.mxu0
        %v551 = vadd.f32 0.0, %v550
        %v552 = vpop.f32.mrf.mxu0
        %553 = vmatprep.mubr.f32.mxu0 0.0
        %554 = vmatmul.mubr.f32.gmra.mxu0 %v344
        %v555 = vpop.f32.mrf.mxu0
        %v556 = vadd.f32 0.0, %v555
        %v557 = vpop.f32.mrf.mxu0
        %558 = vmatprep.mubr.f32.mxu0 0.0
        %559 = vmatmul.mubr.f32.gmra.mxu0 %v345
        %v560 = vpop.f32.mrf.mxu0
        %v561 = vadd.f32 0.0, %v560
        %v562 = vpop.f32.mrf.mxu0
        %563 = vmatprep.mubr.f32.mxu0 0.0
        %564 = vmatmul.mubr.f32.gmra.mxu0 %v346
        %v565 = vpop.f32.mrf.mxu0
        %v566 = vadd.f32 0.0, %v565
        %v567 = vpop.f32.mrf.mxu0
        %568 = vdwg.mxu0
        %vm569 = vcmask 261120
        %v571 = vsel %vm569, %v462, 0
        %v574 = vsel %vm569, %v464, 0
        %576 = vmatprep.subr.mxu0 0.0
        %577 = vmatpush1.xpose.msra.mxu0 0.0
        %578 = vmatprep.subr.mxu0 0.0
        %579 = vmatpush1.xpose.msra.mxu0 0.0
        %580 = vmatprep.subr.mxu0 0.0
        %581 = vmatpush1.xpose.msra.mxu0 0.0
        %582 = vmatprep.subr.mxu0 0.0
        %583 = vmatpush1.xpose.msra.mxu0 0.0
        %584 = vmatprep.subr.mxu0 0.0
        %585 = vmatpush1.xpose.msra.mxu0 0.0
        %586 = vmatprep.subr.mxu0 0.0
        %587 = vmatpush1.xpose.msra.mxu0 0.0
        %588 = vmatprep.subr.mxu0 0.0
        %589 = vmatpush1.xpose.msra.mxu0 0.0
        %590 = vmatprep.subr.mxu0 0.0
        %591 = vmatpush1.xpose.msra.mxu0 0.0
        %592 = vmatprep.subr.mxu0 0.0
        %593 = vmatpush1.xpose.msra.mxu0 0.0
        %594 = vmatprep.subr.mxu0 0.0
        %595 = vmatpush1.xpose.msra.mxu0 0.0
        %596 = vmatprep.subr.mxu0 0.0
        %597 = vmatpush1.xpose.msra.mxu0 0.0
        %598 = vmatprep.subr.mxu0 0.0
        %599 = vmatpush1.xpose.msra.mxu0 0.0
        %600 = vmatprep.subr.mxu0 0.0
        %601 = vmatpush1.xpose.msra.mxu0 0.0
        %602 = vmatprep.subr.mxu0 0.0
        %603 = vmatpush1.xpose.msra.mxu0 0.0
        %604 = vmatprep.subr.mxu0 0.0
        %605 = vmatpush1.xpose.msra.mxu0 0.0
        %606 = vmatprep.subr.mxu0 0.0
        %607 = vmatpush1.xpose.msra.mxu0 %v574
        %608 = vmatprep.subr.mxu0 0.0
        %609 = vmatpush2.xpose.msra.mxu0 0.0
        %610 = vmatprep.subr.mxu0 0.0
        %611 = vmatpush2.xpose.msra.mxu0 0.0
        %612 = vmatprep.subr.mxu0 0.0
        %613 = vmatpush2.xpose.msra.mxu0 0.0
        %614 = vmatprep.subr.mxu0 0.0
        %615 = vmatpush2.xpose.msra.mxu0 0.0
        %616 = vmatprep.subr.mxu0 0.0
        %617 = vmatpush2.xpose.msra.mxu0 0.0
        %618 = vmatprep.subr.mxu0 0.0
        %619 = vmatpush2.xpose.msra.mxu0 0.0
        %620 = vmatprep.subr.mxu0 0.0
        %621 = vmatpush2.xpose.msra.mxu0 0.0
        %622 = vmatprep.subr.mxu0 0.0
        %623 = vmatpush2.xpose.msra.mxu0 0.0
        %624 = vmatprep.subr.mxu0 0.0
        %625 = vmatpush2.xpose.msra.mxu0 0.0
        %626 = vmatprep.subr.mxu0 0.0
        %627 = vmatpush2.xpose.msra.mxu0 0.0
        %628 = vmatprep.subr.mxu0 0.0
        %629 = vmatpush2.xpose.msra.mxu0 0.0
        %630 = vmatprep.subr.mxu0 0.0
        %631 = vmatpush2.xpose.msra.mxu0 0.0
        %632 = vmatprep.subr.mxu0 0.0
        %633 = vmatpush2.xpose.msra.mxu0 0.0
        %634 = vmatprep.subr.mxu0 0.0
        %635 = vmatpush2.xpose.msra.mxu0 0.0
        %636 = vmatprep.subr.mxu0 0.0
        %637 = vmatpush2.xpose.msra.mxu0 0.0
        %638 = vmatprep.subr.mxu0 0.0
        %639 = vmatpush2.xpose.msra.mxu0 0.0
        %640 = vmatprep.mubr.f32.mxu0 0.0
        %641 = vmatmul.mubr.f32.gmra.mxu0 %v571
        %v642 = vpop.f32.mrf.mxu0
        %v643 = vadd.f32 0.0, %v642
        %v644 = vpop.f32.mrf.mxu0
        %645 = vdwg.mxu0
        %vm646 = vcmask 64512
        %v647 = vsel %vm646, %v643, -inf
        %648 = vmax.xlane.f32.xlu0 %v647
        %v649 = vpop.xlane.xlu0 %648
        %v650 = vsub.f32 %v643, %v649
        %v651 = vmul.f32 %v650, 1.442695
        %v652 = vpow.pop %v651
        %v653 = vsel %vm646, %v652, 0.0
        %654 = vadd.xlane.f32.xlu0 %v653
        %v655 = vpop.xlane.xlu0 %654
        %v656 = vrcp.pop %v655
        %v657 = vmul.f32 %v652, %v656
        %v659 = vsel %vm646, %v657, 0
        %661 = vmatprep.subr.mxu0 0.0
        %662 = vmatpush1.msra.mxu0 0.0
        %663 = vmatprep.subr.mxu0 0.0
        %664 = vmatpush1.msra.mxu0 0.0
        %665 = vmatprep.subr.mxu0 0.0
        %666 = vmatpush1.msra.mxu0 0.0
        %667 = vmatprep.subr.mxu0 0.0
        %668 = vmatpush1.msra.mxu0 0.0
        %669 = vmatprep.subr.mxu0 0.0
        %670 = vmatpush1.msra.mxu0 0.0
        %671 = vmatprep.subr.mxu0 0.0
        %672 = vmatpush1.msra.mxu0 0.0
        %673 = vmatprep.subr.mxu0 0.0
        %674 = vmatpush1.msra.mxu0 0.0
        %675 = vmatprep.subr.mxu0 0.0
        %676 = vmatpush1.msra.mxu0 0.0
        %677 = vmatprep.subr.mxu0 0.0
        %678 = vmatpush1.msra.mxu0 0.0
        %679 = vmatprep.subr.mxu0 0.0
        %680 = vmatpush1.msra.mxu0 0.0
        %681 = vmatprep.subr.mxu0 0.0
        %682 = vmatpush1.msra.mxu0 0.0
        %683 = vmatprep.subr.mxu0 0.0
        %684 = vmatpush1.msra.mxu0 0.0
        %685 = vmatprep.subr.mxu0 0.0
        %686 = vmatpush1.msra.mxu0 0.0
        %687 = vmatprep.subr.mxu0 0.0
        %688 = vmatpush1.msra.mxu0 0.0
        %689 = vmatprep.subr.mxu0 0.0
        %690 = vmatpush1.msra.mxu0 0.0
        %691 = vmatprep.subr.mxu0 0.0
        %692 = vmatpush1.msra.mxu0 %v551
        %693 = vmatprep.subr.mxu0 0.0
        %694 = vmatpush2.msra.mxu0 0.0
        %695 = vmatprep.subr.mxu0 0.0
        %696 = vmatpush2.msra.mxu0 0.0
        %697 = vmatprep.subr.mxu0 0.0
        %698 = vmatpush2.msra.mxu0 0.0
        %699 = vmatprep.subr.mxu0 0.0
        %700 = vmatpush2.msra.mxu0 0.0
        %701 = vmatprep.subr.mxu0 0.0
        %702 = vmatpush2.msra.mxu0 0.0
        %703 = vmatprep.subr.mxu0 0.0
        %704 = vmatpush2.msra.mxu0 0.0
        %705 = vmatprep.subr.mxu0 0.0
        %706 = vmatpush2.msra.mxu0 0.0
        %707 = vmatprep.subr.mxu0 0.0
        %708 = vmatpush2.msra.mxu0 0.0
        %709 = vmatprep.subr.mxu0 0.0
        %710 = vmatpush2.msra.mxu0 0.0
        %711 = vmatprep.subr.mxu0 0.0
        %712 = vmatpush2.msra.mxu0 0.0
        %713 = vmatprep.subr.mxu0 0.0
        %714 = vmatpush2.msra.mxu0 0.0
        %715 = vmatprep.subr.mxu0 0.0
        %716 = vmatpush2.msra.mxu0 0.0
        %717 = vmatprep.subr.mxu0 0.0
        %718 = vmatpush2.msra.mxu0 0.0
        %719 = vmatprep.subr.mxu0 0.0
        %720 = vmatpush2.msra.mxu0 0.0
        %721 = vmatprep.subr.mxu0 0.0
        %722 = vmatpush2.msra.mxu0 0.0
        %723 = vmatprep.subr.mxu0 0.0
        %724 = vmatpush2.msra.mxu0 0.0
        %725 = vmatprep.mubr.f32.mxu0 0.0
        %726 = vmatmul.mubr.f32.gmra.mxu0 %v659
        %v727 = vpop.f32.mrf.mxu0
        %v728 = vadd.f32 0.0, %v727
        %v729 = vpop.f32.mrf.mxu0
        %730 = vdwg.mxu0
        %731 = vst.msk [vmem:[#allocation2] sm:$0xff] %vm569, %v728
        %732 = vrot.lane.b32.xlu0 %v462, 96
        %v733 = vpop.permute.xlu0 %732
        %734 = vrot.lane.b32.xlu0 %v464, 96
        %v735 = vpop.permute.xlu0 %734
        %v736 = vsel %vm569, %v733, 0
        %v738 = vsel %vm569, %v735, 0
        %740 = vmatprep.subr.mxu0 0.0
        %741 = vmatpush1.xpose.msra.mxu0 0.0
        %742 = vmatprep.subr.mxu0 0.0
        %743 = vmatpush1.xpose.msra.mxu0 0.0
        %744 = vmatprep.subr.mxu0 0.0
        %745 = vmatpush1.xpose.msra.mxu0 0.0
        %746 = vmatprep.subr.mxu0 0.0
        %747 = vmatpush1.xpose.msra.mxu0 0.0
        %748 = vmatprep.subr.mxu0 0.0
        %749 = vmatpush1.xpose.msra.mxu0 0.0
        %750 = vmatprep.subr.mxu0 0.0
        %751 = vmatpush1.xpose.msra.mxu0 0.0
        %752 = vmatprep.subr.mxu0 0.0
        %753 = vmatpush1.xpose.msra.mxu0 0.0
        %754 = vmatprep.subr.mxu0 0.0
        %755 = vmatpush1.xpose.msra.mxu0 0.0
        %756 = vmatprep.subr.mxu0 0.0
        %757 = vmatpush1.xpose.msra.mxu0 0.0
        %758 = vmatprep.subr.mxu0 0.0
        %759 = vmatpush1.xpose.msra.mxu0 0.0
        %760 = vmatprep.subr.mxu0 0.0
        %761 = vmatpush1.xpose.msra.mxu0 0.0
        %762 = vmatprep.subr.mxu0 0.0
        %763 = vmatpush1.xpose.msra.mxu0 0.0
        %764 = vmatprep.subr.mxu0 0.0
        %765 = vmatpush1.xpose.msra.mxu0 0.0
        %766 = vmatprep.subr.mxu0 0.0
        %767 = vmatpush1.xpose.msra.mxu0 0.0
        %768 = vmatprep.subr.mxu0 0.0
        %769 = vmatpush1.xpose.msra.mxu0 0.0
        %770 = vmatprep.subr.mxu0 0.0
        %771 = vmatpush1.xpose.msra.mxu0 %v738
        %772 = vmatprep.subr.mxu0 0.0
        %773 = vmatpush2.xpose.msra.mxu0 0.0
        %774 = vmatprep.subr.mxu0 0.0
        %775 = vmatpush2.xpose.msra.mxu0 0.0
        %776 = vmatprep.subr.mxu0 0.0
        %777 = vmatpush2.xpose.msra.mxu0 0.0
        %778 = vmatprep.subr.mxu0 0.0
        %779 = vmatpush2.xpose.msra.mxu0 0.0
        %780 = vmatprep.subr.mxu0 0.0
        %781 = vmatpush2.xpose.msra.mxu0 0.0
        %782 = vmatprep.subr.mxu0 0.0
        %783 = vmatpush2.xpose.msra.mxu0 0.0
        %784 = vmatprep.subr.mxu0 0.0
        %785 = vmatpush2.xpose.msra.mxu0 0.0
        %786 = vmatprep.subr.mxu0 0.0
        %787 = vmatpush2.xpose.msra.mxu0 0.0
        %788 = vmatprep.subr.mxu0 0.0
        %789 = vmatpush2.xpose.msra.mxu0 0.0
        %790 = vmatprep.subr.mxu0 0.0
        %791 = vmatpush2.xpose.msra.mxu0 0.0
        %792 = vmatprep.subr.mxu0 0.0
        %793 = vmatpush2.xpose.msra.mxu0 0.0
        %794 = vmatprep.subr.mxu0 0.0
        %795 = vmatpush2.xpose.msra.mxu0 0.0
        %796 = vmatprep.subr.mxu0 0.0
        %797 = vmatpush2.xpose.msra.mxu0 0.0
        %798 = vmatprep.subr.mxu0 0.0
        %799 = vmatpush2.xpose.msra.mxu0 0.0
        %800 = vmatprep.subr.mxu0 0.0
        %801 = vmatpush2.xpose.msra.mxu0 0.0
        %802 = vmatprep.subr.mxu0 0.0
        %803 = vmatpush2.xpose.msra.mxu0 0.0
        %804 = vmatprep.mubr.f32.mxu0 0.0
        %805 = vmatmul.mubr.f32.gmra.mxu0 %v736
        %v806 = vpop.f32.mrf.mxu0
        %v807 = vadd.f32 0.0, %v806
        %v808 = vpop.f32.mrf.mxu0
        %809 = vdwg.mxu0
        %v810 = vsel %vm646, %v807, -inf
        %811 = vmax.xlane.f32.xlu0 %v810
        %v812 = vpop.xlane.xlu0 %811
        %v813 = vsub.f32 %v807, %v812
        %v814 = vmul.f32 %v813, 1.442695
        %v815 = vpow.pop %v814
        %v816 = vsel %vm646, %v815, 0.0
        %817 = vadd.xlane.f32.xlu0 %v816
        %v818 = vpop.xlane.xlu0 %817
        %v819 = vrcp.pop %v818
        %v820 = vmul.f32 %v815, %v819
        %822 = vrot.lane.b32.xlu0 %v551, 96
        %v823 = vpop.permute.xlu0 %822
        %v826 = vsel %vm646, %v820, 0
        %828 = vmatprep.subr.mxu0 0.0
        %829 = vmatpush1.msra.mxu0 0.0
        %830 = vmatprep.subr.mxu0 0.0
        %831 = vmatpush1.msra.mxu0 0.0
        %832 = vmatprep.subr.mxu0 0.0
        %833 = vmatpush1.msra.mxu0 0.0
        %834 = vmatprep.subr.mxu0 0.0
        %835 = vmatpush1.msra.mxu0 0.0
        %836 = vmatprep.subr.mxu0 0.0
        %837 = vmatpush1.msra.mxu0 0.0
        %838 = vmatprep.subr.mxu0 0.0
        %839 = vmatpush1.msra.mxu0 0.0
        %840 = vmatprep.subr.mxu0 0.0
        %841 = vmatpush1.msra.mxu0 0.0
        %842 = vmatprep.subr.mxu0 0.0
        %843 = vmatpush1.msra.mxu0 0.0
        %844 = vmatprep.subr.mxu0 0.0
        %845 = vmatpush1.msra.mxu0 0.0
        %846 = vmatprep.subr.mxu0 0.0
        %847 = vmatpush1.msra.mxu0 0.0
        %848 = vmatprep.subr.mxu0 0.0
        %849 = vmatpush1.msra.mxu0 0.0
        %850 = vmatprep.subr.mxu0 0.0
        %851 = vmatpush1.msra.mxu0 0.0
        %852 = vmatprep.subr.mxu0 0.0
        %853 = vmatpush1.msra.mxu0 0.0
        %854 = vmatprep.subr.mxu0 0.0
        %855 = vmatpush1.msra.mxu0 0.0
        %856 = vmatprep.subr.mxu0 0.0
        %857 = vmatpush1.msra.mxu0 0.0
        %858 = vmatprep.subr.mxu0 0.0
        %859 = vmatpush1.msra.mxu0 %v823
        %860 = vmatprep.subr.mxu0 0.0
        %861 = vmatpush2.msra.mxu0 0.0
        %862 = vmatprep.subr.mxu0 0.0
        %863 = vmatpush2.msra.mxu0 0.0
        %864 = vmatprep.subr.mxu0 0.0
        %865 = vmatpush2.msra.mxu0 0.0
        %866 = vmatprep.subr.mxu0 0.0
        %867 = vmatpush2.msra.mxu0 0.0
        %868 = vmatprep.subr.mxu0 0.0
        %869 = vmatpush2.msra.mxu0 0.0
        %870 = vmatprep.subr.mxu0 0.0
        %871 = vmatpush2.msra.mxu0 0.0
        %872 = vmatprep.subr.mxu0 0.0
        %873 = vmatpush2.msra.mxu0 0.0
        %874 = vmatprep.subr.mxu0 0.0
        %875 = vmatpush2.msra.mxu0 0.0
        %876 = vmatprep.subr.mxu0 0.0
        %877 = vmatpush2.msra.mxu0 0.0
        %878 = vmatprep.subr.mxu0 0.0
        %879 = vmatpush2.msra.mxu0 0.0
        %880 = vmatprep.subr.mxu0 0.0
        %881 = vmatpush2.msra.mxu0 0.0
        %882 = vmatprep.subr.mxu0 0.0
        %883 = vmatpush2.msra.mxu0 0.0
        %884 = vmatprep.subr.mxu0 0.0
        %885 = vmatpush2.msra.mxu0 0.0
        %886 = vmatprep.subr.mxu0 0.0
        %887 = vmatpush2.msra.mxu0 0.0
        %888 = vmatprep.subr.mxu0 0.0
        %889 = vmatpush2.msra.mxu0 0.0
        %890 = vmatprep.subr.mxu0 0.0
        %891 = vmatpush2.msra.mxu0 0.0
        %892 = vmatprep.mubr.f32.mxu0 0.0
        %893 = vmatmul.mubr.f32.gmra.mxu0 %v826
        %v894 = vpop.f32.mrf.mxu0
        %v895 = vadd.f32 0.0, %v894
        %v896 = vpop.f32.mrf.mxu0
        %897 = vdwg.mxu0
        %899 = vrot.lane.b32.xlu0 %v895, 32
        %v900 = vpop.permute.xlu0 %899
        %vm902 = vcmask 523520
        %903 = vst.msk [vmem:[#allocation2] sm:$0xff] %vm902, %v900
        %904 = vrot.lane.b32.xlu0 %v462, 64
        %v905 = vpop.permute.xlu0 %904
        %906 = vrot.lane.b32.xlu0 %v464, 64
        %v907 = vpop.permute.xlu0 %906
        %v908 = vsel %vm569, %v905, 0
        %v910 = vsel %vm569, %v907, 0
        %912 = vmatprep.subr.mxu0 0.0
        %913 = vmatpush1.xpose.msra.mxu0 0.0
        %914 = vmatprep.subr.mxu0 0.0
        %915 = vmatpush1.xpose.msra.mxu0 0.0
        %916 = vmatprep.subr.mxu0 0.0
        %917 = vmatpush1.xpose.msra.mxu0 0.0
        %918 = vmatprep.subr.mxu0 0.0
        %919 = vmatpush1.xpose.msra.mxu0 0.0
        %920 = vmatprep.subr.mxu0 0.0
        %921 = vmatpush1.xpose.msra.mxu0 0.0
        %922 = vmatprep.subr.mxu0 0.0
        %923 = vmatpush1.xpose.msra.mxu0 0.0
        %924 = vmatprep.subr.mxu0 0.0
        %925 = vmatpush1.xpose.msra.mxu0 0.0
        %926 = vmatprep.subr.mxu0 0.0
        %927 = vmatpush1.xpose.msra.mxu0 0.0
        %928 = vmatprep.subr.mxu0 0.0
        %929 = vmatpush1.xpose.msra.mxu0 0.0
        %930 = vmatprep.subr.mxu0 0.0
        %931 = vmatpush1.xpose.msra.mxu0 0.0
        %932 = vmatprep.subr.mxu0 0.0
        %933 = vmatpush1.xpose.msra.mxu0 0.0
        %934 = vmatprep.subr.mxu0 0.0
        %935 = vmatpush1.xpose.msra.mxu0 0.0
        %936 = vmatprep.subr.mxu0 0.0
        %937 = vmatpush1.xpose.msra.mxu0 0.0
        %938 = vmatprep.subr.mxu0 0.0
        %939 = vmatpush1.xpose.msra.mxu0 0.0
        %940 = vmatprep.subr.mxu0 0.0
        %941 = vmatpush1.xpose.msra.mxu0 0.0
        %942 = vmatprep.subr.mxu0 0.0
        %943 = vmatpush1.xpose.msra.mxu0 %v910
        %944 = vmatprep.subr.mxu0 0.0
        %945 = vmatpush2.xpose.msra.mxu0 0.0
        %946 = vmatprep.subr.mxu0 0.0
        %947 = vmatpush2.xpose.msra.mxu0 0.0
        %948 = vmatprep.subr.mxu0 0.0
        %949 = vmatpush2.xpose.msra.mxu0 0.0
        %950 = vmatprep.subr.mxu0 0.0
        %951 = vmatpush2.xpose.msra.mxu0 0.0
        %952 = vmatprep.subr.mxu0 0.0
        %953 = vmatpush2.xpose.msra.mxu0 0.0
        %954 = vmatprep.subr.mxu0 0.0
        %955 = vmatpush2.xpose.msra.mxu0 0.0
        %956 = vmatprep.subr.mxu0 0.0
        %957 = vmatpush2.xpose.msra.mxu0 0.0
        %958 = vmatprep.subr.mxu0 0.0
        %959 = vmatpush2.xpose.msra.mxu0 0.0
        %960 = vmatprep.subr.mxu0 0.0
        %961 = vmatpush2.xpose.msra.mxu0 0.0
        %962 = vmatprep.subr.mxu0 0.0
        %963 = vmatpush2.xpose.msra.mxu0 0.0
        %964 = vmatprep.subr.mxu0 0.0
        %965 = vmatpush2.xpose.msra.mxu0 0.0
        %966 = vmatprep.subr.mxu0 0.0
        %967 = vmatpush2.xpose.msra.mxu0 0.0
        %968 = vmatprep.subr.mxu0 0.0
        %969 = vmatpush2.xpose.msra.mxu0 0.0
        %970 = vmatprep.subr.mxu0 0.0
        %971 = vmatpush2.xpose.msra.mxu0 0.0
        %972 = vmatprep.subr.mxu0 0.0
        %973 = vmatpush2.xpose.msra.mxu0 0.0
        %974 = vmatprep.subr.mxu0 0.0
        %975 = vmatpush2.xpose.msra.mxu0 0.0
        %976 = vmatprep.mubr.f32.mxu0 0.0
        %977 = vmatmul.mubr.f32.gmra.mxu0 %v908
        %v978 = vpop.f32.mrf.mxu0
        %v979 = vadd.f32 0.0, %v978
        %v980 = vpop.f32.mrf.mxu0
        %981 = vdwg.mxu0
        %v982 = vsel %vm646, %v979, -inf
        %983 = vmax.xlane.f32.xlu0 %v982
        %v984 = vpop.xlane.xlu0 %983
        %v985 = vsub.f32 %v979, %v984
        %v986 = vmul.f32 %v985, 1.442695
        %v987 = vpow.pop %v986
        %v988 = vsel %vm646, %v987, 0.0
        %989 = vadd.xlane.f32.xlu0 %v988
        %v990 = vpop.xlane.xlu0 %989
        %v991 = vrcp.pop %v990
        %v992 = vmul.f32 %v987, %v991
        %993 = vrot.lane.b32.xlu0 %v551, 64
        %v994 = vpop.permute.xlu0 %993
        %v997 = vsel %vm646, %v992, 0
        %999 = vmatprep.subr.mxu0 0.0
        %1000 = vmatpush1.msra.mxu0 0.0
        %1001 = vmatprep.subr.mxu0 0.0
        %1002 = vmatpush1.msra.mxu0 0.0
        %1003 = vmatprep.subr.mxu0 0.0
        %1004 = vmatpush1.msra.mxu0 0.0
        %1005 = vmatprep.subr.mxu0 0.0
        %1006 = vmatpush1.msra.mxu0 0.0
        %1007 = vmatprep.subr.mxu0 0.0
        %1008 = vmatpush1.msra.mxu0 0.0
        %1009 = vmatprep.subr.mxu0 0.0
        %1010 = vmatpush1.msra.mxu0 0.0
        %1011 = vmatprep.subr.mxu0 0.0
        %1012 = vmatpush1.msra.mxu0 0.0
        %1013 = vmatprep.subr.mxu0 0.0
        %1014 = vmatpush1.msra.mxu0 0.0
        %1015 = vmatprep.subr.mxu0 0.0
        %1016 = vmatpush1.msra.mxu0 0.0
        %1017 = vmatprep.subr.mxu0 0.0
        %1018 = vmatpush1.msra.mxu0 0.0
        %1019 = vmatprep.subr.mxu0 0.0
        %1020 = vmatpush1.msra.mxu0 0.0
        %1021 = vmatprep.subr.mxu0 0.0
        %1022 = vmatpush1.msra.mxu0 0.0
        %1023 = vmatprep.subr.mxu0 0.0
        %1024 = vmatpush1.msra.mxu0 0.0
        %1025 = vmatprep.subr.mxu0 0.0
        %1026 = vmatpush1.msra.mxu0 0.0
        %1027 = vmatprep.subr.mxu0 0.0
        %1028 = vmatpush1.msra.mxu0 0.0
        %1029 = vmatprep.subr.mxu0 0.0
        %1030 = vmatpush1.msra.mxu0 %v994
        %1031 = vmatprep.subr.mxu0 0.0
        %1032 = vmatpush2.msra.mxu0 0.0
        %1033 = vmatprep.subr.mxu0 0.0
        %1034 = vmatpush2.msra.mxu0 0.0
        %1035 = vmatprep.subr.mxu0 0.0
        %1036 = vmatpush2.msra.mxu0 0.0
        %1037 = vmatprep.subr.mxu0 0.0
        %1038 = vmatpush2.msra.mxu0 0.0
        %1039 = vmatprep.subr.mxu0 0.0
        %1040 = vmatpush2.msra.mxu0 0.0
        %1041 = vmatprep.subr.mxu0 0.0
        %1042 = vmatpush2.msra.mxu0 0.0
        %1043 = vmatprep.subr.mxu0 0.0
        %1044 = vmatpush2.msra.mxu0 0.0
        %1045 = vmatprep.subr.mxu0 0.0
        %1046 = vmatpush2.msra.mxu0 0.0
        %1047 = vmatprep.subr.mxu0 0.0
        %1048 = vmatpush2.msra.mxu0 0.0
        %1049 = vmatprep.subr.mxu0 0.0
        %1050 = vmatpush2.msra.mxu0 0.0
        %1051 = vmatprep.subr.mxu0 0.0
        %1052 = vmatpush2.msra.mxu0 0.0
        %1053 = vmatprep.subr.mxu0 0.0
        %1054 = vmatpush2.msra.mxu0 0.0
        %1055 = vmatprep.subr.mxu0 0.0
        %1056 = vmatpush2.msra.mxu0 0.0
        %1057 = vmatprep.subr.mxu0 0.0
        %1058 = vmatpush2.msra.mxu0 0.0
        %1059 = vmatprep.subr.mxu0 0.0
        %1060 = vmatpush2.msra.mxu0 0.0
        %1061 = vmatprep.subr.mxu0 0.0
        %1062 = vmatpush2.msra.mxu0 0.0
        %1063 = vmatprep.mubr.f32.mxu0 0.0
        %1064 = vmatmul.mubr.f32.gmra.mxu0 %v997
        %v1065 = vpop.f32.mrf.mxu0
        %v1066 = vadd.f32 0.0, %v1065
        %v1067 = vpop.f32.mrf.mxu0
        %1068 = vdwg.mxu0
        %1070 = vrot.lane.b32.xlu0 %v1066, 64
        %v1071 = vpop.permute.xlu0 %1070
        %vm1073 = vcmask 785920
        %1074 = vst.msk [vmem:[#allocation2] sm:$0xff] %vm1073, %v1071
        %1075 = vrot.lane.b32.xlu0 %v462, 32
        %v1076 = vpop.permute.xlu0 %1075
        %1077 = vrot.lane.b32.xlu0 %v464, 32
        %v1078 = vpop.permute.xlu0 %1077
        %v1079 = vsel %vm569, %v1076, 0
        %v1081 = vsel %vm569, %v1078, 0
        %1083 = vmatprep.subr.mxu0 0.0
        %1084 = vmatpush1.xpose.msra.mxu0 0.0
        %1085 = vmatprep.subr.mxu0 0.0
        %1086 = vmatpush1.xpose.msra.mxu0 0.0
        %1087 = vmatprep.subr.mxu0 0.0
        %1088 = vmatpush1.xpose.msra.mxu0 0.0
        %1089 = vmatprep.subr.mxu0 0.0
        %1090 = vmatpush1.xpose.msra.mxu0 0.0
        %1091 = vmatprep.subr.mxu0 0.0
        %1092 = vmatpush1.xpose.msra.mxu0 0.0
        %1093 = vmatprep.subr.mxu0 0.0
        %1094 = vmatpush1.xpose.msra.mxu0 0.0
        %1095 = vmatprep.subr.mxu0 0.0
        %1096 = vmatpush1.xpose.msra.mxu0 0.0
        %1097 = vmatprep.subr.mxu0 0.0
        %1098 = vmatpush1.xpose.msra.mxu0 0.0
        %1099 = vmatprep.subr.mxu0 0.0
        %1100 = vmatpush1.xpose.msra.mxu0 0.0
        %1101 = vmatprep.subr.mxu0 0.0
        %1102 = vmatpush1.xpose.msra.mxu0 0.0
        %1103 = vmatprep.subr.mxu0 0.0
        %1104 = vmatpush1.xpose.msra.mxu0 0.0
        %1105 = vmatprep.subr.mxu0 0.0
        %1106 = vmatpush1.xpose.msra.mxu0 0.0
        %1107 = vmatprep.subr.mxu0 0.0
        %1108 = vmatpush1.xpose.msra.mxu0 0.0
        %1109 = vmatprep.subr.mxu0 0.0
        %1110 = vmatpush1.xpose.msra.mxu0 0.0
        %1111 = vmatprep.subr.mxu0 0.0
        %1112 = vmatpush1.xpose.msra.mxu0 0.0
        %1113 = vmatprep.subr.mxu0 0.0
        %1114 = vmatpush1.xpose.msra.mxu0 %v1081
        %1115 = vmatprep.subr.mxu0 0.0
        %1116 = vmatpush2.xpose.msra.mxu0 0.0
        %1117 = vmatprep.subr.mxu0 0.0
        %1118 = vmatpush2.xpose.msra.mxu0 0.0
        %1119 = vmatprep.subr.mxu0 0.0
        %1120 = vmatpush2.xpose.msra.mxu0 0.0
        %1121 = vmatprep.subr.mxu0 0.0
        %1122 = vmatpush2.xpose.msra.mxu0 0.0
        %1123 = vmatprep.subr.mxu0 0.0
        %1124 = vmatpush2.xpose.msra.mxu0 0.0
        %1125 = vmatprep.subr.mxu0 0.0
        %1126 = vmatpush2.xpose.msra.mxu0 0.0
        %1127 = vmatprep.subr.mxu0 0.0
        %1128 = vmatpush2.xpose.msra.mxu0 0.0
        %1129 = vmatprep.subr.mxu0 0.0
        %1130 = vmatpush2.xpose.msra.mxu0 0.0
        %1131 = vmatprep.subr.mxu0 0.0
        %1132 = vmatpush2.xpose.msra.mxu0 0.0
        %1133 = vmatprep.subr.mxu0 0.0
        %1134 = vmatpush2.xpose.msra.mxu0 0.0
        %1135 = vmatprep.subr.mxu0 0.0
        %1136 = vmatpush2.xpose.msra.mxu0 0.0
        %1137 = vmatprep.subr.mxu0 0.0
        %1138 = vmatpush2.xpose.msra.mxu0 0.0
        %1139 = vmatprep.subr.mxu0 0.0
        %1140 = vmatpush2.xpose.msra.mxu0 0.0
        %1141 = vmatprep.subr.mxu0 0.0
        %1142 = vmatpush2.xpose.msra.mxu0 0.0
        %1143 = vmatprep.subr.mxu0 0.0
        %1144 = vmatpush2.xpose.msra.mxu0 0.0
        %1145 = vmatprep.subr.mxu0 0.0
        %1146 = vmatpush2.xpose.msra.mxu0 0.0
        %1147 = vmatprep.mubr.f32.mxu0 0.0
        %1148 = vmatmul.mubr.f32.gmra.mxu0 %v1079
        %v1149 = vpop.f32.mrf.mxu0
        %v1150 = vadd.f32 0.0, %v1149
        %v1151 = vpop.f32.mrf.mxu0
        %1152 = vdwg.mxu0
        %v1153 = vsel %vm646, %v1150, -inf
        %1154 = vmax.xlane.f32.xlu0 %v1153
        %v1155 = vpop.xlane.xlu0 %1154
        %v1156 = vsub.f32 %v1150, %v1155
        %v1157 = vmul.f32 %v1156, 1.442695
        %v1158 = vpow.pop %v1157
        %v1159 = vsel %vm646, %v1158, 0.0
        %1160 = vadd.xlane.f32.xlu0 %v1159
        %v1161 = vpop.xlane.xlu0 %1160
        %v1162 = vrcp.pop %v1161
        %v1163 = vmul.f32 %v1158, %v1162
        %1164 = vrot.lane.b32.xlu0 %v551, 32
        %v1165 = vpop.permute.xlu0 %1164
        %v1168 = vsel %vm646, %v1163, 0
        %1170 = vmatprep.subr.mxu0 0.0
        %1171 = vmatpush1.msra.mxu0 0.0
        %1172 = vmatprep.subr.mxu0 0.0
        %1173 = vmatpush1.msra.mxu0 0.0
        %1174 = vmatprep.subr.mxu0 0.0
        %1175 = vmatpush1.msra.mxu0 0.0
        %1176 = vmatprep.subr.mxu0 0.0
        %1177 = vmatpush1.msra.mxu0 0.0
        %1178 = vmatprep.subr.mxu0 0.0
        %1179 = vmatpush1.msra.mxu0 0.0
        %1180 = vmatprep.subr.mxu0 0.0
        %1181 = vmatpush1.msra.mxu0 0.0
        %1182 = vmatprep.subr.mxu0 0.0
        %1183 = vmatpush1.msra.mxu0 0.0
        %1184 = vmatprep.subr.mxu0 0.0
        %1185 = vmatpush1.msra.mxu0 0.0
        %1186 = vmatprep.subr.mxu0 0.0
        %1187 = vmatpush1.msra.mxu0 0.0
        %1188 = vmatprep.subr.mxu0 0.0
        %1189 = vmatpush1.msra.mxu0 0.0
        %1190 = vmatprep.subr.mxu0 0.0
        %1191 = vmatpush1.msra.mxu0 0.0
        %1192 = vmatprep.subr.mxu0 0.0
        %1193 = vmatpush1.msra.mxu0 0.0
        %1194 = vmatprep.subr.mxu0 0.0
        %1195 = vmatpush1.msra.mxu0 0.0
        %1196 = vmatprep.subr.mxu0 0.0
        %1197 = vmatpush1.msra.mxu0 0.0
        %1198 = vmatprep.subr.mxu0 0.0
        %1199 = vmatpush1.msra.mxu0 0.0
        %1200 = vmatprep.subr.mxu0 0.0
        %1201 = vmatpush1.msra.mxu0 %v1165
        %1202 = vmatprep.subr.mxu0 0.0
        %1203 = vmatpush2.msra.mxu0 0.0
        %1204 = vmatprep.subr.mxu0 0.0
        %1205 = vmatpush2.msra.mxu0 0.0
        %1206 = vmatprep.subr.mxu0 0.0
        %1207 = vmatpush2.msra.mxu0 0.0
        %1208 = vmatprep.subr.mxu0 0.0
        %1209 = vmatpush2.msra.mxu0 0.0
        %1210 = vmatprep.subr.mxu0 0.0
        %1211 = vmatpush2.msra.mxu0 0.0
        %1212 = vmatprep.subr.mxu0 0.0
        %1213 = vmatpush2.msra.mxu0 0.0
        %1214 = vmatprep.subr.mxu0 0.0
        %1215 = vmatpush2.msra.mxu0 0.0
        %1216 = vmatprep.subr.mxu0 0.0
        %1217 = vmatpush2.msra.mxu0 0.0
        %1218 = vmatprep.subr.mxu0 0.0
        %1219 = vmatpush2.msra.mxu0 0.0
        %1220 = vmatprep.subr.mxu0 0.0
        %1221 = vmatpush2.msra.mxu0 0.0
        %1222 = vmatprep.subr.mxu0 0.0
        %1223 = vmatpush2.msra.mxu0 0.0
        %1224 = vmatprep.subr.mxu0 0.0
        %1225 = vmatpush2.msra.mxu0 0.0
        %1226 = vmatprep.subr.mxu0 0.0
        %1227 = vmatpush2.msra.mxu0 0.0
        %1228 = vmatprep.subr.mxu0 0.0
        %1229 = vmatpush2.msra.mxu0 0.0
        %1230 = vmatprep.subr.mxu0 0.0
        %1231 = vmatpush2.msra.mxu0 0.0
        %1232 = vmatprep.subr.mxu0 0.0
        %1233 = vmatpush2.msra.mxu0 0.0
        %1234 = vmatprep.mubr.f32.mxu0 0.0
        %1235 = vmatmul.mubr.f32.gmra.mxu0 %v1168
        %v1236 = vpop.f32.mrf.mxu0
        %v1237 = vadd.f32 0.0, %v1236
        %v1238 = vpop.f32.mrf.mxu0
        %1239 = vdwg.mxu0
        %1241 = vrot.lane.b32.xlu0 %v1237, 96
        %v1242 = vpop.permute.xlu0 %1241
        %vm1244 = vcmask 1048320
        %1245 = vst.msk [vmem:[#allocation2] sm:$0xff] %vm1244, %v1242
        %v1247 = vsel %vm569, %v468, 0
        %v1250 = vsel %vm569, %v470, 0
        %1252 = vmatprep.subr.mxu0 0.0
        %1253 = vmatpush1.xpose.msra.mxu0 0.0
        %1254 = vmatprep.subr.mxu0 0.0
        %1255 = vmatpush1.xpose.msra.mxu0 0.0
        %1256 = vmatprep.subr.mxu0 0.0
        %1257 = vmatpush1.xpose.msra.mxu0 0.0
        %1258 = vmatprep.subr.mxu0 0.0
        %1259 = vmatpush1.xpose.msra.mxu0 0.0
        %1260 = vmatprep.subr.mxu0 0.0
        %1261 = vmatpush1.xpose.msra.mxu0 0.0
        %1262 = vmatprep.subr.mxu0 0.0
        %1263 = vmatpush1.xpose.msra.mxu0 0.0
        %1264 = vmatprep.subr.mxu0 0.0
        %1265 = vmatpush1.xpose.msra.mxu0 0.0
        %1266 = vmatprep.subr.mxu0 0.0
        %1267 = vmatpush1.xpose.msra.mxu0 0.0
        %1268 = vmatprep.subr.mxu0 0.0
        %1269 = vmatpush1.xpose.msra.mxu0 0.0
        %1270 = vmatprep.subr.mxu0 0.0
        %1271 = vmatpush1.xpose.msra.mxu0 0.0
        %1272 = vmatprep.subr.mxu0 0.0
        %1273 = vmatpush1.xpose.msra.mxu0 0.0
        %1274 = vmatprep.subr.mxu0 0.0
        %1275 = vmatpush1.xpose.msra.mxu0 0.0
        %1276 = vmatprep.subr.mxu0 0.0
        %1277 = vmatpush1.xpose.msra.mxu0 0.0
        %1278 = vmatprep.subr.mxu0 0.0
        %1279 = vmatpush1.xpose.msra.mxu0 0.0
        %1280 = vmatprep.subr.mxu0 0.0
        %1281 = vmatpush1.xpose.msra.mxu0 0.0
        %1282 = vmatprep.subr.mxu0 0.0
        %1283 = vmatpush1.xpose.msra.mxu0 %v1250
        %1284 = vmatprep.subr.mxu0 0.0
        %1285 = vmatpush2.xpose.msra.mxu0 0.0
        %1286 = vmatprep.subr.mxu0 0.0
        %1287 = vmatpush2.xpose.msra.mxu0 0.0
        %1288 = vmatprep.subr.mxu0 0.0
        %1289 = vmatpush2.xpose.msra.mxu0 0.0
        %1290 = vmatprep.subr.mxu0 0.0
        %1291 = vmatpush2.xpose.msra.mxu0 0.0
        %1292 = vmatprep.subr.mxu0 0.0
        %1293 = vmatpush2.xpose.msra.mxu0 0.0
        %1294 = vmatprep.subr.mxu0 0.0
        %1295 = vmatpush2.xpose.msra.mxu0 0.0
        %1296 = vmatprep.subr.mxu0 0.0
        %1297 = vmatpush2.xpose.msra.mxu0 0.0
        %1298 = vmatprep.subr.mxu0 0.0
        %1299 = vmatpush2.xpose.msra.mxu0 0.0
        %1300 = vmatprep.subr.mxu0 0.0
        %1301 = vmatpush2.xpose.msra.mxu0 0.0
        %1302 = vmatprep.subr.mxu0 0.0
        %1303 = vmatpush2.xpose.msra.mxu0 0.0
        %1304 = vmatprep.subr.mxu0 0.0
        %1305 = vmatpush2.xpose.msra.mxu0 0.0
        %1306 = vmatprep.subr.mxu0 0.0
        %1307 = vmatpush2.xpose.msra.mxu0 0.0
        %1308 = vmatprep.subr.mxu0 0.0
        %1309 = vmatpush2.xpose.msra.mxu0 0.0
        %1310 = vmatprep.subr.mxu0 0.0
        %1311 = vmatpush2.xpose.msra.mxu0 0.0
        %1312 = vmatprep.subr.mxu0 0.0
        %1313 = vmatpush2.xpose.msra.mxu0 0.0
        %1314 = vmatprep.subr.mxu0 0.0
        %1315 = vmatpush2.xpose.msra.mxu0 0.0
        %1316 = vmatprep.mubr.f32.mxu0 0.0
        %1317 = vmatmul.mubr.f32.gmra.mxu0 %v1247
        %v1318 = vpop.f32.mrf.mxu0
        %v1319 = vadd.f32 0.0, %v1318
        %v1320 = vpop.f32.mrf.mxu0
        %1321 = vdwg.mxu0
        %v1322 = vsel %vm646, %v1319, -inf
        %1323 = vmax.xlane.f32.xlu0 %v1322
        %v1324 = vpop.xlane.xlu0 %1323
        %v1325 = vsub.f32 %v1319, %v1324
        %v1326 = vmul.f32 %v1325, 1.442695
        %v1327 = vpow.pop %v1326
        %v1328 = vsel %vm646, %v1327, 0.0
        %1329 = vadd.xlane.f32.xlu0 %v1328
        %v1330 = vpop.xlane.xlu0 %1329
        %v1331 = vrcp.pop %v1330
        %v1332 = vmul.f32 %v1327, %v1331
        %v1334 = vsel %vm646, %v1332, 0
        %1336 = vmatprep.subr.mxu0 0.0
        %1337 = vmatpush1.msra.mxu0 0.0
        %1338 = vmatprep.subr.mxu0 0.0
        %1339 = vmatpush1.msra.mxu0 0.0
        %1340 = vmatprep.subr.mxu0 0.0
        %1341 = vmatpush1.msra.mxu0 0.0
        %1342 = vmatprep.subr.mxu0 0.0
        %1343 = vmatpush1.msra.mxu0 0.0
        %1344 = vmatprep.subr.mxu0 0.0
        %1345 = vmatpush1.msra.mxu0 0.0
        %1346 = vmatprep.subr.mxu0 0.0
        %1347 = vmatpush1.msra.mxu0 0.0
        %1348 = vmatprep.subr.mxu0 0.0
        %1349 = vmatpush1.msra.mxu0 0.0
        %1350 = vmatprep.subr.mxu0 0.0
        %1351 = vmatpush1.msra.mxu0 0.0
        %1352 = vmatprep.subr.mxu0 0.0
        %1353 = vmatpush1.msra.mxu0 0.0
        %1354 = vmatprep.subr.mxu0 0.0
        %1355 = vmatpush1.msra.mxu0 0.0
        %1356 = vmatprep.subr.mxu0 0.0
        %1357 = vmatpush1.msra.mxu0 0.0
        %1358 = vmatprep.subr.mxu0 0.0
        %1359 = vmatpush1.msra.mxu0 0.0
        %1360 = vmatprep.subr.mxu0 0.0
        %1361 = vmatpush1.msra.mxu0 0.0
        %1362 = vmatprep.subr.mxu0 0.0
        %1363 = vmatpush1.msra.mxu0 0.0
        %1364 = vmatprep.subr.mxu0 0.0
        %1365 = vmatpush1.msra.mxu0 0.0
        %1366 = vmatprep.subr.mxu0 0.0
        %1367 = vmatpush1.msra.mxu0 %v556
        %1368 = vmatprep.subr.mxu0 0.0
        %1369 = vmatpush2.msra.mxu0 0.0
        %1370 = vmatprep.subr.mxu0 0.0
        %1371 = vmatpush2.msra.mxu0 0.0
        %1372 = vmatprep.subr.mxu0 0.0
        %1373 = vmatpush2.msra.mxu0 0.0
        %1374 = vmatprep.subr.mxu0 0.0
        %1375 = vmatpush2.msra.mxu0 0.0
        %1376 = vmatprep.subr.mxu0 0.0
        %1377 = vmatpush2.msra.mxu0 0.0
        %1378 = vmatprep.subr.mxu0 0.0
        %1379 = vmatpush2.msra.mxu0 0.0
        %1380 = vmatprep.subr.mxu0 0.0
        %1381 = vmatpush2.msra.mxu0 0.0
        %1382 = vmatprep.subr.mxu0 0.0
        %1383 = vmatpush2.msra.mxu0 0.0
        %1384 = vmatprep.subr.mxu0 0.0
        %1385 = vmatpush2.msra.mxu0 0.0
        %1386 = vmatprep.subr.mxu0 0.0
        %1387 = vmatpush2.msra.mxu0 0.0
        %1388 = vmatprep.subr.mxu0 0.0
        %1389 = vmatpush2.msra.mxu0 0.0
        %1390 = vmatprep.subr.mxu0 0.0
        %1391 = vmatpush2.msra.mxu0 0.0
        %1392 = vmatprep.subr.mxu0 0.0
        %1393 = vmatpush2.msra.mxu0 0.0
        %1394 = vmatprep.subr.mxu0 0.0
        %1395 = vmatpush2.msra.mxu0 0.0
        %1396 = vmatprep.subr.mxu0 0.0
        %1397 = vmatpush2.msra.mxu0 0.0
        %1398 = vmatprep.subr.mxu0 0.0
        %1399 = vmatpush2.msra.mxu0 0.0
        %1400 = vmatprep.mubr.f32.mxu0 0.0
        %1401 = vmatmul.mubr.f32.gmra.mxu0 %v1334
        %v1402 = vpop.f32.mrf.mxu0
        %v1403 = vadd.f32 0.0, %v1402
        %v1404 = vpop.f32.mrf.mxu0
        %1405 = vdwg.mxu0
        %1406 = vst.msk [vmem:[#allocation2 + $0x8] sm:$0xff] %vm569, %v1403
        %1407 = vrot.lane.b32.xlu0 %v468, 96
        %v1408 = vpop.permute.xlu0 %1407
        %1409 = vrot.lane.b32.xlu0 %v470, 96
        %v1410 = vpop.permute.xlu0 %1409
        %v1411 = vsel %vm569, %v1408, 0
        %v1413 = vsel %vm569, %v1410, 0
        %1415 = vmatprep.subr.mxu0 0.0
        %1416 = vmatpush1.xpose.msra.mxu0 0.0
        %1417 = vmatprep.subr.mxu0 0.0
        %1418 = vmatpush1.xpose.msra.mxu0 0.0
        %1419 = vmatprep.subr.mxu0 0.0
        %1420 = vmatpush1.xpose.msra.mxu0 0.0
        %1421 = vmatprep.subr.mxu0 0.0
        %1422 = vmatpush1.xpose.msra.mxu0 0.0
        %1423 = vmatprep.subr.mxu0 0.0
        %1424 = vmatpush1.xpose.msra.mxu0 0.0
        %1425 = vmatprep.subr.mxu0 0.0
        %1426 = vmatpush1.xpose.msra.mxu0 0.0
        %1427 = vmatprep.subr.mxu0 0.0
        %1428 = vmatpush1.xpose.msra.mxu0 0.0
        %1429 = vmatprep.subr.mxu0 0.0
        %1430 = vmatpush1.xpose.msra.mxu0 0.0
        %1431 = vmatprep.subr.mxu0 0.0
        %1432 = vmatpush1.xpose.msra.mxu0 0.0
        %1433 = vmatprep.subr.mxu0 0.0
        %1434 = vmatpush1.xpose.msra.mxu0 0.0
        %1435 = vmatprep.subr.mxu0 0.0
        %1436 = vmatpush1.xpose.msra.mxu0 0.0
        %1437 = vmatprep.subr.mxu0 0.0
        %1438 = vmatpush1.xpose.msra.mxu0 0.0
        %1439 = vmatprep.subr.mxu0 0.0
        %1440 = vmatpush1.xpose.msra.mxu0 0.0
        %1441 = vmatprep.subr.mxu0 0.0
        %1442 = vmatpush1.xpose.msra.mxu0 0.0
        %1443 = vmatprep.subr.mxu0 0.0
        %1444 = vmatpush1.xpose.msra.mxu0 0.0
        %1445 = vmatprep.subr.mxu0 0.0
        %1446 = vmatpush1.xpose.msra.mxu0 %v1413
        %1447 = vmatprep.subr.mxu0 0.0
        %1448 = vmatpush2.xpose.msra.mxu0 0.0
        %1449 = vmatprep.subr.mxu0 0.0
        %1450 = vmatpush2.xpose.msra.mxu0 0.0
        %1451 = vmatprep.subr.mxu0 0.0
        %1452 = vmatpush2.xpose.msra.mxu0 0.0
        %1453 = vmatprep.subr.mxu0 0.0
        %1454 = vmatpush2.xpose.msra.mxu0 0.0
        %1455 = vmatprep.subr.mxu0 0.0
        %1456 = vmatpush2.xpose.msra.mxu0 0.0
        %1457 = vmatprep.subr.mxu0 0.0
        %1458 = vmatpush2.xpose.msra.mxu0 0.0
        %1459 = vmatprep.subr.mxu0 0.0
        %1460 = vmatpush2.xpose.msra.mxu0 0.0
        %1461 = vmatprep.subr.mxu0 0.0
        %1462 = vmatpush2.xpose.msra.mxu0 0.0
        %1463 = vmatprep.subr.mxu0 0.0
        %1464 = vmatpush2.xpose.msra.mxu0 0.0
        %1465 = vmatprep.subr.mxu0 0.0
        %1466 = vmatpush2.xpose.msra.mxu0 0.0
        %1467 = vmatprep.subr.mxu0 0.0
        %1468 = vmatpush2.xpose.msra.mxu0 0.0
        %1469 = vmatprep.subr.mxu0 0.0
        %1470 = vmatpush2.xpose.msra.mxu0 0.0
        %1471 = vmatprep.subr.mxu0 0.0
        %1472 = vmatpush2.xpose.msra.mxu0 0.0
        %1473 = vmatprep.subr.mxu0 0.0
        %1474 = vmatpush2.xpose.msra.mxu0 0.0
        %1475 = vmatprep.subr.mxu0 0.0
        %1476 = vmatpush2.xpose.msra.mxu0 0.0
        %1477 = vmatprep.subr.mxu0 0.0
        %1478 = vmatpush2.xpose.msra.mxu0 0.0
        %1479 = vmatprep.mubr.f32.mxu0 0.0
        %1480 = vmatmul.mubr.f32.gmra.mxu0 %v1411
        %v1481 = vpop.f32.mrf.mxu0
        %v1482 = vadd.f32 0.0, %v1481
        %v1483 = vpop.f32.mrf.mxu0
        %1484 = vdwg.mxu0
        %v1485 = vsel %vm646, %v1482, -inf
        %1486 = vmax.xlane.f32.xlu0 %v1485
        %v1487 = vpop.xlane.xlu0 %1486
        %v1488 = vsub.f32 %v1482, %v1487
        %v1489 = vmul.f32 %v1488, 1.442695
        %v1490 = vpow.pop %v1489
        %v1491 = vsel %vm646, %v1490, 0.0
        %1492 = vadd.xlane.f32.xlu0 %v1491
        %v1493 = vpop.xlane.xlu0 %1492
        %v1494 = vrcp.pop %v1493
        %v1495 = vmul.f32 %v1490, %v1494
        %1497 = vrot.lane.b32.xlu0 %v556, 96
        %v1498 = vpop.permute.xlu0 %1497
        %v1501 = vsel %vm646, %v1495, 0
        %1503 = vmatprep.subr.mxu0 0.0
        %1504 = vmatpush1.msra.mxu0 0.0
        %1505 = vmatprep.subr.mxu0 0.0
        %1506 = vmatpush1.msra.mxu0 0.0
        %1507 = vmatprep.subr.mxu0 0.0
        %1508 = vmatpush1.msra.mxu0 0.0
        %1509 = vmatprep.subr.mxu0 0.0
        %1510 = vmatpush1.msra.mxu0 0.0
        %1511 = vmatprep.subr.mxu0 0.0
        %1512 = vmatpush1.msra.mxu0 0.0
        %1513 = vmatprep.subr.mxu0 0.0
        %1514 = vmatpush1.msra.mxu0 0.0
        %1515 = vmatprep.subr.mxu0 0.0
        %1516 = vmatpush1.msra.mxu0 0.0
        %1517 = vmatprep.subr.mxu0 0.0
        %1518 = vmatpush1.msra.mxu0 0.0
        %1519 = vmatprep.subr.mxu0 0.0
        %1520 = vmatpush1.msra.mxu0 0.0
        %1521 = vmatprep.subr.mxu0 0.0
        %1522 = vmatpush1.msra.mxu0 0.0
        %1523 = vmatprep.subr.mxu0 0.0
        %1524 = vmatpush1.msra.mxu0 0.0
        %1525 = vmatprep.subr.mxu0 0.0
        %1526 = vmatpush1.msra.mxu0 0.0
        %1527 = vmatprep.subr.mxu0 0.0
        %1528 = vmatpush1.msra.mxu0 0.0
        %1529 = vmatprep.subr.mxu0 0.0
        %1530 = vmatpush1.msra.mxu0 0.0
        %1531 = vmatprep.subr.mxu0 0.0
        %1532 = vmatpush1.msra.mxu0 0.0
        %1533 = vmatprep.subr.mxu0 0.0
        %1534 = vmatpush1.msra.mxu0 %v1498
        %1535 = vmatprep.subr.mxu0 0.0
        %1536 = vmatpush2.msra.mxu0 0.0
        %1537 = vmatprep.subr.mxu0 0.0
        %1538 = vmatpush2.msra.mxu0 0.0
        %1539 = vmatprep.subr.mxu0 0.0
        %1540 = vmatpush2.msra.mxu0 0.0
        %1541 = vmatprep.subr.mxu0 0.0
        %1542 = vmatpush2.msra.mxu0 0.0
        %1543 = vmatprep.subr.mxu0 0.0
        %1544 = vmatpush2.msra.mxu0 0.0
        %1545 = vmatprep.subr.mxu0 0.0
        %1546 = vmatpush2.msra.mxu0 0.0
        %1547 = vmatprep.subr.mxu0 0.0
        %1548 = vmatpush2.msra.mxu0 0.0
        %1549 = vmatprep.subr.mxu0 0.0
        %1550 = vmatpush2.msra.mxu0 0.0
        %1551 = vmatprep.subr.mxu0 0.0
        %1552 = vmatpush2.msra.mxu0 0.0
        %1553 = vmatprep.subr.mxu0 0.0
        %1554 = vmatpush2.msra.mxu0 0.0
        %1555 = vmatprep.subr.mxu0 0.0
        %1556 = vmatpush2.msra.mxu0 0.0
        %1557 = vmatprep.subr.mxu0 0.0
        %1558 = vmatpush2.msra.mxu0 0.0
        %1559 = vmatprep.subr.mxu0 0.0
        %1560 = vmatpush2.msra.mxu0 0.0
        %1561 = vmatprep.subr.mxu0 0.0
        %1562 = vmatpush2.msra.mxu0 0.0
        %1563 = vmatprep.subr.mxu0 0.0
        %1564 = vmatpush2.msra.mxu0 0.0
        %1565 = vmatprep.subr.mxu0 0.0
        %1566 = vmatpush2.msra.mxu0 0.0
        %1567 = vmatprep.mubr.f32.mxu0 0.0
        %1568 = vmatmul.mubr.f32.gmra.mxu0 %v1501
        %v1569 = vpop.f32.mrf.mxu0
        %v1570 = vadd.f32 0.0, %v1569
        %v1571 = vpop.f32.mrf.mxu0
        %1572 = vdwg.mxu0
        %1574 = vrot.lane.b32.xlu0 %v1570, 32
        %v1575 = vpop.permute.xlu0 %1574
        %1577 = vst.msk [vmem:[#allocation2 + $0x8] sm:$0xff] %vm902, %v1575
        %1578 = vrot.lane.b32.xlu0 %v468, 64
        %v1579 = vpop.permute.xlu0 %1578
        %1580 = vrot.lane.b32.xlu0 %v470, 64
        %v1581 = vpop.permute.xlu0 %1580
        %v1582 = vsel %vm569, %v1579, 0
        %v1584 = vsel %vm569, %v1581, 0
        %1586 = vmatprep.subr.mxu0 0.0
        %1587 = vmatpush1.xpose.msra.mxu0 0.0
        %1588 = vmatprep.subr.mxu0 0.0
        %1589 = vmatpush1.xpose.msra.mxu0 0.0
        %1590 = vmatprep.subr.mxu0 0.0
        %1591 = vmatpush1.xpose.msra.mxu0 0.0
        %1592 = vmatprep.subr.mxu0 0.0
        %1593 = vmatpush1.xpose.msra.mxu0 0.0
        %1594 = vmatprep.subr.mxu0 0.0
        %1595 = vmatpush1.xpose.msra.mxu0 0.0
        %1596 = vmatprep.subr.mxu0 0.0
        %1597 = vmatpush1.xpose.msra.mxu0 0.0
        %1598 = vmatprep.subr.mxu0 0.0
        %1599 = vmatpush1.xpose.msra.mxu0 0.0
        %1600 = vmatprep.subr.mxu0 0.0
        %1601 = vmatpush1.xpose.msra.mxu0 0.0
        %1602 = vmatprep.subr.mxu0 0.0
        %1603 = vmatpush1.xpose.msra.mxu0 0.0
        %1604 = vmatprep.subr.mxu0 0.0
        %1605 = vmatpush1.xpose.msra.mxu0 0.0
        %1606 = vmatprep.subr.mxu0 0.0
        %1607 = vmatpush1.xpose.msra.mxu0 0.0
        %1608 = vmatprep.subr.mxu0 0.0
        %1609 = vmatpush1.xpose.msra.mxu0 0.0
        %1610 = vmatprep.subr.mxu0 0.0
        %1611 = vmatpush1.xpose.msra.mxu0 0.0
        %1612 = vmatprep.subr.mxu0 0.0
        %1613 = vmatpush1.xpose.msra.mxu0 0.0
        %1614 = vmatprep.subr.mxu0 0.0
        %1615 = vmatpush1.xpose.msra.mxu0 0.0
        %1616 = vmatprep.subr.mxu0 0.0
        %1617 = vmatpush1.xpose.msra.mxu0 %v1584
        %1618 = vmatprep.subr.mxu0 0.0
        %1619 = vmatpush2.xpose.msra.mxu0 0.0
        %1620 = vmatprep.subr.mxu0 0.0
        %1621 = vmatpush2.xpose.msra.mxu0 0.0
        %1622 = vmatprep.subr.mxu0 0.0
        %1623 = vmatpush2.xpose.msra.mxu0 0.0
        %1624 = vmatprep.subr.mxu0 0.0
        %1625 = vmatpush2.xpose.msra.mxu0 0.0
        %1626 = vmatprep.subr.mxu0 0.0
        %1627 = vmatpush2.xpose.msra.mxu0 0.0
        %1628 = vmatprep.subr.mxu0 0.0
        %1629 = vmatpush2.xpose.msra.mxu0 0.0
        %1630 = vmatprep.subr.mxu0 0.0
        %1631 = vmatpush2.xpose.msra.mxu0 0.0
        %1632 = vmatprep.subr.mxu0 0.0
        %1633 = vmatpush2.xpose.msra.mxu0 0.0
        %1634 = vmatprep.subr.mxu0 0.0
        %1635 = vmatpush2.xpose.msra.mxu0 0.0
        %1636 = vmatprep.subr.mxu0 0.0
        %1637 = vmatpush2.xpose.msra.mxu0 0.0
        %1638 = vmatprep.subr.mxu0 0.0
        %1639 = vmatpush2.xpose.msra.mxu0 0.0
        %1640 = vmatprep.subr.mxu0 0.0
        %1641 = vmatpush2.xpose.msra.mxu0 0.0
        %1642 = vmatprep.subr.mxu0 0.0
        %1643 = vmatpush2.xpose.msra.mxu0 0.0
        %1644 = vmatprep.subr.mxu0 0.0
        %1645 = vmatpush2.xpose.msra.mxu0 0.0
        %1646 = vmatprep.subr.mxu0 0.0
        %1647 = vmatpush2.xpose.msra.mxu0 0.0
        %1648 = vmatprep.subr.mxu0 0.0
        %1649 = vmatpush2.xpose.msra.mxu0 0.0
        %1650 = vmatprep.mubr.f32.mxu0 0.0
        %1651 = vmatmul.mubr.f32.gmra.mxu0 %v1582
        %v1652 = vpop.f32.mrf.mxu0
        %v1653 = vadd.f32 0.0, %v1652
        %v1654 = vpop.f32.mrf.mxu0
        %1655 = vdwg.mxu0
        %v1656 = vsel %vm646, %v1653, -inf
        %1657 = vmax.xlane.f32.xlu0 %v1656
        %v1658 = vpop.xlane.xlu0 %1657
        %v1659 = vsub.f32 %v1653, %v1658
        %v1660 = vmul.f32 %v1659, 1.442695
        %v1661 = vpow.pop %v1660
        %v1662 = vsel %vm646, %v1661, 0.0
        %1663 = vadd.xlane.f32.xlu0 %v1662
        %v1664 = vpop.xlane.xlu0 %1663
        %v1665 = vrcp.pop %v1664
        %v1666 = vmul.f32 %v1661, %v1665
        %1667 = vrot.lane.b32.xlu0 %v556, 64
        %v1668 = vpop.permute.xlu0 %1667
        %v1671 = vsel %vm646, %v1666, 0
        %1673 = vmatprep.subr.mxu0 0.0
        %1674 = vmatpush1.msra.mxu0 0.0
        %1675 = vmatprep.subr.mxu0 0.0
        %1676 = vmatpush1.msra.mxu0 0.0
        %1677 = vmatprep.subr.mxu0 0.0
        %1678 = vmatpush1.msra.mxu0 0.0
        %1679 = vmatprep.subr.mxu0 0.0
        %1680 = vmatpush1.msra.mxu0 0.0
        %1681 = vmatprep.subr.mxu0 0.0
        %1682 = vmatpush1.msra.mxu0 0.0
        %1683 = vmatprep.subr.mxu0 0.0
        %1684 = vmatpush1.msra.mxu0 0.0
        %1685 = vmatprep.subr.mxu0 0.0
        %1686 = vmatpush1.msra.mxu0 0.0
        %1687 = vmatprep.subr.mxu0 0.0
        %1688 = vmatpush1.msra.mxu0 0.0
        %1689 = vmatprep.subr.mxu0 0.0
        %1690 = vmatpush1.msra.mxu0 0.0
        %1691 = vmatprep.subr.mxu0 0.0
        %1692 = vmatpush1.msra.mxu0 0.0
        %1693 = vmatprep.subr.mxu0 0.0
        %1694 = vmatpush1.msra.mxu0 0.0
        %1695 = vmatprep.subr.mxu0 0.0
        %1696 = vmatpush1.msra.mxu0 0.0
        %1697 = vmatprep.subr.mxu0 0.0
        %1698 = vmatpush1.msra.mxu0 0.0
        %1699 = vmatprep.subr.mxu0 0.0
        %1700 = vmatpush1.msra.mxu0 0.0
        %1701 = vmatprep.subr.mxu0 0.0
        %1702 = vmatpush1.msra.mxu0 0.0
        %1703 = vmatprep.subr.mxu0 0.0
        %1704 = vmatpush1.msra.mxu0 %v1668
        %1705 = vmatprep.subr.mxu0 0.0
        %1706 = vmatpush2.msra.mxu0 0.0
        %1707 = vmatprep.subr.mxu0 0.0
        %1708 = vmatpush2.msra.mxu0 0.0
        %1709 = vmatprep.subr.mxu0 0.0
        %1710 = vmatpush2.msra.mxu0 0.0
        %1711 = vmatprep.subr.mxu0 0.0
        %1712 = vmatpush2.msra.mxu0 0.0
        %1713 = vmatprep.subr.mxu0 0.0
        %1714 = vmatpush2.msra.mxu0 0.0
        %1715 = vmatprep.subr.mxu0 0.0
        %1716 = vmatpush2.msra.mxu0 0.0
        %1717 = vmatprep.subr.mxu0 0.0
        %1718 = vmatpush2.msra.mxu0 0.0
        %1719 = vmatprep.subr.mxu0 0.0
        %1720 = vmatpush2.msra.mxu0 0.0
        %1721 = vmatprep.subr.mxu0 0.0
        %1722 = vmatpush2.msra.mxu0 0.0
        %1723 = vmatprep.subr.mxu0 0.0
        %1724 = vmatpush2.msra.mxu0 0.0
        %1725 = vmatprep.subr.mxu0 0.0
        %1726 = vmatpush2.msra.mxu0 0.0
        %1727 = vmatprep.subr.mxu0 0.0
        %1728 = vmatpush2.msra.mxu0 0.0
        %1729 = vmatprep.subr.mxu0 0.0
        %1730 = vmatpush2.msra.mxu0 0.0
        %1731 = vmatprep.subr.mxu0 0.0
        %1732 = vmatpush2.msra.mxu0 0.0
        %1733 = vmatprep.subr.mxu0 0.0
        %1734 = vmatpush2.msra.mxu0 0.0
        %1735 = vmatprep.subr.mxu0 0.0
        %1736 = vmatpush2.msra.mxu0 0.0
        %1737 = vmatprep.mubr.f32.mxu0 0.0
        %1738 = vmatmul.mubr.f32.gmra.mxu0 %v1671
        %v1739 = vpop.f32.mrf.mxu0
        %v1740 = vadd.f32 0.0, %v1739
        %v1741 = vpop.f32.mrf.mxu0
        %1742 = vdwg.mxu0
        %1744 = vrot.lane.b32.xlu0 %v1740, 64
        %v1745 = vpop.permute.xlu0 %1744
        %1747 = vst.msk [vmem:[#allocation2 + $0x8] sm:$0xff] %vm1073, %v1745
        %1748 = vrot.lane.b32.xlu0 %v468, 32
        %v1749 = vpop.permute.xlu0 %1748
        %1750 = vrot.lane.b32.xlu0 %v470, 32
        %v1751 = vpop.permute.xlu0 %1750
        %v1752 = vsel %vm569, %v1749, 0
        %v1754 = vsel %vm569, %v1751, 0
        %1756 = vmatprep.subr.mxu0 0.0
        %1757 = vmatpush1.xpose.msra.mxu0 0.0
        %1758 = vmatprep.subr.mxu0 0.0
        %1759 = vmatpush1.xpose.msra.mxu0 0.0
        %1760 = vmatprep.subr.mxu0 0.0
        %1761 = vmatpush1.xpose.msra.mxu0 0.0
        %1762 = vmatprep.subr.mxu0 0.0
        %1763 = vmatpush1.xpose.msra.mxu0 0.0
        %1764 = vmatprep.subr.mxu0 0.0
        %1765 = vmatpush1.xpose.msra.mxu0 0.0
        %1766 = vmatprep.subr.mxu0 0.0
        %1767 = vmatpush1.xpose.msra.mxu0 0.0
        %1768 = vmatprep.subr.mxu0 0.0
        %1769 = vmatpush1.xpose.msra.mxu0 0.0
        %1770 = vmatprep.subr.mxu0 0.0
        %1771 = vmatpush1.xpose.msra.mxu0 0.0
        %1772 = vmatprep.subr.mxu0 0.0
        %1773 = vmatpush1.xpose.msra.mxu0 0.0
        %1774 = vmatprep.subr.mxu0 0.0
        %1775 = vmatpush1.xpose.msra.mxu0 0.0
        %1776 = vmatprep.subr.mxu0 0.0
        %1777 = vmatpush1.xpose.msra.mxu0 0.0
        %1778 = vmatprep.subr.mxu0 0.0
        %1779 = vmatpush1.xpose.msra.mxu0 0.0
        %1780 = vmatprep.subr.mxu0 0.0
        %1781 = vmatpush1.xpose.msra.mxu0 0.0
        %1782 = vmatprep.subr.mxu0 0.0
        %1783 = vmatpush1.xpose.msra.mxu0 0.0
        %1784 = vmatprep.subr.mxu0 0.0
        %1785 = vmatpush1.xpose.msra.mxu0 0.0
        %1786 = vmatprep.subr.mxu0 0.0
        %1787 = vmatpush1.xpose.msra.mxu0 %v1754
        %1788 = vmatprep.subr.mxu0 0.0
        %1789 = vmatpush2.xpose.msra.mxu0 0.0
        %1790 = vmatprep.subr.mxu0 0.0
        %1791 = vmatpush2.xpose.msra.mxu0 0.0
        %1792 = vmatprep.subr.mxu0 0.0
        %1793 = vmatpush2.xpose.msra.mxu0 0.0
        %1794 = vmatprep.subr.mxu0 0.0
        %1795 = vmatpush2.xpose.msra.mxu0 0.0
        %1796 = vmatprep.subr.mxu0 0.0
        %1797 = vmatpush2.xpose.msra.mxu0 0.0
        %1798 = vmatprep.subr.mxu0 0.0
        %1799 = vmatpush2.xpose.msra.mxu0 0.0
        %1800 = vmatprep.subr.mxu0 0.0
        %1801 = vmatpush2.xpose.msra.mxu0 0.0
        %1802 = vmatprep.subr.mxu0 0.0
        %1803 = vmatpush2.xpose.msra.mxu0 0.0
        %1804 = vmatprep.subr.mxu0 0.0
        %1805 = vmatpush2.xpose.msra.mxu0 0.0
        %1806 = vmatprep.subr.mxu0 0.0
        %1807 = vmatpush2.xpose.msra.mxu0 0.0
        %1808 = vmatprep.subr.mxu0 0.0
        %1809 = vmatpush2.xpose.msra.mxu0 0.0
        %1810 = vmatprep.subr.mxu0 0.0
        %1811 = vmatpush2.xpose.msra.mxu0 0.0
        %1812 = vmatprep.subr.mxu0 0.0
        %1813 = vmatpush2.xpose.msra.mxu0 0.0
        %1814 = vmatprep.subr.mxu0 0.0
        %1815 = vmatpush2.xpose.msra.mxu0 0.0
        %1816 = vmatprep.subr.mxu0 0.0
        %1817 = vmatpush2.xpose.msra.mxu0 0.0
        %1818 = vmatprep.subr.mxu0 0.0
        %1819 = vmatpush2.xpose.msra.mxu0 0.0
        %1820 = vmatprep.mubr.f32.mxu0 0.0
        %1821 = vmatmul.mubr.f32.gmra.mxu0 %v1752
        %v1822 = vpop.f32.mrf.mxu0
        %v1823 = vadd.f32 0.0, %v1822
        %v1824 = vpop.f32.mrf.mxu0
        %1825 = vdwg.mxu0
        %v1826 = vsel %vm646, %v1823, -inf
        %1827 = vmax.xlane.f32.xlu0 %v1826
        %v1828 = vpop.xlane.xlu0 %1827
        %v1829 = vsub.f32 %v1823, %v1828
        %v1830 = vmul.f32 %v1829, 1.442695
        %v1831 = vpow.pop %v1830
        %v1832 = vsel %vm646, %v1831, 0.0
        %1833 = vadd.xlane.f32.xlu0 %v1832
        %v1834 = vpop.xlane.xlu0 %1833
        %v1835 = vrcp.pop %v1834
        %v1836 = vmul.f32 %v1831, %v1835
        %1837 = vrot.lane.b32.xlu0 %v556, 32
        %v1838 = vpop.permute.xlu0 %1837
        %v1841 = vsel %vm646, %v1836, 0
        %1843 = vmatprep.subr.mxu0 0.0
        %1844 = vmatpush1.msra.mxu0 0.0
        %1845 = vmatprep.subr.mxu0 0.0
        %1846 = vmatpush1.msra.mxu0 0.0
        %1847 = vmatprep.subr.mxu0 0.0
        %1848 = vmatpush1.msra.mxu0 0.0
        %1849 = vmatprep.subr.mxu0 0.0
        %1850 = vmatpush1.msra.mxu0 0.0
        %1851 = vmatprep.subr.mxu0 0.0
        %1852 = vmatpush1.msra.mxu0 0.0
        %1853 = vmatprep.subr.mxu0 0.0
        %1854 = vmatpush1.msra.mxu0 0.0
        %1855 = vmatprep.subr.mxu0 0.0
        %1856 = vmatpush1.msra.mxu0 0.0
        %1857 = vmatprep.subr.mxu0 0.0
        %1858 = vmatpush1.msra.mxu0 0.0
        %1859 = vmatprep.subr.mxu0 0.0
        %1860 = vmatpush1.msra.mxu0 0.0
        %1861 = vmatprep.subr.mxu0 0.0
        %1862 = vmatpush1.msra.mxu0 0.0
        %1863 = vmatprep.subr.mxu0 0.0
        %1864 = vmatpush1.msra.mxu0 0.0
        %1865 = vmatprep.subr.mxu0 0.0
        %1866 = vmatpush1.msra.mxu0 0.0
        %1867 = vmatprep.subr.mxu0 0.0
        %1868 = vmatpush1.msra.mxu0 0.0
        %1869 = vmatprep.subr.mxu0 0.0
        %1870 = vmatpush1.msra.mxu0 0.0
        %1871 = vmatprep.subr.mxu0 0.0
        %1872 = vmatpush1.msra.mxu0 0.0
        %1873 = vmatprep.subr.mxu0 0.0
        %1874 = vmatpush1.msra.mxu0 %v1838
        %1875 = vmatprep.subr.mxu0 0.0
        %1876 = vmatpush2.msra.mxu0 0.0
        %1877 = vmatprep.subr.mxu0 0.0
        %1878 = vmatpush2.msra.mxu0 0.0
        %1879 = vmatprep.subr.mxu0 0.0
        %1880 = vmatpush2.msra.mxu0 0.0
        %1881 = vmatprep.subr.mxu0 0.0
        %1882 = vmatpush2.msra.mxu0 0.0
        %1883 = vmatprep.subr.mxu0 0.0
        %1884 = vmatpush2.msra.mxu0 0.0
        %1885 = vmatprep.subr.mxu0 0.0
        %1886 = vmatpush2.msra.mxu0 0.0
        %1887 = vmatprep.subr.mxu0 0.0
        %1888 = vmatpush2.msra.mxu0 0.0
        %1889 = vmatprep.subr.mxu0 0.0
        %1890 = vmatpush2.msra.mxu0 0.0
        %1891 = vmatprep.subr.mxu0 0.0
        %1892 = vmatpush2.msra.mxu0 0.0
        %1893 = vmatprep.subr.mxu0 0.0
        %1894 = vmatpush2.msra.mxu0 0.0
        %1895 = vmatprep.subr.mxu0 0.0
        %1896 = vmatpush2.msra.mxu0 0.0
        %1897 = vmatprep.subr.mxu0 0.0
        %1898 = vmatpush2.msra.mxu0 0.0
        %1899 = vmatprep.subr.mxu0 0.0
        %1900 = vmatpush2.msra.mxu0 0.0
        %1901 = vmatprep.subr.mxu0 0.0
        %1902 = vmatpush2.msra.mxu0 0.0
        %1903 = vmatprep.subr.mxu0 0.0
        %1904 = vmatpush2.msra.mxu0 0.0
        %1905 = vmatprep.subr.mxu0 0.0
        %1906 = vmatpush2.msra.mxu0 0.0
        %1907 = vmatprep.mubr.f32.mxu0 0.0
        %1908 = vmatmul.mubr.f32.gmra.mxu0 %v1841
        %v1909 = vpop.f32.mrf.mxu0
        %v1910 = vadd.f32 0.0, %v1909
        %v1911 = vpop.f32.mrf.mxu0
        %1912 = vdwg.mxu0
        %1914 = vrot.lane.b32.xlu0 %v1910, 96
        %v1915 = vpop.permute.xlu0 %1914
        %1917 = vst.msk [vmem:[#allocation2 + $0x8] sm:$0xff] %vm1244, %v1915
        %v1919 = vsel %vm569, %v474, 0
        %v1922 = vsel %vm569, %v476, 0
        %1924 = vmatprep.subr.mxu0 0.0
        %1925 = vmatpush1.xpose.msra.mxu0 0.0
        %1926 = vmatprep.subr.mxu0 0.0
        %1927 = vmatpush1.xpose.msra.mxu0 0.0
        %1928 = vmatprep.subr.mxu0 0.0
        %1929 = vmatpush1.xpose.msra.mxu0 0.0
        %1930 = vmatprep.subr.mxu0 0.0
        %1931 = vmatpush1.xpose.msra.mxu0 0.0
        %1932 = vmatprep.subr.mxu0 0.0
        %1933 = vmatpush1.xpose.msra.mxu0 0.0
        %1934 = vmatprep.subr.mxu0 0.0
        %1935 = vmatpush1.xpose.msra.mxu0 0.0
        %1936 = vmatprep.subr.mxu0 0.0
        %1937 = vmatpush1.xpose.msra.mxu0 0.0
        %1938 = vmatprep.subr.mxu0 0.0
        %1939 = vmatpush1.xpose.msra.mxu0 0.0
        %1940 = vmatprep.subr.mxu0 0.0
        %1941 = vmatpush1.xpose.msra.mxu0 0.0
        %1942 = vmatprep.subr.mxu0 0.0
        %1943 = vmatpush1.xpose.msra.mxu0 0.0
        %1944 = vmatprep.subr.mxu0 0.0
        %1945 = vmatpush1.xpose.msra.mxu0 0.0
        %1946 = vmatprep.subr.mxu0 0.0
        %1947 = vmatpush1.xpose.msra.mxu0 0.0
        %1948 = vmatprep.subr.mxu0 0.0
        %1949 = vmatpush1.xpose.msra.mxu0 0.0
        %1950 = vmatprep.subr.mxu0 0.0
        %1951 = vmatpush1.xpose.msra.mxu0 0.0
        %1952 = vmatprep.subr.mxu0 0.0
        %1953 = vmatpush1.xpose.msra.mxu0 0.0
        %1954 = vmatprep.subr.mxu0 0.0
        %1955 = vmatpush1.xpose.msra.mxu0 %v1922
        %1956 = vmatprep.subr.mxu0 0.0
        %1957 = vmatpush2.xpose.msra.mxu0 0.0
        %1958 = vmatprep.subr.mxu0 0.0
        %1959 = vmatpush2.xpose.msra.mxu0 0.0
        %1960 = vmatprep.subr.mxu0 0.0
        %1961 = vmatpush2.xpose.msra.mxu0 0.0
        %1962 = vmatprep.subr.mxu0 0.0
        %1963 = vmatpush2.xpose.msra.mxu0 0.0
        %1964 = vmatprep.subr.mxu0 0.0
        %1965 = vmatpush2.xpose.msra.mxu0 0.0
        %1966 = vmatprep.subr.mxu0 0.0
        %1967 = vmatpush2.xpose.msra.mxu0 0.0
        %1968 = vmatprep.subr.mxu0 0.0
        %1969 = vmatpush2.xpose.msra.mxu0 0.0
        %1970 = vmatprep.subr.mxu0 0.0
        %1971 = vmatpush2.xpose.msra.mxu0 0.0
        %1972 = vmatprep.subr.mxu0 0.0
        %1973 = vmatpush2.xpose.msra.mxu0 0.0
        %1974 = vmatprep.subr.mxu0 0.0
        %1975 = vmatpush2.xpose.msra.mxu0 0.0
        %1976 = vmatprep.subr.mxu0 0.0
        %1977 = vmatpush2.xpose.msra.mxu0 0.0
        %1978 = vmatprep.subr.mxu0 0.0
        %1979 = vmatpush2.xpose.msra.mxu0 0.0
        %1980 = vmatprep.subr.mxu0 0.0
        %1981 = vmatpush2.xpose.msra.mxu0 0.0
        %1982 = vmatprep.subr.mxu0 0.0
        %1983 = vmatpush2.xpose.msra.mxu0 0.0
        %1984 = vmatprep.subr.mxu0 0.0
        %1985 = vmatpush2.xpose.msra.mxu0 0.0
        %1986 = vmatprep.subr.mxu0 0.0
        %1987 = vmatpush2.xpose.msra.mxu0 0.0
        %1988 = vmatprep.mubr.f32.mxu0 0.0
        %1989 = vmatmul.mubr.f32.gmra.mxu0 %v1919
        %v1990 = vpop.f32.mrf.mxu0
        %v1991 = vadd.f32 0.0, %v1990
        %v1992 = vpop.f32.mrf.mxu0
        %1993 = vdwg.mxu0
        %v1994 = vsel %vm646, %v1991, -inf
        %1995 = vmax.xlane.f32.xlu0 %v1994
        %v1996 = vpop.xlane.xlu0 %1995
        %v1997 = vsub.f32 %v1991, %v1996
        %v1998 = vmul.f32 %v1997, 1.442695
        %v1999 = vpow.pop %v1998
        %v2000 = vsel %vm646, %v1999, 0.0
        %2001 = vadd.xlane.f32.xlu0 %v2000
        %v2002 = vpop.xlane.xlu0 %2001
        %v2003 = vrcp.pop %v2002
        %v2004 = vmul.f32 %v1999, %v2003
        %v2006 = vsel %vm646, %v2004, 0
        %2008 = vmatprep.subr.mxu0 0.0
        %2009 = vmatpush1.msra.mxu0 0.0
        %2010 = vmatprep.subr.mxu0 0.0
        %2011 = vmatpush1.msra.mxu0 0.0
        %2012 = vmatprep.subr.mxu0 0.0
        %2013 = vmatpush1.msra.mxu0 0.0
        %2014 = vmatprep.subr.mxu0 0.0
        %2015 = vmatpush1.msra.mxu0 0.0
        %2016 = vmatprep.subr.mxu0 0.0
        %2017 = vmatpush1.msra.mxu0 0.0
        %2018 = vmatprep.subr.mxu0 0.0
        %2019 = vmatpush1.msra.mxu0 0.0
        %2020 = vmatprep.subr.mxu0 0.0
        %2021 = vmatpush1.msra.mxu0 0.0
        %2022 = vmatprep.subr.mxu0 0.0
        %2023 = vmatpush1.msra.mxu0 0.0
        %2024 = vmatprep.subr.mxu0 0.0
        %2025 = vmatpush1.msra.mxu0 0.0
        %2026 = vmatprep.subr.mxu0 0.0
        %2027 = vmatpush1.msra.mxu0 0.0
        %2028 = vmatprep.subr.mxu0 0.0
        %2029 = vmatpush1.msra.mxu0 0.0
        %2030 = vmatprep.subr.mxu0 0.0
        %2031 = vmatpush1.msra.mxu0 0.0
        %2032 = vmatprep.subr.mxu0 0.0
        %2033 = vmatpush1.msra.mxu0 0.0
        %2034 = vmatprep.subr.mxu0 0.0
        %2035 = vmatpush1.msra.mxu0 0.0
        %2036 = vmatprep.subr.mxu0 0.0
        %2037 = vmatpush1.msra.mxu0 0.0
        %2038 = vmatprep.subr.mxu0 0.0
        %2039 = vmatpush1.msra.mxu0 %v561
        %2040 = vmatprep.subr.mxu0 0.0
        %2041 = vmatpush2.msra.mxu0 0.0
        %2042 = vmatprep.subr.mxu0 0.0
        %2043 = vmatpush2.msra.mxu0 0.0
        %2044 = vmatprep.subr.mxu0 0.0
        %2045 = vmatpush2.msra.mxu0 0.0
        %2046 = vmatprep.subr.mxu0 0.0
        %2047 = vmatpush2.msra.mxu0 0.0
        %2048 = vmatprep.subr.mxu0 0.0
        %2049 = vmatpush2.msra.mxu0 0.0
        %2050 = vmatprep.subr.mxu0 0.0
        %2051 = vmatpush2.msra.mxu0 0.0
        %2052 = vmatprep.subr.mxu0 0.0
        %2053 = vmatpush2.msra.mxu0 0.0
        %2054 = vmatprep.subr.mxu0 0.0
        %2055 = vmatpush2.msra.mxu0 0.0
        %2056 = vmatprep.subr.mxu0 0.0
        %2057 = vmatpush2.msra.mxu0 0.0
        %2058 = vmatprep.subr.mxu0 0.0
        %2059 = vmatpush2.msra.mxu0 0.0
        %2060 = vmatprep.subr.mxu0 0.0
        %2061 = vmatpush2.msra.mxu0 0.0
        %2062 = vmatprep.subr.mxu0 0.0
        %2063 = vmatpush2.msra.mxu0 0.0
        %2064 = vmatprep.subr.mxu0 0.0
        %2065 = vmatpush2.msra.mxu0 0.0
        %2066 = vmatprep.subr.mxu0 0.0
        %2067 = vmatpush2.msra.mxu0 0.0
        %2068 = vmatprep.subr.mxu0 0.0
        %2069 = vmatpush2.msra.mxu0 0.0
        %2070 = vmatprep.subr.mxu0 0.0
        %2071 = vmatpush2.msra.mxu0 0.0
        %2072 = vmatprep.mubr.f32.mxu0 0.0
        %2073 = vmatmul.mubr.f32.gmra.mxu0 %v2006
        %v2074 = vpop.f32.mrf.mxu0
        %v2075 = vadd.f32 0.0, %v2074
        %v2076 = vpop.f32.mrf.mxu0
        %2077 = vdwg.mxu0
        %2078 = vst.msk [vmem:[#allocation2 + $0x10] sm:$0xff] %vm569, %v2075
        %2079 = vrot.lane.b32.xlu0 %v474, 96
        %v2080 = vpop.permute.xlu0 %2079
        %2081 = vrot.lane.b32.xlu0 %v476, 96
        %v2082 = vpop.permute.xlu0 %2081
        %v2083 = vsel %vm569, %v2080, 0
        %v2085 = vsel %vm569, %v2082, 0
        %2087 = vmatprep.subr.mxu0 0.0
        %2088 = vmatpush1.xpose.msra.mxu0 0.0
        %2089 = vmatprep.subr.mxu0 0.0
        %2090 = vmatpush1.xpose.msra.mxu0 0.0
        %2091 = vmatprep.subr.mxu0 0.0
        %2092 = vmatpush1.xpose.msra.mxu0 0.0
        %2093 = vmatprep.subr.mxu0 0.0
        %2094 = vmatpush1.xpose.msra.mxu0 0.0
        %2095 = vmatprep.subr.mxu0 0.0
        %2096 = vmatpush1.xpose.msra.mxu0 0.0
        %2097 = vmatprep.subr.mxu0 0.0
        %2098 = vmatpush1.xpose.msra.mxu0 0.0
        %2099 = vmatprep.subr.mxu0 0.0
        %2100 = vmatpush1.xpose.msra.mxu0 0.0
        %2101 = vmatprep.subr.mxu0 0.0
        %2102 = vmatpush1.xpose.msra.mxu0 0.0
        %2103 = vmatprep.subr.mxu0 0.0
        %2104 = vmatpush1.xpose.msra.mxu0 0.0
        %2105 = vmatprep.subr.mxu0 0.0
        %2106 = vmatpush1.xpose.msra.mxu0 0.0
        %2107 = vmatprep.subr.mxu0 0.0
        %2108 = vmatpush1.xpose.msra.mxu0 0.0
        %2109 = vmatprep.subr.mxu0 0.0
        %2110 = vmatpush1.xpose.msra.mxu0 0.0
        %2111 = vmatprep.subr.mxu0 0.0
        %2112 = vmatpush1.xpose.msra.mxu0 0.0
        %2113 = vmatprep.subr.mxu0 0.0
        %2114 = vmatpush1.xpose.msra.mxu0 0.0
        %2115 = vmatprep.subr.mxu0 0.0
        %2116 = vmatpush1.xpose.msra.mxu0 0.0
        %2117 = vmatprep.subr.mxu0 0.0
        %2118 = vmatpush1.xpose.msra.mxu0 %v2085
        %2119 = vmatprep.subr.mxu0 0.0
        %2120 = vmatpush2.xpose.msra.mxu0 0.0
        %2121 = vmatprep.subr.mxu0 0.0
        %2122 = vmatpush2.xpose.msra.mxu0 0.0
        %2123 = vmatprep.subr.mxu0 0.0
        %2124 = vmatpush2.xpose.msra.mxu0 0.0
        %2125 = vmatprep.subr.mxu0 0.0
        %2126 = vmatpush2.xpose.msra.mxu0 0.0
        %2127 = vmatprep.subr.mxu0 0.0
        %2128 = vmatpush2.xpose.msra.mxu0 0.0
        %2129 = vmatprep.subr.mxu0 0.0
        %2130 = vmatpush2.xpose.msra.mxu0 0.0
        %2131 = vmatprep.subr.mxu0 0.0
        %2132 = vmatpush2.xpose.msra.mxu0 0.0
        %2133 = vmatprep.subr.mxu0 0.0
        %2134 = vmatpush2.xpose.msra.mxu0 0.0
        %2135 = vmatprep.subr.mxu0 0.0
        %2136 = vmatpush2.xpose.msra.mxu0 0.0
        %2137 = vmatprep.subr.mxu0 0.0
        %2138 = vmatpush2.xpose.msra.mxu0 0.0
        %2139 = vmatprep.subr.mxu0 0.0
        %2140 = vmatpush2.xpose.msra.mxu0 0.0
        %2141 = vmatprep.subr.mxu0 0.0
        %2142 = vmatpush2.xpose.msra.mxu0 0.0
        %2143 = vmatprep.subr.mxu0 0.0
        %2144 = vmatpush2.xpose.msra.mxu0 0.0
        %2145 = vmatprep.subr.mxu0 0.0
        %2146 = vmatpush2.xpose.msra.mxu0 0.0
        %2147 = vmatprep.subr.mxu0 0.0
        %2148 = vmatpush2.xpose.msra.mxu0 0.0
        %2149 = vmatprep.subr.mxu0 0.0
        %2150 = vmatpush2.xpose.msra.mxu0 0.0
        %2151 = vmatprep.mubr.f32.mxu0 0.0
        %2152 = vmatmul.mubr.f32.gmra.mxu0 %v2083
        %v2153 = vpop.f32.mrf.mxu0
        %v2154 = vadd.f32 0.0, %v2153
        %v2155 = vpop.f32.mrf.mxu0
        %2156 = vdwg.mxu0
        %v2157 = vsel %vm646, %v2154, -inf
        %2158 = vmax.xlane.f32.xlu0 %v2157
        %v2159 = vpop.xlane.xlu0 %2158
        %v2160 = vsub.f32 %v2154, %v2159
        %v2161 = vmul.f32 %v2160, 1.442695
        %v2162 = vpow.pop %v2161
        %v2163 = vsel %vm646, %v2162, 0.0
        %2164 = vadd.xlane.f32.xlu0 %v2163
        %v2165 = vpop.xlane.xlu0 %2164
        %v2166 = vrcp.pop %v2165
        %v2167 = vmul.f32 %v2162, %v2166
        %2169 = vrot.lane.b32.xlu0 %v561, 96
        %v2170 = vpop.permute.xlu0 %2169
        %v2173 = vsel %vm646, %v2167, 0
        %2175 = vmatprep.subr.mxu0 0.0
        %2176 = vmatpush1.msra.mxu0 0.0
        %2177 = vmatprep.subr.mxu0 0.0
        %2178 = vmatpush1.msra.mxu0 0.0
        %2179 = vmatprep.subr.mxu0 0.0
        %2180 = vmatpush1.msra.mxu0 0.0
        %2181 = vmatprep.subr.mxu0 0.0
        %2182 = vmatpush1.msra.mxu0 0.0
        %2183 = vmatprep.subr.mxu0 0.0
        %2184 = vmatpush1.msra.mxu0 0.0
        %2185 = vmatprep.subr.mxu0 0.0
        %2186 = vmatpush1.msra.mxu0 0.0
        %2187 = vmatprep.subr.mxu0 0.0
        %2188 = vmatpush1.msra.mxu0 0.0
        %2189 = vmatprep.subr.mxu0 0.0
        %2190 = vmatpush1.msra.mxu0 0.0
        %2191 = vmatprep.subr.mxu0 0.0
        %2192 = vmatpush1.msra.mxu0 0.0
        %2193 = vmatprep.subr.mxu0 0.0
        %2194 = vmatpush1.msra.mxu0 0.0
        %2195 = vmatprep.subr.mxu0 0.0
        %2196 = vmatpush1.msra.mxu0 0.0
        %2197 = vmatprep.subr.mxu0 0.0
        %2198 = vmatpush1.msra.mxu0 0.0
        %2199 = vmatprep.subr.mxu0 0.0
        %2200 = vmatpush1.msra.mxu0 0.0
        %2201 = vmatprep.subr.mxu0 0.0
        %2202 = vmatpush1.msra.mxu0 0.0
        %2203 = vmatprep.subr.mxu0 0.0
        %2204 = vmatpush1.msra.mxu0 0.0
        %2205 = vmatprep.subr.mxu0 0.0
        %2206 = vmatpush1.msra.mxu0 %v2170
        %2207 = vmatprep.subr.mxu0 0.0
        %2208 = vmatpush2.msra.mxu0 0.0
        %2209 = vmatprep.subr.mxu0 0.0
        %2210 = vmatpush2.msra.mxu0 0.0
        %2211 = vmatprep.subr.mxu0 0.0
        %2212 = vmatpush2.msra.mxu0 0.0
        %2213 = vmatprep.subr.mxu0 0.0
        %2214 = vmatpush2.msra.mxu0 0.0
        %2215 = vmatprep.subr.mxu0 0.0
        %2216 = vmatpush2.msra.mxu0 0.0
        %2217 = vmatprep.subr.mxu0 0.0
        %2218 = vmatpush2.msra.mxu0 0.0
        %2219 = vmatprep.subr.mxu0 0.0
        %2220 = vmatpush2.msra.mxu0 0.0
        %2221 = vmatprep.subr.mxu0 0.0
        %2222 = vmatpush2.msra.mxu0 0.0
        %2223 = vmatprep.subr.mxu0 0.0
        %2224 = vmatpush2.msra.mxu0 0.0
        %2225 = vmatprep.subr.mxu0 0.0
        %2226 = vmatpush2.msra.mxu0 0.0
        %2227 = vmatprep.subr.mxu0 0.0
        %2228 = vmatpush2.msra.mxu0 0.0
        %2229 = vmatprep.subr.mxu0 0.0
        %2230 = vmatpush2.msra.mxu0 0.0
        %2231 = vmatprep.subr.mxu0 0.0
        %2232 = vmatpush2.msra.mxu0 0.0
        %2233 = vmatprep.subr.mxu0 0.0
        %2234 = vmatpush2.msra.mxu0 0.0
        %2235 = vmatprep.subr.mxu0 0.0
        %2236 = vmatpush2.msra.mxu0 0.0
        %2237 = vmatprep.subr.mxu0 0.0
        %2238 = vmatpush2.msra.mxu0 0.0
        %2239 = vmatprep.mubr.f32.mxu0 0.0
        %2240 = vmatmul.mubr.f32.gmra.mxu0 %v2173
        %v2241 = vpop.f32.mrf.mxu0
        %v2242 = vadd.f32 0.0, %v2241
        %v2243 = vpop.f32.mrf.mxu0
        %2244 = vdwg.mxu0
        %2246 = vrot.lane.b32.xlu0 %v2242, 32
        %v2247 = vpop.permute.xlu0 %2246
        %2249 = vst.msk [vmem:[#allocation2 + $0x10] sm:$0xff] %vm902, %v2247
        %2250 = vrot.lane.b32.xlu0 %v474, 64
        %v2251 = vpop.permute.xlu0 %2250
        %2252 = vrot.lane.b32.xlu0 %v476, 64
        %v2253 = vpop.permute.xlu0 %2252
        %v2254 = vsel %vm569, %v2251, 0
        %v2256 = vsel %vm569, %v2253, 0
        %2258 = vmatprep.subr.mxu0 0.0
        %2259 = vmatpush1.xpose.msra.mxu0 0.0
        %2260 = vmatprep.subr.mxu0 0.0
        %2261 = vmatpush1.xpose.msra.mxu0 0.0
        %2262 = vmatprep.subr.mxu0 0.0
        %2263 = vmatpush1.xpose.msra.mxu0 0.0
        %2264 = vmatprep.subr.mxu0 0.0
        %2265 = vmatpush1.xpose.msra.mxu0 0.0
        %2266 = vmatprep.subr.mxu0 0.0
        %2267 = vmatpush1.xpose.msra.mxu0 0.0
        %2268 = vmatprep.subr.mxu0 0.0
        %2269 = vmatpush1.xpose.msra.mxu0 0.0
        %2270 = vmatprep.subr.mxu0 0.0
        %2271 = vmatpush1.xpose.msra.mxu0 0.0
        %2272 = vmatprep.subr.mxu0 0.0
        %2273 = vmatpush1.xpose.msra.mxu0 0.0
        %2274 = vmatprep.subr.mxu0 0.0
        %2275 = vmatpush1.xpose.msra.mxu0 0.0
        %2276 = vmatprep.subr.mxu0 0.0
        %2277 = vmatpush1.xpose.msra.mxu0 0.0
        %2278 = vmatprep.subr.mxu0 0.0
        %2279 = vmatpush1.xpose.msra.mxu0 0.0
        %2280 = vmatprep.subr.mxu0 0.0
        %2281 = vmatpush1.xpose.msra.mxu0 0.0
        %2282 = vmatprep.subr.mxu0 0.0
        %2283 = vmatpush1.xpose.msra.mxu0 0.0
        %2284 = vmatprep.subr.mxu0 0.0
        %2285 = vmatpush1.xpose.msra.mxu0 0.0
        %2286 = vmatprep.subr.mxu0 0.0
        %2287 = vmatpush1.xpose.msra.mxu0 0.0
        %2288 = vmatprep.subr.mxu0 0.0
        %2289 = vmatpush1.xpose.msra.mxu0 %v2256
        %2290 = vmatprep.subr.mxu0 0.0
        %2291 = vmatpush2.xpose.msra.mxu0 0.0
        %2292 = vmatprep.subr.mxu0 0.0
        %2293 = vmatpush2.xpose.msra.mxu0 0.0
        %2294 = vmatprep.subr.mxu0 0.0
        %2295 = vmatpush2.xpose.msra.mxu0 0.0
        %2296 = vmatprep.subr.mxu0 0.0
        %2297 = vmatpush2.xpose.msra.mxu0 0.0
        %2298 = vmatprep.subr.mxu0 0.0
        %2299 = vmatpush2.xpose.msra.mxu0 0.0
        %2300 = vmatprep.subr.mxu0 0.0
        %2301 = vmatpush2.xpose.msra.mxu0 0.0
        %2302 = vmatprep.subr.mxu0 0.0
        %2303 = vmatpush2.xpose.msra.mxu0 0.0
        %2304 = vmatprep.subr.mxu0 0.0
        %2305 = vmatpush2.xpose.msra.mxu0 0.0
        %2306 = vmatprep.subr.mxu0 0.0
        %2307 = vmatpush2.xpose.msra.mxu0 0.0
        %2308 = vmatprep.subr.mxu0 0.0
        %2309 = vmatpush2.xpose.msra.mxu0 0.0
        %2310 = vmatprep.subr.mxu0 0.0
        %2311 = vmatpush2.xpose.msra.mxu0 0.0
        %2312 = vmatprep.subr.mxu0 0.0
        %2313 = vmatpush2.xpose.msra.mxu0 0.0
        %2314 = vmatprep.subr.mxu0 0.0
        %2315 = vmatpush2.xpose.msra.mxu0 0.0
        %2316 = vmatprep.subr.mxu0 0.0
        %2317 = vmatpush2.xpose.msra.mxu0 0.0
        %2318 = vmatprep.subr.mxu0 0.0
        %2319 = vmatpush2.xpose.msra.mxu0 0.0
        %2320 = vmatprep.subr.mxu0 0.0
        %2321 = vmatpush2.xpose.msra.mxu0 0.0
        %2322 = vmatprep.mubr.f32.mxu0 0.0
        %2323 = vmatmul.mubr.f32.gmra.mxu0 %v2254
        %v2324 = vpop.f32.mrf.mxu0
        %v2325 = vadd.f32 0.0, %v2324
        %v2326 = vpop.f32.mrf.mxu0
        %2327 = vdwg.mxu0
        %v2328 = vsel %vm646, %v2325, -inf
        %2329 = vmax.xlane.f32.xlu0 %v2328
        %v2330 = vpop.xlane.xlu0 %2329
        %v2331 = vsub.f32 %v2325, %v2330
        %v2332 = vmul.f32 %v2331, 1.442695
        %v2333 = vpow.pop %v2332
        %v2334 = vsel %vm646, %v2333, 0.0
        %2335 = vadd.xlane.f32.xlu0 %v2334
        %v2336 = vpop.xlane.xlu0 %2335
        %v2337 = vrcp.pop %v2336
        %v2338 = vmul.f32 %v2333, %v2337
        %2339 = vrot.lane.b32.xlu0 %v561, 64
        %v2340 = vpop.permute.xlu0 %2339
        %v2343 = vsel %vm646, %v2338, 0
        %2345 = vmatprep.subr.mxu0 0.0
        %2346 = vmatpush1.msra.mxu0 0.0
        %2347 = vmatprep.subr.mxu0 0.0
        %2348 = vmatpush1.msra.mxu0 0.0
        %2349 = vmatprep.subr.mxu0 0.0
        %2350 = vmatpush1.msra.mxu0 0.0
        %2351 = vmatprep.subr.mxu0 0.0
        %2352 = vmatpush1.msra.mxu0 0.0
        %2353 = vmatprep.subr.mxu0 0.0
        %2354 = vmatpush1.msra.mxu0 0.0
        %2355 = vmatprep.subr.mxu0 0.0
        %2356 = vmatpush1.msra.mxu0 0.0
        %2357 = vmatprep.subr.mxu0 0.0
        %2358 = vmatpush1.msra.mxu0 0.0
        %2359 = vmatprep.subr.mxu0 0.0
        %2360 = vmatpush1.msra.mxu0 0.0
        %2361 = vmatprep.subr.mxu0 0.0
        %2362 = vmatpush1.msra.mxu0 0.0
        %2363 = vmatprep.subr.mxu0 0.0
        %2364 = vmatpush1.msra.mxu0 0.0
        %2365 = vmatprep.subr.mxu0 0.0
        %2366 = vmatpush1.msra.mxu0 0.0
        %2367 = vmatprep.subr.mxu0 0.0
        %2368 = vmatpush1.msra.mxu0 0.0
        %2369 = vmatprep.subr.mxu0 0.0
        %2370 = vmatpush1.msra.mxu0 0.0
        %2371 = vmatprep.subr.mxu0 0.0
        %2372 = vmatpush1.msra.mxu0 0.0
        %2373 = vmatprep.subr.mxu0 0.0
        %2374 = vmatpush1.msra.mxu0 0.0
        %2375 = vmatprep.subr.mxu0 0.0
        %2376 = vmatpush1.msra.mxu0 %v2340
        %2377 = vmatprep.subr.mxu0 0.0
        %2378 = vmatpush2.msra.mxu0 0.0
        %2379 = vmatprep.subr.mxu0 0.0
        %2380 = vmatpush2.msra.mxu0 0.0
        %2381 = vmatprep.subr.mxu0 0.0
        %2382 = vmatpush2.msra.mxu0 0.0
        %2383 = vmatprep.subr.mxu0 0.0
        %2384 = vmatpush2.msra.mxu0 0.0
        %2385 = vmatprep.subr.mxu0 0.0
        %2386 = vmatpush2.msra.mxu0 0.0
        %2387 = vmatprep.subr.mxu0 0.0
        %2388 = vmatpush2.msra.mxu0 0.0
        %2389 = vmatprep.subr.mxu0 0.0
        %2390 = vmatpush2.msra.mxu0 0.0
        %2391 = vmatprep.subr.mxu0 0.0
        %2392 = vmatpush2.msra.mxu0 0.0
        %2393 = vmatprep.subr.mxu0 0.0
        %2394 = vmatpush2.msra.mxu0 0.0
        %2395 = vmatprep.subr.mxu0 0.0
        %2396 = vmatpush2.msra.mxu0 0.0
        %2397 = vmatprep.subr.mxu0 0.0
        %2398 = vmatpush2.msra.mxu0 0.0
        %2399 = vmatprep.subr.mxu0 0.0
        %2400 = vmatpush2.msra.mxu0 0.0
        %2401 = vmatprep.subr.mxu0 0.0
        %2402 = vmatpush2.msra.mxu0 0.0
        %2403 = vmatprep.subr.mxu0 0.0
        %2404 = vmatpush2.msra.mxu0 0.0
        %2405 = vmatprep.subr.mxu0 0.0
        %2406 = vmatpush2.msra.mxu0 0.0
        %2407 = vmatprep.subr.mxu0 0.0
        %2408 = vmatpush2.msra.mxu0 0.0
        %2409 = vmatprep.mubr.f32.mxu0 0.0
        %2410 = vmatmul.mubr.f32.gmra.mxu0 %v2343
        %v2411 = vpop.f32.mrf.mxu0
        %v2412 = vadd.f32 0.0, %v2411
        %v2413 = vpop.f32.mrf.mxu0
        %2414 = vdwg.mxu0
        %2416 = vrot.lane.b32.xlu0 %v2412, 64
        %v2417 = vpop.permute.xlu0 %2416
        %2419 = vst.msk [vmem:[#allocation2 + $0x10] sm:$0xff] %vm1073, %v2417
        %2420 = vrot.lane.b32.xlu0 %v474, 32
        %v2421 = vpop.permute.xlu0 %2420
        %2422 = vrot.lane.b32.xlu0 %v476, 32
        %v2423 = vpop.permute.xlu0 %2422
        %v2424 = vsel %vm569, %v2421, 0
        %v2426 = vsel %vm569, %v2423, 0
        %2428 = vmatprep.subr.mxu0 0.0
        %2429 = vmatpush1.xpose.msra.mxu0 0.0
        %2430 = vmatprep.subr.mxu0 0.0
        %2431 = vmatpush1.xpose.msra.mxu0 0.0
        %2432 = vmatprep.subr.mxu0 0.0
        %2433 = vmatpush1.xpose.msra.mxu0 0.0
        %2434 = vmatprep.subr.mxu0 0.0
        %2435 = vmatpush1.xpose.msra.mxu0 0.0
        %2436 = vmatprep.subr.mxu0 0.0
        %2437 = vmatpush1.xpose.msra.mxu0 0.0
        %2438 = vmatprep.subr.mxu0 0.0
        %2439 = vmatpush1.xpose.msra.mxu0 0.0
        %2440 = vmatprep.subr.mxu0 0.0
        %2441 = vmatpush1.xpose.msra.mxu0 0.0
        %2442 = vmatprep.subr.mxu0 0.0
        %2443 = vmatpush1.xpose.msra.mxu0 0.0
        %2444 = vmatprep.subr.mxu0 0.0
        %2445 = vmatpush1.xpose.msra.mxu0 0.0
        %2446 = vmatprep.subr.mxu0 0.0
        %2447 = vmatpush1.xpose.msra.mxu0 0.0
        %2448 = vmatprep.subr.mxu0 0.0
        %2449 = vmatpush1.xpose.msra.mxu0 0.0
        %2450 = vmatprep.subr.mxu0 0.0
        %2451 = vmatpush1.xpose.msra.mxu0 0.0
        %2452 = vmatprep.subr.mxu0 0.0
        %2453 = vmatpush1.xpose.msra.mxu0 0.0
        %2454 = vmatprep.subr.mxu0 0.0
        %2455 = vmatpush1.xpose.msra.mxu0 0.0
        %2456 = vmatprep.subr.mxu0 0.0
        %2457 = vmatpush1.xpose.msra.mxu0 0.0
        %2458 = vmatprep.subr.mxu0 0.0
        %2459 = vmatpush1.xpose.msra.mxu0 %v2426
        %2460 = vmatprep.subr.mxu0 0.0
        %2461 = vmatpush2.xpose.msra.mxu0 0.0
        %2462 = vmatprep.subr.mxu0 0.0
        %2463 = vmatpush2.xpose.msra.mxu0 0.0
        %2464 = vmatprep.subr.mxu0 0.0
        %2465 = vmatpush2.xpose.msra.mxu0 0.0
        %2466 = vmatprep.subr.mxu0 0.0
        %2467 = vmatpush2.xpose.msra.mxu0 0.0
        %2468 = vmatprep.subr.mxu0 0.0
        %2469 = vmatpush2.xpose.msra.mxu0 0.0
        %2470 = vmatprep.subr.mxu0 0.0
        %2471 = vmatpush2.xpose.msra.mxu0 0.0
        %2472 = vmatprep.subr.mxu0 0.0
        %2473 = vmatpush2.xpose.msra.mxu0 0.0
        %2474 = vmatprep.subr.mxu0 0.0
        %2475 = vmatpush2.xpose.msra.mxu0 0.0
        %2476 = vmatprep.subr.mxu0 0.0
        %2477 = vmatpush2.xpose.msra.mxu0 0.0
        %2478 = vmatprep.subr.mxu0 0.0
        %2479 = vmatpush2.xpose.msra.mxu0 0.0
        %2480 = vmatprep.subr.mxu0 0.0
        %2481 = vmatpush2.xpose.msra.mxu0 0.0
        %2482 = vmatprep.subr.mxu0 0.0
        %2483 = vmatpush2.xpose.msra.mxu0 0.0
        %2484 = vmatprep.subr.mxu0 0.0
        %2485 = vmatpush2.xpose.msra.mxu0 0.0
        %2486 = vmatprep.subr.mxu0 0.0
        %2487 = vmatpush2.xpose.msra.mxu0 0.0
        %2488 = vmatprep.subr.mxu0 0.0
        %2489 = vmatpush2.xpose.msra.mxu0 0.0
        %2490 = vmatprep.subr.mxu0 0.0
        %2491 = vmatpush2.xpose.msra.mxu0 0.0
        %2492 = vmatprep.mubr.f32.mxu0 0.0
        %2493 = vmatmul.mubr.f32.gmra.mxu0 %v2424
        %v2494 = vpop.f32.mrf.mxu0
        %v2495 = vadd.f32 0.0, %v2494
        %v2496 = vpop.f32.mrf.mxu0
        %2497 = vdwg.mxu0
        %v2498 = vsel %vm646, %v2495, -inf
        %2499 = vmax.xlane.f32.xlu0 %v2498
        %v2500 = vpop.xlane.xlu0 %2499
        %v2501 = vsub.f32 %v2495, %v2500
        %v2502 = vmul.f32 %v2501, 1.442695
        %v2503 = vpow.pop %v2502
        %v2504 = vsel %vm646, %v2503, 0.0
        %2505 = vadd.xlane.f32.xlu0 %v2504
        %v2506 = vpop.xlane.xlu0 %2505
        %v2507 = vrcp.pop %v2506
        %v2508 = vmul.f32 %v2503, %v2507
        %2509 = vrot.lane.b32.xlu0 %v561, 32
        %v2510 = vpop.permute.xlu0 %2509
        %v2513 = vsel %vm646, %v2508, 0
        %2515 = vmatprep.subr.mxu0 0.0
        %2516 = vmatpush1.msra.mxu0 0.0
        %2517 = vmatprep.subr.mxu0 0.0
        %2518 = vmatpush1.msra.mxu0 0.0
        %2519 = vmatprep.subr.mxu0 0.0
        %2520 = vmatpush1.msra.mxu0 0.0
        %2521 = vmatprep.subr.mxu0 0.0
        %2522 = vmatpush1.msra.mxu0 0.0
        %2523 = vmatprep.subr.mxu0 0.0
        %2524 = vmatpush1.msra.mxu0 0.0
        %2525 = vmatprep.subr.mxu0 0.0
        %2526 = vmatpush1.msra.mxu0 0.0
        %2527 = vmatprep.subr.mxu0 0.0
        %2528 = vmatpush1.msra.mxu0 0.0
        %2529 = vmatprep.subr.mxu0 0.0
        %2530 = vmatpush1.msra.mxu0 0.0
        %2531 = vmatprep.subr.mxu0 0.0
        %2532 = vmatpush1.msra.mxu0 0.0
        %2533 = vmatprep.subr.mxu0 0.0
        %2534 = vmatpush1.msra.mxu0 0.0
        %2535 = vmatprep.subr.mxu0 0.0
        %2536 = vmatpush1.msra.mxu0 0.0
        %2537 = vmatprep.subr.mxu0 0.0
        %2538 = vmatpush1.msra.mxu0 0.0
        %2539 = vmatprep.subr.mxu0 0.0
        %2540 = vmatpush1.msra.mxu0 0.0
        %2541 = vmatprep.subr.mxu0 0.0
        %2542 = vmatpush1.msra.mxu0 0.0
        %2543 = vmatprep.subr.mxu0 0.0
        %2544 = vmatpush1.msra.mxu0 0.0
        %2545 = vmatprep.subr.mxu0 0.0
        %2546 = vmatpush1.msra.mxu0 %v2510
        %2547 = vmatprep.subr.mxu0 0.0
        %2548 = vmatpush2.msra.mxu0 0.0
        %2549 = vmatprep.subr.mxu0 0.0
        %2550 = vmatpush2.msra.mxu0 0.0
        %2551 = vmatprep.subr.mxu0 0.0
        %2552 = vmatpush2.msra.mxu0 0.0
        %2553 = vmatprep.subr.mxu0 0.0
        %2554 = vmatpush2.msra.mxu0 0.0
        %2555 = vmatprep.subr.mxu0 0.0
        %2556 = vmatpush2.msra.mxu0 0.0
        %2557 = vmatprep.subr.mxu0 0.0
        %2558 = vmatpush2.msra.mxu0 0.0
        %2559 = vmatprep.subr.mxu0 0.0
        %2560 = vmatpush2.msra.mxu0 0.0
        %2561 = vmatprep.subr.mxu0 0.0
        %2562 = vmatpush2.msra.mxu0 0.0
        %2563 = vmatprep.subr.mxu0 0.0
        %2564 = vmatpush2.msra.mxu0 0.0
        %2565 = vmatprep.subr.mxu0 0.0
        %2566 = vmatpush2.msra.mxu0 0.0
        %2567 = vmatprep.subr.mxu0 0.0
        %2568 = vmatpush2.msra.mxu0 0.0
        %2569 = vmatprep.subr.mxu0 0.0
        %2570 = vmatpush2.msra.mxu0 0.0
        %2571 = vmatprep.subr.mxu0 0.0
        %2572 = vmatpush2.msra.mxu0 0.0
        %2573 = vmatprep.subr.mxu0 0.0
        %2574 = vmatpush2.msra.mxu0 0.0
        %2575 = vmatprep.subr.mxu0 0.0
        %2576 = vmatpush2.msra.mxu0 0.0
        %2577 = vmatprep.subr.mxu0 0.0
        %2578 = vmatpush2.msra.mxu0 0.0
        %2579 = vmatprep.mubr.f32.mxu0 0.0
        %2580 = vmatmul.mubr.f32.gmra.mxu0 %v2513
        %v2581 = vpop.f32.mrf.mxu0
        %v2582 = vadd.f32 0.0, %v2581
        %v2583 = vpop.f32.mrf.mxu0
        %2584 = vdwg.mxu0
        %2586 = vrot.lane.b32.xlu0 %v2582, 96
        %v2587 = vpop.permute.xlu0 %2586
        %2589 = vst.msk [vmem:[#allocation2 + $0x10] sm:$0xff] %vm1244, %v2587
        %v2591 = vsel %vm569, %v480, 0
        %v2594 = vsel %vm569, %v482, 0
        %2596 = vmatprep.subr.mxu0 0.0
        %2597 = vmatpush1.xpose.msra.mxu0 0.0
        %2598 = vmatprep.subr.mxu0 0.0
        %2599 = vmatpush1.xpose.msra.mxu0 0.0
        %2600 = vmatprep.subr.mxu0 0.0
        %2601 = vmatpush1.xpose.msra.mxu0 0.0
        %2602 = vmatprep.subr.mxu0 0.0
        %2603 = vmatpush1.xpose.msra.mxu0 0.0
        %2604 = vmatprep.subr.mxu0 0.0
        %2605 = vmatpush1.xpose.msra.mxu0 0.0
        %2606 = vmatprep.subr.mxu0 0.0
        %2607 = vmatpush1.xpose.msra.mxu0 0.0
        %2608 = vmatprep.subr.mxu0 0.0
        %2609 = vmatpush1.xpose.msra.mxu0 0.0
        %2610 = vmatprep.subr.mxu0 0.0
        %2611 = vmatpush1.xpose.msra.mxu0 0.0
        %2612 = vmatprep.subr.mxu0 0.0
        %2613 = vmatpush1.xpose.msra.mxu0 0.0
        %2614 = vmatprep.subr.mxu0 0.0
        %2615 = vmatpush1.xpose.msra.mxu0 0.0
        %2616 = vmatprep.subr.mxu0 0.0
        %2617 = vmatpush1.xpose.msra.mxu0 0.0
        %2618 = vmatprep.subr.mxu0 0.0
        %2619 = vmatpush1.xpose.msra.mxu0 0.0
        %2620 = vmatprep.subr.mxu0 0.0
        %2621 = vmatpush1.xpose.msra.mxu0 0.0
        %2622 = vmatprep.subr.mxu0 0.0
        %2623 = vmatpush1.xpose.msra.mxu0 0.0
        %2624 = vmatprep.subr.mxu0 0.0
        %2625 = vmatpush1.xpose.msra.mxu0 0.0
        %2626 = vmatprep.subr.mxu0 0.0
        %2627 = vmatpush1.xpose.msra.mxu0 %v2594
        %2628 = vmatprep.subr.mxu0 0.0
        %2629 = vmatpush2.xpose.msra.mxu0 0.0
        %2630 = vmatprep.subr.mxu0 0.0
        %2631 = vmatpush2.xpose.msra.mxu0 0.0
        %2632 = vmatprep.subr.mxu0 0.0
        %2633 = vmatpush2.xpose.msra.mxu0 0.0
        %2634 = vmatprep.subr.mxu0 0.0
        %2635 = vmatpush2.xpose.msra.mxu0 0.0
        %2636 = vmatprep.subr.mxu0 0.0
        %2637 = vmatpush2.xpose.msra.mxu0 0.0
        %2638 = vmatprep.subr.mxu0 0.0
        %2639 = vmatpush2.xpose.msra.mxu0 0.0
        %2640 = vmatprep.subr.mxu0 0.0
        %2641 = vmatpush2.xpose.msra.mxu0 0.0
        %2642 = vmatprep.subr.mxu0 0.0
        %2643 = vmatpush2.xpose.msra.mxu0 0.0
        %2644 = vmatprep.subr.mxu0 0.0
        %2645 = vmatpush2.xpose.msra.mxu0 0.0
        %2646 = vmatprep.subr.mxu0 0.0
        %2647 = vmatpush2.xpose.msra.mxu0 0.0
        %2648 = vmatprep.subr.mxu0 0.0
        %2649 = vmatpush2.xpose.msra.mxu0 0.0
        %2650 = vmatprep.subr.mxu0 0.0
        %2651 = vmatpush2.xpose.msra.mxu0 0.0
        %2652 = vmatprep.subr.mxu0 0.0
        %2653 = vmatpush2.xpose.msra.mxu0 0.0
        %2654 = vmatprep.subr.mxu0 0.0
        %2655 = vmatpush2.xpose.msra.mxu0 0.0
        %2656 = vmatprep.subr.mxu0 0.0
        %2657 = vmatpush2.xpose.msra.mxu0 0.0
        %2658 = vmatprep.subr.mxu0 0.0
        %2659 = vmatpush2.xpose.msra.mxu0 0.0
        %2660 = vmatprep.mubr.f32.mxu0 0.0
        %2661 = vmatmul.mubr.f32.gmra.mxu0 %v2591
        %v2662 = vpop.f32.mrf.mxu0
        %v2663 = vadd.f32 0.0, %v2662
        %v2664 = vpop.f32.mrf.mxu0
        %2665 = vdwg.mxu0
        %v2666 = vsel %vm646, %v2663, -inf
        %2667 = vmax.xlane.f32.xlu0 %v2666
        %v2668 = vpop.xlane.xlu0 %2667
        %v2669 = vsub.f32 %v2663, %v2668
        %v2670 = vmul.f32 %v2669, 1.442695
        %v2671 = vpow.pop %v2670
        %v2672 = vsel %vm646, %v2671, 0.0
        %2673 = vadd.xlane.f32.xlu0 %v2672
        %v2674 = vpop.xlane.xlu0 %2673
        %v2675 = vrcp.pop %v2674
        %v2676 = vmul.f32 %v2671, %v2675
        %v2678 = vsel %vm646, %v2676, 0
        %2680 = vmatprep.subr.mxu0 0.0
        %2681 = vmatpush1.msra.mxu0 0.0
        %2682 = vmatprep.subr.mxu0 0.0
        %2683 = vmatpush1.msra.mxu0 0.0
        %2684 = vmatprep.subr.mxu0 0.0
        %2685 = vmatpush1.msra.mxu0 0.0
        %2686 = vmatprep.subr.mxu0 0.0
        %2687 = vmatpush1.msra.mxu0 0.0
        %2688 = vmatprep.subr.mxu0 0.0
        %2689 = vmatpush1.msra.mxu0 0.0
        %2690 = vmatprep.subr.mxu0 0.0
        %2691 = vmatpush1.msra.mxu0 0.0
        %2692 = vmatprep.subr.mxu0 0.0
        %2693 = vmatpush1.msra.mxu0 0.0
        %2694 = vmatprep.subr.mxu0 0.0
        %2695 = vmatpush1.msra.mxu0 0.0
        %2696 = vmatprep.subr.mxu0 0.0
        %2697 = vmatpush1.msra.mxu0 0.0
        %2698 = vmatprep.subr.mxu0 0.0
        %2699 = vmatpush1.msra.mxu0 0.0
        %2700 = vmatprep.subr.mxu0 0.0
        %2701 = vmatpush1.msra.mxu0 0.0
        %2702 = vmatprep.subr.mxu0 0.0
        %2703 = vmatpush1.msra.mxu0 0.0
        %2704 = vmatprep.subr.mxu0 0.0
        %2705 = vmatpush1.msra.mxu0 0.0
        %2706 = vmatprep.subr.mxu0 0.0
        %2707 = vmatpush1.msra.mxu0 0.0
        %2708 = vmatprep.subr.mxu0 0.0
        %2709 = vmatpush1.msra.mxu0 0.0
        %2710 = vmatprep.subr.mxu0 0.0
        %2711 = vmatpush1.msra.mxu0 %v566
        %2712 = vmatprep.subr.mxu0 0.0
        %2713 = vmatpush2.msra.mxu0 0.0
        %2714 = vmatprep.subr.mxu0 0.0
        %2715 = vmatpush2.msra.mxu0 0.0
        %2716 = vmatprep.subr.mxu0 0.0
        %2717 = vmatpush2.msra.mxu0 0.0
        %2718 = vmatprep.subr.mxu0 0.0
        %2719 = vmatpush2.msra.mxu0 0.0
        %2720 = vmatprep.subr.mxu0 0.0
        %2721 = vmatpush2.msra.mxu0 0.0
        %2722 = vmatprep.subr.mxu0 0.0
        %2723 = vmatpush2.msra.mxu0 0.0
        %2724 = vmatprep.subr.mxu0 0.0
        %2725 = vmatpush2.msra.mxu0 0.0
        %2726 = vmatprep.subr.mxu0 0.0
        %2727 = vmatpush2.msra.mxu0 0.0
        %2728 = vmatprep.subr.mxu0 0.0
        %2729 = vmatpush2.msra.mxu0 0.0
        %2730 = vmatprep.subr.mxu0 0.0
        %2731 = vmatpush2.msra.mxu0 0.0
        %2732 = vmatprep.subr.mxu0 0.0
        %2733 = vmatpush2.msra.mxu0 0.0
        %2734 = vmatprep.subr.mxu0 0.0
        %2735 = vmatpush2.msra.mxu0 0.0
        %2736 = vmatprep.subr.mxu0 0.0
        %2737 = vmatpush2.msra.mxu0 0.0
        %2738 = vmatprep.subr.mxu0 0.0
        %2739 = vmatpush2.msra.mxu0 0.0
        %2740 = vmatprep.subr.mxu0 0.0
        %2741 = vmatpush2.msra.mxu0 0.0
        %2742 = vmatprep.subr.mxu0 0.0
        %2743 = vmatpush2.msra.mxu0 0.0
        %2744 = vmatprep.mubr.f32.mxu0 0.0
        %2745 = vmatmul.mubr.f32.gmra.mxu0 %v2678
        %v2746 = vpop.f32.mrf.mxu0
        %v2747 = vadd.f32 0.0, %v2746
        %v2748 = vpop.f32.mrf.mxu0
        %2749 = vdwg.mxu0
        %2750 = vst.msk [vmem:[#allocation2 + $0x18] sm:$0xff] %vm569, %v2747
        %2751 = vrot.lane.b32.xlu0 %v480, 96
        %v2752 = vpop.permute.xlu0 %2751
        %2753 = vrot.lane.b32.xlu0 %v482, 96
        %v2754 = vpop.permute.xlu0 %2753
        %v2755 = vsel %vm569, %v2752, 0
        %v2757 = vsel %vm569, %v2754, 0
        %2759 = vmatprep.subr.mxu0 0.0
        %2760 = vmatpush1.xpose.msra.mxu0 0.0
        %2761 = vmatprep.subr.mxu0 0.0
        %2762 = vmatpush1.xpose.msra.mxu0 0.0
        %2763 = vmatprep.subr.mxu0 0.0
        %2764 = vmatpush1.xpose.msra.mxu0 0.0
        %2765 = vmatprep.subr.mxu0 0.0
        %2766 = vmatpush1.xpose.msra.mxu0 0.0
        %2767 = vmatprep.subr.mxu0 0.0
        %2768 = vmatpush1.xpose.msra.mxu0 0.0
        %2769 = vmatprep.subr.mxu0 0.0
        %2770 = vmatpush1.xpose.msra.mxu0 0.0
        %2771 = vmatprep.subr.mxu0 0.0
        %2772 = vmatpush1.xpose.msra.mxu0 0.0
        %2773 = vmatprep.subr.mxu0 0.0
        %2774 = vmatpush1.xpose.msra.mxu0 0.0
        %2775 = vmatprep.subr.mxu0 0.0
        %2776 = vmatpush1.xpose.msra.mxu0 0.0
        %2777 = vmatprep.subr.mxu0 0.0
        %2778 = vmatpush1.xpose.msra.mxu0 0.0
        %2779 = vmatprep.subr.mxu0 0.0
        %2780 = vmatpush1.xpose.msra.mxu0 0.0
        %2781 = vmatprep.subr.mxu0 0.0
        %2782 = vmatpush1.xpose.msra.mxu0 0.0
        %2783 = vmatprep.subr.mxu0 0.0
        %2784 = vmatpush1.xpose.msra.mxu0 0.0
        %2785 = vmatprep.subr.mxu0 0.0
        %2786 = vmatpush1.xpose.msra.mxu0 0.0
        %2787 = vmatprep.subr.mxu0 0.0
        %2788 = vmatpush1.xpose.msra.mxu0 0.0
        %2789 = vmatprep.subr.mxu0 0.0
        %2790 = vmatpush1.xpose.msra.mxu0 %v2757
        %2791 = vmatprep.subr.mxu0 0.0
        %2792 = vmatpush2.xpose.msra.mxu0 0.0
        %2793 = vmatprep.subr.mxu0 0.0
        %2794 = vmatpush2.xpose.msra.mxu0 0.0
        %2795 = vmatprep.subr.mxu0 0.0
        %2796 = vmatpush2.xpose.msra.mxu0 0.0
        %2797 = vmatprep.subr.mxu0 0.0
        %2798 = vmatpush2.xpose.msra.mxu0 0.0
        %2799 = vmatprep.subr.mxu0 0.0
        %2800 = vmatpush2.xpose.msra.mxu0 0.0
        %2801 = vmatprep.subr.mxu0 0.0
        %2802 = vmatpush2.xpose.msra.mxu0 0.0
        %2803 = vmatprep.subr.mxu0 0.0
        %2804 = vmatpush2.xpose.msra.mxu0 0.0
        %2805 = vmatprep.subr.mxu0 0.0
        %2806 = vmatpush2.xpose.msra.mxu0 0.0
        %2807 = vmatprep.subr.mxu0 0.0
        %2808 = vmatpush2.xpose.msra.mxu0 0.0
        %2809 = vmatprep.subr.mxu0 0.0
        %2810 = vmatpush2.xpose.msra.mxu0 0.0
        %2811 = vmatprep.subr.mxu0 0.0
        %2812 = vmatpush2.xpose.msra.mxu0 0.0
        %2813 = vmatprep.subr.mxu0 0.0
        %2814 = vmatpush2.xpose.msra.mxu0 0.0
        %2815 = vmatprep.subr.mxu0 0.0
        %2816 = vmatpush2.xpose.msra.mxu0 0.0
        %2817 = vmatprep.subr.mxu0 0.0
        %2818 = vmatpush2.xpose.msra.mxu0 0.0
        %2819 = vmatprep.subr.mxu0 0.0
        %2820 = vmatpush2.xpose.msra.mxu0 0.0
        %2821 = vmatprep.subr.mxu0 0.0
        %2822 = vmatpush2.xpose.msra.mxu0 0.0
        %2823 = vmatprep.mubr.f32.mxu0 0.0
        %2824 = vmatmul.mubr.f32.gmra.mxu0 %v2755
        %v2825 = vpop.f32.mrf.mxu0
        %v2826 = vadd.f32 0.0, %v2825
        %v2827 = vpop.f32.mrf.mxu0
        %2828 = vdwg.mxu0
        %v2829 = vsel %vm646, %v2826, -inf
        %2830 = vmax.xlane.f32.xlu0 %v2829
        %v2831 = vpop.xlane.xlu0 %2830
        %v2832 = vsub.f32 %v2826, %v2831
        %v2833 = vmul.f32 %v2832, 1.442695
        %v2834 = vpow.pop %v2833
        %v2835 = vsel %vm646, %v2834, 0.0
        %2836 = vadd.xlane.f32.xlu0 %v2835
        %v2837 = vpop.xlane.xlu0 %2836
        %v2838 = vrcp.pop %v2837
        %v2839 = vmul.f32 %v2834, %v2838
        %2841 = vrot.lane.b32.xlu0 %v566, 96
        %v2842 = vpop.permute.xlu0 %2841
        %v2845 = vsel %vm646, %v2839, 0
        %2847 = vmatprep.subr.mxu0 0.0
        %2848 = vmatpush1.msra.mxu0 0.0
        %2849 = vmatprep.subr.mxu0 0.0
        %2850 = vmatpush1.msra.mxu0 0.0
        %2851 = vmatprep.subr.mxu0 0.0
        %2852 = vmatpush1.msra.mxu0 0.0
        %2853 = vmatprep.subr.mxu0 0.0
        %2854 = vmatpush1.msra.mxu0 0.0
        %2855 = vmatprep.subr.mxu0 0.0
        %2856 = vmatpush1.msra.mxu0 0.0
        %2857 = vmatprep.subr.mxu0 0.0
        %2858 = vmatpush1.msra.mxu0 0.0
        %2859 = vmatprep.subr.mxu0 0.0
        %2860 = vmatpush1.msra.mxu0 0.0
        %2861 = vmatprep.subr.mxu0 0.0
        %2862 = vmatpush1.msra.mxu0 0.0
        %2863 = vmatprep.subr.mxu0 0.0
        %2864 = vmatpush1.msra.mxu0 0.0
        %2865 = vmatprep.subr.mxu0 0.0
        %2866 = vmatpush1.msra.mxu0 0.0
        %2867 = vmatprep.subr.mxu0 0.0
        %2868 = vmatpush1.msra.mxu0 0.0
        %2869 = vmatprep.subr.mxu0 0.0
        %2870 = vmatpush1.msra.mxu0 0.0
        %2871 = vmatprep.subr.mxu0 0.0
        %2872 = vmatpush1.msra.mxu0 0.0
        %2873 = vmatprep.subr.mxu0 0.0
        %2874 = vmatpush1.msra.mxu0 0.0
        %2875 = vmatprep.subr.mxu0 0.0
        %2876 = vmatpush1.msra.mxu0 0.0
        %2877 = vmatprep.subr.mxu0 0.0
        %2878 = vmatpush1.msra.mxu0 %v2842
        %2879 = vmatprep.subr.mxu0 0.0
        %2880 = vmatpush2.msra.mxu0 0.0
        %2881 = vmatprep.subr.mxu0 0.0
        %2882 = vmatpush2.msra.mxu0 0.0
        %2883 = vmatprep.subr.mxu0 0.0
        %2884 = vmatpush2.msra.mxu0 0.0
        %2885 = vmatprep.subr.mxu0 0.0
        %2886 = vmatpush2.msra.mxu0 0.0
        %2887 = vmatprep.subr.mxu0 0.0
        %2888 = vmatpush2.msra.mxu0 0.0
        %2889 = vmatprep.subr.mxu0 0.0
        %2890 = vmatpush2.msra.mxu0 0.0
        %2891 = vmatprep.subr.mxu0 0.0
        %2892 = vmatpush2.msra.mxu0 0.0
        %2893 = vmatprep.subr.mxu0 0.0
        %2894 = vmatpush2.msra.mxu0 0.0
        %2895 = vmatprep.subr.mxu0 0.0
        %2896 = vmatpush2.msra.mxu0 0.0
        %2897 = vmatprep.subr.mxu0 0.0
        %2898 = vmatpush2.msra.mxu0 0.0
        %2899 = vmatprep.subr.mxu0 0.0
        %2900 = vmatpush2.msra.mxu0 0.0
        %2901 = vmatprep.subr.mxu0 0.0
        %2902 = vmatpush2.msra.mxu0 0.0
        %2903 = vmatprep.subr.mxu0 0.0
        %2904 = vmatpush2.msra.mxu0 0.0
        %2905 = vmatprep.subr.mxu0 0.0
        %2906 = vmatpush2.msra.mxu0 0.0
        %2907 = vmatprep.subr.mxu0 0.0
        %2908 = vmatpush2.msra.mxu0 0.0
        %2909 = vmatprep.subr.mxu0 0.0
        %2910 = vmatpush2.msra.mxu0 0.0
        %2911 = vmatprep.mubr.f32.mxu0 0.0
        %2912 = vmatmul.mubr.f32.gmra.mxu0 %v2845
        %v2913 = vpop.f32.mrf.mxu0
        %v2914 = vadd.f32 0.0, %v2913
        %v2915 = vpop.f32.mrf.mxu0
        %2916 = vdwg.mxu0
        %2918 = vrot.lane.b32.xlu0 %v2914, 32
        %v2919 = vpop.permute.xlu0 %2918
        %2921 = vst.msk [vmem:[#allocation2 + $0x18] sm:$0xff] %vm902, %v2919
        %2922 = vrot.lane.b32.xlu0 %v480, 64
        %v2923 = vpop.permute.xlu0 %2922
        %2924 = vrot.lane.b32.xlu0 %v482, 64
        %v2925 = vpop.permute.xlu0 %2924
        %v2926 = vsel %vm569, %v2923, 0
        %v2928 = vsel %vm569, %v2925, 0
        %2930 = vmatprep.subr.mxu0 0.0
        %2931 = vmatpush1.xpose.msra.mxu0 0.0
        %2932 = vmatprep.subr.mxu0 0.0
        %2933 = vmatpush1.xpose.msra.mxu0 0.0
        %2934 = vmatprep.subr.mxu0 0.0
        %2935 = vmatpush1.xpose.msra.mxu0 0.0
        %2936 = vmatprep.subr.mxu0 0.0
        %2937 = vmatpush1.xpose.msra.mxu0 0.0
        %2938 = vmatprep.subr.mxu0 0.0
        %2939 = vmatpush1.xpose.msra.mxu0 0.0
        %2940 = vmatprep.subr.mxu0 0.0
        %2941 = vmatpush1.xpose.msra.mxu0 0.0
        %2942 = vmatprep.subr.mxu0 0.0
        %2943 = vmatpush1.xpose.msra.mxu0 0.0
        %2944 = vmatprep.subr.mxu0 0.0
        %2945 = vmatpush1.xpose.msra.mxu0 0.0
        %2946 = vmatprep.subr.mxu0 0.0
        %2947 = vmatpush1.xpose.msra.mxu0 0.0
        %2948 = vmatprep.subr.mxu0 0.0
        %2949 = vmatpush1.xpose.msra.mxu0 0.0
        %2950 = vmatprep.subr.mxu0 0.0
        %2951 = vmatpush1.xpose.msra.mxu0 0.0
        %2952 = vmatprep.subr.mxu0 0.0
        %2953 = vmatpush1.xpose.msra.mxu0 0.0
        %2954 = vmatprep.subr.mxu0 0.0
        %2955 = vmatpush1.xpose.msra.mxu0 0.0
        %2956 = vmatprep.subr.mxu0 0.0
        %2957 = vmatpush1.xpose.msra.mxu0 0.0
        %2958 = vmatprep.subr.mxu0 0.0
        %2959 = vmatpush1.xpose.msra.mxu0 0.0
        %2960 = vmatprep.subr.mxu0 0.0
        %2961 = vmatpush1.xpose.msra.mxu0 %v2928
        %2962 = vmatprep.subr.mxu0 0.0
        %2963 = vmatpush2.xpose.msra.mxu0 0.0
        %2964 = vmatprep.subr.mxu0 0.0
        %2965 = vmatpush2.xpose.msra.mxu0 0.0
        %2966 = vmatprep.subr.mxu0 0.0
        %2967 = vmatpush2.xpose.msra.mxu0 0.0
        %2968 = vmatprep.subr.mxu0 0.0
        %2969 = vmatpush2.xpose.msra.mxu0 0.0
        %2970 = vmatprep.subr.mxu0 0.0
        %2971 = vmatpush2.xpose.msra.mxu0 0.0
        %2972 = vmatprep.subr.mxu0 0.0
        %2973 = vmatpush2.xpose.msra.mxu0 0.0
        %2974 = vmatprep.subr.mxu0 0.0
        %2975 = vmatpush2.xpose.msra.mxu0 0.0
        %2976 = vmatprep.subr.mxu0 0.0
        %2977 = vmatpush2.xpose.msra.mxu0 0.0
        %2978 = vmatprep.subr.mxu0 0.0
        %2979 = vmatpush2.xpose.msra.mxu0 0.0
        %2980 = vmatprep.subr.mxu0 0.0
        %2981 = vmatpush2.xpose.msra.mxu0 0.0
        %2982 = vmatprep.subr.mxu0 0.0
        %2983 = vmatpush2.xpose.msra.mxu0 0.0
        %2984 = vmatprep.subr.mxu0 0.0
        %2985 = vmatpush2.xpose.msra.mxu0 0.0
        %2986 = vmatprep.subr.mxu0 0.0
        %2987 = vmatpush2.xpose.msra.mxu0 0.0
        %2988 = vmatprep.subr.mxu0 0.0
        %2989 = vmatpush2.xpose.msra.mxu0 0.0
        %2990 = vmatprep.subr.mxu0 0.0
        %2991 = vmatpush2.xpose.msra.mxu0 0.0
        %2992 = vmatprep.subr.mxu0 0.0
        %2993 = vmatpush2.xpose.msra.mxu0 0.0
        %2994 = vmatprep.mubr.f32.mxu0 0.0
        %2995 = vmatmul.mubr.f32.gmra.mxu0 %v2926
        %v2996 = vpop.f32.mrf.mxu0
        %v2997 = vadd.f32 0.0, %v2996
        %v2998 = vpop.f32.mrf.mxu0
        %2999 = vdwg.mxu0
        %v3000 = vsel %vm646, %v2997, -inf
        %3001 = vmax.xlane.f32.xlu0 %v3000
        %v3002 = vpop.xlane.xlu0 %3001
        %v3003 = vsub.f32 %v2997, %v3002
        %v3004 = vmul.f32 %v3003, 1.442695
        %v3005 = vpow.pop %v3004
        %v3006 = vsel %vm646, %v3005, 0.0
        %3007 = vadd.xlane.f32.xlu0 %v3006
        %v3008 = vpop.xlane.xlu0 %3007
        %v3009 = vrcp.pop %v3008
        %v3010 = vmul.f32 %v3005, %v3009
        %3011 = vrot.lane.b32.xlu0 %v566, 64
        %v3012 = vpop.permute.xlu0 %3011
        %v3015 = vsel %vm646, %v3010, 0
        %3017 = vmatprep.subr.mxu0 0.0
        %3018 = vmatpush1.msra.mxu0 0.0
        %3019 = vmatprep.subr.mxu0 0.0
        %3020 = vmatpush1.msra.mxu0 0.0
        %3021 = vmatprep.subr.mxu0 0.0
        %3022 = vmatpush1.msra.mxu0 0.0
        %3023 = vmatprep.subr.mxu0 0.0
        %3024 = vmatpush1.msra.mxu0 0.0
        %3025 = vmatprep.subr.mxu0 0.0
        %3026 = vmatpush1.msra.mxu0 0.0
        %3027 = vmatprep.subr.mxu0 0.0
        %3028 = vmatpush1.msra.mxu0 0.0
        %3029 = vmatprep.subr.mxu0 0.0
        %3030 = vmatpush1.msra.mxu0 0.0
        %3031 = vmatprep.subr.mxu0 0.0
        %3032 = vmatpush1.msra.mxu0 0.0
        %3033 = vmatprep.subr.mxu0 0.0
        %3034 = vmatpush1.msra.mxu0 0.0
        %3035 = vmatprep.subr.mxu0 0.0
        %3036 = vmatpush1.msra.mxu0 0.0
        %3037 = vmatprep.subr.mxu0 0.0
        %3038 = vmatpush1.msra.mxu0 0.0
        %3039 = vmatprep.subr.mxu0 0.0
        %3040 = vmatpush1.msra.mxu0 0.0
        %3041 = vmatprep.subr.mxu0 0.0
        %3042 = vmatpush1.msra.mxu0 0.0
        %3043 = vmatprep.subr.mxu0 0.0
        %3044 = vmatpush1.msra.mxu0 0.0
        %3045 = vmatprep.subr.mxu0 0.0
        %3046 = vmatpush1.msra.mxu0 0.0
        %3047 = vmatprep.subr.mxu0 0.0
        %3048 = vmatpush1.msra.mxu0 %v3012
        %3049 = vmatprep.subr.mxu0 0.0
        %3050 = vmatpush2.msra.mxu0 0.0
        %3051 = vmatprep.subr.mxu0 0.0
        %3052 = vmatpush2.msra.mxu0 0.0
        %3053 = vmatprep.subr.mxu0 0.0
        %3054 = vmatpush2.msra.mxu0 0.0
        %3055 = vmatprep.subr.mxu0 0.0
        %3056 = vmatpush2.msra.mxu0 0.0
        %3057 = vmatprep.subr.mxu0 0.0
        %3058 = vmatpush2.msra.mxu0 0.0
        %3059 = vmatprep.subr.mxu0 0.0
        %3060 = vmatpush2.msra.mxu0 0.0
        %3061 = vmatprep.subr.mxu0 0.0
        %3062 = vmatpush2.msra.mxu0 0.0
        %3063 = vmatprep.subr.mxu0 0.0
        %3064 = vmatpush2.msra.mxu0 0.0
        %3065 = vmatprep.subr.mxu0 0.0
        %3066 = vmatpush2.msra.mxu0 0.0
        %3067 = vmatprep.subr.mxu0 0.0
        %3068 = vmatpush2.msra.mxu0 0.0
        %3069 = vmatprep.subr.mxu0 0.0
        %3070 = vmatpush2.msra.mxu0 0.0
        %3071 = vmatprep.subr.mxu0 0.0
        %3072 = vmatpush2.msra.mxu0 0.0
        %3073 = vmatprep.subr.mxu0 0.0
        %3074 = vmatpush2.msra.mxu0 0.0
        %3075 = vmatprep.subr.mxu0 0.0
        %3076 = vmatpush2.msra.mxu0 0.0
        %3077 = vmatprep.subr.mxu0 0.0
        %3078 = vmatpush2.msra.mxu0 0.0
        %3079 = vmatprep.subr.mxu0 0.0
        %3080 = vmatpush2.msra.mxu0 0.0
        %3081 = vmatprep.mubr.f32.mxu0 0.0
        %3082 = vmatmul.mubr.f32.gmra.mxu0 %v3015
        %v3083 = vpop.f32.mrf.mxu0
        %v3084 = vadd.f32 0.0, %v3083
        %v3085 = vpop.f32.mrf.mxu0
        %3086 = vdwg.mxu0
        %3088 = vrot.lane.b32.xlu0 %v3084, 64
        %v3089 = vpop.permute.xlu0 %3088
        %3091 = vst.msk [vmem:[#allocation2 + $0x18] sm:$0xff] %vm1073, %v3089
        %3092 = vrot.lane.b32.xlu0 %v480, 32
        %v3093 = vpop.permute.xlu0 %3092
        %3094 = vrot.lane.b32.xlu0 %v482, 32
        %v3095 = vpop.permute.xlu0 %3094
        %v3096 = vsel %vm569, %v3093, 0
        %v3098 = vsel %vm569, %v3095, 0
        %3100 = vmatprep.subr.mxu0 0.0
        %3101 = vmatpush1.xpose.msra.mxu0 0.0
        %3102 = vmatprep.subr.mxu0 0.0
        %3103 = vmatpush1.xpose.msra.mxu0 0.0
        %3104 = vmatprep.subr.mxu0 0.0
        %3105 = vmatpush1.xpose.msra.mxu0 0.0
        %3106 = vmatprep.subr.mxu0 0.0
        %3107 = vmatpush1.xpose.msra.mxu0 0.0
        %3108 = vmatprep.subr.mxu0 0.0
        %3109 = vmatpush1.xpose.msra.mxu0 0.0
        %3110 = vmatprep.subr.mxu0 0.0
        %3111 = vmatpush1.xpose.msra.mxu0 0.0
        %3112 = vmatprep.subr.mxu0 0.0
        %3113 = vmatpush1.xpose.msra.mxu0 0.0
        %3114 = vmatprep.subr.mxu0 0.0
        %3115 = vmatpush1.xpose.msra.mxu0 0.0
        %3116 = vmatprep.subr.mxu0 0.0
        %3117 = vmatpush1.xpose.msra.mxu0 0.0
        %3118 = vmatprep.subr.mxu0 0.0
        %3119 = vmatpush1.xpose.msra.mxu0 0.0
        %3120 = vmatprep.subr.mxu0 0.0
        %3121 = vmatpush1.xpose.msra.mxu0 0.0
        %3122 = vmatprep.subr.mxu0 0.0
        %3123 = vmatpush1.xpose.msra.mxu0 0.0
        %3124 = vmatprep.subr.mxu0 0.0
        %3125 = vmatpush1.xpose.msra.mxu0 0.0
        %3126 = vmatprep.subr.mxu0 0.0
        %3127 = vmatpush1.xpose.msra.mxu0 0.0
        %3128 = vmatprep.subr.mxu0 0.0
        %3129 = vmatpush1.xpose.msra.mxu0 0.0
        %3130 = vmatprep.subr.mxu0 0.0
        %3131 = vmatpush1.xpose.msra.mxu0 %v3098
        %3132 = vmatprep.subr.mxu0 0.0
        %3133 = vmatpush2.xpose.msra.mxu0 0.0
        %3134 = vmatprep.subr.mxu0 0.0
        %3135 = vmatpush2.xpose.msra.mxu0 0.0
        %3136 = vmatprep.subr.mxu0 0.0
        %3137 = vmatpush2.xpose.msra.mxu0 0.0
        %3138 = vmatprep.subr.mxu0 0.0
        %3139 = vmatpush2.xpose.msra.mxu0 0.0
        %3140 = vmatprep.subr.mxu0 0.0
        %3141 = vmatpush2.xpose.msra.mxu0 0.0
        %3142 = vmatprep.subr.mxu0 0.0
        %3143 = vmatpush2.xpose.msra.mxu0 0.0
        %3144 = vmatprep.subr.mxu0 0.0
        %3145 = vmatpush2.xpose.msra.mxu0 0.0
        %3146 = vmatprep.subr.mxu0 0.0
        %3147 = vmatpush2.xpose.msra.mxu0 0.0
        %3148 = vmatprep.subr.mxu0 0.0
        %3149 = vmatpush2.xpose.msra.mxu0 0.0
        %3150 = vmatprep.subr.mxu0 0.0
        %3151 = vmatpush2.xpose.msra.mxu0 0.0
        %3152 = vmatprep.subr.mxu0 0.0
        %3153 = vmatpush2.xpose.msra.mxu0 0.0
        %3154 = vmatprep.subr.mxu0 0.0
        %3155 = vmatpush2.xpose.msra.mxu0 0.0
        %3156 = vmatprep.subr.mxu0 0.0
        %3157 = vmatpush2.xpose.msra.mxu0 0.0
        %3158 = vmatprep.subr.mxu0 0.0
        %3159 = vmatpush2.xpose.msra.mxu0 0.0
        %3160 = vmatprep.subr.mxu0 0.0
        %3161 = vmatpush2.xpose.msra.mxu0 0.0
        %3162 = vmatprep.subr.mxu0 0.0
        %3163 = vmatpush2.xpose.msra.mxu0 0.0
        %3164 = vmatprep.mubr.f32.mxu0 0.0
        %3165 = vmatmul.mubr.f32.gmra.mxu0 %v3096
        %v3166 = vpop.f32.mrf.mxu0
        %v3167 = vadd.f32 0.0, %v3166
        %v3168 = vpop.f32.mrf.mxu0
        %3169 = vdwg.mxu0
        %v3170 = vsel %vm646, %v3167, -inf
        %3171 = vmax.xlane.f32.xlu0 %v3170
        %v3172 = vpop.xlane.xlu0 %3171
        %v3173 = vsub.f32 %v3167, %v3172
        %v3174 = vmul.f32 %v3173, 1.442695
        %v3175 = vpow.pop %v3174
        %v3176 = vsel %vm646, %v3175, 0.0
        %3177 = vadd.xlane.f32.xlu0 %v3176
        %v3178 = vpop.xlane.xlu0 %3177
        %v3179 = vrcp.pop %v3178
        %v3180 = vmul.f32 %v3175, %v3179
        %3181 = vrot.lane.b32.xlu0 %v566, 32
        %v3182 = vpop.permute.xlu0 %3181
        %v3185 = vsel %vm646, %v3180, 0
        %3187 = vmatprep.subr.mxu0 0.0
        %3188 = vmatpush1.msra.mxu0 0.0
        %3189 = vmatprep.subr.mxu0 0.0
        %3190 = vmatpush1.msra.mxu0 0.0
        %3191 = vmatprep.subr.mxu0 0.0
        %3192 = vmatpush1.msra.mxu0 0.0
        %3193 = vmatprep.subr.mxu0 0.0
        %3194 = vmatpush1.msra.mxu0 0.0
        %3195 = vmatprep.subr.mxu0 0.0
        %3196 = vmatpush1.msra.mxu0 0.0
        %3197 = vmatprep.subr.mxu0 0.0
        %3198 = vmatpush1.msra.mxu0 0.0
        %3199 = vmatprep.subr.mxu0 0.0
        %3200 = vmatpush1.msra.mxu0 0.0
        %3201 = vmatprep.subr.mxu0 0.0
        %3202 = vmatpush1.msra.mxu0 0.0
        %3203 = vmatprep.subr.mxu0 0.0
        %3204 = vmatpush1.msra.mxu0 0.0
        %3205 = vmatprep.subr.mxu0 0.0
        %3206 = vmatpush1.msra.mxu0 0.0
        %3207 = vmatprep.subr.mxu0 0.0
        %3208 = vmatpush1.msra.mxu0 0.0
        %3209 = vmatprep.subr.mxu0 0.0
        %3210 = vmatpush1.msra.mxu0 0.0
        %3211 = vmatprep.subr.mxu0 0.0
        %3212 = vmatpush1.msra.mxu0 0.0
        %3213 = vmatprep.subr.mxu0 0.0
        %3214 = vmatpush1.msra.mxu0 0.0
        %3215 = vmatprep.subr.mxu0 0.0
        %3216 = vmatpush1.msra.mxu0 0.0
        %3217 = vmatprep.subr.mxu0 0.0
        %3218 = vmatpush1.msra.mxu0 %v3182
        %3219 = vmatprep.subr.mxu0 0.0
        %3220 = vmatpush2.msra.mxu0 0.0
        %3221 = vmatprep.subr.mxu0 0.0
        %3222 = vmatpush2.msra.mxu0 0.0
        %3223 = vmatprep.subr.mxu0 0.0
        %3224 = vmatpush2.msra.mxu0 0.0
        %3225 = vmatprep.subr.mxu0 0.0
        %3226 = vmatpush2.msra.mxu0 0.0
        %3227 = vmatprep.subr.mxu0 0.0
        %3228 = vmatpush2.msra.mxu0 0.0
        %3229 = vmatprep.subr.mxu0 0.0
        %3230 = vmatpush2.msra.mxu0 0.0
        %3231 = vmatprep.subr.mxu0 0.0
        %3232 = vmatpush2.msra.mxu0 0.0
        %3233 = vmatprep.subr.mxu0 0.0
        %3234 = vmatpush2.msra.mxu0 0.0
        %3235 = vmatprep.subr.mxu0 0.0
        %3236 = vmatpush2.msra.mxu0 0.0
        %3237 = vmatprep.subr.mxu0 0.0
        %3238 = vmatpush2.msra.mxu0 0.0
        %3239 = vmatprep.subr.mxu0 0.0
        %3240 = vmatpush2.msra.mxu0 0.0
        %3241 = vmatprep.subr.mxu0 0.0
        %3242 = vmatpush2.msra.mxu0 0.0
        %3243 = vmatprep.subr.mxu0 0.0
        %3244 = vmatpush2.msra.mxu0 0.0
        %3245 = vmatprep.subr.mxu0 0.0
        %3246 = vmatpush2.msra.mxu0 0.0
        %3247 = vmatprep.subr.mxu0 0.0
        %3248 = vmatpush2.msra.mxu0 0.0
        %3249 = vmatprep.subr.mxu0 0.0
        %3250 = vmatpush2.msra.mxu0 0.0
        %3251 = vmatprep.mubr.f32.mxu0 0.0
        %3252 = vmatmul.mubr.f32.gmra.mxu0 %v3185
        %v3253 = vpop.f32.mrf.mxu0
        %v3254 = vadd.f32 0.0, %v3253
        %v3255 = vpop.f32.mrf.mxu0
        %3256 = vdwg.mxu0
        %3258 = vrot.lane.b32.xlu0 %v3254, 96
        %v3259 = vpop.permute.xlu0 %3258
        %3261 = vst.msk [vmem:[#allocation2 + $0x18] sm:$0xff] %vm1244, %v3259
        %v3262 = vld [vmem:[#allocation2] sm:$0xff]
        %v3263 = vld [vmem:[#allocation2 + $0x8] sm:$0xff]
        %v3264 = vld [vmem:[#allocation2 + $0x10] sm:$0xff]
        %v3265 = vld [vmem:[#allocation2 + $0x18] sm:$0xff]
        %v3266 = vld [vmem:[#allocation9] sm:$0xff]
        %v3267 = vld [vmem:[#allocation9 + $0x8] sm:$0xff]
        %v3268 = vld [vmem:[#allocation9 + $0x10] sm:$0xff]
        %v3269 = vld [vmem:[#allocation9 + $0x18] sm:$0xff]
        %v3270 = vld [vmem:[#allocation9 + $0x20] sm:$0xff]
        %v3271 = vld [vmem:[#allocation9 + $0x28] sm:$0xff]
        %v3272 = vld [vmem:[#allocation9 + $0x30] sm:$0xff]
        %v3273 = vld [vmem:[#allocation9 + $0x38] sm:$0xff]
        %v3274 = vld [vmem:[#allocation9 + $0x40] sm:$0xff]
        %v3275 = vld [vmem:[#allocation9 + $0x48] sm:$0xff]
        %v3276 = vld [vmem:[#allocation9 + $0x50] sm:$0xff]
        %v3277 = vld [vmem:[#allocation9 + $0x58] sm:$0xff]
        %v3278 = vld [vmem:[#allocation9 + $0x60] sm:$0xff]
        %v3279 = vld [vmem:[#allocation9 + $0x68] sm:$0xff]
        %v3280 = vld [vmem:[#allocation9 + $0x70] sm:$0xff]
        %v3281 = vld [vmem:[#allocation9 + $0x78] sm:$0xff]
        %3282 = vmatprep.subr.mxu0 0.0
        %3283 = vmatpush1.msra.mxu0 %v3281
        %3284 = vmatprep.subr.mxu0 0.0
        %3285 = vmatpush1.msra.mxu0 %v3280
        %3286 = vmatprep.subr.mxu0 0.0
        %3287 = vmatpush1.msra.mxu0 %v3279
        %3288 = vmatprep.subr.mxu0 0.0
        %3289 = vmatpush1.msra.mxu0 %v3278
        %3290 = vmatprep.subr.mxu0 0.0
        %3291 = vmatpush1.msra.mxu0 %v3277
        %3292 = vmatprep.subr.mxu0 0.0
        %3293 = vmatpush1.msra.mxu0 %v3276
        %3294 = vmatprep.subr.mxu0 0.0
        %3295 = vmatpush1.msra.mxu0 %v3275
        %3296 = vmatprep.subr.mxu0 0.0
        %3297 = vmatpush1.msra.mxu0 %v3274
        %3298 = vmatprep.subr.mxu0 0.0
        %3299 = vmatpush1.msra.mxu0 %v3273
        %3300 = vmatprep.subr.mxu0 0.0
        %3301 = vmatpush1.msra.mxu0 %v3272
        %3302 = vmatprep.subr.mxu0 0.0
        %3303 = vmatpush1.msra.mxu0 %v3271
        %3304 = vmatprep.subr.mxu0 0.0
        %3305 = vmatpush1.msra.mxu0 %v3270
        %3306 = vmatprep.subr.mxu0 0.0
        %3307 = vmatpush1.msra.mxu0 %v3269
        %3308 = vmatprep.subr.mxu0 0.0
        %3309 = vmatpush1.msra.mxu0 %v3268
        %3310 = vmatprep.subr.mxu0 0.0
        %3311 = vmatpush1.msra.mxu0 %v3267
        %3312 = vmatprep.subr.mxu0 0.0
        %3313 = vmatpush1.msra.mxu0 %v3266
        %3314 = vmatprep.subr.mxu0 0.0
        %3315 = vmatpush2.msra.mxu0 0.0
        %3316 = vmatprep.subr.mxu0 0.0
        %3317 = vmatpush2.msra.mxu0 0.0
        %3318 = vmatprep.subr.mxu0 0.0
        %3319 = vmatpush2.msra.mxu0 0.0
        %3320 = vmatprep.subr.mxu0 0.0
        %3321 = vmatpush2.msra.mxu0 0.0
        %3322 = vmatprep.subr.mxu0 0.0
        %3323 = vmatpush2.msra.mxu0 0.0
        %3324 = vmatprep.subr.mxu0 0.0
        %3325 = vmatpush2.msra.mxu0 0.0
        %3326 = vmatprep.subr.mxu0 0.0
        %3327 = vmatpush2.msra.mxu0 0.0
        %3328 = vmatprep.subr.mxu0 0.0
        %3329 = vmatpush2.msra.mxu0 0.0
        %3330 = vmatprep.subr.mxu0 0.0
        %3331 = vmatpush2.msra.mxu0 0.0
        %3332 = vmatprep.subr.mxu0 0.0
        %3333 = vmatpush2.msra.mxu0 0.0
        %3334 = vmatprep.subr.mxu0 0.0
        %3335 = vmatpush2.msra.mxu0 0.0
        %3336 = vmatprep.subr.mxu0 0.0
        %3337 = vmatpush2.msra.mxu0 0.0
        %3338 = vmatprep.subr.mxu0 0.0
        %3339 = vmatpush2.msra.mxu0 0.0
        %3340 = vmatprep.subr.mxu0 0.0
        %3341 = vmatpush2.msra.mxu0 0.0
        %3342 = vmatprep.subr.mxu0 0.0
        %3343 = vmatpush2.msra.mxu0 0.0
        %3344 = vmatprep.subr.mxu0 0.0
        %3345 = vmatpush2.msra.mxu0 0.0
        %3346 = vmatprep.mubr.f32.mxu0 0.0
        %3347 = vmatmul.mubr.f32.gmra.mxu0 %v3262
        %v3348 = vpop.f32.mrf.mxu0
        %v3349 = vadd.f32 0.0, %v3348
        %v3350 = vpop.f32.mrf.mxu0
        %3351 = vmatprep.mubr.f32.mxu0 0.0
        %3352 = vmatmul.mubr.f32.gmra.mxu0 %v3263
        %v3353 = vpop.f32.mrf.mxu0
        %v3354 = vadd.f32 0.0, %v3353
        %v3355 = vpop.f32.mrf.mxu0
        %3356 = vmatprep.mubr.f32.mxu0 0.0
        %3357 = vmatmul.mubr.f32.gmra.mxu0 %v3264
        %v3358 = vpop.f32.mrf.mxu0
        %v3359 = vadd.f32 0.0, %v3358
        %v3360 = vpop.f32.mrf.mxu0
        %3361 = vmatprep.mubr.f32.mxu0 0.0
        %3362 = vmatmul.mubr.f32.gmra.mxu0 %v3265
        %v3363 = vpop.f32.mrf.mxu0
        %v3364 = vadd.f32 0.0, %v3363
        %v3365 = vpop.f32.mrf.mxu0
        %3366 = vdwg.mxu0
        %v3367 = vadd.f32 %v343, %v3349
        %v3368 = vadd.f32 %v344, %v3354
        %v3369 = vadd.f32 %v345, %v3359
        %v3370 = vadd.f32 %v346, %v3364
        %3371 = vadd.xlane.f32.xlu0 %v3367
        %v3372 = vpop.xlane.xlu0 %3371
        %3373 = vadd.xlane.f32.xlu0 %v3368
        %v3374 = vpop.xlane.xlu0 %3373
        %3375 = vadd.xlane.f32.xlu0 %v3369
        %v3376 = vpop.xlane.xlu0 %3375
        %3377 = vadd.xlane.f32.xlu0 %v3370
        %v3378 = vpop.xlane.xlu0 %3377
        %v3379 = vmul.f32 %v3372, 0.03125
        %v3380 = vmul.f32 %v3374, 0.03125
        %v3381 = vmul.f32 %v3376, 0.03125
        %v3382 = vmul.f32 %v3378, 0.03125
        %v3383 = vsub.f32 %v3367, %v3379
        %v3384 = vsub.f32 %v3368, %v3380
        %v3385 = vsub.f32 %v3369, %v3381
        %v3386 = vsub.f32 %v3370, %v3382
        %v3387 = vmul.f32 %v3383, %v3383
        %v3388 = vmul.f32 %v3384, %v3384
        %v3389 = vmul.f32 %v3385, %v3385
        %v3390 = vmul.f32 %v3386, %v3386
        %3391 = vadd.xlane.f32.xlu0 %v3387
        %v3392 = vpop.xlane.xlu0 %3391
        %3393 = vadd.xlane.f32.xlu0 %v3388
        %v3394 = vpop.xlane.xlu0 %3393
        %3395 = vadd.xlane.f32.xlu0 %v3389
        %v3396 = vpop.xlane.xlu0 %3395
        %3397 = vadd.xlane.f32.xlu0 %v3390
        %v3398 = vpop.xlane.xlu0 %3397
        %v3399 = vmul.f32 %v3379, %v3379
        %v3400 = vmul.f32 %v3380, %v3380
        %v3401 = vmul.f32 %v3381, %v3381
        %v3402 = vmul.f32 %v3382, %v3382
        %v3403 = vmul.f32 %v3399, 96.0
        %v3404 = vmul.f32 %v3400, 96.0
        %v3405 = vmul.f32 %v3401, 96.0
        %v3406 = vmul.f32 %v3402, 96.0
        %v3407 = vsub.f32 %v3392, %v3403
        %v3408 = vsub.f32 %v3394, %v3404
        %v3409 = vsub.f32 %v3396, %v3405
        %v3410 = vsub.f32 %v3398, %v3406
        %v3411 = vmul.f32 %v3407, 0.03125
        %v3412 = vmul.f32 %v3408, 0.03125
        %v3413 = vmul.f32 %v3409, 0.03125
        %v3414 = vmul.f32 %v3410, 0.03125
        %v3415 = vadd.f32 %v3411, 1e-05
        %v3416 = vadd.f32 %v3412, 1e-05
        %v3417 = vadd.f32 %v3413, 1e-05
        %v3418 = vadd.f32 %v3414, 1e-05
        %v3419 = vrsqrt.pop %v3415
        %v3420 = vrsqrt.pop %v3416
        %v3421 = vrsqrt.pop %v3417
        %v3422 = vrsqrt.pop %v3418
        %v3423 = vmul.f32 %v3383, %v3419
        %v3424 = vmul.f32 %v3384, %v3420
        %v3425 = vmul.f32 %v3385, %v3421
        %v3426 = vmul.f32 %v3386, %v3422
        %v3427 = vld [vmem:[%s3] sm:$0x1]
        %v3429 = vlaneseq
        %v3430 = vshrl.u32 %v3429, 7
        %v3431 = vsub.s32 0, %v3430
        %v3432 = vrot.slane %v3427, %v3431
        %v3434 = vmul.f32 %v3423, %v3432
        %v3435 = vmul.f32 %v3424, %v3432
        %v3436 = vmul.f32 %v3425, %v3432
        %v3437 = vmul.f32 %v3426, %v3432
        %v3438 = vld [vmem:[%s4] sm:$0x1]
        %v3440 = vlaneseq
        %v3441 = vshrl.u32 %v3440, 7
        %v3442 = vsub.s32 0, %v3441
        %v3443 = vrot.slane %v3438, %v3442
        %v3445 = vadd.f32 %v3434, %v3443
        %v3446 = vadd.f32 %v3435, %v3443
        %v3447 = vadd.f32 %v3436, %v3443
        %v3448 = vadd.f32 %v3437, %v3443
        %v3449 = vlaneseq
        %v3450 = vshrl.u32 %v3449, 7
        %v3451 = vadd.s32 %v3450, 8
        %v3452 = vadd.s32 %v3450, 16
        %v3453 = vadd.s32 %v3450, 24
        %vm3454 = vcmp.lt.s32.totalorder %v3450, 0
        %v3455 = vsub.s32 0, %v3450
        %v3456 = vsel %vm3454, %v3455, %v3450
        %v3457 = vshrl.u32 %v3456, 3
        %v3458 = vand.u32 %v3456, 7
        %v3459 = vsub.s32 0, %v3458
        %v3460 = vsel %vm3454, %v3459, %v3458
        %vm3461 = vcmp.lt.s32.totalorder %v3451, 0
        %v3462 = vsub.s32 0, %v3451
        %v3463 = vsel %vm3461, %v3462, %v3451
        %v3464 = vshrl.u32 %v3463, 3
        %v3465 = vand.u32 %v3463, 7
        %v3466 = vsub.s32 0, %v3465
        %v3467 = vsel %vm3461, %v3466, %v3465
        %vm3468 = vcmp.lt.s32.totalorder %v3452, 0
        %v3469 = vsub.s32 0, %v3452
        %v3470 = vsel %vm3468, %v3469, %v3452
        %v3471 = vshrl.u32 %v3470, 3
        %v3472 = vand.u32 %v3470, 7
        %v3473 = vsub.s32 0, %v3472
        %v3474 = vsel %vm3468, %v3473, %v3472
        %vm3475 = vcmp.lt.s32.totalorder %v3453, 0
        %v3476 = vsub.s32 0, %v3453
        %v3477 = vsel %vm3475, %v3476, %v3453
        %v3478 = vshrl.u32 %v3477, 3
        %v3479 = vand.u32 %v3477, 7
        %v3480 = vsub.s32 0, %v3479
        %v3481 = vsel %vm3475, %v3480, %v3479
        %vm3482 = vcmp.ne.s32.totalorder %v3460, 0
        %vm3483 = vcmp.ne.s32.totalorder %v3467, 0
        %vm3484 = vcmp.ne.s32.totalorder %v3474, 0
        %vm3485 = vcmp.ne.s32.totalorder %v3481, 0
        %vm3486 = vcmp.lt.s32.totalorder %v3460, 0
        %vm3487 = vcmp.lt.s32.totalorder %v3467, 0
        %vm3488 = vcmp.lt.s32.totalorder %v3474, 0
        %vm3489 = vcmp.lt.s32.totalorder %v3481, 0
        %vm3490 = vmand %vm3486, %vm3482
        %vm3491 = vmand %vm3487, %vm3483
        %vm3492 = vmand %vm3488, %vm3484
        %vm3493 = vmand %vm3489, %vm3485
        %v3494 = vadd.s32 %v3460, 8
        %v3495 = vadd.s32 %v3467, 8
        %v3496 = vadd.s32 %v3474, 8
        %v3497 = vadd.s32 %v3481, 8
        %v3498 = vsel %vm3490, %v3494, %v3460
        %v3499 = vsel %vm3491, %v3495, %v3467
        %v3500 = vsel %vm3492, %v3496, %v3474
        %v3501 = vsel %vm3493, %v3497, %v3481
        %v3502 = vrot.slane %v3445, 7
        %v3503 = vrot.slane %v3446, 7
        %v3504 = vrot.slane %v3447, 7
        %v3505 = vrot.slane %v3448, 7
        %vm3506 = vcmp.lt.s32.totalorder %v3450, 1
        %v3507 = vsel %vm3506, %v3504, %v3505
        %v3508 = vsel %vm3506, %v3503, %v3504
        %v3509 = vsel %vm3506, %v3502, %v3503
        %v3510 = vsel %vm3506, %v3505, %v3502
        %v3511 = vadd.s32 %v3498, 4294967295
        %v3512 = vadd.s32 %v3499, 4294967295
        %v3513 = vadd.s32 %v3500, 4294967295
        %v3514 = vadd.s32 %v3501, 4294967295
        %vm3515 = vcmp.ge.s32.totalorder %v3511, 0
        %vm3516 = vcmp.ge.s32.totalorder %v3512, 0
        %vm3517 = vcmp.ge.s32.totalorder %v3513, 0
        %vm3518 = vcmp.ge.s32.totalorder %v3514, 0
        %vm3519 = vcmp.lt.s32.totalorder %v3511, 8
        %vm3520 = vcmp.lt.s32.totalorder %v3512, 8
        %vm3521 = vcmp.lt.s32.totalorder %v3513, 8
        %vm3522 = vcmp.lt.s32.totalorder %v3514, 8
        %vm3523 = vmand %vm3515, %vm3519
        %vm3524 = vmand %vm3516, %vm3520
        %vm3525 = vmand %vm3517, %vm3521
        %vm3526 = vmand %vm3518, %vm3522
        %v3527 = vsel %vm3523, 1, 0
        %v3528 = vsel %vm3524, 1, 0
        %v3529 = vsel %vm3525, 1, 0
        %v3530 = vsel %vm3526, 1, 0
        %vm3531 = vcmp.eq.s32.totalorder %v3527, 1
        %vm3532 = vcmp.eq.s32.totalorder %v3528, 1
        %vm3533 = vcmp.eq.s32.totalorder %v3529, 1
        %vm3534 = vcmp.eq.s32.totalorder %v3530, 1
        %v3535 = vsel %vm3531, %v3510, 0.0
        %v3536 = vsel %vm3532, %v3509, 0.0
        %v3537 = vsel %vm3533, %v3508, 0.0
        %v3538 = vsel %vm3534, %v3507, 0.0
        %3539 = vst [vmem:[#allocation3] sm:$0xff] %v3535
        %3540 = vst [vmem:[#allocation3 + $0x18] sm:$0xff] %v3536
        %3541 = vst [vmem:[#allocation3 + $0x30] sm:$0xff] %v3537
        %3542 = vst [vmem:[#allocation3 + $0x48] sm:$0xff] %v3538
        %3543 = vst [vmem:[#allocation3 + $0x8] sm:$0xff] %v3445
        %3544 = vst [vmem:[#allocation3 + $0x20] sm:$0xff] %v3446
        %3545 = vst [vmem:[#allocation3 + $0x38] sm:$0xff] %v3447
        %3546 = vst [vmem:[#allocation3 + $0x50] sm:$0xff] %v3448
        %v3547 = vrot.slane %v3445, 1
        %v3548 = vrot.slane %v3446, 1
        %v3549 = vrot.slane %v3447, 1
        %v3550 = vrot.slane %v3448, 1
        %vm3551 = vcmp.lt.s32.totalorder %v3450, 7
        %v3552 = vsel %vm3551, %v3549, %v3550
        %v3553 = vsel %vm3551, %v3548, %v3549
        %v3554 = vsel %vm3551, %v3547, %v3548
        %v3555 = vsel %vm3551, %v3550, %v3547
        %v3556 = vadd.s32 %v3498, 1
        %v3557 = vadd.s32 %v3499, 1
        %v3558 = vadd.s32 %v3500, 1
        %v3559 = vadd.s32 %v3501, 1
        %vm3560 = vcmp.ge.s32.totalorder %v3556, 0
        %vm3561 = vcmp.ge.s32.totalorder %v3557, 0
        %vm3562 = vcmp.ge.s32.totalorder %v3558, 0
        %vm3563 = vcmp.ge.s32.totalorder %v3559, 0
        %vm3564 = vcmp.lt.s32.totalorder %v3556, 8
        %vm3565 = vcmp.lt.s32.totalorder %v3557, 8
        %vm3566 = vcmp.lt.s32.totalorder %v3558, 8
        %vm3567 = vcmp.lt.s32.totalorder %v3559, 8
        %vm3568 = vmand %vm3560, %vm3564
        %vm3569 = vmand %vm3561, %vm3565
        %vm3570 = vmand %vm3562, %vm3566
        %vm3571 = vmand %vm3563, %vm3567
        %v3572 = vsel %vm3568, 1, 0
        %v3573 = vsel %vm3569, 1, 0
        %v3574 = vsel %vm3570, 1, 0
        %v3575 = vsel %vm3571, 1, 0
        %vm3576 = vcmp.eq.s32.totalorder %v3572, 1
        %vm3577 = vcmp.eq.s32.totalorder %v3573, 1
        %vm3578 = vcmp.eq.s32.totalorder %v3574, 1
        %vm3579 = vcmp.eq.s32.totalorder %v3575, 1
        %v3580 = vsel %vm3576, %v3554, 0.0
        %v3581 = vsel %vm3577, %v3553, 0.0
        %v3582 = vsel %vm3578, %v3552, 0.0
        %v3583 = vsel %vm3579, %v3555, 0.0
        %3584 = vst [vmem:[#allocation3 + $0x10] sm:$0xff] %v3580
        %3585 = vst [vmem:[#allocation3 + $0x28] sm:$0xff] %v3581
        %3586 = vst [vmem:[#allocation3 + $0x40] sm:$0xff] %v3582
        %3587 = vst [vmem:[#allocation3 + $0x58] sm:$0xff] %v3583
        %v3588 = vld [vmem:[#allocation3] sm:$0xff]
        %v3589 = vld [vmem:[#allocation3 + $0x8] sm:$0xff]
        %v3590 = vld [vmem:[#allocation3 + $0x10] sm:$0xff]
        %v3591 = vld [vmem:[#allocation3 + $0x18] sm:$0xff]
        %v3592 = vld [vmem:[#allocation3 + $0x20] sm:$0xff]
        %v3593 = vld [vmem:[#allocation3 + $0x28] sm:$0xff]
        %v3594 = vld [vmem:[#allocation3 + $0x30] sm:$0xff]
        %v3595 = vld [vmem:[#allocation3 + $0x38] sm:$0xff]
        %v3596 = vld [vmem:[#allocation3 + $0x40] sm:$0xff]
        %v3597 = vld [vmem:[#allocation3 + $0x48] sm:$0xff]
        %v3598 = vld [vmem:[#allocation3 + $0x50] sm:$0xff]
        %v3599 = vld [vmem:[#allocation3 + $0x58] sm:$0xff]
        %v3600 = vld [vmem:[#allocation10] sm:$0xff]
        %v3601 = vld [vmem:[#allocation10 + $0x8] sm:$0xff]
        %v3602 = vld [vmem:[#allocation10 + $0x10] sm:$0xff]
        %v3603 = vld [vmem:[#allocation10 + $0x18] sm:$0xff]
        %v3604 = vld [vmem:[#allocation10 + $0x20] sm:$0xff]
        %v3605 = vld [vmem:[#allocation10 + $0x28] sm:$0xff]
        %v3606 = vld [vmem:[#allocation10 + $0x30] sm:$0xff]
        %v3607 = vld [vmem:[#allocation10 + $0x38] sm:$0xff]
        %v3608 = vld [vmem:[#allocation10 + $0x40] sm:$0xff]
        %v3609 = vld [vmem:[#allocation10 + $0x48] sm:$0xff]
        %v3610 = vld [vmem:[#allocation10 + $0x50] sm:$0xff]
        %v3611 = vld [vmem:[#allocation10 + $0x58] sm:$0xff]
        %v3612 = vld [vmem:[#allocation10 + $0x60] sm:$0xff]
        %v3613 = vld [vmem:[#allocation10 + $0x68] sm:$0xff]
        %v3614 = vld [vmem:[#allocation10 + $0x70] sm:$0xff]
        %v3615 = vld [vmem:[#allocation10 + $0x78] sm:$0xff]
        %v3616 = vld [vmem:[#allocation10 + $0x80] sm:$0xff]
        %v3617 = vld [vmem:[#allocation10 + $0x88] sm:$0xff]
        %v3618 = vld [vmem:[#allocation10 + $0x90] sm:$0xff]
        %v3619 = vld [vmem:[#allocation10 + $0x98] sm:$0xff]
        %v3620 = vld [vmem:[#allocation10 + $0xa0] sm:$0xff]
        %v3621 = vld [vmem:[#allocation10 + $0xa8] sm:$0xff]
        %v3622 = vld [vmem:[#allocation10 + $0xb0] sm:$0xff]
        %v3623 = vld [vmem:[#allocation10 + $0xb8] sm:$0xff]
        %v3624 = vld [vmem:[#allocation10 + $0xc0] sm:$0xff]
        %v3625 = vld [vmem:[#allocation10 + $0xc8] sm:$0xff]
        %v3626 = vld [vmem:[#allocation10 + $0xd0] sm:$0xff]
        %v3627 = vld [vmem:[#allocation10 + $0xd8] sm:$0xff]
        %v3628 = vld [vmem:[#allocation10 + $0xe0] sm:$0xff]
        %v3629 = vld [vmem:[#allocation10 + $0xe8] sm:$0xff]
        %v3630 = vld [vmem:[#allocation10 + $0xf0] sm:$0xff]
        %v3631 = vld [vmem:[#allocation10 + $0xf8] sm:$0xff]
        %v3632 = vld [vmem:[#allocation10 + $0x100] sm:$0xff]
        %v3633 = vld [vmem:[#allocation10 + $0x108] sm:$0xff]
        %v3634 = vld [vmem:[#allocation10 + $0x110] sm:$0xff]
        %v3635 = vld [vmem:[#allocation10 + $0x118] sm:$0xff]
        %v3636 = vld [vmem:[#allocation10 + $0x120] sm:$0xff]
        %v3637 = vld [vmem:[#allocation10 + $0x128] sm:$0xff]
        %v3638 = vld [vmem:[#allocation10 + $0x130] sm:$0xff]
        %v3639 = vld [vmem:[#allocation10 + $0x138] sm:$0xff]
        %v3640 = vld [vmem:[#allocation10 + $0x140] sm:$0xff]
        %v3641 = vld [vmem:[#allocation10 + $0x148] sm:$0xff]
        %v3642 = vld [vmem:[#allocation10 + $0x150] sm:$0xff]
        %v3643 = vld [vmem:[#allocation10 + $0x158] sm:$0xff]
        %v3644 = vld [vmem:[#allocation10 + $0x160] sm:$0xff]
        %v3645 = vld [vmem:[#allocation10 + $0x168] sm:$0xff]
        %v3646 = vld [vmem:[#allocation10 + $0x170] sm:$0xff]
        %v3647 = vld [vmem:[#allocation10 + $0x178] sm:$0xff]
        %v3648 = vld [vmem:[%s6] sm:$0x1]
        %v3650 = vlaneseq
        %v3651 = vshrl.u32 %v3650, 7
        %v3652 = vsub.s32 0, %v3651
        %v3653 = vrot.slane %v3648, %v3652
        %3655 = vmatprep.subr.mxu0 0.0
        %3656 = vmatpush1.msra.mxu0 %v3615
        %3657 = vmatprep.subr.mxu0 0.0
        %3658 = vmatpush1.msra.mxu0 %v3614
        %3659 = vmatprep.subr.mxu0 0.0
        %3660 = vmatpush1.msra.mxu0 %v3613
        %3661 = vmatprep.subr.mxu0 0.0
        %3662 = vmatpush1.msra.mxu0 %v3612
        %3663 = vmatprep.subr.mxu0 0.0
        %3664 = vmatpush1.msra.mxu0 %v3611
        %3665 = vmatprep.subr.mxu0 0.0
        %3666 = vmatpush1.msra.mxu0 %v3610
        %3667 = vmatprep.subr.mxu0 0.0
        %3668 = vmatpush1.msra.mxu0 %v3609
        %3669 = vmatprep.subr.mxu0 0.0
        %3670 = vmatpush1.msra.mxu0 %v3608
        %3671 = vmatprep.subr.mxu0 0.0
        %3672 = vmatpush1.msra.mxu0 %v3607
        %3673 = vmatprep.subr.mxu0 0.0
        %3674 = vmatpush1.msra.mxu0 %v3606
        %3675 = vmatprep.subr.mxu0 0.0
        %3676 = vmatpush1.msra.mxu0 %v3605
        %3677 = vmatprep.subr.mxu0 0.0
        %3678 = vmatpush1.msra.mxu0 %v3604
        %3679 = vmatprep.subr.mxu0 0.0
        %3680 = vmatpush1.msra.mxu0 %v3603
        %3681 = vmatprep.subr.mxu0 0.0
        %3682 = vmatpush1.msra.mxu0 %v3602
        %3683 = vmatprep.subr.mxu0 0.0
        %3684 = vmatpush1.msra.mxu0 %v3601
        %3685 = vmatprep.subr.mxu0 0.0
        %3686 = vmatpush1.msra.mxu0 %v3600
        %3687 = vmatprep.subr.mxu0 0.0
        %3688 = vmatpush2.msra.mxu0 %v3631
        %3689 = vmatprep.subr.mxu0 0.0
        %3690 = vmatpush2.msra.mxu0 %v3630
        %3691 = vmatprep.subr.mxu0 0.0
        %3692 = vmatpush2.msra.mxu0 %v3629
        %3693 = vmatprep.subr.mxu0 0.0
        %3694 = vmatpush2.msra.mxu0 %v3628
        %3695 = vmatprep.subr.mxu0 0.0
        %3696 = vmatpush2.msra.mxu0 %v3627
        %3697 = vmatprep.subr.mxu0 0.0
        %3698 = vmatpush2.msra.mxu0 %v3626
        %3699 = vmatprep.subr.mxu0 0.0
        %3700 = vmatpush2.msra.mxu0 %v3625
        %3701 = vmatprep.subr.mxu0 0.0
        %3702 = vmatpush2.msra.mxu0 %v3624
        %3703 = vmatprep.subr.mxu0 0.0
        %3704 = vmatpush2.msra.mxu0 %v3623
        %3705 = vmatprep.subr.mxu0 0.0
        %3706 = vmatpush2.msra.mxu0 %v3622
        %3707 = vmatprep.subr.mxu0 0.0
        %3708 = vmatpush2.msra.mxu0 %v3621
        %3709 = vmatprep.subr.mxu0 0.0
        %3710 = vmatpush2.msra.mxu0 %v3620
        %3711 = vmatprep.subr.mxu0 0.0
        %3712 = vmatpush2.msra.mxu0 %v3619
        %3713 = vmatprep.subr.mxu0 0.0
        %3714 = vmatpush2.msra.mxu0 %v3618
        %3715 = vmatprep.subr.mxu0 0.0
        %3716 = vmatpush2.msra.mxu0 %v3617
        %3717 = vmatprep.subr.mxu0 0.0
        %3718 = vmatpush2.msra.mxu0 %v3616
        %3719 = vmatprep.mubr.f32.mxu0 %v3589
        %3720 = vmatmul.mubr.f32.gmra.mxu0 %v3588
        %v3721 = vpop.f32.mrf.mxu0
        %v3722 = vadd.f32 %v3653, %v3721
        %v3723 = vpop.f32.mrf.mxu0
        %3724 = vmatprep.mubr.f32.mxu0 %v3592
        %3725 = vmatmul.mubr.f32.gmra.mxu0 %v3591
        %v3726 = vpop.f32.mrf.mxu0
        %v3727 = vadd.f32 %v3653, %v3726
        %v3728 = vpop.f32.mrf.mxu0
        %3729 = vmatprep.mubr.f32.mxu0 %v3595
        %3730 = vmatmul.mubr.f32.gmra.mxu0 %v3594
        %v3731 = vpop.f32.mrf.mxu0
        %v3732 = vadd.f32 %v3653, %v3731
        %v3733 = vpop.f32.mrf.mxu0
        %3734 = vmatprep.mubr.f32.mxu0 %v3598
        %3735 = vmatmul.mubr.f32.gmra.mxu0 %v3597
        %v3736 = vpop.f32.mrf.mxu0
        %v3737 = vadd.f32 %v3653, %v3736
        %v3738 = vpop.f32.mrf.mxu0
        %3739 = vdwg.mxu0
        %3740 = vmatprep.subr.mxu0 0.0
        %3741 = vmatpush1.msra.mxu0 %v3647
        %3742 = vmatprep.subr.mxu0 0.0
        %3743 = vmatpush1.msra.mxu0 %v3646
        %3744 = vmatprep.subr.mxu0 0.0
        %3745 = vmatpush1.msra.mxu0 %v3645
        %3746 = vmatprep.subr.mxu0 0.0
        %3747 = vmatpush1.msra.mxu0 %v3644
        %3748 = vmatprep.subr.mxu0 0.0
        %3749 = vmatpush1.msra.mxu0 %v3643
        %3750 = vmatprep.subr.mxu0 0.0
        %3751 = vmatpush1.msra.mxu0 %v3642
        %3752 = vmatprep.subr.mxu0 0.0
        %3753 = vmatpush1.msra.mxu0 %v3641
        %3754 = vmatprep.subr.mxu0 0.0
        %3755 = vmatpush1.msra.mxu0 %v3640
        %3756 = vmatprep.subr.mxu0 0.0
        %3757 = vmatpush1.msra.mxu0 %v3639
        %3758 = vmatprep.subr.mxu0 0.0
        %3759 = vmatpush1.msra.mxu0 %v3638
        %3760 = vmatprep.subr.mxu0 0.0
        %3761 = vmatpush1.msra.mxu0 %v3637
        %3762 = vmatprep.subr.mxu0 0.0
        %3763 = vmatpush1.msra.mxu0 %v3636
        %3764 = vmatprep.subr.mxu0 0.0
        %3765 = vmatpush1.msra.mxu0 %v3635
        %3766 = vmatprep.subr.mxu0 0.0
        %3767 = vmatpush1.msra.mxu0 %v3634
        %3768 = vmatprep.subr.mxu0 0.0
        %3769 = vmatpush1.msra.mxu0 %v3633
        %3770 = vmatprep.subr.mxu0 0.0
        %3771 = vmatpush1.msra.mxu0 %v3632
        %3772 = vmatprep.subr.mxu0 0.0
        %3773 = vmatpush2.msra.mxu0 0.0
        %3774 = vmatprep.subr.mxu0 0.0
        %3775 = vmatpush2.msra.mxu0 0.0
        %3776 = vmatprep.subr.mxu0 0.0
        %3777 = vmatpush2.msra.mxu0 0.0
        %3778 = vmatprep.subr.mxu0 0.0
        %3779 = vmatpush2.msra.mxu0 0.0
        %3780 = vmatprep.subr.mxu0 0.0
        %3781 = vmatpush2.msra.mxu0 0.0
        %3782 = vmatprep.subr.mxu0 0.0
        %3783 = vmatpush2.msra.mxu0 0.0
        %3784 = vmatprep.subr.mxu0 0.0
        %3785 = vmatpush2.msra.mxu0 0.0
        %3786 = vmatprep.subr.mxu0 0.0
        %3787 = vmatpush2.msra.mxu0 0.0
        %3788 = vmatprep.subr.mxu0 0.0
        %3789 = vmatpush2.msra.mxu0 0.0
        %3790 = vmatprep.subr.mxu0 0.0
        %3791 = vmatpush2.msra.mxu0 0.0
        %3792 = vmatprep.subr.mxu0 0.0
        %3793 = vmatpush2.msra.mxu0 0.0
        %3794 = vmatprep.subr.mxu0 0.0
        %3795 = vmatpush2.msra.mxu0 0.0
        %3796 = vmatprep.subr.mxu0 0.0
        %3797 = vmatpush2.msra.mxu0 0.0
        %3798 = vmatprep.subr.mxu0 0.0
        %3799 = vmatpush2.msra.mxu0 0.0
        %3800 = vmatprep.subr.mxu0 0.0
        %3801 = vmatpush2.msra.mxu0 0.0
        %3802 = vmatprep.subr.mxu0 0.0
        %3803 = vmatpush2.msra.mxu0 0.0
        %3804 = vmatprep.mubr.f32.mxu0 0.0
        %3805 = vmatmul.mubr.f32.gmra.mxu0 %v3590
        %v3806 = vpop.f32.mrf.mxu0
        %v3807 = vadd.f32 %v3722, %v3806
        %v3808 = vpop.f32.mrf.mxu0
        %3809 = vmatprep.mubr.f32.mxu0 0.0
        %3810 = vmatmul.mubr.f32.gmra.mxu0 %v3593
        %v3811 = vpop.f32.mrf.mxu0
        %v3812 = vadd.f32 %v3727, %v3811
        %v3813 = vpop.f32.mrf.mxu0
        %3814 = vmatprep.mubr.f32.mxu0 0.0
        %3815 = vmatmul.mubr.f32.gmra.mxu0 %v3596
        %v3816 = vpop.f32.mrf.mxu0
        %v3817 = vadd.f32 %v3732, %v3816
        %v3818 = vpop.f32.mrf.mxu0
        %3819 = vmatprep.mubr.f32.mxu0 0.0
        %3820 = vmatmul.mubr.f32.gmra.mxu0 %v3599
        %v3821 = vpop.f32.mrf.mxu0
        %v3822 = vadd.f32 %v3737, %v3821
        %v3823 = vpop.f32.mrf.mxu0
        %3824 = vdwg.mxu0
        %3825 = vst [vmem:[%s340] sm:$0xff] %v3807
        %3826 = vst [vmem:[%s340 + $0x8] sm:$0xff] %v3812
        %3827 = vst [vmem:[%s340 + $0x10] sm:$0xff] %v3817
        %3828 = vst [vmem:[%s340 + $0x18] sm:$0xff] %v3822
        %s3829 = sand.u32 %s186, 1
        %s3830 = scalar_lea.sflag [#allocation6], %s3829
        %s3831 = sand.u32 %s186, 1
        %s3832 = smul.addr %s3831, 32
        %s3833 = scalar_lea.vmem [#allocation12], %s3832
        // Predicated region
        $region65: #{tpu_custom_call.1} parent=47 // pred_check
          %p3834 = pneg %p196
        $region66: #{tpu_custom_call.1} parent=47 // pred_check_branch
          %3836 = sbr.rel (%p3834) target = $region68
        $region67: #{tpu_custom_call.1} parent=47 // pred_region
          %s3837 = smul.u32 4, %s26
          %s3839 = ssub.s32 512, 512
          %3840 = vsyncadd %s3830, %s3839
          %s3841 = smul.addr %s3837, 128
          %s3842 = scalar_lea.hbm %s7, %s3841
          %s3843 = sshll.u32 %s3833, 4
          %s3844 = int_to_ptr.vmem [resolvable:$true] %s3843
          %3849 = dma.vmem_to_hbm [thread:$0]  %s3844, 512, %s3842, %s3830, 128, 128, 8
        $region68: #{tpu_custom_call.1} parent=47 // pred_fallthru
          _
      $region48: #{tpu_custom_call.1} parent=5 // pred_fallthru
        _
      %p3850 = scmp.le.s32.totalorder 2, %s21
      // Predicated region
      $region69: #{tpu_custom_call.1} parent=5 // pred_check
        %p3851 = pneg %p3850
      $region70: #{tpu_custom_call.1} parent=5 // pred_check_branch
        %3853 = sbr.rel (%p3851) target = $region72
      $region71: #{tpu_custom_call.1} parent=5 // pred_region
        %s3854 = ssub.s32 %s21, 2
        // Predicated region
        $region73: #{tpu_custom_call.1} parent=71 // pred_check
          %p3855 = pneg %p202
        $region74: #{tpu_custom_call.1} parent=71 // pred_check_branch
          %3857 = sbr.rel (%p3855) target = $region76
        $region75: #{tpu_custom_call.1} parent=71 // pred_region
          %s3858 = sand.u32 %s187, 1
          %s3859 = scalar_lea.sflag [#allocation6], %s3858
          %s3860 = sand.u32 %s187, 1
          %s3861 = smul.addr %s3860, 32
          %s3862 = scalar_lea.vmem [#allocation12], %s3861
          %3863 = dma.done %s3859, 512
        $region76: #{tpu_custom_call.1} parent=71 // pred_fallthru
          _
      $region72: #{tpu_custom_call.1} parent=5 // pred_fallthru
        _
    $region6: #{tpu_custom_call.1} parent=1 // loop_footer
      %s25 = sadd.s32 1, %s21
    $region7: #{tpu_custom_call.1} parent=1 // loop_footer_branch
      %20 = sbr.rel target = $region3
    $region8: #{tpu_custom_call.1} parent=1 // loop_exit
      _
    %3864 = vsyncpa [#allocation5], 1
    %s3865 = scalar_lea.sflag [#allocation5], 1
    %3866 = vsyncpa %s3865, 1
    %3867 = vsyncpa [#allocation8], 1
    %3868 = vsyncpa [#allocation11], 1
    %3869 = vsyncpa [#allocation6], 1
    %s3870 = scalar_lea.sflag [#allocation6], 1
    %3871 = vsyncpa %s3870, 1

</llo_original>
